<compile_context>
chip_gen: v7x
topology: tpu7x:2x2x1
jax: 0.10.0
libtpu: 0.0.40
codegen_flags: <defaults>
</compile_context>

<pallas_src>
import jax
import jax.numpy as jnp
import numpy as np
from jax.experimental import pallas as pl
from jax.experimental.pallas import tpu as pltpu

# ---------------- problem sizes (small, consistent with the module) ----------
B = 2            # graphs in the batch
N = 16           # original nodes (8 per graph)
E = 32           # edges in the original graph
F_NODE = 13      # dataset.num_features (QM9-style node features)
F_EDGE = 6       # edge_attr dim (Linear(6, 128) in the edge MLPs)
N2 = 24          # 2-tuple ("2-malkin") nodes (12 per graph)
E2 = 48          # edges among 2-tuple nodes
NUM_I2 = 8       # num_i_2  (iso_type_2 one-hot width)

F32 = jnp.float32
BF16 = jnp.bfloat16
VMEM = pl.BlockSpec(memory_space=pltpu.MemorySpace.VMEM)

# ---------------- NNConv static sizes + packed-slab layout constants ---------
M_INS = (F_NODE, 32, 64)
M_OUTS = (32, 64, 64)
KS = tuple(mi * mo for mi, mo in zip(M_INS, M_OUTS))      # (416, 2048, 4096)

LANE_OFF = (0, 512, 2560)      # lane offsets of conv1/2/3 in w2/exp slabs (416->512 pad)
W2_LANES = 2560 + 4096         # 6656
RED_OFF = (0, 416, 2464)       # row offsets of conv1/2/3 in the reduce slab
RED_ROWS = 2464 + 4096         # 6560

# small-weight slab (rows x 128 lanes), all row offsets multiples of 8
SW_ROOT = (0, 16, 48)          # root1 (13,32) / root2 (32,64) / root3 (64,64)
SW_C4X, SW_C4I, SW_C5 = 112, 176, 184          # GraphConv [w_rel | w_root] packs
SW_FC1A, SW_FC1B, SW_FC2, SW_FC3 = 248, 312, 376, 440
SW_ROWS = 472

# f32 bias slab rows
BR_H1 = 0                      # fused edge-MLP layer-1 bias (384,)
BR_B2 = (1, 2, 3)              # edge-MLP layer-2 biases (K_c,)
BR_CONV = (4, 5, 6)            # NNConv root biases
BR_C4, BR_C5, BR_FC1, BR_FC2, BR_FC3 = 7, 8, 9, 10, 11
B_ROWS, B_COLS = 16, 4096

XT_OFF = 8                     # row offset of assign2 inside the stacked pool matrix
PA_ROWS = XT_OFF + N2          # 32


# ---------------- in-kernel helpers -------------------------------------------
def _elu(x):
    # F.elu, alpha=1.  Negative branch = expm1(z) via the exact identity
    # expm1(z) = 2*t / (1 - t), t = tanh(z/2) (accurate near 0); the divide is
    # an EUP reciprocal so only a mul/select sits on the VPU chain.
    z = jnp.minimum(x, 0.0)
    t = jnp.tanh(0.5 * z)
    neg = (2.0 * t) * pl.reciprocal(1.0 - t, approx=True)
    return jnp.where(x > 0, x, neg)


# ---------------- the single fused kernel --------------------------------------
def _net_fused_kernel(x_ref, ea_ref, src_ref, tgt_ref, pa_ref, iso2_ref,
                      adj2_ref, pool2_ref,
                      w1_ref, w2_ref, exp_ref, red_ref, sw_ref, b_ref,
                      o_ref):
    x = x_ref[...]                                            # (N, 13) f32

    # ---- fused edge-MLP layer 1 for conv1/2/3: ONE matmul + ONE ReLU --------
    h_all = jnp.maximum(
        jnp.dot(ea_ref[...].astype(BF16), w1_ref[...],
                preferred_element_type=F32) + b_ref[BR_H1:BR_H1 + 1, :384],
        0.0).astype(BF16)                                     # (E, 384)

    src = src_ref[...]                                        # (E, N) bf16
    tgt = tgt_ref[...]                                        # (N, E) bf16

    # ---- 3x (NNConv + ELU), fully matmul-based edge contraction -------------
    for c in range(3):
        m_in, m_out, k = M_INS[c], M_OUTS[c], KS[c]
        lo, ro = LANE_OFF[c], RED_OFF[c]
        xb16 = x.astype(BF16)

        # edge-conditioned weights Theta (flattened), one lane-dense matmul
        theta = jnp.dot(h_all[:, 128 * c:128 * (c + 1)], w2_ref[:, lo:lo + k],
                        preferred_element_type=F32) \
            + b_ref[BR_B2[c]:BR_B2[c] + 1, :k]                # (E, m_in*m_out)

        # gather source-node features x_j
        x_src = jnp.dot(src, xb16, preferred_element_type=F32)       # (E, m_in)
        # lane-expand: x_exp[e, m*m_out + o] == x_src[e, m]  (0/1 matrix, MXU)
        x_exp = jnp.dot(x_src.astype(BF16), exp_ref[:m_in, lo:lo + k],
                        preferred_element_type=F32)                   # (E, k)
        # per-edge message: segmented lane-sum over m via 0/1 reduce matmul
        prod = (x_exp * theta).astype(BF16)
        msg = jnp.dot(prod, red_ref[ro:ro + k, :m_out],
                      preferred_element_type=F32)                     # (E, m_out)

        # scatter-add to target nodes + root transform + bias + ELU
        agg = jnp.dot(tgt, msg.astype(BF16), preferred_element_type=F32)  # (N, m_out)
        root = sw_ref[SW_ROOT[c]:SW_ROOT[c] + m_in, :m_out]
        x = _elu(jnp.dot(xb16, root, preferred_element_type=F32) + agg
                 + b_ref[BR_CONV[c]:BR_CONV[c] + 1, :m_out])          # (N, m_out)

    # ---- scatter_mean(x, batch) + avg_pool(x, assignment_index_2):
    #      ONE matmul against the stacked pool/assign matrix -------------------
    pa = jnp.dot(pa_ref[...], x.astype(BF16), preferred_element_type=F32)  # (32, 64)
    x_1 = pa[:B, :]                                            # (B, 64)
    xt = pa[XT_OFF:XT_OFF + N2, :]                             # (N2, 64)

    iso2 = iso2_ref[...]
    adj2 = adj2_ref[...]

    # ---- conv4: GraphConv on concat([xt, iso2]); concat folded into split
    #      weights, [w_rel | w_root] lane-packed -> 1 matmul per input part ----
    p_x = jnp.dot(xt.astype(BF16), sw_ref[SW_C4X:SW_C4X + 64, :],
                  preferred_element_type=F32)                  # (N2, 128)
    p_i = jnp.dot(iso2, sw_ref[SW_C4I:SW_C4I + NUM_I2, :],
                  preferred_element_type=F32)                  # (N2, 128)
    rel = (p_x[:, :64] + p_i[:, :64]).astype(BF16)
    agg4 = jnp.dot(adj2, rel, preferred_element_type=F32)
    xt = _elu(agg4 + p_x[:, 64:] + p_i[:, 64:] + b_ref[BR_C4:BR_C4 + 1, :64])

    # ---- conv5 ---------------------------------------------------------------
    p5 = jnp.dot(xt.astype(BF16), sw_ref[SW_C5:SW_C5 + 64, :],
                 preferred_element_type=F32)                   # (N2, 128)
    agg5 = jnp.dot(adj2, p5[:, :64].astype(BF16), preferred_element_type=F32)
    xt = _elu(agg5 + p5[:, 64:] + b_ref[BR_C5:BR_C5 + 1, :64])

    # ---- scatter_mean(xt, batch_2) --------------------------------------------
    x_2 = jnp.dot(pool2_ref[...], xt.astype(BF16), preferred_element_type=F32)  # (B, 64)

    # ---- MLP head; concat([x_1, x_2]) folded into split fc1 weights ----------
    h1 = _elu(jnp.dot(x_1.astype(BF16), sw_ref[SW_FC1A:SW_FC1A + 64, :64],
                      preferred_element_type=F32)
              + jnp.dot(x_2.astype(BF16), sw_ref[SW_FC1B:SW_FC1B + 64, :64],
                        preferred_element_type=F32)
              + b_ref[BR_FC1:BR_FC1 + 1, :64])
    h2 = _elu(jnp.dot(h1.astype(BF16), sw_ref[SW_FC2:SW_FC2 + 64, :32],
                      preferred_element_type=F32)
              + b_ref[BR_FC2:BR_FC2 + 1, :32])
    # fc3: weight/bias lane-padded to 128 -> full unmasked lane-tile store
    o_ref[...] = jnp.dot(h2.astype(BF16), sw_ref[SW_FC3:SW_FC3 + 32, :],
                         preferred_element_type=F32) + b_ref[BR_FC3:BR_FC3 + 1, :128]


def net_forward(x, edge_attr, src_oh, tgt_scat, pool_assign, iso2, adj2, pool2,
                packed):
    ins = (x, edge_attr, src_oh, tgt_scat, pool_assign, iso2, adj2, pool2) \
        + tuple(packed)
    out_pad = pl.pallas_call(
        _net_fused_kernel,
        out_shape=jax.ShapeDtypeStruct((B, 128), F32),
        in_specs=[VMEM] * len(ins),
        out_specs=VMEM,
        compiler_params=pltpu.CompilerParams(vmem_limit_bytes=32 * 1024 * 1024),
    )(*ins)
    return out_pad[:, :12]


# ---------------- parameter init + one-time packing ----------------------------
def _glorot(key, shape):
    lim = 1.0 / np.sqrt(shape[0])
    return jax.random.uniform(key, shape, F32, -lim, lim)


def init_params(key):
    ks = iter(jax.random.split(key, 40))

    def lin_p(in_d, out_d):
        return _glorot(next(ks), (in_d, out_d)), _glorot(next(ks), (out_d,))

    def nnconv_p(m_in, m_out):
        w1, b1 = lin_p(F_EDGE, 128)
        w2, b2 = lin_p(128, m_in * m_out)
        return dict(nn_w1=w1, nn_b1=b1, nn_w2=w2, nn_b2=b2,
                    root=_glorot(next(ks), (m_in, m_out)),
                    bias=jnp.zeros((m_out,), F32))

    def graphconv_p(in_d, out_d):
        return dict(w_rel=_glorot(next(ks), (in_d, out_d)),
                    b_rel=jnp.zeros((out_d,), F32),
                    w_root=_glorot(next(ks), (in_d, out_d)))

    params = dict(
        conv1=nnconv_p(F_NODE, 32),
        conv2=nnconv_p(32, 64),
        conv3=nnconv_p(64, 64),
        conv4=graphconv_p(64 + NUM_I2, 64),
        conv5=graphconv_p(64, 64),
    )
    params["fc1_w"], params["fc1_b"] = lin_p(2 * 64, 64)
    params["fc2_w"], params["fc2_b"] = lin_p(64, 32)
    params["fc3_w"], params["fc3_b"] = lin_p(32, 12)
    return params


def pack_params(params):
    """One-time re-layout of all weights into 6 packed slabs (outside jit).

    Slabs (bf16 except the f32 bias slab):
      w1_all   (6, 384)        fused edge-MLP layer-1 weights [c1|c2|c3]
      w2_slab  (128, 6656)     edge-MLP layer-2 weights, lane-concatenated
      exp_slab (64, 6656)      0/1 lane-expand matrices  EXP[m, m*M_out+o]=1
      red_slab (6560, 64)      0/1 segmented lane-sum    RED[m*M_out+o, o]=1
      sw       (472, 128)      roots, GraphConv [rel|root] packs, fc weights
      b_slab   (16, 4096) f32  every bias as one row
    """
    bf = lambda a: a.astype(BF16)
    convs = (params["conv1"], params["conv2"], params["conv3"])

    w1_all = jnp.concatenate([p["nn_w1"] for p in convs], axis=1)       # (6, 384)

    w2_slab = jnp.zeros((128, W2_LANES), F32)
    exp_slab = jnp.zeros((64, W2_LANES), F32)
    red_slab = jnp.zeros((RED_ROWS, 64), F32)
    b_slab = jnp.zeros((B_ROWS, B_COLS), F32)
    sw = jnp.zeros((SW_ROWS, 128), F32)

    b_slab = b_slab.at[BR_H1, :384].set(
        jnp.concatenate([p["nn_b1"] for p in convs]))

    for c, p in enumerate(convs):
        m_in, m_out, k = M_INS[c], M_OUTS[c], KS[c]
        lo, ro = LANE_OFF[c], RED_OFF[c]
        # flat layout matches theta.view(E, M_in, M_out): column m*M_out + o
        w2_slab = w2_slab.at[:, lo:lo + k].set(p["nn_w2"])
        b_slab = b_slab.at[BR_B2[c], :k].set(p["nn_b2"])
        b_slab = b_slab.at[BR_CONV[c], :m_out].set(p["bias"])
        exp = jnp.repeat(jnp.eye(m_in, dtype=F32), m_out, axis=1)       # (m_in, k)
        exp_slab = exp_slab.at[:m_in, lo:lo + k].set(exp)
        red = jnp.tile(jnp.eye(m_out, dtype=F32), (m_in, 1))            # (k, m_out)
        red_slab = red_slab.at[ro:ro + k, :m_out].set(red)
        sw = sw.at[SW_ROOT[c]:SW_ROOT[c] + m_in, :m_out].set(p["root"])

    c4, c5 = params["conv4"], params["conv5"]
    # GraphConv: lane-concat [w_rel | w_root]; conv4 input = concat([xt, iso2])
    sw = sw.at[SW_C4X:SW_C4X + 64, :].set(
        jnp.concatenate([c4["w_rel"][:64], c4["w_root"][:64]], axis=1))
    sw = sw.at[SW_C4I:SW_C4I + NUM_I2, :].set(
        jnp.concatenate([c4["w_rel"][64:], c4["w_root"][64:]], axis=1))
    sw = sw.at[SW_C5:SW_C5 + 64, :].set(
        jnp.concatenate([c5["w_rel"], c5["w_root"]], axis=1))
    sw = sw.at[SW_FC1A:SW_FC1A + 64, :64].set(params["fc1_w"][:64])
    sw = sw.at[SW_FC1B:SW_FC1B + 64, :64].set(params["fc1_w"][64:])
    sw = sw.at[SW_FC2:SW_FC2 + 64, :32].set(params["fc2_w"])
    sw = sw.at[SW_FC3:SW_FC3 + 32, :12].set(params["fc3_w"])            # lane-pad to 128

    b_slab = b_slab.at[BR_C4, :64].set(c4["b_rel"])
    b_slab = b_slab.at[BR_C5, :64].set(c5["b_rel"])
    b_slab = b_slab.at[BR_FC1, :64].set(params["fc1_b"])
    b_slab = b_slab.at[BR_FC2, :32].set(params["fc2_b"])
    b_slab = b_slab.at[BR_FC3, :12].set(params["fc3_b"])

    return (bf(w1_all), bf(w2_slab), bf(exp_slab), bf(red_slab), bf(sw), b_slab)


# ---------------- main ----------------------------------------------------------
if __name__ == "__main__":
    key = jax.random.PRNGKey(0)
    keys = jax.random.split(key, 16)

    npg = N // B          # original nodes per graph
    npg2 = N2 // B        # 2-tuple nodes per graph
    epg = E // B
    epg2 = E2 // B

    # node / edge features
    x = jax.random.normal(keys[0], (N, F_NODE), F32)
    edge_attr = jax.random.uniform(keys[1], (E, F_EDGE), F32)

    # original graph connectivity (each edge stays within its graph)
    off_e = jnp.repeat(jnp.arange(B), epg) * npg
    src = jax.random.randint(keys[2], (E,), 0, npg) + off_e      # edge_index[0]
    tgt = jax.random.randint(keys[3], (E,), 0, npg) + off_e      # edge_index[1]
    batch = jnp.repeat(jnp.arange(B), npg)

    # 2-tuple graph connectivity
    off_e2 = jnp.repeat(jnp.arange(B), epg2) * npg2
    src2 = jax.random.randint(keys[4], (E2,), 0, npg2) + off_e2  # edge_index_2[0]
    tgt2 = jax.random.randint(keys[5], (E2,), 0, npg2) + off_e2  # edge_index_2[1]
    batch_2 = jnp.repeat(jnp.arange(B), npg2)

    # assignment_index_2: every 2-tuple node is assigned 2 original nodes of its graph
    assign_node = (jax.random.randint(keys[6], (2 * N2,), 0, npg)
                   + jnp.repeat(jnp.arange(B), 2 * npg2) * npg)
    assign_tuple = jnp.repeat(jnp.arange(N2), 2)

    # one-hot iso_type_2
    iso2 = jax.nn.one_hot(jax.random.randint(keys[7], (N2,), 0, NUM_I2),
                          NUM_I2, dtype=F32)

    # --- glue: densify graph index structures into matrices (bf16) -----------
    # TODO(synk): at real QM9 sizes replace these O(E*N) dense matrices with a
    # scalar-prefetch row gather + per-node-tile VMEM scatter accumulator.
    src_oh = jax.nn.one_hot(src, N, dtype=F32)                    # (E, N)  gather x_j
    tgt_scat = jax.nn.one_hot(tgt, N, dtype=F32).T                # (N, E)  scatter-add to i

    b_oh = jax.nn.one_hot(batch, B, dtype=F32)                    # (N, B)
    pool1 = (b_oh / jnp.maximum(b_oh.sum(0, keepdims=True), 1.0)).T   # (B, N) scatter_mean

    a_t = jax.nn.one_hot(assign_tuple, N2, dtype=F32)             # (2*N2, N2)
    a_n = jax.nn.one_hot(assign_node, N, dtype=F32)               # (2*N2, N)
    assign2 = a_t.T @ a_n                                         # (N2, N) multiplicity counts
    assign2 = assign2 / jnp.maximum(assign2.sum(1, keepdims=True), 1.0)   # avg_pool

    # stacked pool/assign matrix: rows [0:B] = scatter_mean, [8:8+N2] = avg_pool
    pool_assign = jnp.zeros((PA_ROWS, N), F32)
    pool_assign = pool_assign.at[:B].set(pool1)
    pool_assign = pool_assign.at[XT_OFF:XT_OFF + N2].set(assign2)

    adj2 = (jax.nn.one_hot(tgt2, N2, dtype=F32).T
            @ jax.nn.one_hot(src2, N2, dtype=F32))                # (N2, N2) adj[i,j]=#edges j->i

    b2_oh = jax.nn.one_hot(batch_2, B, dtype=F32)
    pool2 = (b2_oh / jnp.maximum(b2_oh.sum(0, keepdims=True), 1.0)).T     # (B, N2)

    params = init_params(keys[8])
    packed = pack_params(params)           # one-time re-layout, outside jit

    forward = jax.jit(net_forward)
    out = forward(x, edge_attr,
                  src_oh.astype(BF16), tgt_scat.astype(BF16),
                  pool_assign.astype(BF16), iso2.astype(BF16),
                  adj2.astype(BF16), pool2.astype(BF16), packed)
    out = jax.block_until_ready(out)

    assert out.shape == (B, 12) and out.dtype == F32
    assert bool(jnp.all(jnp.isfinite(out)))
    print("KERNEL_OK")
</pallas_src>

<mosaic_0001>
module attributes {stable_mosaic.version = 11 : i64} {
  func.func @_net_fused_kernel(%arg0: memref<16x13xf32, #tpu.memory_space<vmem>>, %arg1: memref<32x6xf32, #tpu.memory_space<vmem>>, %arg2: memref<32x16xbf16, #tpu.memory_space<vmem>>, %arg3: memref<16x32xbf16, #tpu.memory_space<vmem>>, %arg4: memref<32x16xbf16, #tpu.memory_space<vmem>>, %arg5: memref<24x8xbf16, #tpu.memory_space<vmem>>, %arg6: memref<24x24xbf16, #tpu.memory_space<vmem>>, %arg7: memref<2x24xbf16, #tpu.memory_space<vmem>>, %arg8: memref<6x384xbf16, #tpu.memory_space<vmem>>, %arg9: memref<128x6656xbf16, #tpu.memory_space<vmem>>, %arg10: memref<64x6656xbf16, #tpu.memory_space<vmem>>, %arg11: memref<6560x64xbf16, #tpu.memory_space<vmem>>, %arg12: memref<472x128xbf16, #tpu.memory_space<vmem>>, %arg13: memref<16x4096xf32, #tpu.memory_space<vmem>>, %arg14: memref<2x128xf32, #tpu.memory_space<vmem>>) attributes {dimension_semantics = [], scalar_prefetch = 0 : i64, scratch_operands = 0 : i64, tpu.core_type = #tpu.core_type<tc>} {
    %c0 = arith.constant 0 : index
    %c0_0 = arith.constant 0 : index
    %0 = vector.load %arg0[%c0, %c0_0] : memref<16x13xf32, #tpu.memory_space<vmem>>, vector<16x13xf32>
    %c0_1 = arith.constant 0 : index
    %c0_2 = arith.constant 0 : index
    %1 = vector.load %arg1[%c0_1, %c0_2] : memref<32x6xf32, #tpu.memory_space<vmem>>, vector<32x6xf32>
    %2 = arith.truncf %1 : vector<32x6xf32> to vector<32x6xbf16>
    %c0_3 = arith.constant 0 : index
    %c0_4 = arith.constant 0 : index
    %3 = vector.load %arg8[%c0_3, %c0_4] : memref<6x384xbf16, #tpu.memory_space<vmem>>, vector<6x384xbf16>
    %cst = arith.constant dense<0.000000e+00> : vector<32x384xf32>
    %4 = tpu.matmul %2, %3, %cst {dimension_numbers = #tpu.dot_dimension_numbers<[1], [0], [0], [1], [0, 0, 1, 1], [], []>} : vector<32x6xbf16>, vector<6x384xbf16>, vector<32x384xf32> -> vector<32x384xf32>
    %c0_5 = arith.constant 0 : index
    %c0_6 = arith.constant 0 : index
    %5 = vector.load %arg13[%c0_5, %c0_6] : memref<16x4096xf32, #tpu.memory_space<vmem>>, vector<1x384xf32>
    %6 = vector.broadcast %5 : vector<1x384xf32> to vector<32x384xf32>
    %7 = arith.addf %4, %6 : vector<32x384xf32>
    %cst_7 = arith.constant 0.000000e+00 : f32
    %8 = vector.broadcast %cst_7 : f32 to vector<32x384xf32>
    %9 = arith.maximumf %7, %8 : vector<32x384xf32>
    %10 = arith.truncf %9 : vector<32x384xf32> to vector<32x384xbf16>
    %c0_8 = arith.constant 0 : index
    %c0_9 = arith.constant 0 : index
    %11 = vector.load %arg2[%c0_8, %c0_9] : memref<32x16xbf16, #tpu.memory_space<vmem>>, vector<32x16xbf16>
    %c0_10 = arith.constant 0 : index
    %c0_11 = arith.constant 0 : index
    %12 = vector.load %arg3[%c0_10, %c0_11] : memref<16x32xbf16, #tpu.memory_space<vmem>>, vector<16x32xbf16>
    %13 = arith.truncf %0 : vector<16x13xf32> to vector<16x13xbf16>
    %14 = vector.extract_strided_slice %10 {offsets = [0, 0], sizes = [32, 128], strides = [1, 1]} : vector<32x384xbf16> to vector<32x128xbf16>
    %c0_12 = arith.constant 0 : index
    %c0_13 = arith.constant 0 : index
    %15 = vector.load %arg9[%c0_12, %c0_13] : memref<128x6656xbf16, #tpu.memory_space<vmem>>, vector<128x416xbf16>
    %cst_14 = arith.constant dense<0.000000e+00> : vector<32x416xf32>
    %16 = tpu.matmul %14, %15, %cst_14 {dimension_numbers = #tpu.dot_dimension_numbers<[1], [0], [0], [1], [0, 0, 1, 1], [], []>} : vector<32x128xbf16>, vector<128x416xbf16>, vector<32x416xf32> -> vector<32x416xf32>
    %c1 = arith.constant 1 : index
    %c0_15 = arith.constant 0 : index
    %17 = vector.load %arg13[%c1, %c0_15] : memref<16x4096xf32, #tpu.memory_space<vmem>>, vector<1x416xf32>
    %18 = vector.broadcast %17 : vector<1x416xf32> to vector<32x416xf32>
    %19 = arith.addf %16, %18 : vector<32x416xf32>
    %cst_16 = arith.constant dense<0.000000e+00> : vector<32x13xf32>
    %20 = tpu.matmul %11, %13, %cst_16 {dimension_numbers = #tpu.dot_dimension_numbers<[1], [0], [0], [1], [0, 0, 1, 1], [], []>} : vector<32x16xbf16>, vector<16x13xbf16>, vector<32x13xf32> -> vector<32x13xf32>
    %21 = arith.truncf %20 : vector<32x13xf32> to vector<32x13xbf16>
    %c0_17 = arith.constant 0 : index
    %c0_18 = arith.constant 0 : index
    %22 = vector.load %arg10[%c0_17, %c0_18] : memref<64x6656xbf16, #tpu.memory_space<vmem>>, vector<13x416xbf16>
    %cst_19 = arith.constant dense<0.000000e+00> : vector<32x416xf32>
    %23 = tpu.matmul %21, %22, %cst_19 {dimension_numbers = #tpu.dot_dimension_numbers<[1], [0], [0], [1], [0, 0, 1, 1], [], []>} : vector<32x13xbf16>, vector<13x416xbf16>, vector<32x416xf32> -> vector<32x416xf32>
    %24 = arith.mulf %23, %19 : vector<32x416xf32>
    %25 = arith.truncf %24 : vector<32x416xf32> to vector<32x416xbf16>
    %c0_20 = arith.constant 0 : index
    %c0_21 = arith.constant 0 : index
    %26 = vector.load %arg11[%c0_20, %c0_21] : memref<6560x64xbf16, #tpu.memory_space<vmem>>, vector<416x32xbf16>
    %cst_22 = arith.constant dense<0.000000e+00> : vector<32x32xf32>
    %27 = tpu.matmul %25, %26, %cst_22 {dimension_numbers = #tpu.dot_dimension_numbers<[1], [0], [0], [1], [0, 0, 1, 1], [], []>} : vector<32x416xbf16>, vector<416x32xbf16>, vector<32x32xf32> -> vector<32x32xf32>
    %28 = arith.truncf %27 : vector<32x32xf32> to vector<32x32xbf16>
    %cst_23 = arith.constant dense<0.000000e+00> : vector<16x32xf32>
    %29 = tpu.matmul %12, %28, %cst_23 {dimension_numbers = #tpu.dot_dimension_numbers<[1], [0], [0], [1], [0, 0, 1, 1], [], []>} : vector<16x32xbf16>, vector<32x32xbf16>, vector<16x32xf32> -> vector<16x32xf32>
    %c0_24 = arith.constant 0 : index
    %c0_25 = arith.constant 0 : index
    %30 = vector.load %arg12[%c0_24, %c0_25] : memref<472x128xbf16, #tpu.memory_space<vmem>>, vector<13x32xbf16>
    %cst_26 = arith.constant dense<0.000000e+00> : vector<16x32xf32>
    %31 = tpu.matmul %13, %30, %cst_26 {dimension_numbers = #tpu.dot_dimension_numbers<[1], [0], [0], [1], [0, 0, 1, 1], [], []>} : vector<16x13xbf16>, vector<13x32xbf16>, vector<16x32xf32> -> vector<16x32xf32>
    %32 = arith.addf %31, %29 : vector<16x32xf32>
    %c4 = arith.constant 4 : index
    %c0_27 = arith.constant 0 : index
    %33 = vector.load %arg13[%c4, %c0_27] : memref<16x4096xf32, #tpu.memory_space<vmem>>, vector<1x32xf32>
    %34 = vector.broadcast %33 : vector<1x32xf32> to vector<16x32xf32>
    %35 = arith.addf %32, %34 : vector<16x32xf32>
    %cst_28 = arith.constant 0.000000e+00 : f32
    %36 = vector.broadcast %cst_28 : f32 to vector<16x32xf32>
    %37 = arith.minimumf %35, %36 : vector<16x32xf32>
    %cst_29 = arith.constant 5.000000e-01 : f32
    %38 = vector.broadcast %cst_29 : f32 to vector<16x32xf32>
    %39 = arith.mulf %38, %37 : vector<16x32xf32>
    %40 = math.tanh %39 : vector<16x32xf32>
    %cst_30 = arith.constant 2.000000e+00 : f32
    %41 = vector.broadcast %cst_30 : f32 to vector<16x32xf32>
    %42 = arith.mulf %41, %40 : vector<16x32xf32>
    %cst_31 = arith.constant 1.000000e+00 : f32
    %43 = vector.broadcast %cst_31 : f32 to vector<16x32xf32>
    %44 = arith.subf %43, %40 : vector<16x32xf32>
    %45 = tpu.reciprocal %44 {approx = true} : vector<16x32xf32> -> vector<16x32xf32>
    %46 = arith.mulf %42, %45 : vector<16x32xf32>
    %cst_32 = arith.constant 0.000000e+00 : f32
    %47 = vector.broadcast %cst_32 : f32 to vector<16x32xf32>
    %48 = arith.cmpf ogt, %35, %47 : vector<16x32xf32>
    %49 = arith.select %48, %35, %46 : vector<16x32xi1>, vector<16x32xf32>
    %50 = arith.truncf %49 : vector<16x32xf32> to vector<16x32xbf16>
    %51 = vector.extract_strided_slice %10 {offsets = [0, 128], sizes = [32, 128], strides = [1, 1]} : vector<32x384xbf16> to vector<32x128xbf16>
    %c0_33 = arith.constant 0 : index
    %c512 = arith.constant 512 : index
    %52 = vector.load %arg9[%c0_33, %c512] : memref<128x6656xbf16, #tpu.memory_space<vmem>>, vector<128x2048xbf16>
    %cst_34 = arith.constant dense<0.000000e+00> : vector<32x2048xf32>
    %53 = tpu.matmul %51, %52, %cst_34 {dimension_numbers = #tpu.dot_dimension_numbers<[1], [0], [0], [1], [0, 0, 1, 1], [], []>} : vector<32x128xbf16>, vector<128x2048xbf16>, vector<32x2048xf32> -> vector<32x2048xf32>
    %c2 = arith.constant 2 : index
    %c0_35 = arith.constant 0 : index
    %54 = vector.load %arg13[%c2, %c0_35] : memref<16x4096xf32, #tpu.memory_space<vmem>>, vector<1x2048xf32>
    %55 = vector.broadcast %54 : vector<1x2048xf32> to vector<32x2048xf32>
    %56 = arith.addf %53, %55 : vector<32x2048xf32>
    %cst_36 = arith.constant dense<0.000000e+00> : vector<32x32xf32>
    %57 = tpu.matmul %11, %50, %cst_36 {dimension_numbers = #tpu.dot_dimension_numbers<[1], [0], [0], [1], [0, 0, 1, 1], [], []>} : vector<32x16xbf16>, vector<16x32xbf16>, vector<32x32xf32> -> vector<32x32xf32>
    %58 = arith.truncf %57 : vector<32x32xf32> to vector<32x32xbf16>
    %c0_37 = arith.constant 0 : index
    %c512_38 = arith.constant 512 : index
    %59 = vector.load %arg10[%c0_37, %c512_38] : memref<64x6656xbf16, #tpu.memory_space<vmem>>, vector<32x2048xbf16>
    %cst_39 = arith.constant dense<0.000000e+00> : vector<32x2048xf32>
    %60 = tpu.matmul %58, %59, %cst_39 {dimension_numbers = #tpu.dot_dimension_numbers<[1], [0], [0], [1], [0, 0, 1, 1], [], []>} : vector<32x32xbf16>, vector<32x2048xbf16>, vector<32x2048xf32> -> vector<32x2048xf32>
    %61 = arith.mulf %60, %56 : vector<32x2048xf32>
    %62 = arith.truncf %61 : vector<32x2048xf32> to vector<32x2048xbf16>
    %c416 = arith.constant 416 : index
    %c0_40 = arith.constant 0 : index
    %63 = vector.load %arg11[%c416, %c0_40] : memref<6560x64xbf16, #tpu.memory_space<vmem>>, vector<2048x64xbf16>
    %cst_41 = arith.constant dense<0.000000e+00> : vector<32x64xf32>
    %64 = tpu.matmul %62, %63, %cst_41 {dimension_numbers = #tpu.dot_dimension_numbers<[1], [0], [0], [1], [0, 0, 1, 1], [], []>} : vector<32x2048xbf16>, vector<2048x64xbf16>, vector<32x64xf32> -> vector<32x64xf32>
    %65 = arith.truncf %64 : vector<32x64xf32> to vector<32x64xbf16>
    %cst_42 = arith.constant dense<0.000000e+00> : vector<16x64xf32>
    %66 = tpu.matmul %12, %65, %cst_42 {dimension_numbers = #tpu.dot_dimension_numbers<[1], [0], [0], [1], [0, 0, 1, 1], [], []>} : vector<16x32xbf16>, vector<32x64xbf16>, vector<16x64xf32> -> vector<16x64xf32>
    %c16 = arith.constant 16 : index
    %c0_43 = arith.constant 0 : index
    %67 = vector.load %arg12[%c16, %c0_43] : memref<472x128xbf16, #tpu.memory_space<vmem>>, vector<32x64xbf16>
    %cst_44 = arith.constant dense<0.000000e+00> : vector<16x64xf32>
    %68 = tpu.matmul %50, %67, %cst_44 {dimension_numbers = #tpu.dot_dimension_numbers<[1], [0], [0], [1], [0, 0, 1, 1], [], []>} : vector<16x32xbf16>, vector<32x64xbf16>, vector<16x64xf32> -> vector<16x64xf32>
    %69 = arith.addf %68, %66 : vector<16x64xf32>
    %c5 = arith.constant 5 : index
    %c0_45 = arith.constant 0 : index
    %70 = vector.load %arg13[%c5, %c0_45] : memref<16x4096xf32, #tpu.memory_space<vmem>>, vector<1x64xf32>
    %71 = vector.broadcast %70 : vector<1x64xf32> to vector<16x64xf32>
    %72 = arith.addf %69, %71 : vector<16x64xf32>
    %cst_46 = arith.constant 0.000000e+00 : f32
    %73 = vector.broadcast %cst_46 : f32 to vector<16x64xf32>
    %74 = arith.minimumf %72, %73 : vector<16x64xf32>
    %cst_47 = arith.constant 5.000000e-01 : f32
    %75 = vector.broadcast %cst_47 : f32 to vector<16x64xf32>
    %76 = arith.mulf %75, %74 : vector<16x64xf32>
    %77 = math.tanh %76 : vector<16x64xf32>
    %cst_48 = arith.constant 2.000000e+00 : f32
    %78 = vector.broadcast %cst_48 : f32 to vector<16x64xf32>
    %79 = arith.mulf %78, %77 : vector<16x64xf32>
    %cst_49 = arith.constant 1.000000e+00 : f32
    %80 = vector.broadcast %cst_49 : f32 to vector<16x64xf32>
    %81 = arith.subf %80, %77 : vector<16x64xf32>
    %82 = tpu.reciprocal %81 {approx = true} : vector<16x64xf32> -> vector<16x64xf32>
    %83 = arith.mulf %79, %82 : vector<16x64xf32>
    %cst_50 = arith.constant 0.000000e+00 : f32
    %84 = vector.broadcast %cst_50 : f32 to vector<16x64xf32>
    %85 = arith.cmpf ogt, %72, %84 : vector<16x64xf32>
    %86 = arith.select %85, %72, %83 : vector<16x64xi1>, vector<16x64xf32>
    %87 = arith.truncf %86 : vector<16x64xf32> to vector<16x64xbf16>
    %88 = vector.extract_strided_slice %10 {offsets = [0, 256], sizes = [32, 128], strides = [1, 1]} : vector<32x384xbf16> to vector<32x128xbf16>
    %c0_51 = arith.constant 0 : index
    %c2560 = arith.constant 2560 : index
    %89 = vector.load %arg9[%c0_51, %c2560] : memref<128x6656xbf16, #tpu.memory_space<vmem>>, vector<128x4096xbf16>
    %cst_52 = arith.constant dense<0.000000e+00> : vector<32x4096xf32>
    %90 = tpu.matmul %88, %89, %cst_52 {dimension_numbers = #tpu.dot_dimension_numbers<[1], [0], [0], [1], [0, 0, 1, 1], [], []>} : vector<32x128xbf16>, vector<128x4096xbf16>, vector<32x4096xf32> -> vector<32x4096xf32>
    %c3 = arith.constant 3 : index
    %c0_53 = arith.constant 0 : index
    %91 = vector.load %arg13[%c3, %c0_53] : memref<16x4096xf32, #tpu.memory_space<vmem>>, vector<1x4096xf32>
    %92 = vector.broadcast %91 : vector<1x4096xf32> to vector<32x4096xf32>
    %93 = arith.addf %90, %92 : vector<32x4096xf32>
    %cst_54 = arith.constant dense<0.000000e+00> : vector<32x64xf32>
    %94 = tpu.matmul %11, %87, %cst_54 {dimension_numbers = #tpu.dot_dimension_numbers<[1], [0], [0], [1], [0, 0, 1, 1], [], []>} : vector<32x16xbf16>, vector<16x64xbf16>, vector<32x64xf32> -> vector<32x64xf32>
    %95 = arith.truncf %94 : vector<32x64xf32> to vector<32x64xbf16>
    %c0_55 = arith.constant 0 : index
    %c2560_56 = arith.constant 2560 : index
    %96 = vector.load %arg10[%c0_55, %c2560_56] : memref<64x6656xbf16, #tpu.memory_space<vmem>>, vector<64x4096xbf16>
    %cst_57 = arith.constant dense<0.000000e+00> : vector<32x4096xf32>
    %97 = tpu.matmul %95, %96, %cst_57 {dimension_numbers = #tpu.dot_dimension_numbers<[1], [0], [0], [1], [0, 0, 1, 1], [], []>} : vector<32x64xbf16>, vector<64x4096xbf16>, vector<32x4096xf32> -> vector<32x4096xf32>
    %98 = arith.mulf %97, %93 : vector<32x4096xf32>
    %99 = arith.truncf %98 : vector<32x4096xf32> to vector<32x4096xbf16>
    %c2464 = arith.constant 2464 : index
    %c0_58 = arith.constant 0 : index
    %100 = vector.load %arg11[%c2464, %c0_58] : memref<6560x64xbf16, #tpu.memory_space<vmem>>, vector<4096x64xbf16>
    %cst_59 = arith.constant dense<0.000000e+00> : vector<32x64xf32>
    %101 = tpu.matmul %99, %100, %cst_59 {dimension_numbers = #tpu.dot_dimension_numbers<[1], [0], [0], [1], [0, 0, 1, 1], [], []>} : vector<32x4096xbf16>, vector<4096x64xbf16>, vector<32x64xf32> -> vector<32x64xf32>
    %102 = arith.truncf %101 : vector<32x64xf32> to vector<32x64xbf16>
    %cst_60 = arith.constant dense<0.000000e+00> : vector<16x64xf32>
    %103 = tpu.matmul %12, %102, %cst_60 {dimension_numbers = #tpu.dot_dimension_numbers<[1], [0], [0], [1], [0, 0, 1, 1], [], []>} : vector<16x32xbf16>, vector<32x64xbf16>, vector<16x64xf32> -> vector<16x64xf32>
    %c48 = arith.constant 48 : index
    %c0_61 = arith.constant 0 : index
    %104 = vector.load %arg12[%c48, %c0_61] : memref<472x128xbf16, #tpu.memory_space<vmem>>, vector<64x64xbf16>
    %cst_62 = arith.constant dense<0.000000e+00> : vector<16x64xf32>
    %105 = tpu.matmul %87, %104, %cst_62 {dimension_numbers = #tpu.dot_dimension_numbers<[1], [0], [0], [1], [0, 0, 1, 1], [], []>} : vector<16x64xbf16>, vector<64x64xbf16>, vector<16x64xf32> -> vector<16x64xf32>
    %106 = arith.addf %105, %103 : vector<16x64xf32>
    %c6 = arith.constant 6 : index
    %c0_63 = arith.constant 0 : index
    %107 = vector.load %arg13[%c6, %c0_63] : memref<16x4096xf32, #tpu.memory_space<vmem>>, vector<1x64xf32>
    %108 = vector.broadcast %107 : vector<1x64xf32> to vector<16x64xf32>
    %109 = arith.addf %106, %108 : vector<16x64xf32>
    %cst_64 = arith.constant 0.000000e+00 : f32
    %110 = vector.broadcast %cst_64 : f32 to vector<16x64xf32>
    %111 = arith.minimumf %109, %110 : vector<16x64xf32>
    %cst_65 = arith.constant 5.000000e-01 : f32
    %112 = vector.broadcast %cst_65 : f32 to vector<16x64xf32>
    %113 = arith.mulf %112, %111 : vector<16x64xf32>
    %114 = math.tanh %113 : vector<16x64xf32>
    %cst_66 = arith.constant 2.000000e+00 : f32
    %115 = vector.broadcast %cst_66 : f32 to vector<16x64xf32>
    %116 = arith.mulf %115, %114 : vector<16x64xf32>
    %cst_67 = arith.constant 1.000000e+00 : f32
    %117 = vector.broadcast %cst_67 : f32 to vector<16x64xf32>
    %118 = arith.subf %117, %114 : vector<16x64xf32>
    %119 = tpu.reciprocal %118 {approx = true} : vector<16x64xf32> -> vector<16x64xf32>
    %120 = arith.mulf %116, %119 : vector<16x64xf32>
    %cst_68 = arith.constant 0.000000e+00 : f32
    %121 = vector.broadcast %cst_68 : f32 to vector<16x64xf32>
    %122 = arith.cmpf ogt, %109, %121 : vector<16x64xf32>
    %123 = arith.select %122, %109, %120 : vector<16x64xi1>, vector<16x64xf32>
    %c0_69 = arith.constant 0 : index
    %c0_70 = arith.constant 0 : index
    %124 = vector.load %arg4[%c0_69, %c0_70] : memref<32x16xbf16, #tpu.memory_space<vmem>>, vector<32x16xbf16>
    %125 = arith.truncf %123 : vector<16x64xf32> to vector<16x64xbf16>
    %cst_71 = arith.constant dense<0.000000e+00> : vector<32x64xf32>
    %126 = tpu.matmul %124, %125, %cst_71 {dimension_numbers = #tpu.dot_dimension_numbers<[1], [0], [0], [1], [0, 0, 1, 1], [], []>} : vector<32x16xbf16>, vector<16x64xbf16>, vector<32x64xf32> -> vector<32x64xf32>
    %127 = vector.extract_strided_slice %126 {offsets = [0, 0], sizes = [2, 64], strides = [1, 1]} : vector<32x64xf32> to vector<2x64xf32>
    %128 = vector.extract_strided_slice %126 {offsets = [8, 0], sizes = [24, 64], strides = [1, 1]} : vector<32x64xf32> to vector<24x64xf32>
    %c0_72 = arith.constant 0 : index
    %c0_73 = arith.constant 0 : index
    %129 = vector.load %arg5[%c0_72, %c0_73] : memref<24x8xbf16, #tpu.memory_space<vmem>>, vector<24x8xbf16>
    %c0_74 = arith.constant 0 : index
    %c0_75 = arith.constant 0 : index
    %130 = vector.load %arg6[%c0_74, %c0_75] : memref<24x24xbf16, #tpu.memory_space<vmem>>, vector<24x24xbf16>
    %131 = arith.truncf %128 : vector<24x64xf32> to vector<24x64xbf16>
    %c112 = arith.constant 112 : index
    %c0_76 = arith.constant 0 : index
    %132 = vector.load %arg12[%c112, %c0_76] : memref<472x128xbf16, #tpu.memory_space<vmem>>, vector<64x128xbf16>
    %cst_77 = arith.constant dense<0.000000e+00> : vector<24x128xf32>
    %133 = tpu.matmul %131, %132, %cst_77 {dimension_numbers = #tpu.dot_dimension_numbers<[1], [0], [0], [1], [0, 0, 1, 1], [], []>} : vector<24x64xbf16>, vector<64x128xbf16>, vector<24x128xf32> -> vector<24x128xf32>
    %c176 = arith.constant 176 : index
    %c0_78 = arith.constant 0 : index
    %134 = vector.load %arg12[%c176, %c0_78] : memref<472x128xbf16, #tpu.memory_space<vmem>>, vector<8x128xbf16>
    %cst_79 = arith.constant dense<0.000000e+00> : vector<24x128xf32>
    %135 = tpu.matmul %129, %134, %cst_79 {dimension_numbers = #tpu.dot_dimension_numbers<[1], [0], [0], [1], [0, 0, 1, 1], [], []>} : vector<24x8xbf16>, vector<8x128xbf16>, vector<24x128xf32> -> vector<24x128xf32>
    %136 = vector.extract_strided_slice %133 {offsets = [0, 0], sizes = [24, 64], strides = [1, 1]} : vector<24x128xf32> to vector<24x64xf32>
    %137 = vector.extract_strided_slice %135 {offsets = [0, 0], sizes = [24, 64], strides = [1, 1]} : vector<24x128xf32> to vector<24x64xf32>
    %138 = arith.addf %136, %137 : vector<24x64xf32>
    %139 = arith.truncf %138 : vector<24x64xf32> to vector<24x64xbf16>
    %cst_80 = arith.constant dense<0.000000e+00> : vector<24x64xf32>
    %140 = tpu.matmul %130, %139, %cst_80 {dimension_numbers = #tpu.dot_dimension_numbers<[1], [0], [0], [1], [0, 0, 1, 1], [], []>} : vector<24x24xbf16>, vector<24x64xbf16>, vector<24x64xf32> -> vector<24x64xf32>
    %141 = vector.extract_strided_slice %133 {offsets = [0, 64], sizes = [24, 64], strides = [1, 1]} : vector<24x128xf32> to vector<24x64xf32>
    %142 = arith.addf %140, %141 : vector<24x64xf32>
    %143 = vector.extract_strided_slice %135 {offsets = [0, 64], sizes = [24, 64], strides = [1, 1]} : vector<24x128xf32> to vector<24x64xf32>
    %144 = arith.addf %142, %143 : vector<24x64xf32>
    %c7 = arith.constant 7 : index
    %c0_81 = arith.constant 0 : index
    %145 = vector.load %arg13[%c7, %c0_81] : memref<16x4096xf32, #tpu.memory_space<vmem>>, vector<1x64xf32>
    %146 = vector.broadcast %145 : vector<1x64xf32> to vector<24x64xf32>
    %147 = arith.addf %144, %146 : vector<24x64xf32>
    %cst_82 = arith.constant 0.000000e+00 : f32
    %148 = vector.broadcast %cst_82 : f32 to vector<24x64xf32>
    %149 = arith.minimumf %147, %148 : vector<24x64xf32>
    %cst_83 = arith.constant 5.000000e-01 : f32
    %150 = vector.broadcast %cst_83 : f32 to vector<24x64xf32>
    %151 = arith.mulf %150, %149 : vector<24x64xf32>
    %152 = math.tanh %151 : vector<24x64xf32>
    %cst_84 = arith.constant 2.000000e+00 : f32
    %153 = vector.broadcast %cst_84 : f32 to vector<24x64xf32>
    %154 = arith.mulf %153, %152 : vector<24x64xf32>
    %cst_85 = arith.constant 1.000000e+00 : f32
    %155 = vector.broadcast %cst_85 : f32 to vector<24x64xf32>
    %156 = arith.subf %155, %152 : vector<24x64xf32>
    %157 = tpu.reciprocal %156 {approx = true} : vector<24x64xf32> -> vector<24x64xf32>
    %158 = arith.mulf %154, %157 : vector<24x64xf32>
    %cst_86 = arith.constant 0.000000e+00 : f32
    %159 = vector.broadcast %cst_86 : f32 to vector<24x64xf32>
    %160 = arith.cmpf ogt, %147, %159 : vector<24x64xf32>
    %161 = arith.select %160, %147, %158 : vector<24x64xi1>, vector<24x64xf32>
    %162 = arith.truncf %161 : vector<24x64xf32> to vector<24x64xbf16>
    %c184 = arith.constant 184 : index
    %c0_87 = arith.constant 0 : index
    %163 = vector.load %arg12[%c184, %c0_87] : memref<472x128xbf16, #tpu.memory_space<vmem>>, vector<64x128xbf16>
    %cst_88 = arith.constant dense<0.000000e+00> : vector<24x128xf32>
    %164 = tpu.matmul %162, %163, %cst_88 {dimension_numbers = #tpu.dot_dimension_numbers<[1], [0], [0], [1], [0, 0, 1, 1], [], []>} : vector<24x64xbf16>, vector<64x128xbf16>, vector<24x128xf32> -> vector<24x128xf32>
    %165 = vector.extract_strided_slice %164 {offsets = [0, 0], sizes = [24, 64], strides = [1, 1]} : vector<24x128xf32> to vector<24x64xf32>
    %166 = arith.truncf %165 : vector<24x64xf32> to vector<24x64xbf16>
    %cst_89 = arith.constant dense<0.000000e+00> : vector<24x64xf32>
    %167 = tpu.matmul %130, %166, %cst_89 {dimension_numbers = #tpu.dot_dimension_numbers<[1], [0], [0], [1], [0, 0, 1, 1], [], []>} : vector<24x24xbf16>, vector<24x64xbf16>, vector<24x64xf32> -> vector<24x64xf32>
    %168 = vector.extract_strided_slice %164 {offsets = [0, 64], sizes = [24, 64], strides = [1, 1]} : vector<24x128xf32> to vector<24x64xf32>
    %169 = arith.addf %167, %168 : vector<24x64xf32>
    %c8 = arith.constant 8 : index
    %c0_90 = arith.constant 0 : index
    %170 = vector.load %arg13[%c8, %c0_90] : memref<16x4096xf32, #tpu.memory_space<vmem>>, vector<1x64xf32>
    %171 = vector.broadcast %170 : vector<1x64xf32> to vector<24x64xf32>
    %172 = arith.addf %169, %171 : vector<24x64xf32>
    %cst_91 = arith.constant 0.000000e+00 : f32
    %173 = vector.broadcast %cst_91 : f32 to vector<24x64xf32>
    %174 = arith.minimumf %172, %173 : vector<24x64xf32>
    %cst_92 = arith.constant 5.000000e-01 : f32
    %175 = vector.broadcast %cst_92 : f32 to vector<24x64xf32>
    %176 = arith.mulf %175, %174 : vector<24x64xf32>
    %177 = math.tanh %176 : vector<24x64xf32>
    %cst_93 = arith.constant 2.000000e+00 : f32
    %178 = vector.broadcast %cst_93 : f32 to vector<24x64xf32>
    %179 = arith.mulf %178, %177 : vector<24x64xf32>
    %cst_94 = arith.constant 1.000000e+00 : f32
    %180 = vector.broadcast %cst_94 : f32 to vector<24x64xf32>
    %181 = arith.subf %180, %177 : vector<24x64xf32>
    %182 = tpu.reciprocal %181 {approx = true} : vector<24x64xf32> -> vector<24x64xf32>
    %183 = arith.mulf %179, %182 : vector<24x64xf32>
    %cst_95 = arith.constant 0.000000e+00 : f32
    %184 = vector.broadcast %cst_95 : f32 to vector<24x64xf32>
    %185 = arith.cmpf ogt, %172, %184 : vector<24x64xf32>
    %186 = arith.select %185, %172, %183 : vector<24x64xi1>, vector<24x64xf32>
    %c0_96 = arith.constant 0 : index
    %c0_97 = arith.constant 0 : index
    %187 = vector.load %arg7[%c0_96, %c0_97] : memref<2x24xbf16, #tpu.memory_space<vmem>>, vector<2x24xbf16>
    %188 = arith.truncf %186 : vector<24x64xf32> to vector<24x64xbf16>
    %cst_98 = arith.constant dense<0.000000e+00> : vector<2x64xf32>
    %189 = tpu.matmul %187, %188, %cst_98 {dimension_numbers = #tpu.dot_dimension_numbers<[1], [0], [0], [1], [0, 0, 1, 1], [], []>} : vector<2x24xbf16>, vector<24x64xbf16>, vector<2x64xf32> -> vector<2x64xf32>
    %190 = arith.truncf %127 : vector<2x64xf32> to vector<2x64xbf16>
    %c248 = arith.constant 248 : index
    %c0_99 = arith.constant 0 : index
    %191 = vector.load %arg12[%c248, %c0_99] : memref<472x128xbf16, #tpu.memory_space<vmem>>, vector<64x64xbf16>
    %cst_100 = arith.constant dense<0.000000e+00> : vector<2x64xf32>
    %192 = tpu.matmul %190, %191, %cst_100 {dimension_numbers = #tpu.dot_dimension_numbers<[1], [0], [0], [1], [0, 0, 1, 1], [], []>} : vector<2x64xbf16>, vector<64x64xbf16>, vector<2x64xf32> -> vector<2x64xf32>
    %193 = arith.truncf %189 : vector<2x64xf32> to vector<2x64xbf16>
    %c312 = arith.constant 312 : index
    %c0_101 = arith.constant 0 : index
    %194 = vector.load %arg12[%c312, %c0_101] : memref<472x128xbf16, #tpu.memory_space<vmem>>, vector<64x64xbf16>
    %cst_102 = arith.constant dense<0.000000e+00> : vector<2x64xf32>
    %195 = tpu.matmul %193, %194, %cst_102 {dimension_numbers = #tpu.dot_dimension_numbers<[1], [0], [0], [1], [0, 0, 1, 1], [], []>} : vector<2x64xbf16>, vector<64x64xbf16>, vector<2x64xf32> -> vector<2x64xf32>
    %196 = arith.addf %192, %195 : vector<2x64xf32>
    %c9 = arith.constant 9 : index
    %c0_103 = arith.constant 0 : index
    %197 = vector.load %arg13[%c9, %c0_103] : memref<16x4096xf32, #tpu.memory_space<vmem>>, vector<1x64xf32>
    %198 = vector.broadcast %197 : vector<1x64xf32> to vector<2x64xf32>
    %199 = arith.addf %196, %198 : vector<2x64xf32>
    %cst_104 = arith.constant 0.000000e+00 : f32
    %200 = vector.broadcast %cst_104 : f32 to vector<2x64xf32>
    %201 = arith.minimumf %199, %200 : vector<2x64xf32>
    %cst_105 = arith.constant 5.000000e-01 : f32
    %202 = vector.broadcast %cst_105 : f32 to vector<2x64xf32>
    %203 = arith.mulf %202, %201 : vector<2x64xf32>
    %204 = math.tanh %203 : vector<2x64xf32>
    %cst_106 = arith.constant 2.000000e+00 : f32
    %205 = vector.broadcast %cst_106 : f32 to vector<2x64xf32>
    %206 = arith.mulf %205, %204 : vector<2x64xf32>
    %cst_107 = arith.constant 1.000000e+00 : f32
    %207 = vector.broadcast %cst_107 : f32 to vector<2x64xf32>
    %208 = arith.subf %207, %204 : vector<2x64xf32>
    %209 = tpu.reciprocal %208 {approx = true} : vector<2x64xf32> -> vector<2x64xf32>
    %210 = arith.mulf %206, %209 : vector<2x64xf32>
    %cst_108 = arith.constant 0.000000e+00 : f32
    %211 = vector.broadcast %cst_108 : f32 to vector<2x64xf32>
    %212 = arith.cmpf ogt, %199, %211 : vector<2x64xf32>
    %213 = arith.select %212, %199, %210 : vector<2x64xi1>, vector<2x64xf32>
    %214 = arith.truncf %213 : vector<2x64xf32> to vector<2x64xbf16>
    %c376 = arith.constant 376 : index
    %c0_109 = arith.constant 0 : index
    %215 = vector.load %arg12[%c376, %c0_109] : memref<472x128xbf16, #tpu.memory_space<vmem>>, vector<64x32xbf16>
    %cst_110 = arith.constant dense<0.000000e+00> : vector<2x32xf32>
    %216 = tpu.matmul %214, %215, %cst_110 {dimension_numbers = #tpu.dot_dimension_numbers<[1], [0], [0], [1], [0, 0, 1, 1], [], []>} : vector<2x64xbf16>, vector<64x32xbf16>, vector<2x32xf32> -> vector<2x32xf32>
    %c10 = arith.constant 10 : index
    %c0_111 = arith.constant 0 : index
    %217 = vector.load %arg13[%c10, %c0_111] : memref<16x4096xf32, #tpu.memory_space<vmem>>, vector<1x32xf32>
    %218 = vector.broadcast %217 : vector<1x32xf32> to vector<2x32xf32>
    %219 = arith.addf %216, %218 : vector<2x32xf32>
    %cst_112 = arith.constant 0.000000e+00 : f32
    %220 = vector.broadcast %cst_112 : f32 to vector<2x32xf32>
    %221 = arith.minimumf %219, %220 : vector<2x32xf32>
    %cst_113 = arith.constant 5.000000e-01 : f32
    %222 = vector.broadcast %cst_113 : f32 to vector<2x32xf32>
    %223 = arith.mulf %222, %221 : vector<2x32xf32>
    %224 = math.tanh %223 : vector<2x32xf32>
    %cst_114 = arith.constant 2.000000e+00 : f32
    %225 = vector.broadcast %cst_114 : f32 to vector<2x32xf32>
    %226 = arith.mulf %225, %224 : vector<2x32xf32>
    %cst_115 = arith.constant 1.000000e+00 : f32
    %227 = vector.broadcast %cst_115 : f32 to vector<2x32xf32>
    %228 = arith.subf %227, %224 : vector<2x32xf32>
    %229 = tpu.reciprocal %228 {approx = true} : vector<2x32xf32> -> vector<2x32xf32>
    %230 = arith.mulf %226, %229 : vector<2x32xf32>
    %cst_116 = arith.constant 0.000000e+00 : f32
    %231 = vector.broadcast %cst_116 : f32 to vector<2x32xf32>
    %232 = arith.cmpf ogt, %219, %231 : vector<2x32xf32>
    %233 = arith.select %232, %219, %230 : vector<2x32xi1>, vector<2x32xf32>
    %234 = arith.truncf %233 : vector<2x32xf32> to vector<2x32xbf16>
    %c440 = arith.constant 440 : index
    %c0_117 = arith.constant 0 : index
    %235 = vector.load %arg12[%c440, %c0_117] : memref<472x128xbf16, #tpu.memory_space<vmem>>, vector<32x128xbf16>
    %cst_118 = arith.constant dense<0.000000e+00> : vector<2x128xf32>
    %236 = tpu.matmul %234, %235, %cst_118 {dimension_numbers = #tpu.dot_dimension_numbers<[1], [0], [0], [1], [0, 0, 1, 1], [], []>} : vector<2x32xbf16>, vector<32x128xbf16>, vector<2x128xf32> -> vector<2x128xf32>
    %c11 = arith.constant 11 : index
    %c0_119 = arith.constant 0 : index
    %237 = vector.load %arg13[%c11, %c0_119] : memref<16x4096xf32, #tpu.memory_space<vmem>>, vector<1x128xf32>
    %238 = vector.broadcast %237 : vector<1x128xf32> to vector<2x128xf32>
    %239 = arith.addf %236, %238 : vector<2x128xf32>
    %c0_120 = arith.constant 0 : index
    %c0_121 = arith.constant 0 : index
    %240 = vector.load %arg14[%c0_120, %c0_121] : memref<2x128xf32, #tpu.memory_space<vmem>>, vector<2x128xf32>
    tpu.vector_store %arg14[%c0_120, %c0_121], %239 {strides = array<i32>} : memref<2x128xf32, #tpu.memory_space<vmem>>, vector<2x128xf32>,
    return
  }
}

</mosaic_0001>

<llo_original>
// kernel: net_forward.1
$region0: #{net_forward.1}
  #allocation0 [shape = 'u32[]', space=smem, size = 0x4, offset = 0x4, fixed_abs, tag = 'smem constant byte address 0x4 - core index']
  #allocation1 [shape = 'u32[144,128]{1,0:T(1,128)}', space=vmem, size = 0x12000, scoped, tag = 'internal scratch']
  %s0 = inlined_call_operand.vmem [shape: f32[16,13], index: 0, kind: input, shape index: {}]
  %s1 = inlined_call_operand.vmem [shape: f32[32,6], index: 1, kind: input, shape index: {}]
  %s2 = inlined_call_operand.vmem [shape: bf16[32,16], index: 2, kind: input, shape index: {}]
  %s3 = inlined_call_operand.vmem [shape: bf16[16,32], index: 3, kind: input, shape index: {}]
  %s4 = inlined_call_operand.vmem [shape: bf16[32,16], index: 4, kind: input, shape index: {}]
  %s5 = inlined_call_operand.vmem [shape: bf16[24,8], index: 5, kind: input, shape index: {}]
  %s6 = inlined_call_operand.vmem [shape: bf16[24,24], index: 6, kind: input, shape index: {}]
  %s7 = inlined_call_operand.vmem [shape: bf16[2,24], index: 7, kind: input, shape index: {}]
  %s8 = inlined_call_operand.vmem [shape: bf16[6,384], index: 8, kind: input, shape index: {}]
  %s9 = inlined_call_operand.vmem [shape: bf16[128,6656], index: 9, kind: input, shape index: {}]
  %s10 = inlined_call_operand.vmem [shape: bf16[64,6656], index: 10, kind: input, shape index: {}]
  %s11 = inlined_call_operand.vmem [shape: bf16[6560,64], index: 11, kind: input, shape index: {}]
  %s12 = inlined_call_operand.hbm [shape: bf16[472,128], index: 12, kind: input, shape index: {}]
  %s13 = inlined_call_operand.hbm [shape: f32[16,4096], index: 13, kind: input, shape index: {}]
  %s14 = inlined_call_operand.hbm [shape: f32[2,128], index: 14, kind: output, shape index: {}]
  %s15 = sld [smem:[#allocation0]]
  $region74: #{net_forward.1} parent=0
    _
  %s17 = ssub.s32 1, %s15
  %s18 = scalar_select 0, %s17, %s15
  $region1: #{net_forward.1} parent=0
    #allocation2 [shape = 'u8[120832]{0}', space=vmem, size = 0x1d800, scoped, tag = 'input window, operand 12, single buffered']
    #allocation3 [shape = 's32[1]{0}', space=sflag, size = 0x4, scoped, tag = 'scoped memory for net_forward.1']
    #allocation4 [shape = 's32[1]{0}', space=sflag, size = 0x4, scoped, tag = 'scoped memory for net_forward.1']
    #allocation5 [shape = 'u8[262144]{0}', space=vmem, size = 0x40000, scoped, tag = 'input window, operand 13, single buffered']
    #allocation6 [shape = 's32[1]{0}', space=sflag, size = 0x4, scoped, tag = 'scoped memory for net_forward.1']
    #allocation7 [shape = 'u8[1024]{0}', space=vmem, size = 0x400, scoped, tag = 'output window, operand 0, single buffered']
    %19 = vsyncpa [#allocation3], 0
    %20 = vsyncpa [#allocation6], 0
    %21 = vsyncpa [#allocation4], 0
    // Predicated region
    $region2: #{net_forward.1} parent=1 // pred_check
      _
    $region3: #{net_forward.1} parent=1 // pred_check_branch
      %23 = sbr.rel (0) target = $region5
    $region4: #{net_forward.1} parent=1 // pred_region
      _
    $region5: #{net_forward.1} parent=1 // pred_fallthru
      _
    // Predicated region
    $region6: #{net_forward.1} parent=1 // pred_check
      _
    $region7: #{net_forward.1} parent=1 // pred_check_branch
      %25 = sbr.rel (0) target = $region9
    $region8: #{net_forward.1} parent=1 // pred_region
      _
    $region9: #{net_forward.1} parent=1 // pred_fallthru
      _
    // Predicated region
    $region10: #{net_forward.1} parent=1 // pred_check
      _
    $region11: #{net_forward.1} parent=1 // pred_check_branch
      %27 = sbr.rel (0) target = $region13
    $region12: #{net_forward.1} parent=1 // pred_region
      _
    $region13: #{net_forward.1} parent=1 // pred_fallthru
      _
    // Predicated region
    $region14: #{net_forward.1} parent=1 // pred_check
      _
    $region15: #{net_forward.1} parent=1 // pred_check_branch
      %29 = sbr.rel (0) target = $region17
    $region16: #{net_forward.1} parent=1 // pred_region
      _
    $region17: #{net_forward.1} parent=1 // pred_fallthru
      _
    // Predicated region
    $region18: #{net_forward.1} parent=1 // pred_check
      _
    $region19: #{net_forward.1} parent=1 // pred_check_branch
      %31 = sbr.rel (0) target = $region21
    $region20: #{net_forward.1} parent=1 // pred_region
      _
    $region21: #{net_forward.1} parent=1 // pred_fallthru
      _
    // Predicated region
    $region22: #{net_forward.1} parent=1 // pred_check
      _
    $region23: #{net_forward.1} parent=1 // pred_check_branch
      %33 = sbr.rel (0) target = $region25
    $region24: #{net_forward.1} parent=1 // pred_region
      _
    $region25: #{net_forward.1} parent=1 // pred_fallthru
      _
    // Predicated region
    $region26: #{net_forward.1} parent=1 // pred_check
      _
    $region27: #{net_forward.1} parent=1 // pred_check_branch
      %35 = sbr.rel (0) target = $region29
    $region28: #{net_forward.1} parent=1 // pred_region
      _
    $region29: #{net_forward.1} parent=1 // pred_fallthru
      _
    // Predicated region
    $region30: #{net_forward.1} parent=1 // pred_check
      _
    $region31: #{net_forward.1} parent=1 // pred_check_branch
      %37 = sbr.rel (0) target = $region33
    $region32: #{net_forward.1} parent=1 // pred_region
      _
    $region33: #{net_forward.1} parent=1 // pred_fallthru
      _
    // Predicated region
    $region34: #{net_forward.1} parent=1 // pred_check
      _
    $region35: #{net_forward.1} parent=1 // pred_check_branch
      %39 = sbr.rel (0) target = $region37
    $region36: #{net_forward.1} parent=1 // pred_region
      _
    $region37: #{net_forward.1} parent=1 // pred_fallthru
      _
    // Predicated region
    $region38: #{net_forward.1} parent=1 // pred_check
      _
    $region39: #{net_forward.1} parent=1 // pred_check_branch
      %41 = sbr.rel (0) target = $region41
    $region40: #{net_forward.1} parent=1 // pred_region
      _
    $region41: #{net_forward.1} parent=1 // pred_fallthru
      _
    // Predicated region
    $region42: #{net_forward.1} parent=1 // pred_check
      _
    $region43: #{net_forward.1} parent=1 // pred_check_branch
      %43 = sbr.rel (0) target = $region45
    $region44: #{net_forward.1} parent=1 // pred_region
      _
    $region45: #{net_forward.1} parent=1 // pred_fallthru
      _
    // Predicated region
    $region46: #{net_forward.1} parent=1 // pred_check
      _
    $region47: #{net_forward.1} parent=1 // pred_check_branch
      %45 = sbr.rel (0) target = $region49
    $region48: #{net_forward.1} parent=1 // pred_region
      _
    $region49: #{net_forward.1} parent=1 // pred_fallthru
      _
    // Predicated region
    $region50: #{net_forward.1} parent=1 // pred_check
      _
    $region51: #{net_forward.1} parent=1 // pred_check_branch
      %47 = sbr.rel (0) target = $region53
    $region52: #{net_forward.1} parent=1 // pred_region
      %s49 = ssub.s32 3776, 3776
      %50 = vsyncadd [#allocation3], %s49
      %s51 = sshll.u32 [#allocation2], 4
      %s52 = int_to_ptr.vmem [resolvable:$true] %s51
      %57 = dma.hbm_to_vmem [thread:$0]  %s12, 3776, %s52, [#allocation3], 64, 64, 4
    $region53: #{net_forward.1} parent=1 // pred_fallthru
      _
    // Predicated region
    $region54: #{net_forward.1} parent=1 // pred_check
      _
    $region55: #{net_forward.1} parent=1 // pred_check_branch
      %59 = sbr.rel (0) target = $region57
    $region56: #{net_forward.1} parent=1 // pred_region
      %s61 = ssub.s32 8192, 8192
      %62 = vsyncadd [#allocation6], %s61
      %s63 = sshll.u32 [#allocation5], 4
      %s64 = int_to_ptr.vmem [resolvable:$true] %s63
      %69 = dma.hbm_to_vmem [thread:$0]  %s13, 8192, %s64, [#allocation6], 4096, 4096, 256
    $region57: #{net_forward.1} parent=1 // pred_fallthru
      _
    // Predicated region
    $region58: #{net_forward.1} parent=1 // pred_check
      _
    $region59: #{net_forward.1} parent=1 // pred_check_branch
      %71 = sbr.rel (0) target = $region61
    $region60: #{net_forward.1} parent=1 // pred_region
      %72 = dma.done [#allocation3], 3776
    $region61: #{net_forward.1} parent=1 // pred_fallthru
      _
    // Predicated region
    $region62: #{net_forward.1} parent=1 // pred_check
      _
    $region63: #{net_forward.1} parent=1 // pred_check_branch
      %74 = sbr.rel (0) target = $region65
    $region64: #{net_forward.1} parent=1 // pred_region
      %75 = dma.done [#allocation6], 8192
    $region65: #{net_forward.1} parent=1 // pred_fallthru
      _
    %v77 = vld [vmem:[%s0] sm:$0xff]
    %v78 = vld [vmem:[%s0 + $0x8] sm:$0xff]
    %v79 = vld [vmem:[%s1] sm:$0xff]
    %v80 = vld [vmem:[%s1 + $0x8] sm:$0xff]
    %v81 = vld [vmem:[%s1 + $0x10] sm:$0xff]
    %v82 = vld [vmem:[%s1 + $0x18] sm:$0xff]
    %v83 = vpack.c.bf16 %v80, %v79
    %v84 = vpack.c.bf16 %v82, %v81
    %v85 = vld [vmem:[%s8] sm:$0x77]
    %v86 = vld [vmem:[%s8 + $0x8] sm:$0x7]
    %v87 = vld [vmem:[#allocation5] ss:$8 sm:$0x7]
    %v89 = vlaneseq
    %v90 = vshrl.u32 %v89, 7
    %v91 = vsub.s32 0, %v90
    %v92 = vrot.slane %v87, %v91
    %v93 = vlaneseq
    %v94 = vshrl.u32 %v93, 7
    %v95 = vsub.s32 1, %v94
    %v96 = vrot.slane %v87, %v95
    %v97 = vlaneseq
    %v98 = vshrl.u32 %v97, 7
    %v99 = vsub.s32 2, %v98
    %v100 = vrot.slane %v87, %v99
    %v106 = vunpack.c.l.b16 %v85
    %v107 = vunpack.c.h.b16 %v85
    %v108 = vunpack.c.l.b16 %v86
    %v109 = vpack.c.b16 %v106, %v106
    %v110 = vpack.c.b16 %v107, %v107
    %v111 = vpack.c.b16 %v108, %v108
    %vm112 = vcmask 48128
    %v114 = vsel %vm112, %v83, 0
    %v117 = vsel %vm112, %v84, 0
    %vm119 = vcmask 1042432
    %v121 = vsel %vm119, %v109, 0
    %v124 = vsel %vm119, %v110, 0
    %v127 = vsel %vm119, %v111, 0
    %129 = vmatprep.subr.bf16.mxu0 %v124
    %130 = vmatpush1.bf16.msra.mxu0 %v121
    %131 = vmatprep.subr.bf16.mxu0 0
    %132 = vmatpush1.bf16.msra.mxu0 0
    %133 = vmatprep.subr.bf16.mxu0 0
    %134 = vmatpush1.bf16.msra.mxu0 0
    %135 = vmatprep.subr.bf16.mxu0 0
    %136 = vmatpush1.bf16.msra.mxu0 0
    %137 = vmatprep.subr.bf16.mxu0 0
    %138 = vmatpush1.bf16.msra.mxu0 0
    %139 = vmatprep.subr.bf16.mxu0 0
    %140 = vmatpush1.bf16.msra.mxu0 0
    %141 = vmatprep.subr.bf16.mxu0 0
    %142 = vmatpush1.bf16.msra.mxu0 0
    %143 = vmatprep.subr.bf16.mxu0 0
    %144 = vmatpush1.bf16.msra.mxu0 0
    %145 = vmatprep.subr.bf16.mxu0 0
    %146 = vmatpush1.bf16.msra.mxu0 0
    %147 = vmatprep.subr.bf16.mxu0 0
    %148 = vmatpush1.bf16.msra.mxu0 0
    %149 = vmatprep.subr.bf16.mxu0 0
    %150 = vmatpush1.bf16.msra.mxu0 0
    %151 = vmatprep.subr.bf16.mxu0 0
    %152 = vmatpush1.bf16.msra.mxu0 0
    %153 = vmatprep.subr.bf16.mxu0 0
    %154 = vmatpush1.bf16.msra.mxu0 0
    %155 = vmatprep.subr.bf16.mxu0 0
    %156 = vmatpush1.bf16.msra.mxu0 0
    %157 = vmatprep.subr.bf16.mxu0 0
    %158 = vmatpush1.bf16.msra.mxu0 0
    %159 = vmatprep.subr.bf16.mxu0 0
    %160 = vmatpush1.bf16.msra.mxu0 0
    %161 = vmatprep.mubr.bf16.mxu0 0
    %162 = vmatmul.mubr.bf16.gmra.mrb[0].mxu0 %v114
    %v163 = vpop.f32.mrb[0].mxu0
    %v164 = vadd.f32 %v92, %v163
    %v165 = vpop.f32.mrb[0].mxu0
    %v166 = vadd.f32 %v96, %v165
    %v167 = vpop.f32.mrb[0].mxu0
    %v168 = vadd.f32 %v92, %v167
    %v169 = vpop.f32.mrb[0].mxu0
    %v170 = vadd.f32 %v96, %v169
    %171 = vmatprep.mubr.bf16.mxu0 0
    %172 = vmatmul.mubr.bf16.gmra.mrb[0].mxu0 %v117
    %v173 = vpop.f32.mrb[0].mxu0
    %v174 = vadd.f32 %v92, %v173
    %v175 = vpop.f32.mrb[0].mxu0
    %v176 = vadd.f32 %v96, %v175
    %v177 = vpop.f32.mrb[0].mxu0
    %v178 = vadd.f32 %v92, %v177
    %v179 = vpop.f32.mrb[0].mxu0
    %v180 = vadd.f32 %v96, %v179
    %181 = vdwg.mxu0
    %182 = vmatprep.subr.bf16.mxu0 0
    %183 = vmatpush1.bf16.msra.mxu0 %v127
    %184 = vmatprep.subr.bf16.mxu0 0
    %185 = vmatpush1.bf16.msra.mxu0 0
    %186 = vmatprep.subr.bf16.mxu0 0
    %187 = vmatpush1.bf16.msra.mxu0 0
    %188 = vmatprep.subr.bf16.mxu0 0
    %189 = vmatpush1.bf16.msra.mxu0 0
    %190 = vmatprep.subr.bf16.mxu0 0
    %191 = vmatpush1.bf16.msra.mxu0 0
    %192 = vmatprep.subr.bf16.mxu0 0
    %193 = vmatpush1.bf16.msra.mxu0 0
    %194 = vmatprep.subr.bf16.mxu0 0
    %195 = vmatpush1.bf16.msra.mxu0 0
    %196 = vmatprep.subr.bf16.mxu0 0
    %197 = vmatpush1.bf16.msra.mxu0 0
    %198 = vmatprep.subr.bf16.mxu0 0
    %199 = vmatpush1.bf16.msra.mxu0 0
    %200 = vmatprep.subr.bf16.mxu0 0
    %201 = vmatpush1.bf16.msra.mxu0 0
    %202 = vmatprep.subr.bf16.mxu0 0
    %203 = vmatpush1.bf16.msra.mxu0 0
    %204 = vmatprep.subr.bf16.mxu0 0
    %205 = vmatpush1.bf16.msra.mxu0 0
    %206 = vmatprep.subr.bf16.mxu0 0
    %207 = vmatpush1.bf16.msra.mxu0 0
    %208 = vmatprep.subr.bf16.mxu0 0
    %209 = vmatpush1.bf16.msra.mxu0 0
    %210 = vmatprep.subr.bf16.mxu0 0
    %211 = vmatpush1.bf16.msra.mxu0 0
    %212 = vmatprep.subr.bf16.mxu0 0
    %213 = vmatpush1.bf16.msra.mxu0 0
    %214 = vmatprep.mubr.bf16.mxu0 0
    %215 = vmatmul.mubr.bf16.gmra.mrb[0].mxu0 %v114
    %v216 = vpop.f32.mrb[0].mxu0
    %v217 = vadd.f32 %v100, %v216
    %v218 = vpop.f32.mrb[0].mxu0
    %v219 = vpop.f32.mrb[0].mxu0
    %v220 = vadd.f32 %v100, %v219
    %v221 = vpop.f32.mrb[0].mxu0
    %222 = vmatprep.mubr.bf16.mxu0 0
    %223 = vmatmul.mubr.bf16.gmra.mrb[0].mxu0 %v117
    %v224 = vpop.f32.mrb[0].mxu0
    %v225 = vadd.f32 %v100, %v224
    %v226 = vpop.f32.mrb[0].mxu0
    %v227 = vpop.f32.mrb[0].mxu0
    %v228 = vadd.f32 %v100, %v227
    %v229 = vpop.f32.mrb[0].mxu0
    %230 = vdwg.mxu0
    %v231 = vmax.f32 %v164, 0.0
    %v232 = vmax.f32 %v166, 0.0
    %v233 = vmax.f32 %v217, 0.0
    %v234 = vmax.f32 %v168, 0.0
    %v235 = vmax.f32 %v170, 0.0
    %v236 = vmax.f32 %v220, 0.0
    %v237 = vmax.f32 %v174, 0.0
    %v238 = vmax.f32 %v176, 0.0
    %v239 = vmax.f32 %v225, 0.0
    %v240 = vmax.f32 %v178, 0.0
    %v241 = vmax.f32 %v180, 0.0
    %v242 = vmax.f32 %v228, 0.0
    %v243 = vpack.c.bf16 %v234, %v231
    %v244 = vpack.c.bf16 %v235, %v232
    %v245 = vpack.c.bf16 %v236, %v233
    %v246 = vpack.c.bf16 %v240, %v237
    %v247 = vpack.c.bf16 %v241, %v238
    %v248 = vpack.c.bf16 %v242, %v239
    %v249 = vld [vmem:[%s2] sm:$0xf]
    %v250 = vld [vmem:[%s2 + $0x4] sm:$0xf]
    %v251 = vld [vmem:[%s2 + $0x8] sm:$0xf]
    %v252 = vld [vmem:[%s2 + $0xc] sm:$0xf]
    %v253 = vld [vmem:[%s3] sm:$0xf]
    %v254 = vld [vmem:[%s3 + $0x4] sm:$0xf]
    %v255 = vpack.c.bf16 %v78, %v77
    %v256 = vld [vmem:[%s9] sm:$0xff]
    %v257 = vld [vmem:[%s9 + $0x8] sm:$0xff]
    %v258 = vld [vmem:[%s9 + $0xd0] sm:$0xff]
    %v259 = vld [vmem:[%s9 + $0xd8] sm:$0xff]
    %v260 = vld [vmem:[%s9 + $0x1a0] sm:$0xff]
    %v261 = vld [vmem:[%s9 + $0x1a8] sm:$0xff]
    %v262 = vld [vmem:[%s9 + $0x270] sm:$0xff]
    %v263 = vld [vmem:[%s9 + $0x278] sm:$0xff]
    %v264 = vld [vmem:[%s9 + $0x340] sm:$0xff]
    %v265 = vld [vmem:[%s9 + $0x348] sm:$0xff]
    %v266 = vld [vmem:[%s9 + $0x410] sm:$0xff]
    %v267 = vld [vmem:[%s9 + $0x418] sm:$0xff]
    %v268 = vld [vmem:[%s9 + $0x4e0] sm:$0xff]
    %v269 = vld [vmem:[%s9 + $0x4e8] sm:$0xff]
    %v270 = vld [vmem:[%s9 + $0x5b0] sm:$0xff]
    %v271 = vld [vmem:[%s9 + $0x5b8] sm:$0xff]
    %v272 = vld [vmem:[%s9 + $0x680] sm:$0xff]
    %v273 = vld [vmem:[%s9 + $0x688] sm:$0xff]
    %v274 = vld [vmem:[%s9 + $0x750] sm:$0xff]
    %v275 = vld [vmem:[%s9 + $0x758] sm:$0xff]
    %v276 = vld [vmem:[%s9 + $0x820] sm:$0xff]
    %v277 = vld [vmem:[%s9 + $0x828] sm:$0xff]
    %v278 = vld [vmem:[%s9 + $0x8f0] sm:$0xff]
    %v279 = vld [vmem:[%s9 + $0x8f8] sm:$0xff]
    %v280 = vld [vmem:[%s9 + $0x9c0] sm:$0xff]
    %v281 = vld [vmem:[%s9 + $0x9c8] sm:$0xff]
    %v282 = vld [vmem:[%s9 + $0xa90] sm:$0xff]
    %v283 = vld [vmem:[%s9 + $0xa98] sm:$0xff]
    %v284 = vld [vmem:[%s9 + $0xb60] sm:$0xff]
    %v285 = vld [vmem:[%s9 + $0xb68] sm:$0xff]
    %v286 = vld [vmem:[%s9 + $0xc30] sm:$0xff]
    %v287 = vld [vmem:[%s9 + $0xc38] sm:$0xff]
    %s288 = scalar_lea.vmem [#allocation5], 1
    %v289 = vld [vmem:[%s288] ss:$8 sm:$0xf]
    %v291 = vlaneseq
    %v292 = vshrl.u32 %v291, 7
    %v293 = vsub.s32 0, %v292
    %v294 = vrot.slane %v289, %v293
    %v295 = vlaneseq
    %v296 = vshrl.u32 %v295, 7
    %v297 = vsub.s32 1, %v296
    %v298 = vrot.slane %v289, %v297
    %v299 = vlaneseq
    %v300 = vshrl.u32 %v299, 7
    %v301 = vsub.s32 2, %v300
    %v302 = vrot.slane %v289, %v301
    %v303 = vlaneseq
    %v304 = vshrl.u32 %v303, 7
    %v305 = vsub.s32 3, %v304
    %v306 = vrot.slane %v289, %v305
    %v343 = vunpack.c.l.b16 %v256
    %v344 = vunpack.c.h.b16 %v256
    %v345 = vunpack.c.l.b16 %v257
    %v346 = vunpack.c.h.b16 %v257
    %v347 = vunpack.c.l.b16 %v258
    %v348 = vunpack.c.h.b16 %v258
    %v349 = vunpack.c.l.b16 %v259
    %v350 = vunpack.c.h.b16 %v259
    %v351 = vunpack.c.l.b16 %v260
    %v352 = vunpack.c.h.b16 %v260
    %v353 = vunpack.c.l.b16 %v261
    %v354 = vunpack.c.h.b16 %v261
    %v355 = vunpack.c.l.b16 %v262
    %v356 = vunpack.c.h.b16 %v262
    %v357 = vunpack.c.l.b16 %v263
    %v358 = vunpack.c.h.b16 %v263
    %v359 = vunpack.c.l.b16 %v264
    %v360 = vunpack.c.h.b16 %v264
    %v361 = vunpack.c.l.b16 %v265
    %v362 = vunpack.c.h.b16 %v265
    %v363 = vunpack.c.l.b16 %v266
    %v364 = vunpack.c.h.b16 %v266
    %v365 = vunpack.c.l.b16 %v267
    %v366 = vunpack.c.h.b16 %v267
    %v367 = vunpack.c.l.b16 %v268
    %v368 = vunpack.c.h.b16 %v268
    %v369 = vunpack.c.l.b16 %v269
    %v370 = vunpack.c.h.b16 %v269
    %v371 = vunpack.c.l.b16 %v270
    %v372 = vunpack.c.h.b16 %v270
    %v373 = vunpack.c.l.b16 %v271
    %v374 = vunpack.c.h.b16 %v271
    %v375 = vunpack.c.l.b16 %v272
    %v376 = vunpack.c.h.b16 %v272
    %v377 = vunpack.c.l.b16 %v273
    %v378 = vunpack.c.h.b16 %v273
    %v379 = vunpack.c.l.b16 %v274
    %v380 = vunpack.c.h.b16 %v274
    %v381 = vunpack.c.l.b16 %v275
    %v382 = vunpack.c.h.b16 %v275
    %v383 = vunpack.c.l.b16 %v276
    %v384 = vunpack.c.h.b16 %v276
    %v385 = vunpack.c.l.b16 %v277
    %v386 = vunpack.c.h.b16 %v277
    %v387 = vunpack.c.l.b16 %v278
    %v388 = vunpack.c.h.b16 %v278
    %v389 = vunpack.c.l.b16 %v279
    %v390 = vunpack.c.h.b16 %v279
    %v391 = vunpack.c.l.b16 %v280
    %v392 = vunpack.c.h.b16 %v280
    %v393 = vunpack.c.l.b16 %v281
    %v394 = vunpack.c.h.b16 %v281
    %v395 = vunpack.c.l.b16 %v282
    %v396 = vunpack.c.h.b16 %v282
    %v397 = vunpack.c.l.b16 %v283
    %v398 = vunpack.c.h.b16 %v283
    %v399 = vunpack.c.l.b16 %v284
    %v400 = vunpack.c.h.b16 %v284
    %v401 = vunpack.c.l.b16 %v285
    %v402 = vunpack.c.h.b16 %v285
    %v403 = vunpack.c.l.b16 %v286
    %v404 = vunpack.c.h.b16 %v286
    %v405 = vunpack.c.l.b16 %v287
    %v406 = vunpack.c.h.b16 %v287
    %v407 = vpack.c.b16 %v347, %v343
    %v408 = vpack.c.b16 %v348, %v344
    %v409 = vpack.c.b16 %v349, %v345
    %v410 = vpack.c.b16 %v350, %v346
    %v411 = vpack.c.b16 %v355, %v351
    %v412 = vpack.c.b16 %v356, %v352
    %v413 = vpack.c.b16 %v357, %v353
    %v414 = vpack.c.b16 %v358, %v354
    %v415 = vpack.c.b16 %v363, %v359
    %v416 = vpack.c.b16 %v364, %v360
    %v417 = vpack.c.b16 %v365, %v361
    %v418 = vpack.c.b16 %v366, %v362
    %v419 = vpack.c.b16 %v371, %v367
    %v420 = vpack.c.b16 %v372, %v368
    %v421 = vpack.c.b16 %v373, %v369
    %v422 = vpack.c.b16 %v374, %v370
    %v423 = vpack.c.b16 %v379, %v375
    %v424 = vpack.c.b16 %v380, %v376
    %v425 = vpack.c.b16 %v381, %v377
    %v426 = vpack.c.b16 %v382, %v378
    %v427 = vpack.c.b16 %v387, %v383
    %v428 = vpack.c.b16 %v388, %v384
    %v429 = vpack.c.b16 %v389, %v385
    %v430 = vpack.c.b16 %v390, %v386
    %v431 = vpack.c.b16 %v395, %v391
    %v432 = vpack.c.b16 %v396, %v392
    %v433 = vpack.c.b16 %v397, %v393
    %v434 = vpack.c.b16 %v398, %v394
    %v435 = vpack.c.b16 %v403, %v399
    %v436 = vpack.c.b16 %v404, %v400
    %v437 = vpack.c.b16 %v405, %v401
    %v438 = vpack.c.b16 %v406, %v402
    %471 = vmatprep.subr.bf16.mxu0 %v408
    %472 = vmatpush1.bf16.msra.mxu0 %v407
    %473 = vmatprep.subr.bf16.mxu0 %v412
    %474 = vmatpush1.bf16.msra.mxu0 %v411
    %475 = vmatprep.subr.bf16.mxu0 %v416
    %476 = vmatpush1.bf16.msra.mxu0 %v415
    %477 = vmatprep.subr.bf16.mxu0 %v420
    %478 = vmatpush1.bf16.msra.mxu0 %v419
    %479 = vmatprep.subr.bf16.mxu0 %v424
    %480 = vmatpush1.bf16.msra.mxu0 %v423
    %481 = vmatprep.subr.bf16.mxu0 %v428
    %482 = vmatpush1.bf16.msra.mxu0 %v427
    %483 = vmatprep.subr.bf16.mxu0 %v432
    %484 = vmatpush1.bf16.msra.mxu0 %v431
    %485 = vmatprep.subr.bf16.mxu0 %v436
    %486 = vmatpush1.bf16.msra.mxu0 %v435
    %487 = vmatprep.subr.bf16.mxu0 0
    %488 = vmatpush1.bf16.msra.mxu0 0
    %489 = vmatprep.subr.bf16.mxu0 0
    %490 = vmatpush1.bf16.msra.mxu0 0
    %491 = vmatprep.subr.bf16.mxu0 0
    %492 = vmatpush1.bf16.msra.mxu0 0
    %493 = vmatprep.subr.bf16.mxu0 0
    %494 = vmatpush1.bf16.msra.mxu0 0
    %495 = vmatprep.subr.bf16.mxu0 0
    %496 = vmatpush1.bf16.msra.mxu0 0
    %497 = vmatprep.subr.bf16.mxu0 0
    %498 = vmatpush1.bf16.msra.mxu0 0
    %499 = vmatprep.subr.bf16.mxu0 0
    %500 = vmatpush1.bf16.msra.mxu0 0
    %501 = vmatprep.subr.bf16.mxu0 0
    %502 = vmatpush1.bf16.msra.mxu0 0
    %503 = vmatprep.mubr.bf16.mxu0 0
    %504 = vmatmul.mubr.bf16.gmra.mrb[0].mxu0 %v243
    %v505 = vpop.f32.mrb[0].mxu0
    %v506 = vadd.f32 %v294, %v505
    %v507 = vpop.f32.mrb[0].mxu0
    %v508 = vadd.f32 %v298, %v507
    %v509 = vpop.f32.mrb[0].mxu0
    %v510 = vadd.f32 %v294, %v509
    %v511 = vpop.f32.mrb[0].mxu0
    %v512 = vadd.f32 %v298, %v511
    %513 = vmatprep.mubr.bf16.mxu0 0
    %514 = vmatmul.mubr.bf16.gmra.mrb[0].mxu0 %v246
    %v515 = vpop.f32.mrb[0].mxu0
    %v516 = vadd.f32 %v294, %v515
    %v517 = vpop.f32.mrb[0].mxu0
    %v518 = vadd.f32 %v298, %v517
    %v519 = vpop.f32.mrb[0].mxu0
    %v520 = vadd.f32 %v294, %v519
    %v521 = vpop.f32.mrb[0].mxu0
    %v522 = vadd.f32 %v298, %v521
    %523 = vdwg.mxu0
    %524 = vmatprep.subr.bf16.mxu0 %v410
    %525 = vmatpush1.bf16.msra.mxu0 %v409
    %526 = vmatprep.subr.bf16.mxu0 %v414
    %527 = vmatpush1.bf16.msra.mxu0 %v413
    %528 = vmatprep.subr.bf16.mxu0 %v418
    %529 = vmatpush1.bf16.msra.mxu0 %v417
    %530 = vmatprep.subr.bf16.mxu0 %v422
    %531 = vmatpush1.bf16.msra.mxu0 %v421
    %532 = vmatprep.subr.bf16.mxu0 %v426
    %533 = vmatpush1.bf16.msra.mxu0 %v425
    %534 = vmatprep.subr.bf16.mxu0 %v430
    %535 = vmatpush1.bf16.msra.mxu0 %v429
    %536 = vmatprep.subr.bf16.mxu0 %v434
    %537 = vmatpush1.bf16.msra.mxu0 %v433
    %538 = vmatprep.subr.bf16.mxu0 %v438
    %539 = vmatpush1.bf16.msra.mxu0 %v437
    %540 = vmatprep.subr.bf16.mxu0 0
    %541 = vmatpush1.bf16.msra.mxu0 0
    %542 = vmatprep.subr.bf16.mxu0 0
    %543 = vmatpush1.bf16.msra.mxu0 0
    %544 = vmatprep.subr.bf16.mxu0 0
    %545 = vmatpush1.bf16.msra.mxu0 0
    %546 = vmatprep.subr.bf16.mxu0 0
    %547 = vmatpush1.bf16.msra.mxu0 0
    %548 = vmatprep.subr.bf16.mxu0 0
    %549 = vmatpush1.bf16.msra.mxu0 0
    %550 = vmatprep.subr.bf16.mxu0 0
    %551 = vmatpush1.bf16.msra.mxu0 0
    %552 = vmatprep.subr.bf16.mxu0 0
    %553 = vmatpush1.bf16.msra.mxu0 0
    %554 = vmatprep.subr.bf16.mxu0 0
    %555 = vmatpush1.bf16.msra.mxu0 0
    %556 = vmatprep.mubr.bf16.mxu0 0
    %557 = vmatmul.mubr.bf16.gmra.mrb[0].mxu0 %v243
    %v558 = vpop.f32.mrb[0].mxu0
    %v559 = vadd.f32 %v302, %v558
    %v560 = vpop.f32.mrb[0].mxu0
    %v561 = vadd.f32 %v306, %v560
    %v562 = vpop.f32.mrb[0].mxu0
    %v563 = vadd.f32 %v302, %v562
    %v564 = vpop.f32.mrb[0].mxu0
    %v565 = vadd.f32 %v306, %v564
    %566 = vmatprep.mubr.bf16.mxu0 0
    %567 = vmatmul.mubr.bf16.gmra.mrb[0].mxu0 %v246
    %v568 = vpop.f32.mrb[0].mxu0
    %v569 = vadd.f32 %v302, %v568
    %v570 = vpop.f32.mrb[0].mxu0
    %v571 = vadd.f32 %v306, %v570
    %v572 = vpop.f32.mrb[0].mxu0
    %v573 = vadd.f32 %v302, %v572
    %v574 = vpop.f32.mrb[0].mxu0
    %v575 = vadd.f32 %v306, %v574
    %576 = vdwg.mxu0
    %v581 = vunpack.c.l.b16 %v249
    %v582 = vunpack.c.l.b16 %v250
    %v583 = vunpack.c.l.b16 %v251
    %v584 = vunpack.c.l.b16 %v252
    %v585 = vpack.c.b16 %v582, %v581
    %v586 = vpack.c.b16 %v584, %v583
    %vm587 = vcmask 130048
    %v589 = vsel %vm587, %v585, 0
    %v592 = vsel %vm587, %v586, 0
    %594 = vmatprep.subr.bf16.mxu0 0
    %595 = vmatpush1.bf16.msra.mxu0 %v255
    %596 = vmatprep.subr.bf16.mxu0 0
    %597 = vmatpush1.bf16.msra.mxu0 0
    %598 = vmatprep.subr.bf16.mxu0 0
    %599 = vmatpush1.bf16.msra.mxu0 0
    %600 = vmatprep.subr.bf16.mxu0 0
    %601 = vmatpush1.bf16.msra.mxu0 0
    %602 = vmatprep.subr.bf16.mxu0 0
    %603 = vmatpush1.bf16.msra.mxu0 0
    %604 = vmatprep.subr.bf16.mxu0 0
    %605 = vmatpush1.bf16.msra.mxu0 0
    %606 = vmatprep.subr.bf16.mxu0 0
    %607 = vmatpush1.bf16.msra.mxu0 0
    %608 = vmatprep.subr.bf16.mxu0 0
    %609 = vmatpush1.bf16.msra.mxu0 0
    %610 = vmatprep.subr.bf16.mxu0 0
    %611 = vmatpush1.bf16.msra.mxu0 0
    %612 = vmatprep.subr.bf16.mxu0 0
    %613 = vmatpush1.bf16.msra.mxu0 0
    %614 = vmatprep.subr.bf16.mxu0 0
    %615 = vmatpush1.bf16.msra.mxu0 0
    %616 = vmatprep.subr.bf16.mxu0 0
    %617 = vmatpush1.bf16.msra.mxu0 0
    %618 = vmatprep.subr.bf16.mxu0 0
    %619 = vmatpush1.bf16.msra.mxu0 0
    %620 = vmatprep.subr.bf16.mxu0 0
    %621 = vmatpush1.bf16.msra.mxu0 0
    %622 = vmatprep.subr.bf16.mxu0 0
    %623 = vmatpush1.bf16.msra.mxu0 0
    %624 = vmatprep.subr.bf16.mxu0 0
    %625 = vmatpush1.bf16.msra.mxu0 0
    %626 = vmatprep.mubr.bf16.mxu0 0
    %627 = vmatmul.mubr.bf16.gmra.mrb[0].mxu0 %v589
    %v628 = vpop.f32.mrb[0].mxu0
    %v629 = vadd.f32 0.0, %v628
    %v630 = vpop.f32.mrb[0].mxu0
    %v631 = vpop.f32.mrb[0].mxu0
    %v632 = vadd.f32 0.0, %v631
    %v633 = vpop.f32.mrb[0].mxu0
    %634 = vmatprep.mubr.bf16.mxu0 0
    %635 = vmatmul.mubr.bf16.gmra.mrb[0].mxu0 %v592
    %v636 = vpop.f32.mrb[0].mxu0
    %v637 = vadd.f32 0.0, %v636
    %v638 = vpop.f32.mrb[0].mxu0
    %v639 = vpop.f32.mrb[0].mxu0
    %v640 = vadd.f32 0.0, %v639
    %v641 = vpop.f32.mrb[0].mxu0
    %642 = vdwg.mxu0
    %v643 = vpack.c.bf16 %v632, %v629
    %v644 = vpack.c.bf16 %v640, %v637
    %v645 = vld [vmem:[%s10] sm:$0xff]
    %v646 = vld [vmem:[%s10 + $0x8] sm:$0xff]
    %v647 = vld [vmem:[%s10 + $0xd0] sm:$0x77]
    %v648 = vld [vmem:[%s10 + $0xd8] sm:$0x77]
    %v653 = vunpack.c.l.b16 %v645
    %v654 = vunpack.c.h.b16 %v645
    %v655 = vunpack.c.l.b16 %v646
    %v656 = vunpack.c.h.b16 %v646
    %v657 = vunpack.c.l.b16 %v647
    %v658 = vunpack.c.h.b16 %v647
    %v659 = vunpack.c.l.b16 %v648
    %v660 = vunpack.c.h.b16 %v648
    %v661 = vpack.c.b16 %v657, %v653
    %v662 = vpack.c.b16 %v658, %v654
    %v663 = vpack.c.b16 %v659, %v655
    %v664 = vpack.c.b16 %v660, %v656
    %vm665 = vcmask 105472
    %v667 = vsel %vm665, %v643, 0
    %v670 = vsel %vm665, %v644, 0
    %vm672 = vcmask 1045504
    %vm673 = vcmask 1046528
    %v674 = vsel %vm672, 4294967295, 65535
    %v675 = vsel %vm673, %v674, 0
    %v677 = vand.u32 %v661, %v675
    %v680 = vand.u32 %v662, %v675
    %v683 = vand.u32 %v663, %v675
    %v686 = vand.u32 %v664, %v675
    %688 = vmatprep.subr.bf16.mxu0 %v680
    %689 = vmatpush1.bf16.msra.mxu0 %v677
    %690 = vmatprep.subr.bf16.mxu0 0
    %691 = vmatpush1.bf16.msra.mxu0 0
    %692 = vmatprep.subr.bf16.mxu0 0
    %693 = vmatpush1.bf16.msra.mxu0 0
    %694 = vmatprep.subr.bf16.mxu0 0
    %695 = vmatpush1.bf16.msra.mxu0 0
    %696 = vmatprep.subr.bf16.mxu0 0
    %697 = vmatpush1.bf16.msra.mxu0 0
    %698 = vmatprep.subr.bf16.mxu0 0
    %699 = vmatpush1.bf16.msra.mxu0 0
    %700 = vmatprep.subr.bf16.mxu0 0
    %701 = vmatpush1.bf16.msra.mxu0 0
    %702 = vmatprep.subr.bf16.mxu0 0
    %703 = vmatpush1.bf16.msra.mxu0 0
    %704 = vmatprep.subr.bf16.mxu0 0
    %705 = vmatpush1.bf16.msra.mxu0 0
    %706 = vmatprep.subr.bf16.mxu0 0
    %707 = vmatpush1.bf16.msra.mxu0 0
    %708 = vmatprep.subr.bf16.mxu0 0
    %709 = vmatpush1.bf16.msra.mxu0 0
    %710 = vmatprep.subr.bf16.mxu0 0
    %711 = vmatpush1.bf16.msra.mxu0 0
    %712 = vmatprep.subr.bf16.mxu0 0
    %713 = vmatpush1.bf16.msra.mxu0 0
    %714 = vmatprep.subr.bf16.mxu0 0
    %715 = vmatpush1.bf16.msra.mxu0 0
    %716 = vmatprep.subr.bf16.mxu0 0
    %717 = vmatpush1.bf16.msra.mxu0 0
    %718 = vmatprep.subr.bf16.mxu0 0
    %719 = vmatpush1.bf16.msra.mxu0 0
    %720 = vmatprep.mubr.bf16.mxu0 0
    %721 = vmatmul.mubr.bf16.gmra.mrb[0].mxu0 %v667
    %v722 = vpop.f32.mrb[0].mxu0
    %v723 = vadd.f32 0.0, %v722
    %v724 = vpop.f32.mrb[0].mxu0
    %v725 = vadd.f32 0.0, %v724
    %v726 = vpop.f32.mrb[0].mxu0
    %v727 = vadd.f32 0.0, %v726
    %v728 = vpop.f32.mrb[0].mxu0
    %v729 = vadd.f32 0.0, %v728
    %730 = vmatprep.mubr.bf16.mxu0 0
    %731 = vmatmul.mubr.bf16.gmra.mrb[0].mxu0 %v670
    %v732 = vpop.f32.mrb[0].mxu0
    %v733 = vadd.f32 0.0, %v732
    %v734 = vpop.f32.mrb[0].mxu0
    %v735 = vadd.f32 0.0, %v734
    %v736 = vpop.f32.mrb[0].mxu0
    %v737 = vadd.f32 0.0, %v736
    %v738 = vpop.f32.mrb[0].mxu0
    %v739 = vadd.f32 0.0, %v738
    %740 = vdwg.mxu0
    %741 = vmatprep.subr.bf16.mxu0 %v686
    %742 = vmatpush1.bf16.msra.mxu0 %v683
    %743 = vmatprep.subr.bf16.mxu0 0
    %744 = vmatpush1.bf16.msra.mxu0 0
    %745 = vmatprep.subr.bf16.mxu0 0
    %746 = vmatpush1.bf16.msra.mxu0 0
    %747 = vmatprep.subr.bf16.mxu0 0
    %748 = vmatpush1.bf16.msra.mxu0 0
    %749 = vmatprep.subr.bf16.mxu0 0
    %750 = vmatpush1.bf16.msra.mxu0 0
    %751 = vmatprep.subr.bf16.mxu0 0
    %752 = vmatpush1.bf16.msra.mxu0 0
    %753 = vmatprep.subr.bf16.mxu0 0
    %754 = vmatpush1.bf16.msra.mxu0 0
    %755 = vmatprep.subr.bf16.mxu0 0
    %756 = vmatpush1.bf16.msra.mxu0 0
    %757 = vmatprep.subr.bf16.mxu0 0
    %758 = vmatpush1.bf16.msra.mxu0 0
    %759 = vmatprep.subr.bf16.mxu0 0
    %760 = vmatpush1.bf16.msra.mxu0 0
    %761 = vmatprep.subr.bf16.mxu0 0
    %762 = vmatpush1.bf16.msra.mxu0 0
    %763 = vmatprep.subr.bf16.mxu0 0
    %764 = vmatpush1.bf16.msra.mxu0 0
    %765 = vmatprep.subr.bf16.mxu0 0
    %766 = vmatpush1.bf16.msra.mxu0 0
    %767 = vmatprep.subr.bf16.mxu0 0
    %768 = vmatpush1.bf16.msra.mxu0 0
    %769 = vmatprep.subr.bf16.mxu0 0
    %770 = vmatpush1.bf16.msra.mxu0 0
    %771 = vmatprep.subr.bf16.mxu0 0
    %772 = vmatpush1.bf16.msra.mxu0 0
    %773 = vmatprep.mubr.bf16.mxu0 0
    %774 = vmatmul.mubr.bf16.gmra.mrb[0].mxu0 %v667
    %v775 = vpop.f32.mrb[0].mxu0
    %v776 = vadd.f32 0.0, %v775
    %v777 = vpop.f32.mrb[0].mxu0
    %v778 = vadd.f32 0.0, %v777
    %v779 = vpop.f32.mrb[0].mxu0
    %v780 = vadd.f32 0.0, %v779
    %v781 = vpop.f32.mrb[0].mxu0
    %v782 = vadd.f32 0.0, %v781
    %783 = vmatprep.mubr.bf16.mxu0 0
    %784 = vmatmul.mubr.bf16.gmra.mrb[0].mxu0 %v670
    %v785 = vpop.f32.mrb[0].mxu0
    %v786 = vadd.f32 0.0, %v785
    %v787 = vpop.f32.mrb[0].mxu0
    %v788 = vadd.f32 0.0, %v787
    %v789 = vpop.f32.mrb[0].mxu0
    %v790 = vadd.f32 0.0, %v789
    %v791 = vpop.f32.mrb[0].mxu0
    %v792 = vadd.f32 0.0, %v791
    %793 = vdwg.mxu0
    %v794 = vmul.f32 %v723, %v506
    %v795 = vmul.f32 %v725, %v508
    %v796 = vmul.f32 %v776, %v559
    %v797 = vmul.f32 %v778, %v561
    %v798 = vmul.f32 %v727, %v510
    %v799 = vmul.f32 %v729, %v512
    %v800 = vmul.f32 %v780, %v563
    %v801 = vmul.f32 %v782, %v565
    %v802 = vmul.f32 %v733, %v516
    %v803 = vmul.f32 %v735, %v518
    %v804 = vmul.f32 %v786, %v569
    %v805 = vmul.f32 %v788, %v571
    %v806 = vmul.f32 %v737, %v520
    %v807 = vmul.f32 %v739, %v522
    %v808 = vmul.f32 %v790, %v573
    %v809 = vmul.f32 %v792, %v575
    %v810 = vpack.c.bf16 %v798, %v794
    %v811 = vpack.c.bf16 %v799, %v795
    %v812 = vpack.c.bf16 %v800, %v796
    %v813 = vpack.c.bf16 %v801, %v797
    %v814 = vpack.c.bf16 %v806, %v802
    %v815 = vpack.c.bf16 %v807, %v803
    %v816 = vpack.c.bf16 %v808, %v804
    %v817 = vpack.c.bf16 %v809, %v805
    %v818 = vld [vmem:[%s11] sm:$0xf]
    %v819 = vld [vmem:[%s11 + $0x4] sm:$0xf]
    %v820 = vld [vmem:[%s11 + $0x8] sm:$0xf]
    %v821 = vld [vmem:[%s11 + $0xc] sm:$0xf]
    %v822 = vld [vmem:[%s11 + $0x10] sm:$0xf]
    %v823 = vld [vmem:[%s11 + $0x14] sm:$0xf]
    %v824 = vld [vmem:[%s11 + $0x18] sm:$0xf]
    %v825 = vld [vmem:[%s11 + $0x1c] sm:$0xf]
    %v826 = vld [vmem:[%s11 + $0x20] sm:$0xf]
    %v827 = vld [vmem:[%s11 + $0x24] sm:$0xf]
    %v828 = vld [vmem:[%s11 + $0x28] sm:$0xf]
    %v829 = vld [vmem:[%s11 + $0x2c] sm:$0xf]
    %v830 = vld [vmem:[%s11 + $0x30] sm:$0xf]
    %v831 = vld [vmem:[%s11 + $0x34] sm:$0xf]
    %v832 = vld [vmem:[%s11 + $0x38] sm:$0xf]
    %v833 = vld [vmem:[%s11 + $0x3c] sm:$0xf]
    %v834 = vld [vmem:[%s11 + $0x40] sm:$0xf]
    %v835 = vld [vmem:[%s11 + $0x44] sm:$0xf]
    %v836 = vld [vmem:[%s11 + $0x48] sm:$0xf]
    %v837 = vld [vmem:[%s11 + $0x4c] sm:$0xf]
    %v838 = vld [vmem:[%s11 + $0x50] sm:$0xf]
    %v839 = vld [vmem:[%s11 + $0x54] sm:$0xf]
    %v840 = vld [vmem:[%s11 + $0x58] sm:$0xf]
    %v841 = vld [vmem:[%s11 + $0x5c] sm:$0xf]
    %v842 = vld [vmem:[%s11 + $0x60] sm:$0xf]
    %v843 = vld [vmem:[%s11 + $0x64] sm:$0xf]
    %v844 = vld [vmem:[%s11 + $0x68] sm:$0xf]
    %v845 = vld [vmem:[%s11 + $0x6c] sm:$0xf]
    %v846 = vld [vmem:[%s11 + $0x70] sm:$0xf]
    %v847 = vld [vmem:[%s11 + $0x74] sm:$0xf]
    %v848 = vld [vmem:[%s11 + $0x78] sm:$0xf]
    %v849 = vld [vmem:[%s11 + $0x7c] sm:$0xf]
    %v850 = vld [vmem:[%s11 + $0x80] sm:$0xf]
    %v851 = vld [vmem:[%s11 + $0x84] sm:$0xf]
    %v852 = vld [vmem:[%s11 + $0x88] sm:$0xf]
    %v853 = vld [vmem:[%s11 + $0x8c] sm:$0xf]
    %v854 = vld [vmem:[%s11 + $0x90] sm:$0xf]
    %v855 = vld [vmem:[%s11 + $0x94] sm:$0xf]
    %v856 = vld [vmem:[%s11 + $0x98] sm:$0xf]
    %v857 = vld [vmem:[%s11 + $0x9c] sm:$0xf]
    %v858 = vld [vmem:[%s11 + $0xa0] sm:$0xf]
    %v859 = vld [vmem:[%s11 + $0xa4] sm:$0xf]
    %v860 = vld [vmem:[%s11 + $0xa8] sm:$0xf]
    %v861 = vld [vmem:[%s11 + $0xac] sm:$0xf]
    %v862 = vld [vmem:[%s11 + $0xb0] sm:$0xf]
    %v863 = vld [vmem:[%s11 + $0xb4] sm:$0xf]
    %v864 = vld [vmem:[%s11 + $0xb8] sm:$0xf]
    %v865 = vld [vmem:[%s11 + $0xbc] sm:$0xf]
    %v866 = vld [vmem:[%s11 + $0xc0] sm:$0xf]
    %v867 = vld [vmem:[%s11 + $0xc4] sm:$0xf]
    %v868 = vld [vmem:[%s11 + $0xc8] sm:$0xf]
    %v869 = vld [vmem:[%s11 + $0xcc] sm:$0xf]
    %v922 = vunpack.c.l.b16 %v818
    %v923 = vunpack.c.l.b16 %v819
    %v924 = vunpack.c.l.b16 %v820
    %v925 = vunpack.c.l.b16 %v821
    %v926 = vunpack.c.l.b16 %v822
    %v927 = vunpack.c.l.b16 %v823
    %v928 = vunpack.c.l.b16 %v824
    %v929 = vunpack.c.l.b16 %v825
    %v930 = vunpack.c.l.b16 %v826
    %v931 = vunpack.c.l.b16 %v827
    %v932 = vunpack.c.l.b16 %v828
    %v933 = vunpack.c.l.b16 %v829
    %v934 = vunpack.c.l.b16 %v830
    %v935 = vunpack.c.l.b16 %v831
    %v936 = vunpack.c.l.b16 %v832
    %v937 = vunpack.c.l.b16 %v833
    %v938 = vunpack.c.l.b16 %v834
    %v939 = vunpack.c.l.b16 %v835
    %v940 = vunpack.c.l.b16 %v836
    %v941 = vunpack.c.l.b16 %v837
    %v942 = vunpack.c.l.b16 %v838
    %v943 = vunpack.c.l.b16 %v839
    %v944 = vunpack.c.l.b16 %v840
    %v945 = vunpack.c.l.b16 %v841
    %v946 = vunpack.c.l.b16 %v842
    %v947 = vunpack.c.l.b16 %v843
    %v948 = vunpack.c.l.b16 %v844
    %v949 = vunpack.c.l.b16 %v845
    %v950 = vunpack.c.l.b16 %v846
    %v951 = vunpack.c.l.b16 %v847
    %v952 = vunpack.c.l.b16 %v848
    %v953 = vunpack.c.l.b16 %v849
    %v954 = vunpack.c.l.b16 %v850
    %v955 = vunpack.c.l.b16 %v851
    %v956 = vunpack.c.l.b16 %v852
    %v957 = vunpack.c.l.b16 %v853
    %v958 = vunpack.c.l.b16 %v854
    %v959 = vunpack.c.l.b16 %v855
    %v960 = vunpack.c.l.b16 %v856
    %v961 = vunpack.c.l.b16 %v857
    %v962 = vunpack.c.l.b16 %v858
    %v963 = vunpack.c.l.b16 %v859
    %v964 = vunpack.c.l.b16 %v860
    %v965 = vunpack.c.l.b16 %v861
    %v966 = vunpack.c.l.b16 %v862
    %v967 = vunpack.c.l.b16 %v863
    %v968 = vunpack.c.l.b16 %v864
    %v969 = vunpack.c.l.b16 %v865
    %v970 = vunpack.c.l.b16 %v866
    %v971 = vunpack.c.l.b16 %v867
    %v972 = vunpack.c.l.b16 %v868
    %v973 = vunpack.c.l.b16 %v869
    %v974 = vpack.c.b16 %v923, %v922
    %v975 = vpack.c.b16 %v925, %v924
    %v976 = vpack.c.b16 %v927, %v926
    %v977 = vpack.c.b16 %v929, %v928
    %v978 = vpack.c.b16 %v931, %v930
    %v979 = vpack.c.b16 %v933, %v932
    %v980 = vpack.c.b16 %v935, %v934
    %v981 = vpack.c.b16 %v937, %v936
    %v982 = vpack.c.b16 %v939, %v938
    %v983 = vpack.c.b16 %v941, %v940
    %v984 = vpack.c.b16 %v943, %v942
    %v985 = vpack.c.b16 %v945, %v944
    %v986 = vpack.c.b16 %v947, %v946
    %v987 = vpack.c.b16 %v949, %v948
    %v988 = vpack.c.b16 %v951, %v950
    %v989 = vpack.c.b16 %v953, %v952
    %v990 = vpack.c.b16 %v955, %v954
    %v991 = vpack.c.b16 %v957, %v956
    %v992 = vpack.c.b16 %v959, %v958
    %v993 = vpack.c.b16 %v961, %v960
    %v994 = vpack.c.b16 %v963, %v962
    %v995 = vpack.c.b16 %v965, %v964
    %v996 = vpack.c.b16 %v967, %v966
    %v997 = vpack.c.b16 %v969, %v968
    %v998 = vpack.c.b16 %v971, %v970
    %v999 = vpack.c.b16 %v973, %v972
    %vm1026 = vcmask 261120
    %v1028 = vsel %vm1026, %v813, 0
    %v1031 = vsel %vm1026, %v817, 0
    %1033 = vmatprep.subr.bf16.mxu0 0
    %1034 = vmatpush1.bf16.msra.mxu0 %v974
    %1035 = vmatprep.subr.bf16.mxu0 0
    %1036 = vmatpush1.bf16.msra.mxu0 %v975
    %1037 = vmatprep.subr.bf16.mxu0 0
    %1038 = vmatpush1.bf16.msra.mxu0 %v976
    %1039 = vmatprep.subr.bf16.mxu0 0
    %1040 = vmatpush1.bf16.msra.mxu0 %v977
    %1041 = vmatprep.subr.bf16.mxu0 0
    %1042 = vmatpush1.bf16.msra.mxu0 %v978
    %1043 = vmatprep.subr.bf16.mxu0 0
    %1044 = vmatpush1.bf16.msra.mxu0 %v979
    %1045 = vmatprep.subr.bf16.mxu0 0
    %1046 = vmatpush1.bf16.msra.mxu0 %v980
    %1047 = vmatprep.subr.bf16.mxu0 0
    %1048 = vmatpush1.bf16.msra.mxu0 %v981
    %1049 = vmatprep.subr.bf16.mxu0 0
    %1050 = vmatpush1.bf16.msra.mxu0 %v982
    %1051 = vmatprep.subr.bf16.mxu0 0
    %1052 = vmatpush1.bf16.msra.mxu0 %v983
    %1053 = vmatprep.subr.bf16.mxu0 0
    %1054 = vmatpush1.bf16.msra.mxu0 %v984
    %1055 = vmatprep.subr.bf16.mxu0 0
    %1056 = vmatpush1.bf16.msra.mxu0 %v985
    %1057 = vmatprep.subr.bf16.mxu0 0
    %1058 = vmatpush1.bf16.msra.mxu0 %v986
    %1059 = vmatprep.subr.bf16.mxu0 0
    %1060 = vmatpush1.bf16.msra.mxu0 %v987
    %1061 = vmatprep.subr.bf16.mxu0 0
    %1062 = vmatpush1.bf16.msra.mxu0 %v988
    %1063 = vmatprep.subr.bf16.mxu0 0
    %1064 = vmatpush1.bf16.msra.mxu0 %v989
    %1065 = vmatprep.mubr.bf16.mxu0 %v811
    %1066 = vmatmul.mubr.bf16.gmra.mrb[0].mxu0 %v810
    %v1067 = vpop.f32.mrb[0].mxu0
    %v1068 = vadd.f32 0.0, %v1067
    %v1069 = vpop.f32.mrb[0].mxu0
    %v1070 = vpop.f32.mrb[0].mxu0
    %v1071 = vadd.f32 0.0, %v1070
    %v1072 = vpop.f32.mrb[0].mxu0
    %1073 = vmatprep.mubr.bf16.mxu0 %v815
    %1074 = vmatmul.mubr.bf16.gmra.mrb[0].mxu0 %v814
    %v1075 = vpop.f32.mrb[0].mxu0
    %v1076 = vadd.f32 0.0, %v1075
    %v1077 = vpop.f32.mrb[0].mxu0
    %v1078 = vpop.f32.mrb[0].mxu0
    %v1079 = vadd.f32 0.0, %v1078
    %v1080 = vpop.f32.mrb[0].mxu0
    %1081 = vdwg.mxu0
    %1082 = vmatprep.subr.bf16.mxu0 0
    %1083 = vmatpush1.bf16.msra.mxu0 %v990
    %1084 = vmatprep.subr.bf16.mxu0 0
    %1085 = vmatpush1.bf16.msra.mxu0 %v991
    %1086 = vmatprep.subr.bf16.mxu0 0
    %1087 = vmatpush1.bf16.msra.mxu0 %v992
    %1088 = vmatprep.subr.bf16.mxu0 0
    %1089 = vmatpush1.bf16.msra.mxu0 %v993
    %1090 = vmatprep.subr.bf16.mxu0 0
    %1091 = vmatpush1.bf16.msra.mxu0 %v994
    %1092 = vmatprep.subr.bf16.mxu0 0
    %1093 = vmatpush1.bf16.msra.mxu0 %v995
    %1094 = vmatprep.subr.bf16.mxu0 0
    %1095 = vmatpush1.bf16.msra.mxu0 %v996
    %1096 = vmatprep.subr.bf16.mxu0 0
    %1097 = vmatpush1.bf16.msra.mxu0 %v997
    %1098 = vmatprep.subr.bf16.mxu0 0
    %1099 = vmatpush1.bf16.msra.mxu0 %v998
    %1100 = vmatprep.subr.bf16.mxu0 0
    %1101 = vmatpush1.bf16.msra.mxu0 %v999
    %1102 = vmatprep.subr.bf16.mxu0 0
    %1103 = vmatpush1.bf16.msra.mxu0 0
    %1104 = vmatprep.subr.bf16.mxu0 0
    %1105 = vmatpush1.bf16.msra.mxu0 0
    %1106 = vmatprep.subr.bf16.mxu0 0
    %1107 = vmatpush1.bf16.msra.mxu0 0
    %1108 = vmatprep.subr.bf16.mxu0 0
    %1109 = vmatpush1.bf16.msra.mxu0 0
    %1110 = vmatprep.subr.bf16.mxu0 0
    %1111 = vmatpush1.bf16.msra.mxu0 0
    %1112 = vmatprep.subr.bf16.mxu0 0
    %1113 = vmatpush1.bf16.msra.mxu0 0
    %1114 = vmatprep.mubr.bf16.mxu0 %v1028
    %1115 = vmatmul.mubr.bf16.gmra.mrb[0].mxu0 %v812
    %v1116 = vpop.f32.mrb[0].mxu0
    %v1117 = vadd.f32 %v1068, %v1116
    %v1118 = vpop.f32.mrb[0].mxu0
    %v1119 = vpop.f32.mrb[0].mxu0
    %v1120 = vadd.f32 %v1071, %v1119
    %v1121 = vpop.f32.mrb[0].mxu0
    %1122 = vmatprep.mubr.bf16.mxu0 %v1031
    %1123 = vmatmul.mubr.bf16.gmra.mrb[0].mxu0 %v816
    %v1124 = vpop.f32.mrb[0].mxu0
    %v1125 = vadd.f32 %v1076, %v1124
    %v1126 = vpop.f32.mrb[0].mxu0
    %v1127 = vpop.f32.mrb[0].mxu0
    %v1128 = vadd.f32 %v1079, %v1127
    %v1129 = vpop.f32.mrb[0].mxu0
    %1130 = vdwg.mxu0
    %v1131 = vpack.c.bf16 %v1120, %v1117
    %v1132 = vpack.c.bf16 %v1128, %v1125
    %v1135 = vunpack.c.l.b16 %v253
    %v1136 = vunpack.c.l.b16 %v254
    %v1137 = vpack.c.b16 %v1136, %v1135
    %v1139 = vsel %vm1026, %v1137, 0
    %1141 = vmatprep.subr.bf16.mxu0 0
    %1142 = vmatpush1.bf16.msra.mxu0 %v1131
    %1143 = vmatprep.subr.bf16.mxu0 0
    %1144 = vmatpush1.bf16.msra.mxu0 %v1132
    %1145 = vmatprep.subr.bf16.mxu0 0
    %1146 = vmatpush1.bf16.msra.mxu0 0
    %1147 = vmatprep.subr.bf16.mxu0 0
    %1148 = vmatpush1.bf16.msra.mxu0 0
    %1149 = vmatprep.subr.bf16.mxu0 0
    %1150 = vmatpush1.bf16.msra.mxu0 0
    %1151 = vmatprep.subr.bf16.mxu0 0
    %1152 = vmatpush1.bf16.msra.mxu0 0
    %1153 = vmatprep.subr.bf16.mxu0 0
    %1154 = vmatpush1.bf16.msra.mxu0 0
    %1155 = vmatprep.subr.bf16.mxu0 0
    %1156 = vmatpush1.bf16.msra.mxu0 0
    %1157 = vmatprep.subr.bf16.mxu0 0
    %1158 = vmatpush1.bf16.msra.mxu0 0
    %1159 = vmatprep.subr.bf16.mxu0 0
    %1160 = vmatpush1.bf16.msra.mxu0 0
    %1161 = vmatprep.subr.bf16.mxu0 0
    %1162 = vmatpush1.bf16.msra.mxu0 0
    %1163 = vmatprep.subr.bf16.mxu0 0
    %1164 = vmatpush1.bf16.msra.mxu0 0
    %1165 = vmatprep.subr.bf16.mxu0 0
    %1166 = vmatpush1.bf16.msra.mxu0 0
    %1167 = vmatprep.subr.bf16.mxu0 0
    %1168 = vmatpush1.bf16.msra.mxu0 0
    %1169 = vmatprep.subr.bf16.mxu0 0
    %1170 = vmatpush1.bf16.msra.mxu0 0
    %1171 = vmatprep.subr.bf16.mxu0 0
    %1172 = vmatpush1.bf16.msra.mxu0 0
    %1173 = vmatprep.mubr.bf16.mxu0 0
    %1174 = vmatmul.mubr.bf16.gmra.mrb[0].mxu0 %v1139
    %v1175 = vpop.f32.mrb[0].mxu0
    %v1176 = vadd.f32 0.0, %v1175
    %v1177 = vpop.f32.mrb[0].mxu0
    %v1178 = vpop.f32.mrb[0].mxu0
    %v1179 = vadd.f32 0.0, %v1178
    %v1180 = vpop.f32.mrb[0].mxu0
    %1181 = vdwg.mxu0
    %v1182 = vld [vmem:[#allocation2] sm:$0xf]
    %v1183 = vld [vmem:[#allocation2 + $0x4] sm:$0x7]
    %v1186 = vunpack.c.l.b16 %v1182
    %v1187 = vunpack.c.l.b16 %v1183
    %v1188 = vpack.c.b16 %v1187, %v1186
    %v1190 = vsel %vm665, %v255, 0
    %v1193 = vand.u32 %v1188, %v675
    %1195 = vmatprep.subr.bf16.mxu0 0
    %1196 = vmatpush1.bf16.msra.mxu0 %v1193
    %1197 = vmatprep.subr.bf16.mxu0 0
    %1198 = vmatpush1.bf16.msra.mxu0 0
    %1199 = vmatprep.subr.bf16.mxu0 0
    %1200 = vmatpush1.bf16.msra.mxu0 0
    %1201 = vmatprep.subr.bf16.mxu0 0
    %1202 = vmatpush1.bf16.msra.mxu0 0
    %1203 = vmatprep.subr.bf16.mxu0 0
    %1204 = vmatpush1.bf16.msra.mxu0 0
    %1205 = vmatprep.subr.bf16.mxu0 0
    %1206 = vmatpush1.bf16.msra.mxu0 0
    %1207 = vmatprep.subr.bf16.mxu0 0
    %1208 = vmatpush1.bf16.msra.mxu0 0
    %1209 = vmatprep.subr.bf16.mxu0 0
    %1210 = vmatpush1.bf16.msra.mxu0 0
    %1211 = vmatprep.subr.bf16.mxu0 0
    %1212 = vmatpush1.bf16.msra.mxu0 0
    %1213 = vmatprep.subr.bf16.mxu0 0
    %1214 = vmatpush1.bf16.msra.mxu0 0
    %1215 = vmatprep.subr.bf16.mxu0 0
    %1216 = vmatpush1.bf16.msra.mxu0 0
    %1217 = vmatprep.subr.bf16.mxu0 0
    %1218 = vmatpush1.bf16.msra.mxu0 0
    %1219 = vmatprep.subr.bf16.mxu0 0
    %1220 = vmatpush1.bf16.msra.mxu0 0
    %1221 = vmatprep.subr.bf16.mxu0 0
    %1222 = vmatpush1.bf16.msra.mxu0 0
    %1223 = vmatprep.subr.bf16.mxu0 0
    %1224 = vmatpush1.bf16.msra.mxu0 0
    %1225 = vmatprep.subr.bf16.mxu0 0
    %1226 = vmatpush1.bf16.msra.mxu0 0
    %1227 = vmatprep.mubr.bf16.mxu0 0
    %1228 = vmatmul.mubr.bf16.gmra.mrb[0].mxu0 %v1190
    %v1229 = vpop.f32.mrb[0].mxu0
    %v1230 = vadd.f32 %v1176, %v1229
    %v1231 = vpop.f32.mrb[0].mxu0
    %v1232 = vpop.f32.mrb[0].mxu0
    %v1233 = vadd.f32 %v1179, %v1232
    %v1234 = vpop.f32.mrb[0].mxu0
    %1235 = vdwg.mxu0
    %v1236 = vld [vmem:[#allocation5 + $0x4] ss:$0 sm:$0xff]
    %v1237 = vadd.f32 %v1230, %v1236
    %v1238 = vadd.f32 %v1233, %v1236
    %v1239 = vmin.f32 %v1237, 0.0
    %v1240 = vmin.f32 %v1238, 0.0
    %v1241 = vmul.f32 %v1239, 0.5
    %v1242 = vmul.f32 %v1240, 0.5
    %v1243 = vtanh.pop %v1241
    %v1244 = vtanh.pop %v1242
    %v1245 = vmul.f32 %v1243, 2.0
    %v1246 = vmul.f32 %v1244, 2.0
    %v1247 = vsub.f32 1.0, %v1243
    %v1248 = vsub.f32 1.0, %v1244
    %v1249 = vrcp.pop %v1247
    %v1250 = vrcp.pop %v1248
    %v1251 = vmul.f32 %v1245, %v1249
    %v1252 = vmul.f32 %v1246, %v1250
    %vm1253 = vcmp.gt.f32.partialorder %v1237, 0.0
    %vm1254 = vcmp.gt.f32.partialorder %v1238, 0.0
    %v1255 = vsel %vm1253, %v1237, %v1251
    %v1256 = vsel %vm1254, %v1238, %v1252
    %v1257 = vpack.c.bf16 %v1256, %v1255
    %v1258 = vld [vmem:[%s9 + $0x10] sm:$0xff]
    %v1259 = vld [vmem:[%s9 + $0x18] sm:$0xff]
    %v1260 = vld [vmem:[%s9 + $0x20] sm:$0xff]
    %v1261 = vld [vmem:[%s9 + $0x28] sm:$0xff]
    %v1262 = vld [vmem:[%s9 + $0x30] sm:$0xff]
    %v1263 = vld [vmem:[%s9 + $0x38] sm:$0xff]
    %v1264 = vld [vmem:[%s9 + $0x40] sm:$0xff]
    %v1265 = vld [vmem:[%s9 + $0x48] sm:$0xff]
    %v1266 = vld [vmem:[%s9 + $0xe0] sm:$0xff]
    %v1267 = vld [vmem:[%s9 + $0xe8] sm:$0xff]
    %v1268 = vld [vmem:[%s9 + $0xf0] sm:$0xff]
    %v1269 = vld [vmem:[%s9 + $0xf8] sm:$0xff]
    %v1270 = vld [vmem:[%s9 + $0x100] sm:$0xff]
    %v1271 = vld [vmem:[%s9 + $0x108] sm:$0xff]
    %v1272 = vld [vmem:[%s9 + $0x110] sm:$0xff]
    %v1273 = vld [vmem:[%s9 + $0x118] sm:$0xff]
    %v1274 = vld [vmem:[%s9 + $0x1b0] sm:$0xff]
    %v1275 = vld [vmem:[%s9 + $0x1b8] sm:$0xff]
    %v1276 = vld [vmem:[%s9 + $0x1c0] sm:$0xff]
    %v1277 = vld [vmem:[%s9 + $0x1c8] sm:$0xff]
    %v1278 = vld [vmem:[%s9 + $0x1d0] sm:$0xff]
    %v1279 = vld [vmem:[%s9 + $0x1d8] sm:$0xff]
    %v1280 = vld [vmem:[%s9 + $0x1e0] sm:$0xff]
    %v1281 = vld [vmem:[%s9 + $0x1e8] sm:$0xff]
    %v1282 = vld [vmem:[%s9 + $0x280] sm:$0xff]
    %v1283 = vld [vmem:[%s9 + $0x288] sm:$0xff]
    %v1284 = vld [vmem:[%s9 + $0x290] sm:$0xff]
    %v1285 = vld [vmem:[%s9 + $0x298] sm:$0xff]
    %v1286 = vld [vmem:[%s9 + $0x2a0] sm:$0xff]
    %v1287 = vld [vmem:[%s9 + $0x2a8] sm:$0xff]
    %v1288 = vld [vmem:[%s9 + $0x2b0] sm:$0xff]
    %v1289 = vld [vmem:[%s9 + $0x2b8] sm:$0xff]
    %v1290 = vld [vmem:[%s9 + $0x350] sm:$0xff]
    %v1291 = vld [vmem:[%s9 + $0x358] sm:$0xff]
    %v1292 = vld [vmem:[%s9 + $0x360] sm:$0xff]
    %v1293 = vld [vmem:[%s9 + $0x368] sm:$0xff]
    %v1294 = vld [vmem:[%s9 + $0x370] sm:$0xff]
    %v1295 = vld [vmem:[%s9 + $0x378] sm:$0xff]
    %v1296 = vld [vmem:[%s9 + $0x380] sm:$0xff]
    %v1297 = vld [vmem:[%s9 + $0x388] sm:$0xff]
    %v1298 = vld [vmem:[%s9 + $0x420] sm:$0xff]
    %v1299 = vld [vmem:[%s9 + $0x428] sm:$0xff]
    %v1300 = vld [vmem:[%s9 + $0x430] sm:$0xff]
    %v1301 = vld [vmem:[%s9 + $0x438] sm:$0xff]
    %v1302 = vld [vmem:[%s9 + $0x440] sm:$0xff]
    %v1303 = vld [vmem:[%s9 + $0x448] sm:$0xff]
    %v1304 = vld [vmem:[%s9 + $0x450] sm:$0xff]
    %v1305 = vld [vmem:[%s9 + $0x458] sm:$0xff]
    %v1306 = vld [vmem:[%s9 + $0x4f0] sm:$0xff]
    %v1307 = vld [vmem:[%s9 + $0x4f8] sm:$0xff]
    %v1308 = vld [vmem:[%s9 + $0x500] sm:$0xff]
    %v1309 = vld [vmem:[%s9 + $0x508] sm:$0xff]
    %v1310 = vld [vmem:[%s9 + $0x510] sm:$0xff]
    %v1311 = vld [vmem:[%s9 + $0x518] sm:$0xff]
    %v1312 = vld [vmem:[%s9 + $0x520] sm:$0xff]
    %v1313 = vld [vmem:[%s9 + $0x528] sm:$0xff]
    %v1314 = vld [vmem:[%s9 + $0x5c0] sm:$0xff]
    %v1315 = vld [vmem:[%s9 + $0x5c8] sm:$0xff]
    %v1316 = vld [vmem:[%s9 + $0x5d0] sm:$0xff]
    %v1317 = vld [vmem:[%s9 + $0x5d8] sm:$0xff]
    %v1318 = vld [vmem:[%s9 + $0x5e0] sm:$0xff]
    %v1319 = vld [vmem:[%s9 + $0x5e8] sm:$0xff]
    %v1320 = vld [vmem:[%s9 + $0x5f0] sm:$0xff]
    %v1321 = vld [vmem:[%s9 + $0x5f8] sm:$0xff]
    %v1322 = vld [vmem:[%s9 + $0x690] sm:$0xff]
    %v1323 = vld [vmem:[%s9 + $0x698] sm:$0xff]
    %v1324 = vld [vmem:[%s9 + $0x6a0] sm:$0xff]
    %v1325 = vld [vmem:[%s9 + $0x6a8] sm:$0xff]
    %v1326 = vld [vmem:[%s9 + $0x6b0] sm:$0xff]
    %v1327 = vld [vmem:[%s9 + $0x6b8] sm:$0xff]
    %v1328 = vld [vmem:[%s9 + $0x6c0] sm:$0xff]
    %v1329 = vld [vmem:[%s9 + $0x6c8] sm:$0xff]
    %v1330 = vld [vmem:[%s9 + $0x760] sm:$0xff]
    %v1331 = vld [vmem:[%s9 + $0x768] sm:$0xff]
    %v1332 = vld [vmem:[%s9 + $0x770] sm:$0xff]
    %v1333 = vld [vmem:[%s9 + $0x778] sm:$0xff]
    %v1334 = vld [vmem:[%s9 + $0x780] sm:$0xff]
    %v1335 = vld [vmem:[%s9 + $0x788] sm:$0xff]
    %v1336 = vld [vmem:[%s9 + $0x790] sm:$0xff]
    %v1337 = vld [vmem:[%s9 + $0x798] sm:$0xff]
    %v1338 = vld [vmem:[%s9 + $0x830] sm:$0xff]
    %v1339 = vld [vmem:[%s9 + $0x838] sm:$0xff]
    %v1340 = vld [vmem:[%s9 + $0x840] sm:$0xff]
    %v1341 = vld [vmem:[%s9 + $0x848] sm:$0xff]
    %v1342 = vld [vmem:[%s9 + $0x850] sm:$0xff]
    %v1343 = vld [vmem:[%s9 + $0x858] sm:$0xff]
    %v1344 = vld [vmem:[%s9 + $0x860] sm:$0xff]
    %v1345 = vld [vmem:[%s9 + $0x868] sm:$0xff]
    %v1346 = vld [vmem:[%s9 + $0x900] sm:$0xff]
    %v1347 = vld [vmem:[%s9 + $0x908] sm:$0xff]
    %v1348 = vld [vmem:[%s9 + $0x910] sm:$0xff]
    %v1349 = vld [vmem:[%s9 + $0x918] sm:$0xff]
    %v1350 = vld [vmem:[%s9 + $0x920] sm:$0xff]
    %v1351 = vld [vmem:[%s9 + $0x928] sm:$0xff]
    %v1352 = vld [vmem:[%s9 + $0x930] sm:$0xff]
    %v1353 = vld [vmem:[%s9 + $0x938] sm:$0xff]
    %v1354 = vld [vmem:[%s9 + $0x9d0] sm:$0xff]
    %v1355 = vld [vmem:[%s9 + $0x9d8] sm:$0xff]
    %v1356 = vld [vmem:[%s9 + $0x9e0] sm:$0xff]
    %v1357 = vld [vmem:[%s9 + $0x9e8] sm:$0xff]
    %v1358 = vld [vmem:[%s9 + $0x9f0] sm:$0xff]
    %v1359 = vld [vmem:[%s9 + $0x9f8] sm:$0xff]
    %v1360 = vld [vmem:[%s9 + $0xa00] sm:$0xff]
    %v1361 = vld [vmem:[%s9 + $0xa08] sm:$0xff]
    %v1362 = vld [vmem:[%s9 + $0xaa0] sm:$0xff]
    %v1363 = vld [vmem:[%s9 + $0xaa8] sm:$0xff]
    %v1364 = vld [vmem:[%s9 + $0xab0] sm:$0xff]
    %v1365 = vld [vmem:[%s9 + $0xab8] sm:$0xff]
    %v1366 = vld [vmem:[%s9 + $0xac0] sm:$0xff]
    %v1367 = vld [vmem:[%s9 + $0xac8] sm:$0xff]
    %v1368 = vld [vmem:[%s9 + $0xad0] sm:$0xff]
    %v1369 = vld [vmem:[%s9 + $0xad8] sm:$0xff]
    %v1370 = vld [vmem:[%s9 + $0xb70] sm:$0xff]
    %v1371 = vld [vmem:[%s9 + $0xb78] sm:$0xff]
    %v1372 = vld [vmem:[%s9 + $0xb80] sm:$0xff]
    %v1373 = vld [vmem:[%s9 + $0xb88] sm:$0xff]
    %v1374 = vld [vmem:[%s9 + $0xb90] sm:$0xff]
    %v1375 = vld [vmem:[%s9 + $0xb98] sm:$0xff]
    %v1376 = vld [vmem:[%s9 + $0xba0] sm:$0xff]
    %v1377 = vld [vmem:[%s9 + $0xba8] sm:$0xff]
    %v1378 = vld [vmem:[%s9 + $0xc40] sm:$0xff]
    %v1379 = vld [vmem:[%s9 + $0xc48] sm:$0xff]
    %v1380 = vld [vmem:[%s9 + $0xc50] sm:$0xff]
    %v1381 = vld [vmem:[%s9 + $0xc58] sm:$0xff]
    %v1382 = vld [vmem:[%s9 + $0xc60] sm:$0xff]
    %v1383 = vld [vmem:[%s9 + $0xc68] sm:$0xff]
    %v1384 = vld [vmem:[%s9 + $0xc70] sm:$0xff]
    %v1385 = vld [vmem:[%s9 + $0xc78] sm:$0xff]
    %s1386 = scalar_lea.vmem [#allocation5], 2
    %v1387 = vld [vmem:[%s1386] ss:$8 sm:$0xf]
    %v1388 = vld [vmem:[%s1386] ss:$8 sm:$0xf0]
    %v1389 = vor.u32 %v1387, %v1388
    %s1390 = scalar_lea.vmem [#allocation5], 66
    %v1391 = vld [vmem:[%s1390] ss:$8 sm:$0xf]
    %v1392 = vld [vmem:[%s1390] ss:$8 sm:$0xf0]
    %v1393 = vor.u32 %v1391, %v1392
    %v1396 = vlaneseq
    %v1397 = vshrl.u32 %v1396, 7
    %v1398 = vsub.s32 0, %v1397
    %v1399 = vrot.slane %v1389, %v1398
    %v1400 = vlaneseq
    %v1401 = vshrl.u32 %v1400, 7
    %v1402 = vsub.s32 1, %v1401
    %v1403 = vrot.slane %v1389, %v1402
    %v1404 = vlaneseq
    %v1405 = vshrl.u32 %v1404, 7
    %v1406 = vsub.s32 2, %v1405
    %v1407 = vrot.slane %v1389, %v1406
    %v1408 = vlaneseq
    %v1409 = vshrl.u32 %v1408, 7
    %v1410 = vsub.s32 3, %v1409
    %v1411 = vrot.slane %v1389, %v1410
    %v1412 = vlaneseq
    %v1413 = vshrl.u32 %v1412, 7
    %v1414 = vsub.s32 4, %v1413
    %v1415 = vrot.slane %v1389, %v1414
    %v1416 = vlaneseq
    %v1417 = vshrl.u32 %v1416, 7
    %v1418 = vsub.s32 5, %v1417
    %v1419 = vrot.slane %v1389, %v1418
    %v1420 = vlaneseq
    %v1421 = vshrl.u32 %v1420, 7
    %v1422 = vsub.s32 6, %v1421
    %v1423 = vrot.slane %v1389, %v1422
    %v1424 = vlaneseq
    %v1425 = vshrl.u32 %v1424, 7
    %v1426 = vsub.s32 7, %v1425
    %v1427 = vrot.slane %v1389, %v1426
    %v1428 = vlaneseq
    %v1429 = vshrl.u32 %v1428, 7
    %v1430 = vsub.s32 0, %v1429
    %v1431 = vrot.slane %v1393, %v1430
    %v1432 = vlaneseq
    %v1433 = vshrl.u32 %v1432, 7
    %v1434 = vsub.s32 1, %v1433
    %v1435 = vrot.slane %v1393, %v1434
    %v1436 = vlaneseq
    %v1437 = vshrl.u32 %v1436, 7
    %v1438 = vsub.s32 2, %v1437
    %v1439 = vrot.slane %v1393, %v1438
    %v1440 = vlaneseq
    %v1441 = vshrl.u32 %v1440, 7
    %v1442 = vsub.s32 3, %v1441
    %v1443 = vrot.slane %v1393, %v1442
    %v1444 = vlaneseq
    %v1445 = vshrl.u32 %v1444, 7
    %v1446 = vsub.s32 4, %v1445
    %v1447 = vrot.slane %v1393, %v1446
    %v1448 = vlaneseq
    %v1449 = vshrl.u32 %v1448, 7
    %v1450 = vsub.s32 5, %v1449
    %v1451 = vrot.slane %v1393, %v1450
    %v1452 = vlaneseq
    %v1453 = vshrl.u32 %v1452, 7
    %v1454 = vsub.s32 6, %v1453
    %v1455 = vrot.slane %v1393, %v1454
    %v1456 = vlaneseq
    %v1457 = vshrl.u32 %v1456, 7
    %v1458 = vsub.s32 7, %v1457
    %v1459 = vrot.slane %v1393, %v1458
    %v1604 = vunpack.c.l.b16 %v1258
    %v1605 = vunpack.c.h.b16 %v1258
    %v1606 = vunpack.c.l.b16 %v1259
    %v1607 = vunpack.c.h.b16 %v1259
    %v1608 = vunpack.c.l.b16 %v1260
    %v1609 = vunpack.c.h.b16 %v1260
    %v1610 = vunpack.c.l.b16 %v1261
    %v1611 = vunpack.c.h.b16 %v1261
    %v1612 = vunpack.c.l.b16 %v1262
    %v1613 = vunpack.c.h.b16 %v1262
    %v1614 = vunpack.c.l.b16 %v1263
    %v1615 = vunpack.c.h.b16 %v1263
    %v1616 = vunpack.c.l.b16 %v1264
    %v1617 = vunpack.c.h.b16 %v1264
    %v1618 = vunpack.c.l.b16 %v1265
    %v1619 = vunpack.c.h.b16 %v1265
    %v1620 = vunpack.c.l.b16 %v1266
    %v1621 = vunpack.c.h.b16 %v1266
    %v1622 = vunpack.c.l.b16 %v1267
    %v1623 = vunpack.c.h.b16 %v1267
    %v1624 = vunpack.c.l.b16 %v1268
    %v1625 = vunpack.c.h.b16 %v1268
    %v1626 = vunpack.c.l.b16 %v1269
    %v1627 = vunpack.c.h.b16 %v1269
    %v1628 = vunpack.c.l.b16 %v1270
    %v1629 = vunpack.c.h.b16 %v1270
    %v1630 = vunpack.c.l.b16 %v1271
    %v1631 = vunpack.c.h.b16 %v1271
    %v1632 = vunpack.c.l.b16 %v1272
    %v1633 = vunpack.c.h.b16 %v1272
    %v1634 = vunpack.c.l.b16 %v1273
    %v1635 = vunpack.c.h.b16 %v1273
    %v1636 = vunpack.c.l.b16 %v1274
    %v1637 = vunpack.c.h.b16 %v1274
    %v1638 = vunpack.c.l.b16 %v1275
    %v1639 = vunpack.c.h.b16 %v1275
    %v1640 = vunpack.c.l.b16 %v1276
    %v1641 = vunpack.c.h.b16 %v1276
    %v1642 = vunpack.c.l.b16 %v1277
    %v1643 = vunpack.c.h.b16 %v1277
    %v1644 = vunpack.c.l.b16 %v1278
    %v1645 = vunpack.c.h.b16 %v1278
    %v1646 = vunpack.c.l.b16 %v1279
    %v1647 = vunpack.c.h.b16 %v1279
    %v1648 = vunpack.c.l.b16 %v1280
    %v1649 = vunpack.c.h.b16 %v1280
    %v1650 = vunpack.c.l.b16 %v1281
    %v1651 = vunpack.c.h.b16 %v1281
    %v1652 = vunpack.c.l.b16 %v1282
    %v1653 = vunpack.c.h.b16 %v1282
    %v1654 = vunpack.c.l.b16 %v1283
    %v1655 = vunpack.c.h.b16 %v1283
    %v1656 = vunpack.c.l.b16 %v1284
    %v1657 = vunpack.c.h.b16 %v1284
    %v1658 = vunpack.c.l.b16 %v1285
    %v1659 = vunpack.c.h.b16 %v1285
    %v1660 = vunpack.c.l.b16 %v1286
    %v1661 = vunpack.c.h.b16 %v1286
    %v1662 = vunpack.c.l.b16 %v1287
    %v1663 = vunpack.c.h.b16 %v1287
    %v1664 = vunpack.c.l.b16 %v1288
    %v1665 = vunpack.c.h.b16 %v1288
    %v1666 = vunpack.c.l.b16 %v1289
    %v1667 = vunpack.c.h.b16 %v1289
    %v1668 = vunpack.c.l.b16 %v1290
    %v1669 = vunpack.c.h.b16 %v1290
    %v1670 = vunpack.c.l.b16 %v1291
    %v1671 = vunpack.c.h.b16 %v1291
    %v1672 = vunpack.c.l.b16 %v1292
    %v1673 = vunpack.c.h.b16 %v1292
    %v1674 = vunpack.c.l.b16 %v1293
    %v1675 = vunpack.c.h.b16 %v1293
    %v1676 = vunpack.c.l.b16 %v1294
    %v1677 = vunpack.c.h.b16 %v1294
    %v1678 = vunpack.c.l.b16 %v1295
    %v1679 = vunpack.c.h.b16 %v1295
    %v1680 = vunpack.c.l.b16 %v1296
    %v1681 = vunpack.c.h.b16 %v1296
    %v1682 = vunpack.c.l.b16 %v1297
    %v1683 = vunpack.c.h.b16 %v1297
    %v1684 = vunpack.c.l.b16 %v1298
    %v1685 = vunpack.c.h.b16 %v1298
    %v1686 = vunpack.c.l.b16 %v1299
    %v1687 = vunpack.c.h.b16 %v1299
    %v1688 = vunpack.c.l.b16 %v1300
    %v1689 = vunpack.c.h.b16 %v1300
    %v1690 = vunpack.c.l.b16 %v1301
    %v1691 = vunpack.c.h.b16 %v1301
    %v1692 = vunpack.c.l.b16 %v1302
    %v1693 = vunpack.c.h.b16 %v1302
    %v1694 = vunpack.c.l.b16 %v1303
    %v1695 = vunpack.c.h.b16 %v1303
    %v1696 = vunpack.c.l.b16 %v1304
    %v1697 = vunpack.c.h.b16 %v1304
    %v1698 = vunpack.c.l.b16 %v1305
    %v1699 = vunpack.c.h.b16 %v1305
    %v1700 = vunpack.c.l.b16 %v1306
    %v1701 = vunpack.c.h.b16 %v1306
    %v1702 = vunpack.c.l.b16 %v1307
    %v1703 = vunpack.c.h.b16 %v1307
    %v1704 = vunpack.c.l.b16 %v1308
    %v1705 = vunpack.c.h.b16 %v1308
    %v1706 = vunpack.c.l.b16 %v1309
    %v1707 = vunpack.c.h.b16 %v1309
    %v1708 = vunpack.c.l.b16 %v1310
    %v1709 = vunpack.c.h.b16 %v1310
    %v1710 = vunpack.c.l.b16 %v1311
    %v1711 = vunpack.c.h.b16 %v1311
    %v1712 = vunpack.c.l.b16 %v1312
    %v1713 = vunpack.c.h.b16 %v1312
    %v1714 = vunpack.c.l.b16 %v1313
    %v1715 = vunpack.c.h.b16 %v1313
    %v1716 = vunpack.c.l.b16 %v1314
    %v1717 = vunpack.c.h.b16 %v1314
    %v1718 = vunpack.c.l.b16 %v1315
    %v1719 = vunpack.c.h.b16 %v1315
    %v1720 = vunpack.c.l.b16 %v1316
    %v1721 = vunpack.c.h.b16 %v1316
    %v1722 = vunpack.c.l.b16 %v1317
    %v1723 = vunpack.c.h.b16 %v1317
    %v1724 = vunpack.c.l.b16 %v1318
    %v1725 = vunpack.c.h.b16 %v1318
    %v1726 = vunpack.c.l.b16 %v1319
    %v1727 = vunpack.c.h.b16 %v1319
    %v1728 = vunpack.c.l.b16 %v1320
    %v1729 = vunpack.c.h.b16 %v1320
    %v1730 = vunpack.c.l.b16 %v1321
    %v1731 = vunpack.c.h.b16 %v1321
    %v1732 = vunpack.c.l.b16 %v1322
    %v1733 = vunpack.c.h.b16 %v1322
    %v1734 = vunpack.c.l.b16 %v1323
    %v1735 = vunpack.c.h.b16 %v1323
    %v1736 = vunpack.c.l.b16 %v1324
    %v1737 = vunpack.c.h.b16 %v1324
    %v1738 = vunpack.c.l.b16 %v1325
    %v1739 = vunpack.c.h.b16 %v1325
    %v1740 = vunpack.c.l.b16 %v1326
    %v1741 = vunpack.c.h.b16 %v1326
    %v1742 = vunpack.c.l.b16 %v1327
    %v1743 = vunpack.c.h.b16 %v1327
    %v1744 = vunpack.c.l.b16 %v1328
    %v1745 = vunpack.c.h.b16 %v1328
    %v1746 = vunpack.c.l.b16 %v1329
    %v1747 = vunpack.c.h.b16 %v1329
    %v1748 = vunpack.c.l.b16 %v1330
    %v1749 = vunpack.c.h.b16 %v1330
    %v1750 = vunpack.c.l.b16 %v1331
    %v1751 = vunpack.c.h.b16 %v1331
    %v1752 = vunpack.c.l.b16 %v1332
    %v1753 = vunpack.c.h.b16 %v1332
    %v1754 = vunpack.c.l.b16 %v1333
    %v1755 = vunpack.c.h.b16 %v1333
    %v1756 = vunpack.c.l.b16 %v1334
    %v1757 = vunpack.c.h.b16 %v1334
    %v1758 = vunpack.c.l.b16 %v1335
    %v1759 = vunpack.c.h.b16 %v1335
    %v1760 = vunpack.c.l.b16 %v1336
    %v1761 = vunpack.c.h.b16 %v1336
    %v1762 = vunpack.c.l.b16 %v1337
    %v1763 = vunpack.c.h.b16 %v1337
    %v1764 = vunpack.c.l.b16 %v1338
    %v1765 = vunpack.c.h.b16 %v1338
    %v1766 = vunpack.c.l.b16 %v1339
    %v1767 = vunpack.c.h.b16 %v1339
    %v1768 = vunpack.c.l.b16 %v1340
    %v1769 = vunpack.c.h.b16 %v1340
    %v1770 = vunpack.c.l.b16 %v1341
    %v1771 = vunpack.c.h.b16 %v1341
    %v1772 = vunpack.c.l.b16 %v1342
    %v1773 = vunpack.c.h.b16 %v1342
    %v1774 = vunpack.c.l.b16 %v1343
    %v1775 = vunpack.c.h.b16 %v1343
    %v1776 = vunpack.c.l.b16 %v1344
    %v1777 = vunpack.c.h.b16 %v1344
    %v1778 = vunpack.c.l.b16 %v1345
    %v1779 = vunpack.c.h.b16 %v1345
    %v1780 = vunpack.c.l.b16 %v1346
    %v1781 = vunpack.c.h.b16 %v1346
    %v1782 = vunpack.c.l.b16 %v1347
    %v1783 = vunpack.c.h.b16 %v1347
    %v1784 = vunpack.c.l.b16 %v1348
    %v1785 = vunpack.c.h.b16 %v1348
    %v1786 = vunpack.c.l.b16 %v1349
    %v1787 = vunpack.c.h.b16 %v1349
    %v1788 = vunpack.c.l.b16 %v1350
    %v1789 = vunpack.c.h.b16 %v1350
    %v1790 = vunpack.c.l.b16 %v1351
    %v1791 = vunpack.c.h.b16 %v1351
    %v1792 = vunpack.c.l.b16 %v1352
    %v1793 = vunpack.c.h.b16 %v1352
    %v1794 = vunpack.c.l.b16 %v1353
    %v1795 = vunpack.c.h.b16 %v1353
    %v1796 = vunpack.c.l.b16 %v1354
    %v1797 = vunpack.c.h.b16 %v1354
    %v1798 = vunpack.c.l.b16 %v1355
    %v1799 = vunpack.c.h.b16 %v1355
    %v1800 = vunpack.c.l.b16 %v1356
    %v1801 = vunpack.c.h.b16 %v1356
    %v1802 = vunpack.c.l.b16 %v1357
    %v1803 = vunpack.c.h.b16 %v1357
    %v1804 = vunpack.c.l.b16 %v1358
    %v1805 = vunpack.c.h.b16 %v1358
    %v1806 = vunpack.c.l.b16 %v1359
    %v1807 = vunpack.c.h.b16 %v1359
    %v1808 = vunpack.c.l.b16 %v1360
    %v1809 = vunpack.c.h.b16 %v1360
    %v1810 = vunpack.c.l.b16 %v1361
    %v1811 = vunpack.c.h.b16 %v1361
    %v1812 = vunpack.c.l.b16 %v1362
    %v1813 = vunpack.c.h.b16 %v1362
    %v1814 = vunpack.c.l.b16 %v1363
    %v1815 = vunpack.c.h.b16 %v1363
    %v1816 = vunpack.c.l.b16 %v1364
    %v1817 = vunpack.c.h.b16 %v1364
    %v1818 = vunpack.c.l.b16 %v1365
    %v1819 = vunpack.c.h.b16 %v1365
    %v1820 = vunpack.c.l.b16 %v1366
    %v1821 = vunpack.c.h.b16 %v1366
    %v1822 = vunpack.c.l.b16 %v1367
    %v1823 = vunpack.c.h.b16 %v1367
    %v1824 = vunpack.c.l.b16 %v1368
    %v1825 = vunpack.c.h.b16 %v1368
    %v1826 = vunpack.c.l.b16 %v1369
    %v1827 = vunpack.c.h.b16 %v1369
    %v1828 = vunpack.c.l.b16 %v1370
    %v1829 = vunpack.c.h.b16 %v1370
    %v1830 = vunpack.c.l.b16 %v1371
    %v1831 = vunpack.c.h.b16 %v1371
    %v1832 = vunpack.c.l.b16 %v1372
    %v1833 = vunpack.c.h.b16 %v1372
    %v1834 = vunpack.c.l.b16 %v1373
    %v1835 = vunpack.c.h.b16 %v1373
    %v1836 = vunpack.c.l.b16 %v1374
    %v1837 = vunpack.c.h.b16 %v1374
    %v1838 = vunpack.c.l.b16 %v1375
    %v1839 = vunpack.c.h.b16 %v1375
    %v1840 = vunpack.c.l.b16 %v1376
    %v1841 = vunpack.c.h.b16 %v1376
    %v1842 = vunpack.c.l.b16 %v1377
    %v1843 = vunpack.c.h.b16 %v1377
    %v1844 = vunpack.c.l.b16 %v1378
    %v1845 = vunpack.c.h.b16 %v1378
    %v1846 = vunpack.c.l.b16 %v1379
    %v1847 = vunpack.c.h.b16 %v1379
    %v1848 = vunpack.c.l.b16 %v1380
    %v1849 = vunpack.c.h.b16 %v1380
    %v1850 = vunpack.c.l.b16 %v1381
    %v1851 = vunpack.c.h.b16 %v1381
    %v1852 = vunpack.c.l.b16 %v1382
    %v1853 = vunpack.c.h.b16 %v1382
    %v1854 = vunpack.c.l.b16 %v1383
    %v1855 = vunpack.c.h.b16 %v1383
    %v1856 = vunpack.c.l.b16 %v1384
    %v1857 = vunpack.c.h.b16 %v1384
    %v1858 = vunpack.c.l.b16 %v1385
    %v1859 = vunpack.c.h.b16 %v1385
    %v1860 = vpack.c.b16 %v1620, %v1604
    %v1861 = vpack.c.b16 %v1621, %v1605
    %v1862 = vpack.c.b16 %v1622, %v1606
    %v1863 = vpack.c.b16 %v1623, %v1607
    %v1864 = vpack.c.b16 %v1624, %v1608
    %v1865 = vpack.c.b16 %v1625, %v1609
    %v1866 = vpack.c.b16 %v1626, %v1610
    %v1867 = vpack.c.b16 %v1627, %v1611
    %v1868 = vpack.c.b16 %v1628, %v1612
    %v1869 = vpack.c.b16 %v1629, %v1613
    %v1870 = vpack.c.b16 %v1630, %v1614
    %v1871 = vpack.c.b16 %v1631, %v1615
    %v1872 = vpack.c.b16 %v1632, %v1616
    %v1873 = vpack.c.b16 %v1633, %v1617
    %v1874 = vpack.c.b16 %v1634, %v1618
    %v1875 = vpack.c.b16 %v1635, %v1619
    %v1876 = vpack.c.b16 %v1652, %v1636
    %v1877 = vpack.c.b16 %v1653, %v1637
    %v1878 = vpack.c.b16 %v1654, %v1638
    %v1879 = vpack.c.b16 %v1655, %v1639
    %v1880 = vpack.c.b16 %v1656, %v1640
    %v1881 = vpack.c.b16 %v1657, %v1641
    %v1882 = vpack.c.b16 %v1658, %v1642
    %v1883 = vpack.c.b16 %v1659, %v1643
    %v1884 = vpack.c.b16 %v1660, %v1644
    %v1885 = vpack.c.b16 %v1661, %v1645
    %v1886 = vpack.c.b16 %v1662, %v1646
    %v1887 = vpack.c.b16 %v1663, %v1647
    %v1888 = vpack.c.b16 %v1664, %v1648
    %v1889 = vpack.c.b16 %v1665, %v1649
    %v1890 = vpack.c.b16 %v1666, %v1650
    %v1891 = vpack.c.b16 %v1667, %v1651
    %v1892 = vpack.c.b16 %v1684, %v1668
    %v1893 = vpack.c.b16 %v1685, %v1669
    %v1894 = vpack.c.b16 %v1686, %v1670
    %v1895 = vpack.c.b16 %v1687, %v1671
    %v1896 = vpack.c.b16 %v1688, %v1672
    %v1897 = vpack.c.b16 %v1689, %v1673
    %v1898 = vpack.c.b16 %v1690, %v1674
    %v1899 = vpack.c.b16 %v1691, %v1675
    %v1900 = vpack.c.b16 %v1692, %v1676
    %v1901 = vpack.c.b16 %v1693, %v1677
    %v1902 = vpack.c.b16 %v1694, %v1678
    %v1903 = vpack.c.b16 %v1695, %v1679
    %v1904 = vpack.c.b16 %v1696, %v1680
    %v1905 = vpack.c.b16 %v1697, %v1681
    %v1906 = vpack.c.b16 %v1698, %v1682
    %v1907 = vpack.c.b16 %v1699, %v1683
    %v1908 = vpack.c.b16 %v1716, %v1700
    %v1909 = vpack.c.b16 %v1717, %v1701
    %v1910 = vpack.c.b16 %v1718, %v1702
    %v1911 = vpack.c.b16 %v1719, %v1703
    %v1912 = vpack.c.b16 %v1720, %v1704
    %v1913 = vpack.c.b16 %v1721, %v1705
    %v1914 = vpack.c.b16 %v1722, %v1706
    %v1915 = vpack.c.b16 %v1723, %v1707
    %v1916 = vpack.c.b16 %v1724, %v1708
    %v1917 = vpack.c.b16 %v1725, %v1709
    %v1918 = vpack.c.b16 %v1726, %v1710
    %v1919 = vpack.c.b16 %v1727, %v1711
    %v1920 = vpack.c.b16 %v1728, %v1712
    %v1921 = vpack.c.b16 %v1729, %v1713
    %v1922 = vpack.c.b16 %v1730, %v1714
    %v1923 = vpack.c.b16 %v1731, %v1715
    %v1924 = vpack.c.b16 %v1748, %v1732
    %v1925 = vpack.c.b16 %v1749, %v1733
    %v1926 = vpack.c.b16 %v1750, %v1734
    %v1927 = vpack.c.b16 %v1751, %v1735
    %v1928 = vpack.c.b16 %v1752, %v1736
    %v1929 = vpack.c.b16 %v1753, %v1737
    %v1930 = vpack.c.b16 %v1754, %v1738
    %v1931 = vpack.c.b16 %v1755, %v1739
    %v1932 = vpack.c.b16 %v1756, %v1740
    %v1933 = vpack.c.b16 %v1757, %v1741
    %v1934 = vpack.c.b16 %v1758, %v1742
    %v1935 = vpack.c.b16 %v1759, %v1743
    %v1936 = vpack.c.b16 %v1760, %v1744
    %v1937 = vpack.c.b16 %v1761, %v1745
    %v1938 = vpack.c.b16 %v1762, %v1746
    %v1939 = vpack.c.b16 %v1763, %v1747
    %v1940 = vpack.c.b16 %v1780, %v1764
    %v1941 = vpack.c.b16 %v1781, %v1765
    %v1942 = vpack.c.b16 %v1782, %v1766
    %v1943 = vpack.c.b16 %v1783, %v1767
    %v1944 = vpack.c.b16 %v1784, %v1768
    %v1945 = vpack.c.b16 %v1785, %v1769
    %v1946 = vpack.c.b16 %v1786, %v1770
    %v1947 = vpack.c.b16 %v1787, %v1771
    %v1948 = vpack.c.b16 %v1788, %v1772
    %v1949 = vpack.c.b16 %v1789, %v1773
    %v1950 = vpack.c.b16 %v1790, %v1774
    %v1951 = vpack.c.b16 %v1791, %v1775
    %v1952 = vpack.c.b16 %v1792, %v1776
    %v1953 = vpack.c.b16 %v1793, %v1777
    %v1954 = vpack.c.b16 %v1794, %v1778
    %v1955 = vpack.c.b16 %v1795, %v1779
    %v1956 = vpack.c.b16 %v1812, %v1796
    %v1957 = vpack.c.b16 %v1813, %v1797
    %v1958 = vpack.c.b16 %v1814, %v1798
    %v1959 = vpack.c.b16 %v1815, %v1799
    %v1960 = vpack.c.b16 %v1816, %v1800
    %v1961 = vpack.c.b16 %v1817, %v1801
    %v1962 = vpack.c.b16 %v1818, %v1802
    %v1963 = vpack.c.b16 %v1819, %v1803
    %v1964 = vpack.c.b16 %v1820, %v1804
    %v1965 = vpack.c.b16 %v1821, %v1805
    %v1966 = vpack.c.b16 %v1822, %v1806
    %v1967 = vpack.c.b16 %v1823, %v1807
    %v1968 = vpack.c.b16 %v1824, %v1808
    %v1969 = vpack.c.b16 %v1825, %v1809
    %v1970 = vpack.c.b16 %v1826, %v1810
    %v1971 = vpack.c.b16 %v1827, %v1811
    %v1972 = vpack.c.b16 %v1844, %v1828
    %v1973 = vpack.c.b16 %v1845, %v1829
    %v1974 = vpack.c.b16 %v1846, %v1830
    %v1975 = vpack.c.b16 %v1847, %v1831
    %v1976 = vpack.c.b16 %v1848, %v1832
    %v1977 = vpack.c.b16 %v1849, %v1833
    %v1978 = vpack.c.b16 %v1850, %v1834
    %v1979 = vpack.c.b16 %v1851, %v1835
    %v1980 = vpack.c.b16 %v1852, %v1836
    %v1981 = vpack.c.b16 %v1853, %v1837
    %v1982 = vpack.c.b16 %v1854, %v1838
    %v1983 = vpack.c.b16 %v1855, %v1839
    %v1984 = vpack.c.b16 %v1856, %v1840
    %v1985 = vpack.c.b16 %v1857, %v1841
    %v1986 = vpack.c.b16 %v1858, %v1842
    %v1987 = vpack.c.b16 %v1859, %v1843
    %2116 = vmatprep.subr.bf16.mxu0 %v1861
    %2117 = vmatpush1.bf16.msra.mxu0 %v1860
    %2118 = vmatprep.subr.bf16.mxu0 %v1877
    %2119 = vmatpush1.bf16.msra.mxu0 %v1876
    %2120 = vmatprep.subr.bf16.mxu0 %v1893
    %2121 = vmatpush1.bf16.msra.mxu0 %v1892
    %2122 = vmatprep.subr.bf16.mxu0 %v1909
    %2123 = vmatpush1.bf16.msra.mxu0 %v1908
    %2124 = vmatprep.subr.bf16.mxu0 %v1925
    %2125 = vmatpush1.bf16.msra.mxu0 %v1924
    %2126 = vmatprep.subr.bf16.mxu0 %v1941
    %2127 = vmatpush1.bf16.msra.mxu0 %v1940
    %2128 = vmatprep.subr.bf16.mxu0 %v1957
    %2129 = vmatpush1.bf16.msra.mxu0 %v1956
    %2130 = vmatprep.subr.bf16.mxu0 %v1973
    %2131 = vmatpush1.bf16.msra.mxu0 %v1972
    %2132 = vmatprep.subr.bf16.mxu0 0
    %2133 = vmatpush1.bf16.msra.mxu0 0
    %2134 = vmatprep.subr.bf16.mxu0 0
    %2135 = vmatpush1.bf16.msra.mxu0 0
    %2136 = vmatprep.subr.bf16.mxu0 0
    %2137 = vmatpush1.bf16.msra.mxu0 0
    %2138 = vmatprep.subr.bf16.mxu0 0
    %2139 = vmatpush1.bf16.msra.mxu0 0
    %2140 = vmatprep.subr.bf16.mxu0 0
    %2141 = vmatpush1.bf16.msra.mxu0 0
    %2142 = vmatprep.subr.bf16.mxu0 0
    %2143 = vmatpush1.bf16.msra.mxu0 0
    %2144 = vmatprep.subr.bf16.mxu0 0
    %2145 = vmatpush1.bf16.msra.mxu0 0
    %2146 = vmatprep.subr.bf16.mxu0 0
    %2147 = vmatpush1.bf16.msra.mxu0 0
    %2148 = vmatprep.mubr.bf16.mxu0 0
    %2149 = vmatmul.mubr.bf16.gmra.mrb[0].mxu0 %v244
    %v2150 = vpop.f32.mrb[0].mxu0
    %v2151 = vadd.f32 %v1399, %v2150
    %v2152 = vpop.f32.mrb[0].mxu0
    %v2153 = vadd.f32 %v1403, %v2152
    %v2154 = vpop.f32.mrb[0].mxu0
    %v2155 = vadd.f32 %v1399, %v2154
    %v2156 = vpop.f32.mrb[0].mxu0
    %v2157 = vadd.f32 %v1403, %v2156
    %2158 = vmatprep.mubr.bf16.mxu0 0
    %2159 = vmatmul.mubr.bf16.gmra.mrb[0].mxu0 %v247
    %v2160 = vpop.f32.mrb[0].mxu0
    %v2161 = vadd.f32 %v1399, %v2160
    %v2162 = vpop.f32.mrb[0].mxu0
    %v2163 = vadd.f32 %v1403, %v2162
    %v2164 = vpop.f32.mrb[0].mxu0
    %v2165 = vadd.f32 %v1399, %v2164
    %v2166 = vpop.f32.mrb[0].mxu0
    %v2167 = vadd.f32 %v1403, %v2166
    %2168 = vdwg.mxu0
    %2169 = vmatprep.subr.bf16.mxu0 %v1863
    %2170 = vmatpush1.bf16.msra.mxu0 %v1862
    %2171 = vmatprep.subr.bf16.mxu0 %v1879
    %2172 = vmatpush1.bf16.msra.mxu0 %v1878
    %2173 = vmatprep.subr.bf16.mxu0 %v1895
    %2174 = vmatpush1.bf16.msra.mxu0 %v1894
    %2175 = vmatprep.subr.bf16.mxu0 %v1911
    %2176 = vmatpush1.bf16.msra.mxu0 %v1910
    %2177 = vmatprep.subr.bf16.mxu0 %v1927
    %2178 = vmatpush1.bf16.msra.mxu0 %v1926
    %2179 = vmatprep.subr.bf16.mxu0 %v1943
    %2180 = vmatpush1.bf16.msra.mxu0 %v1942
    %2181 = vmatprep.subr.bf16.mxu0 %v1959
    %2182 = vmatpush1.bf16.msra.mxu0 %v1958
    %2183 = vmatprep.subr.bf16.mxu0 %v1975
    %2184 = vmatpush1.bf16.msra.mxu0 %v1974
    %2185 = vmatprep.subr.bf16.mxu0 0
    %2186 = vmatpush1.bf16.msra.mxu0 0
    %2187 = vmatprep.subr.bf16.mxu0 0
    %2188 = vmatpush1.bf16.msra.mxu0 0
    %2189 = vmatprep.subr.bf16.mxu0 0
    %2190 = vmatpush1.bf16.msra.mxu0 0
    %2191 = vmatprep.subr.bf16.mxu0 0
    %2192 = vmatpush1.bf16.msra.mxu0 0
    %2193 = vmatprep.subr.bf16.mxu0 0
    %2194 = vmatpush1.bf16.msra.mxu0 0
    %2195 = vmatprep.subr.bf16.mxu0 0
    %2196 = vmatpush1.bf16.msra.mxu0 0
    %2197 = vmatprep.subr.bf16.mxu0 0
    %2198 = vmatpush1.bf16.msra.mxu0 0
    %2199 = vmatprep.subr.bf16.mxu0 0
    %2200 = vmatpush1.bf16.msra.mxu0 0
    %2201 = vmatprep.mubr.bf16.mxu0 0
    %2202 = vmatmul.mubr.bf16.gmra.mrb[0].mxu0 %v244
    %v2203 = vpop.f32.mrb[0].mxu0
    %v2204 = vadd.f32 %v1407, %v2203
    %v2205 = vpop.f32.mrb[0].mxu0
    %v2206 = vadd.f32 %v1411, %v2205
    %v2207 = vpop.f32.mrb[0].mxu0
    %v2208 = vadd.f32 %v1407, %v2207
    %v2209 = vpop.f32.mrb[0].mxu0
    %v2210 = vadd.f32 %v1411, %v2209
    %2211 = vmatprep.mubr.bf16.mxu0 0
    %2212 = vmatmul.mubr.bf16.gmra.mrb[0].mxu0 %v247
    %v2213 = vpop.f32.mrb[0].mxu0
    %v2214 = vadd.f32 %v1407, %v2213
    %v2215 = vpop.f32.mrb[0].mxu0
    %v2216 = vadd.f32 %v1411, %v2215
    %v2217 = vpop.f32.mrb[0].mxu0
    %v2218 = vadd.f32 %v1407, %v2217
    %v2219 = vpop.f32.mrb[0].mxu0
    %v2220 = vadd.f32 %v1411, %v2219
    %2221 = vdwg.mxu0
    %2222 = vmatprep.subr.bf16.mxu0 %v1865
    %2223 = vmatpush1.bf16.msra.mxu0 %v1864
    %2224 = vmatprep.subr.bf16.mxu0 %v1881
    %2225 = vmatpush1.bf16.msra.mxu0 %v1880
    %2226 = vmatprep.subr.bf16.mxu0 %v1897
    %2227 = vmatpush1.bf16.msra.mxu0 %v1896
    %2228 = vmatprep.subr.bf16.mxu0 %v1913
    %2229 = vmatpush1.bf16.msra.mxu0 %v1912
    %2230 = vmatprep.subr.bf16.mxu0 %v1929
    %2231 = vmatpush1.bf16.msra.mxu0 %v1928
    %2232 = vmatprep.subr.bf16.mxu0 %v1945
    %2233 = vmatpush1.bf16.msra.mxu0 %v1944
    %2234 = vmatprep.subr.bf16.mxu0 %v1961
    %2235 = vmatpush1.bf16.msra.mxu0 %v1960
    %2236 = vmatprep.subr.bf16.mxu0 %v1977
    %2237 = vmatpush1.bf16.msra.mxu0 %v1976
    %2238 = vmatprep.subr.bf16.mxu0 0
    %2239 = vmatpush1.bf16.msra.mxu0 0
    %2240 = vmatprep.subr.bf16.mxu0 0
    %2241 = vmatpush1.bf16.msra.mxu0 0
    %2242 = vmatprep.subr.bf16.mxu0 0
    %2243 = vmatpush1.bf16.msra.mxu0 0
    %2244 = vmatprep.subr.bf16.mxu0 0
    %2245 = vmatpush1.bf16.msra.mxu0 0
    %2246 = vmatprep.subr.bf16.mxu0 0
    %2247 = vmatpush1.bf16.msra.mxu0 0
    %2248 = vmatprep.subr.bf16.mxu0 0
    %2249 = vmatpush1.bf16.msra.mxu0 0
    %2250 = vmatprep.subr.bf16.mxu0 0
    %2251 = vmatpush1.bf16.msra.mxu0 0
    %2252 = vmatprep.subr.bf16.mxu0 0
    %2253 = vmatpush1.bf16.msra.mxu0 0
    %2254 = vmatprep.mubr.bf16.mxu0 0
    %2255 = vmatmul.mubr.bf16.gmra.mrb[0].mxu0 %v244
    %v2256 = vpop.f32.mrb[0].mxu0
    %v2257 = vadd.f32 %v1415, %v2256
    %v2258 = vpop.f32.mrb[0].mxu0
    %v2259 = vadd.f32 %v1419, %v2258
    %v2260 = vpop.f32.mrb[0].mxu0
    %v2261 = vadd.f32 %v1415, %v2260
    %v2262 = vpop.f32.mrb[0].mxu0
    %v2263 = vadd.f32 %v1419, %v2262
    %2264 = vmatprep.mubr.bf16.mxu0 0
    %2265 = vmatmul.mubr.bf16.gmra.mrb[0].mxu0 %v247
    %v2266 = vpop.f32.mrb[0].mxu0
    %v2267 = vadd.f32 %v1415, %v2266
    %v2268 = vpop.f32.mrb[0].mxu0
    %v2269 = vadd.f32 %v1419, %v2268
    %v2270 = vpop.f32.mrb[0].mxu0
    %v2271 = vadd.f32 %v1415, %v2270
    %v2272 = vpop.f32.mrb[0].mxu0
    %v2273 = vadd.f32 %v1419, %v2272
    %2274 = vdwg.mxu0
    %2275 = vmatprep.subr.bf16.mxu0 %v1867
    %2276 = vmatpush1.bf16.msra.mxu0 %v1866
    %2277 = vmatprep.subr.bf16.mxu0 %v1883
    %2278 = vmatpush1.bf16.msra.mxu0 %v1882
    %2279 = vmatprep.subr.bf16.mxu0 %v1899
    %2280 = vmatpush1.bf16.msra.mxu0 %v1898
    %2281 = vmatprep.subr.bf16.mxu0 %v1915
    %2282 = vmatpush1.bf16.msra.mxu0 %v1914
    %2283 = vmatprep.subr.bf16.mxu0 %v1931
    %2284 = vmatpush1.bf16.msra.mxu0 %v1930
    %2285 = vmatprep.subr.bf16.mxu0 %v1947
    %2286 = vmatpush1.bf16.msra.mxu0 %v1946
    %2287 = vmatprep.subr.bf16.mxu0 %v1963
    %2288 = vmatpush1.bf16.msra.mxu0 %v1962
    %2289 = vmatprep.subr.bf16.mxu0 %v1979
    %2290 = vmatpush1.bf16.msra.mxu0 %v1978
    %2291 = vmatprep.subr.bf16.mxu0 0
    %2292 = vmatpush1.bf16.msra.mxu0 0
    %2293 = vmatprep.subr.bf16.mxu0 0
    %2294 = vmatpush1.bf16.msra.mxu0 0
    %2295 = vmatprep.subr.bf16.mxu0 0
    %2296 = vmatpush1.bf16.msra.mxu0 0
    %2297 = vmatprep.subr.bf16.mxu0 0
    %2298 = vmatpush1.bf16.msra.mxu0 0
    %2299 = vmatprep.subr.bf16.mxu0 0
    %2300 = vmatpush1.bf16.msra.mxu0 0
    %2301 = vmatprep.subr.bf16.mxu0 0
    %2302 = vmatpush1.bf16.msra.mxu0 0
    %2303 = vmatprep.subr.bf16.mxu0 0
    %2304 = vmatpush1.bf16.msra.mxu0 0
    %2305 = vmatprep.subr.bf16.mxu0 0
    %2306 = vmatpush1.bf16.msra.mxu0 0
    %2307 = vmatprep.mubr.bf16.mxu0 0
    %2308 = vmatmul.mubr.bf16.gmra.mrb[0].mxu0 %v244
    %v2309 = vpop.f32.mrb[0].mxu0
    %v2310 = vadd.f32 %v1423, %v2309
    %v2311 = vpop.f32.mrb[0].mxu0
    %v2312 = vadd.f32 %v1427, %v2311
    %v2313 = vpop.f32.mrb[0].mxu0
    %v2314 = vadd.f32 %v1423, %v2313
    %v2315 = vpop.f32.mrb[0].mxu0
    %v2316 = vadd.f32 %v1427, %v2315
    %2317 = vmatprep.mubr.bf16.mxu0 0
    %2318 = vmatmul.mubr.bf16.gmra.mrb[0].mxu0 %v247
    %v2319 = vpop.f32.mrb[0].mxu0
    %v2320 = vadd.f32 %v1423, %v2319
    %v2321 = vpop.f32.mrb[0].mxu0
    %v2322 = vadd.f32 %v1427, %v2321
    %v2323 = vpop.f32.mrb[0].mxu0
    %v2324 = vadd.f32 %v1423, %v2323
    %v2325 = vpop.f32.mrb[0].mxu0
    %v2326 = vadd.f32 %v1427, %v2325
    %2327 = vdwg.mxu0
    %2328 = vmatprep.subr.bf16.mxu0 %v1869
    %2329 = vmatpush1.bf16.msra.mxu0 %v1868
    %2330 = vmatprep.subr.bf16.mxu0 %v1885
    %2331 = vmatpush1.bf16.msra.mxu0 %v1884
    %2332 = vmatprep.subr.bf16.mxu0 %v1901
    %2333 = vmatpush1.bf16.msra.mxu0 %v1900
    %2334 = vmatprep.subr.bf16.mxu0 %v1917
    %2335 = vmatpush1.bf16.msra.mxu0 %v1916
    %2336 = vmatprep.subr.bf16.mxu0 %v1933
    %2337 = vmatpush1.bf16.msra.mxu0 %v1932
    %2338 = vmatprep.subr.bf16.mxu0 %v1949
    %2339 = vmatpush1.bf16.msra.mxu0 %v1948
    %2340 = vmatprep.subr.bf16.mxu0 %v1965
    %2341 = vmatpush1.bf16.msra.mxu0 %v1964
    %2342 = vmatprep.subr.bf16.mxu0 %v1981
    %2343 = vmatpush1.bf16.msra.mxu0 %v1980
    %2344 = vmatprep.subr.bf16.mxu0 0
    %2345 = vmatpush1.bf16.msra.mxu0 0
    %2346 = vmatprep.subr.bf16.mxu0 0
    %2347 = vmatpush1.bf16.msra.mxu0 0
    %2348 = vmatprep.subr.bf16.mxu0 0
    %2349 = vmatpush1.bf16.msra.mxu0 0
    %2350 = vmatprep.subr.bf16.mxu0 0
    %2351 = vmatpush1.bf16.msra.mxu0 0
    %2352 = vmatprep.subr.bf16.mxu0 0
    %2353 = vmatpush1.bf16.msra.mxu0 0
    %2354 = vmatprep.subr.bf16.mxu0 0
    %2355 = vmatpush1.bf16.msra.mxu0 0
    %2356 = vmatprep.subr.bf16.mxu0 0
    %2357 = vmatpush1.bf16.msra.mxu0 0
    %2358 = vmatprep.subr.bf16.mxu0 0
    %2359 = vmatpush1.bf16.msra.mxu0 0
    %2360 = vmatprep.mubr.bf16.mxu0 0
    %2361 = vmatmul.mubr.bf16.gmra.mrb[0].mxu0 %v244
    %v2362 = vpop.f32.mrb[0].mxu0
    %v2363 = vadd.f32 %v1431, %v2362
    %v2364 = vpop.f32.mrb[0].mxu0
    %v2365 = vadd.f32 %v1435, %v2364
    %v2366 = vpop.f32.mrb[0].mxu0
    %v2367 = vadd.f32 %v1431, %v2366
    %v2368 = vpop.f32.mrb[0].mxu0
    %v2369 = vadd.f32 %v1435, %v2368
    %2370 = vmatprep.mubr.bf16.mxu0 0
    %2371 = vmatmul.mubr.bf16.gmra.mrb[0].mxu0 %v247
    %v2372 = vpop.f32.mrb[0].mxu0
    %v2373 = vadd.f32 %v1431, %v2372
    %v2374 = vpop.f32.mrb[0].mxu0
    %v2375 = vadd.f32 %v1435, %v2374
    %v2376 = vpop.f32.mrb[0].mxu0
    %v2377 = vadd.f32 %v1431, %v2376
    %v2378 = vpop.f32.mrb[0].mxu0
    %v2379 = vadd.f32 %v1435, %v2378
    %2380 = vdwg.mxu0
    %2381 = vmatprep.subr.bf16.mxu0 %v1871
    %2382 = vmatpush1.bf16.msra.mxu0 %v1870
    %2383 = vmatprep.subr.bf16.mxu0 %v1887
    %2384 = vmatpush1.bf16.msra.mxu0 %v1886
    %2385 = vmatprep.subr.bf16.mxu0 %v1903
    %2386 = vmatpush1.bf16.msra.mxu0 %v1902
    %2387 = vmatprep.subr.bf16.mxu0 %v1919
    %2388 = vmatpush1.bf16.msra.mxu0 %v1918
    %2389 = vmatprep.subr.bf16.mxu0 %v1935
    %2390 = vmatpush1.bf16.msra.mxu0 %v1934
    %2391 = vmatprep.subr.bf16.mxu0 %v1951
    %2392 = vmatpush1.bf16.msra.mxu0 %v1950
    %2393 = vmatprep.subr.bf16.mxu0 %v1967
    %2394 = vmatpush1.bf16.msra.mxu0 %v1966
    %2395 = vmatprep.subr.bf16.mxu0 %v1983
    %2396 = vmatpush1.bf16.msra.mxu0 %v1982
    %2397 = vmatprep.subr.bf16.mxu0 0
    %2398 = vmatpush1.bf16.msra.mxu0 0
    %2399 = vmatprep.subr.bf16.mxu0 0
    %2400 = vmatpush1.bf16.msra.mxu0 0
    %2401 = vmatprep.subr.bf16.mxu0 0
    %2402 = vmatpush1.bf16.msra.mxu0 0
    %2403 = vmatprep.subr.bf16.mxu0 0
    %2404 = vmatpush1.bf16.msra.mxu0 0
    %2405 = vmatprep.subr.bf16.mxu0 0
    %2406 = vmatpush1.bf16.msra.mxu0 0
    %2407 = vmatprep.subr.bf16.mxu0 0
    %2408 = vmatpush1.bf16.msra.mxu0 0
    %2409 = vmatprep.subr.bf16.mxu0 0
    %2410 = vmatpush1.bf16.msra.mxu0 0
    %2411 = vmatprep.subr.bf16.mxu0 0
    %2412 = vmatpush1.bf16.msra.mxu0 0
    %2413 = vmatprep.mubr.bf16.mxu0 0
    %2414 = vmatmul.mubr.bf16.gmra.mrb[0].mxu0 %v244
    %v2415 = vpop.f32.mrb[0].mxu0
    %v2416 = vadd.f32 %v1439, %v2415
    %v2417 = vpop.f32.mrb[0].mxu0
    %v2418 = vadd.f32 %v1443, %v2417
    %v2419 = vpop.f32.mrb[0].mxu0
    %v2420 = vadd.f32 %v1439, %v2419
    %v2421 = vpop.f32.mrb[0].mxu0
    %v2422 = vadd.f32 %v1443, %v2421
    %2423 = vmatprep.mubr.bf16.mxu0 0
    %2424 = vmatmul.mubr.bf16.gmra.mrb[0].mxu0 %v247
    %v2425 = vpop.f32.mrb[0].mxu0
    %v2426 = vadd.f32 %v1439, %v2425
    %v2427 = vpop.f32.mrb[0].mxu0
    %v2428 = vadd.f32 %v1443, %v2427
    %v2429 = vpop.f32.mrb[0].mxu0
    %v2430 = vadd.f32 %v1439, %v2429
    %v2431 = vpop.f32.mrb[0].mxu0
    %v2432 = vadd.f32 %v1443, %v2431
    %2433 = vdwg.mxu0
    %2434 = vmatprep.subr.bf16.mxu0 %v1873
    %2435 = vmatpush1.bf16.msra.mxu0 %v1872
    %2436 = vmatprep.subr.bf16.mxu0 %v1889
    %2437 = vmatpush1.bf16.msra.mxu0 %v1888
    %2438 = vmatprep.subr.bf16.mxu0 %v1905
    %2439 = vmatpush1.bf16.msra.mxu0 %v1904
    %2440 = vmatprep.subr.bf16.mxu0 %v1921
    %2441 = vmatpush1.bf16.msra.mxu0 %v1920
    %2442 = vmatprep.subr.bf16.mxu0 %v1937
    %2443 = vmatpush1.bf16.msra.mxu0 %v1936
    %2444 = vmatprep.subr.bf16.mxu0 %v1953
    %2445 = vmatpush1.bf16.msra.mxu0 %v1952
    %2446 = vmatprep.subr.bf16.mxu0 %v1969
    %2447 = vmatpush1.bf16.msra.mxu0 %v1968
    %2448 = vmatprep.subr.bf16.mxu0 %v1985
    %2449 = vmatpush1.bf16.msra.mxu0 %v1984
    %2450 = vmatprep.subr.bf16.mxu0 0
    %2451 = vmatpush1.bf16.msra.mxu0 0
    %2452 = vmatprep.subr.bf16.mxu0 0
    %2453 = vmatpush1.bf16.msra.mxu0 0
    %2454 = vmatprep.subr.bf16.mxu0 0
    %2455 = vmatpush1.bf16.msra.mxu0 0
    %2456 = vmatprep.subr.bf16.mxu0 0
    %2457 = vmatpush1.bf16.msra.mxu0 0
    %2458 = vmatprep.subr.bf16.mxu0 0
    %2459 = vmatpush1.bf16.msra.mxu0 0
    %2460 = vmatprep.subr.bf16.mxu0 0
    %2461 = vmatpush1.bf16.msra.mxu0 0
    %2462 = vmatprep.subr.bf16.mxu0 0
    %2463 = vmatpush1.bf16.msra.mxu0 0
    %2464 = vmatprep.subr.bf16.mxu0 0
    %2465 = vmatpush1.bf16.msra.mxu0 0
    %2466 = vmatprep.mubr.bf16.mxu0 0
    %2467 = vmatmul.mubr.bf16.gmra.mrb[0].mxu0 %v244
    %v2468 = vpop.f32.mrb[0].mxu0
    %v2469 = vadd.f32 %v1447, %v2468
    %v2470 = vpop.f32.mrb[0].mxu0
    %v2471 = vadd.f32 %v1451, %v2470
    %v2472 = vpop.f32.mrb[0].mxu0
    %v2473 = vadd.f32 %v1447, %v2472
    %v2474 = vpop.f32.mrb[0].mxu0
    %v2475 = vadd.f32 %v1451, %v2474
    %2476 = vmatprep.mubr.bf16.mxu0 0
    %2477 = vmatmul.mubr.bf16.gmra.mrb[0].mxu0 %v247
    %v2478 = vpop.f32.mrb[0].mxu0
    %v2479 = vadd.f32 %v1447, %v2478
    %v2480 = vpop.f32.mrb[0].mxu0
    %v2481 = vadd.f32 %v1451, %v2480
    %v2482 = vpop.f32.mrb[0].mxu0
    %v2483 = vadd.f32 %v1447, %v2482
    %v2484 = vpop.f32.mrb[0].mxu0
    %v2485 = vadd.f32 %v1451, %v2484
    %2486 = vdwg.mxu0
    %2487 = vmatprep.subr.bf16.mxu0 %v1875
    %2488 = vmatpush1.bf16.msra.mxu0 %v1874
    %2489 = vmatprep.subr.bf16.mxu0 %v1891
    %2490 = vmatpush1.bf16.msra.mxu0 %v1890
    %2491 = vmatprep.subr.bf16.mxu0 %v1907
    %2492 = vmatpush1.bf16.msra.mxu0 %v1906
    %2493 = vmatprep.subr.bf16.mxu0 %v1923
    %2494 = vmatpush1.bf16.msra.mxu0 %v1922
    %2495 = vmatprep.subr.bf16.mxu0 %v1939
    %2496 = vmatpush1.bf16.msra.mxu0 %v1938
    %2497 = vmatprep.subr.bf16.mxu0 %v1955
    %2498 = vmatpush1.bf16.msra.mxu0 %v1954
    %2499 = vmatprep.subr.bf16.mxu0 %v1971
    %2500 = vmatpush1.bf16.msra.mxu0 %v1970
    %2501 = vmatprep.subr.bf16.mxu0 %v1987
    %2502 = vmatpush1.bf16.msra.mxu0 %v1986
    %2503 = vmatprep.subr.bf16.mxu0 0
    %2504 = vmatpush1.bf16.msra.mxu0 0
    %2505 = vmatprep.subr.bf16.mxu0 0
    %2506 = vmatpush1.bf16.msra.mxu0 0
    %2507 = vmatprep.subr.bf16.mxu0 0
    %2508 = vmatpush1.bf16.msra.mxu0 0
    %2509 = vmatprep.subr.bf16.mxu0 0
    %2510 = vmatpush1.bf16.msra.mxu0 0
    %2511 = vmatprep.subr.bf16.mxu0 0
    %2512 = vmatpush1.bf16.msra.mxu0 0
    %2513 = vmatprep.subr.bf16.mxu0 0
    %2514 = vmatpush1.bf16.msra.mxu0 0
    %2515 = vmatprep.subr.bf16.mxu0 0
    %2516 = vmatpush1.bf16.msra.mxu0 0
    %2517 = vmatprep.subr.bf16.mxu0 0
    %2518 = vmatpush1.bf16.msra.mxu0 0
    %2519 = vmatprep.mubr.bf16.mxu0 0
    %2520 = vmatmul.mubr.bf16.gmra.mrb[0].mxu0 %v244
    %v2521 = vpop.f32.mrb[0].mxu0
    %v2522 = vadd.f32 %v1455, %v2521
    %v2523 = vpop.f32.mrb[0].mxu0
    %v2524 = vadd.f32 %v1459, %v2523
    %v2525 = vpop.f32.mrb[0].mxu0
    %v2526 = vadd.f32 %v1455, %v2525
    %v2527 = vpop.f32.mrb[0].mxu0
    %v2528 = vadd.f32 %v1459, %v2527
    %2529 = vmatprep.mubr.bf16.mxu0 0
    %2530 = vmatmul.mubr.bf16.gmra.mrb[0].mxu0 %v247
    %v2531 = vpop.f32.mrb[0].mxu0
    %v2532 = vadd.f32 %v1455, %v2531
    %v2533 = vpop.f32.mrb[0].mxu0
    %v2534 = vadd.f32 %v1459, %v2533
    %v2535 = vpop.f32.mrb[0].mxu0
    %v2536 = vadd.f32 %v1455, %v2535
    %v2537 = vpop.f32.mrb[0].mxu0
    %v2538 = vadd.f32 %v1459, %v2537
    %2539 = vdwg.mxu0
    %2540 = vmatprep.subr.bf16.mxu0 0
    %2541 = vmatpush1.bf16.msra.mxu0 %v1257
    %2542 = vmatprep.subr.bf16.mxu0 0
    %2543 = vmatpush1.bf16.msra.mxu0 0
    %2544 = vmatprep.subr.bf16.mxu0 0
    %2545 = vmatpush1.bf16.msra.mxu0 0
    %2546 = vmatprep.subr.bf16.mxu0 0
    %2547 = vmatpush1.bf16.msra.mxu0 0
    %2548 = vmatprep.subr.bf16.mxu0 0
    %2549 = vmatpush1.bf16.msra.mxu0 0
    %2550 = vmatprep.subr.bf16.mxu0 0
    %2551 = vmatpush1.bf16.msra.mxu0 0
    %2552 = vmatprep.subr.bf16.mxu0 0
    %2553 = vmatpush1.bf16.msra.mxu0 0
    %2554 = vmatprep.subr.bf16.mxu0 0
    %2555 = vmatpush1.bf16.msra.mxu0 0
    %2556 = vmatprep.subr.bf16.mxu0 0
    %2557 = vmatpush1.bf16.msra.mxu0 0
    %2558 = vmatprep.subr.bf16.mxu0 0
    %2559 = vmatpush1.bf16.msra.mxu0 0
    %2560 = vmatprep.subr.bf16.mxu0 0
    %2561 = vmatpush1.bf16.msra.mxu0 0
    %2562 = vmatprep.subr.bf16.mxu0 0
    %2563 = vmatpush1.bf16.msra.mxu0 0
    %2564 = vmatprep.subr.bf16.mxu0 0
    %2565 = vmatpush1.bf16.msra.mxu0 0
    %2566 = vmatprep.subr.bf16.mxu0 0
    %2567 = vmatpush1.bf16.msra.mxu0 0
    %2568 = vmatprep.subr.bf16.mxu0 0
    %2569 = vmatpush1.bf16.msra.mxu0 0
    %2570 = vmatprep.subr.bf16.mxu0 0
    %2571 = vmatpush1.bf16.msra.mxu0 0
    %2572 = vmatprep.mubr.bf16.mxu0 0
    %2573 = vmatmul.mubr.bf16.gmra.mrb[0].mxu0 %v589
    %v2574 = vpop.f32.mrb[0].mxu0
    %v2575 = vadd.f32 0.0, %v2574
    %v2576 = vpop.f32.mrb[0].mxu0
    %v2577 = vpop.f32.mrb[0].mxu0
    %v2578 = vadd.f32 0.0, %v2577
    %v2579 = vpop.f32.mrb[0].mxu0
    %2580 = vmatprep.mubr.bf16.mxu0 0
    %2581 = vmatmul.mubr.bf16.gmra.mrb[0].mxu0 %v592
    %v2582 = vpop.f32.mrb[0].mxu0
    %v2583 = vadd.f32 0.0, %v2582
    %v2584 = vpop.f32.mrb[0].mxu0
    %v2585 = vpop.f32.mrb[0].mxu0
    %v2586 = vadd.f32 0.0, %v2585
    %v2587 = vpop.f32.mrb[0].mxu0
    %2588 = vdwg.mxu0
    %v2589 = vpack.c.bf16 %v2578, %v2575
    %v2590 = vpack.c.bf16 %v2586, %v2583
    %v2591 = vld [vmem:[%s10 + $0x10] sm:$0xff]
    %v2592 = vld [vmem:[%s10 + $0x18] sm:$0xff]
    %v2593 = vld [vmem:[%s10 + $0x20] sm:$0xff]
    %v2594 = vld [vmem:[%s10 + $0x28] sm:$0xff]
    %v2595 = vld [vmem:[%s10 + $0x30] sm:$0xff]
    %v2596 = vld [vmem:[%s10 + $0x38] sm:$0xff]
    %v2597 = vld [vmem:[%s10 + $0x40] sm:$0xff]
    %v2598 = vld [vmem:[%s10 + $0x48] sm:$0xff]
    %v2599 = vld [vmem:[%s10 + $0xe0] sm:$0xff]
    %v2600 = vld [vmem:[%s10 + $0xe8] sm:$0xff]
    %v2601 = vld [vmem:[%s10 + $0xf0] sm:$0xff]
    %v2602 = vld [vmem:[%s10 + $0xf8] sm:$0xff]
    %v2603 = vld [vmem:[%s10 + $0x100] sm:$0xff]
    %v2604 = vld [vmem:[%s10 + $0x108] sm:$0xff]
    %v2605 = vld [vmem:[%s10 + $0x110] sm:$0xff]
    %v2606 = vld [vmem:[%s10 + $0x118] sm:$0xff]
    %v2607 = vld [vmem:[%s10 + $0x1b0] sm:$0xff]
    %v2608 = vld [vmem:[%s10 + $0x1b8] sm:$0xff]
    %v2609 = vld [vmem:[%s10 + $0x1c0] sm:$0xff]
    %v2610 = vld [vmem:[%s10 + $0x1c8] sm:$0xff]
    %v2611 = vld [vmem:[%s10 + $0x1d0] sm:$0xff]
    %v2612 = vld [vmem:[%s10 + $0x1d8] sm:$0xff]
    %v2613 = vld [vmem:[%s10 + $0x1e0] sm:$0xff]
    %v2614 = vld [vmem:[%s10 + $0x1e8] sm:$0xff]
    %v2615 = vld [vmem:[%s10 + $0x280] sm:$0xff]
    %v2616 = vld [vmem:[%s10 + $0x288] sm:$0xff]
    %v2617 = vld [vmem:[%s10 + $0x290] sm:$0xff]
    %v2618 = vld [vmem:[%s10 + $0x298] sm:$0xff]
    %v2619 = vld [vmem:[%s10 + $0x2a0] sm:$0xff]
    %v2620 = vld [vmem:[%s10 + $0x2a8] sm:$0xff]
    %v2621 = vld [vmem:[%s10 + $0x2b0] sm:$0xff]
    %v2622 = vld [vmem:[%s10 + $0x2b8] sm:$0xff]
    %v2655 = vunpack.c.l.b16 %v2591
    %v2656 = vunpack.c.h.b16 %v2591
    %v2657 = vunpack.c.l.b16 %v2592
    %v2658 = vunpack.c.h.b16 %v2592
    %v2659 = vunpack.c.l.b16 %v2593
    %v2660 = vunpack.c.h.b16 %v2593
    %v2661 = vunpack.c.l.b16 %v2594
    %v2662 = vunpack.c.h.b16 %v2594
    %v2663 = vunpack.c.l.b16 %v2595
    %v2664 = vunpack.c.h.b16 %v2595
    %v2665 = vunpack.c.l.b16 %v2596
    %v2666 = vunpack.c.h.b16 %v2596
    %v2667 = vunpack.c.l.b16 %v2597
    %v2668 = vunpack.c.h.b16 %v2597
    %v2669 = vunpack.c.l.b16 %v2598
    %v2670 = vunpack.c.h.b16 %v2598
    %v2671 = vunpack.c.l.b16 %v2599
    %v2672 = vunpack.c.h.b16 %v2599
    %v2673 = vunpack.c.l.b16 %v2600
    %v2674 = vunpack.c.h.b16 %v2600
    %v2675 = vunpack.c.l.b16 %v2601
    %v2676 = vunpack.c.h.b16 %v2601
    %v2677 = vunpack.c.l.b16 %v2602
    %v2678 = vunpack.c.h.b16 %v2602
    %v2679 = vunpack.c.l.b16 %v2603
    %v2680 = vunpack.c.h.b16 %v2603
    %v2681 = vunpack.c.l.b16 %v2604
    %v2682 = vunpack.c.h.b16 %v2604
    %v2683 = vunpack.c.l.b16 %v2605
    %v2684 = vunpack.c.h.b16 %v2605
    %v2685 = vunpack.c.l.b16 %v2606
    %v2686 = vunpack.c.h.b16 %v2606
    %v2687 = vunpack.c.l.b16 %v2607
    %v2688 = vunpack.c.h.b16 %v2607
    %v2689 = vunpack.c.l.b16 %v2608
    %v2690 = vunpack.c.h.b16 %v2608
    %v2691 = vunpack.c.l.b16 %v2609
    %v2692 = vunpack.c.h.b16 %v2609
    %v2693 = vunpack.c.l.b16 %v2610
    %v2694 = vunpack.c.h.b16 %v2610
    %v2695 = vunpack.c.l.b16 %v2611
    %v2696 = vunpack.c.h.b16 %v2611
    %v2697 = vunpack.c.l.b16 %v2612
    %v2698 = vunpack.c.h.b16 %v2612
    %v2699 = vunpack.c.l.b16 %v2613
    %v2700 = vunpack.c.h.b16 %v2613
    %v2701 = vunpack.c.l.b16 %v2614
    %v2702 = vunpack.c.h.b16 %v2614
    %v2703 = vunpack.c.l.b16 %v2615
    %v2704 = vunpack.c.h.b16 %v2615
    %v2705 = vunpack.c.l.b16 %v2616
    %v2706 = vunpack.c.h.b16 %v2616
    %v2707 = vunpack.c.l.b16 %v2617
    %v2708 = vunpack.c.h.b16 %v2617
    %v2709 = vunpack.c.l.b16 %v2618
    %v2710 = vunpack.c.h.b16 %v2618
    %v2711 = vunpack.c.l.b16 %v2619
    %v2712 = vunpack.c.h.b16 %v2619
    %v2713 = vunpack.c.l.b16 %v2620
    %v2714 = vunpack.c.h.b16 %v2620
    %v2715 = vunpack.c.l.b16 %v2621
    %v2716 = vunpack.c.h.b16 %v2621
    %v2717 = vunpack.c.l.b16 %v2622
    %v2718 = vunpack.c.h.b16 %v2622
    %v2719 = vpack.c.b16 %v2671, %v2655
    %v2720 = vpack.c.b16 %v2672, %v2656
    %v2721 = vpack.c.b16 %v2673, %v2657
    %v2722 = vpack.c.b16 %v2674, %v2658
    %v2723 = vpack.c.b16 %v2675, %v2659
    %v2724 = vpack.c.b16 %v2676, %v2660
    %v2725 = vpack.c.b16 %v2677, %v2661
    %v2726 = vpack.c.b16 %v2678, %v2662
    %v2727 = vpack.c.b16 %v2679, %v2663
    %v2728 = vpack.c.b16 %v2680, %v2664
    %v2729 = vpack.c.b16 %v2681, %v2665
    %v2730 = vpack.c.b16 %v2682, %v2666
    %v2731 = vpack.c.b16 %v2683, %v2667
    %v2732 = vpack.c.b16 %v2684, %v2668
    %v2733 = vpack.c.b16 %v2685, %v2669
    %v2734 = vpack.c.b16 %v2686, %v2670
    %v2735 = vpack.c.b16 %v2703, %v2687
    %v2736 = vpack.c.b16 %v2704, %v2688
    %v2737 = vpack.c.b16 %v2705, %v2689
    %v2738 = vpack.c.b16 %v2706, %v2690
    %v2739 = vpack.c.b16 %v2707, %v2691
    %v2740 = vpack.c.b16 %v2708, %v2692
    %v2741 = vpack.c.b16 %v2709, %v2693
    %v2742 = vpack.c.b16 %v2710, %v2694
    %v2743 = vpack.c.b16 %v2711, %v2695
    %v2744 = vpack.c.b16 %v2712, %v2696
    %v2745 = vpack.c.b16 %v2713, %v2697
    %v2746 = vpack.c.b16 %v2714, %v2698
    %v2747 = vpack.c.b16 %v2715, %v2699
    %v2748 = vpack.c.b16 %v2716, %v2700
    %v2749 = vpack.c.b16 %v2717, %v2701
    %v2750 = vpack.c.b16 %v2718, %v2702
    %v2784 = vsel %vm1026, %v2589, 0
    %v2787 = vsel %vm1026, %v2590, 0
    %2789 = vmatprep.subr.bf16.mxu0 %v2720
    %2790 = vmatpush1.bf16.msra.mxu0 %v2719
    %2791 = vmatprep.subr.bf16.mxu0 %v2736
    %2792 = vmatpush1.bf16.msra.mxu0 %v2735
    %2793 = vmatprep.subr.bf16.mxu0 0
    %2794 = vmatpush1.bf16.msra.mxu0 0
    %2795 = vmatprep.subr.bf16.mxu0 0
    %2796 = vmatpush1.bf16.msra.mxu0 0
    %2797 = vmatprep.subr.bf16.mxu0 0
    %2798 = vmatpush1.bf16.msra.mxu0 0
    %2799 = vmatprep.subr.bf16.mxu0 0
    %2800 = vmatpush1.bf16.msra.mxu0 0
    %2801 = vmatprep.subr.bf16.mxu0 0
    %2802 = vmatpush1.bf16.msra.mxu0 0
    %2803 = vmatprep.subr.bf16.mxu0 0
    %2804 = vmatpush1.bf16.msra.mxu0 0
    %2805 = vmatprep.subr.bf16.mxu0 0
    %2806 = vmatpush1.bf16.msra.mxu0 0
    %2807 = vmatprep.subr.bf16.mxu0 0
    %2808 = vmatpush1.bf16.msra.mxu0 0
    %2809 = vmatprep.subr.bf16.mxu0 0
    %2810 = vmatpush1.bf16.msra.mxu0 0
    %2811 = vmatprep.subr.bf16.mxu0 0
    %2812 = vmatpush1.bf16.msra.mxu0 0
    %2813 = vmatprep.subr.bf16.mxu0 0
    %2814 = vmatpush1.bf16.msra.mxu0 0
    %2815 = vmatprep.subr.bf16.mxu0 0
    %2816 = vmatpush1.bf16.msra.mxu0 0
    %2817 = vmatprep.subr.bf16.mxu0 0
    %2818 = vmatpush1.bf16.msra.mxu0 0
    %2819 = vmatprep.subr.bf16.mxu0 0
    %2820 = vmatpush1.bf16.msra.mxu0 0
    %2821 = vmatprep.mubr.bf16.mxu0 0
    %2822 = vmatmul.mubr.bf16.gmra.mrb[0].mxu0 %v2784
    %v2823 = vpop.f32.mrb[0].mxu0
    %v2824 = vadd.f32 0.0, %v2823
    %v2825 = vpop.f32.mrb[0].mxu0
    %v2826 = vadd.f32 0.0, %v2825
    %v2827 = vpop.f32.mrb[0].mxu0
    %v2828 = vadd.f32 0.0, %v2827
    %v2829 = vpop.f32.mrb[0].mxu0
    %v2830 = vadd.f32 0.0, %v2829
    %2831 = vmatprep.mubr.bf16.mxu0 0
    %2832 = vmatmul.mubr.bf16.gmra.mrb[0].mxu0 %v2787
    %v2833 = vpop.f32.mrb[0].mxu0
    %v2834 = vadd.f32 0.0, %v2833
    %v2835 = vpop.f32.mrb[0].mxu0
    %v2836 = vadd.f32 0.0, %v2835
    %v2837 = vpop.f32.mrb[0].mxu0
    %v2838 = vadd.f32 0.0, %v2837
    %v2839 = vpop.f32.mrb[0].mxu0
    %v2840 = vadd.f32 0.0, %v2839
    %2841 = vdwg.mxu0
    %2842 = vmatprep.subr.bf16.mxu0 %v2722
    %2843 = vmatpush1.bf16.msra.mxu0 %v2721
    %2844 = vmatprep.subr.bf16.mxu0 %v2738
    %2845 = vmatpush1.bf16.msra.mxu0 %v2737
    %2846 = vmatprep.subr.bf16.mxu0 0
    %2847 = vmatpush1.bf16.msra.mxu0 0
    %2848 = vmatprep.subr.bf16.mxu0 0
    %2849 = vmatpush1.bf16.msra.mxu0 0
    %2850 = vmatprep.subr.bf16.mxu0 0
    %2851 = vmatpush1.bf16.msra.mxu0 0
    %2852 = vmatprep.subr.bf16.mxu0 0
    %2853 = vmatpush1.bf16.msra.mxu0 0
    %2854 = vmatprep.subr.bf16.mxu0 0
    %2855 = vmatpush1.bf16.msra.mxu0 0
    %2856 = vmatprep.subr.bf16.mxu0 0
    %2857 = vmatpush1.bf16.msra.mxu0 0
    %2858 = vmatprep.subr.bf16.mxu0 0
    %2859 = vmatpush1.bf16.msra.mxu0 0
    %2860 = vmatprep.subr.bf16.mxu0 0
    %2861 = vmatpush1.bf16.msra.mxu0 0
    %2862 = vmatprep.subr.bf16.mxu0 0
    %2863 = vmatpush1.bf16.msra.mxu0 0
    %2864 = vmatprep.subr.bf16.mxu0 0
    %2865 = vmatpush1.bf16.msra.mxu0 0
    %2866 = vmatprep.subr.bf16.mxu0 0
    %2867 = vmatpush1.bf16.msra.mxu0 0
    %2868 = vmatprep.subr.bf16.mxu0 0
    %2869 = vmatpush1.bf16.msra.mxu0 0
    %2870 = vmatprep.subr.bf16.mxu0 0
    %2871 = vmatpush1.bf16.msra.mxu0 0
    %2872 = vmatprep.subr.bf16.mxu0 0
    %2873 = vmatpush1.bf16.msra.mxu0 0
    %2874 = vmatprep.mubr.bf16.mxu0 0
    %2875 = vmatmul.mubr.bf16.gmra.mrb[0].mxu0 %v2784
    %v2876 = vpop.f32.mrb[0].mxu0
    %v2877 = vadd.f32 0.0, %v2876
    %v2878 = vpop.f32.mrb[0].mxu0
    %v2879 = vadd.f32 0.0, %v2878
    %v2880 = vpop.f32.mrb[0].mxu0
    %v2881 = vadd.f32 0.0, %v2880
    %v2882 = vpop.f32.mrb[0].mxu0
    %v2883 = vadd.f32 0.0, %v2882
    %2884 = vmatprep.mubr.bf16.mxu0 0
    %2885 = vmatmul.mubr.bf16.gmra.mrb[0].mxu0 %v2787
    %v2886 = vpop.f32.mrb[0].mxu0
    %v2887 = vadd.f32 0.0, %v2886
    %v2888 = vpop.f32.mrb[0].mxu0
    %v2889 = vadd.f32 0.0, %v2888
    %v2890 = vpop.f32.mrb[0].mxu0
    %v2891 = vadd.f32 0.0, %v2890
    %v2892 = vpop.f32.mrb[0].mxu0
    %v2893 = vadd.f32 0.0, %v2892
    %2894 = vdwg.mxu0
    %2895 = vmatprep.subr.bf16.mxu0 %v2724
    %2896 = vmatpush1.bf16.msra.mxu0 %v2723
    %2897 = vmatprep.subr.bf16.mxu0 %v2740
    %2898 = vmatpush1.bf16.msra.mxu0 %v2739
    %2899 = vmatprep.subr.bf16.mxu0 0
    %2900 = vmatpush1.bf16.msra.mxu0 0
    %2901 = vmatprep.subr.bf16.mxu0 0
    %2902 = vmatpush1.bf16.msra.mxu0 0
    %2903 = vmatprep.subr.bf16.mxu0 0
    %2904 = vmatpush1.bf16.msra.mxu0 0
    %2905 = vmatprep.subr.bf16.mxu0 0
    %2906 = vmatpush1.bf16.msra.mxu0 0
    %2907 = vmatprep.subr.bf16.mxu0 0
    %2908 = vmatpush1.bf16.msra.mxu0 0
    %2909 = vmatprep.subr.bf16.mxu0 0
    %2910 = vmatpush1.bf16.msra.mxu0 0
    %2911 = vmatprep.subr.bf16.mxu0 0
    %2912 = vmatpush1.bf16.msra.mxu0 0
    %2913 = vmatprep.subr.bf16.mxu0 0
    %2914 = vmatpush1.bf16.msra.mxu0 0
    %2915 = vmatprep.subr.bf16.mxu0 0
    %2916 = vmatpush1.bf16.msra.mxu0 0
    %2917 = vmatprep.subr.bf16.mxu0 0
    %2918 = vmatpush1.bf16.msra.mxu0 0
    %2919 = vmatprep.subr.bf16.mxu0 0
    %2920 = vmatpush1.bf16.msra.mxu0 0
    %2921 = vmatprep.subr.bf16.mxu0 0
    %2922 = vmatpush1.bf16.msra.mxu0 0
    %2923 = vmatprep.subr.bf16.mxu0 0
    %2924 = vmatpush1.bf16.msra.mxu0 0
    %2925 = vmatprep.subr.bf16.mxu0 0
    %2926 = vmatpush1.bf16.msra.mxu0 0
    %2927 = vmatprep.mubr.bf16.mxu0 0
    %2928 = vmatmul.mubr.bf16.gmra.mrb[0].mxu0 %v2784
    %v2929 = vpop.f32.mrb[0].mxu0
    %v2930 = vadd.f32 0.0, %v2929
    %v2931 = vpop.f32.mrb[0].mxu0
    %v2932 = vadd.f32 0.0, %v2931
    %v2933 = vpop.f32.mrb[0].mxu0
    %v2934 = vadd.f32 0.0, %v2933
    %v2935 = vpop.f32.mrb[0].mxu0
    %v2936 = vadd.f32 0.0, %v2935
    %2937 = vmatprep.mubr.bf16.mxu0 0
    %2938 = vmatmul.mubr.bf16.gmra.mrb[0].mxu0 %v2787
    %v2939 = vpop.f32.mrb[0].mxu0
    %v2940 = vadd.f32 0.0, %v2939
    %v2941 = vpop.f32.mrb[0].mxu0
    %v2942 = vadd.f32 0.0, %v2941
    %v2943 = vpop.f32.mrb[0].mxu0
    %v2944 = vadd.f32 0.0, %v2943
    %v2945 = vpop.f32.mrb[0].mxu0
    %v2946 = vadd.f32 0.0, %v2945
    %2947 = vdwg.mxu0
    %2948 = vmatprep.subr.bf16.mxu0 %v2726
    %2949 = vmatpush1.bf16.msra.mxu0 %v2725
    %2950 = vmatprep.subr.bf16.mxu0 %v2742
    %2951 = vmatpush1.bf16.msra.mxu0 %v2741
    %2952 = vmatprep.subr.bf16.mxu0 0
    %2953 = vmatpush1.bf16.msra.mxu0 0
    %2954 = vmatprep.subr.bf16.mxu0 0
    %2955 = vmatpush1.bf16.msra.mxu0 0
    %2956 = vmatprep.subr.bf16.mxu0 0
    %2957 = vmatpush1.bf16.msra.mxu0 0
    %2958 = vmatprep.subr.bf16.mxu0 0
    %2959 = vmatpush1.bf16.msra.mxu0 0
    %2960 = vmatprep.subr.bf16.mxu0 0
    %2961 = vmatpush1.bf16.msra.mxu0 0
    %2962 = vmatprep.subr.bf16.mxu0 0
    %2963 = vmatpush1.bf16.msra.mxu0 0
    %2964 = vmatprep.subr.bf16.mxu0 0
    %2965 = vmatpush1.bf16.msra.mxu0 0
    %2966 = vmatprep.subr.bf16.mxu0 0
    %2967 = vmatpush1.bf16.msra.mxu0 0
    %2968 = vmatprep.subr.bf16.mxu0 0
    %2969 = vmatpush1.bf16.msra.mxu0 0
    %2970 = vmatprep.subr.bf16.mxu0 0
    %2971 = vmatpush1.bf16.msra.mxu0 0
    %2972 = vmatprep.subr.bf16.mxu0 0
    %2973 = vmatpush1.bf16.msra.mxu0 0
    %2974 = vmatprep.subr.bf16.mxu0 0
    %2975 = vmatpush1.bf16.msra.mxu0 0
    %2976 = vmatprep.subr.bf16.mxu0 0
    %2977 = vmatpush1.bf16.msra.mxu0 0
    %2978 = vmatprep.subr.bf16.mxu0 0
    %2979 = vmatpush1.bf16.msra.mxu0 0
    %2980 = vmatprep.mubr.bf16.mxu0 0
    %2981 = vmatmul.mubr.bf16.gmra.mrb[0].mxu0 %v2784
    %v2982 = vpop.f32.mrb[0].mxu0
    %v2983 = vadd.f32 0.0, %v2982
    %v2984 = vpop.f32.mrb[0].mxu0
    %v2985 = vadd.f32 0.0, %v2984
    %v2986 = vpop.f32.mrb[0].mxu0
    %v2987 = vadd.f32 0.0, %v2986
    %v2988 = vpop.f32.mrb[0].mxu0
    %v2989 = vadd.f32 0.0, %v2988
    %2990 = vmatprep.mubr.bf16.mxu0 0
    %2991 = vmatmul.mubr.bf16.gmra.mrb[0].mxu0 %v2787
    %v2992 = vpop.f32.mrb[0].mxu0
    %v2993 = vadd.f32 0.0, %v2992
    %v2994 = vpop.f32.mrb[0].mxu0
    %v2995 = vadd.f32 0.0, %v2994
    %v2996 = vpop.f32.mrb[0].mxu0
    %v2997 = vadd.f32 0.0, %v2996
    %v2998 = vpop.f32.mrb[0].mxu0
    %v2999 = vadd.f32 0.0, %v2998
    %3000 = vdwg.mxu0
    %3001 = vmatprep.subr.bf16.mxu0 %v2728
    %3002 = vmatpush1.bf16.msra.mxu0 %v2727
    %3003 = vmatprep.subr.bf16.mxu0 %v2744
    %3004 = vmatpush1.bf16.msra.mxu0 %v2743
    %3005 = vmatprep.subr.bf16.mxu0 0
    %3006 = vmatpush1.bf16.msra.mxu0 0
    %3007 = vmatprep.subr.bf16.mxu0 0
    %3008 = vmatpush1.bf16.msra.mxu0 0
    %3009 = vmatprep.subr.bf16.mxu0 0
    %3010 = vmatpush1.bf16.msra.mxu0 0
    %3011 = vmatprep.subr.bf16.mxu0 0
    %3012 = vmatpush1.bf16.msra.mxu0 0
    %3013 = vmatprep.subr.bf16.mxu0 0
    %3014 = vmatpush1.bf16.msra.mxu0 0
    %3015 = vmatprep.subr.bf16.mxu0 0
    %3016 = vmatpush1.bf16.msra.mxu0 0
    %3017 = vmatprep.subr.bf16.mxu0 0
    %3018 = vmatpush1.bf16.msra.mxu0 0
    %3019 = vmatprep.subr.bf16.mxu0 0
    %3020 = vmatpush1.bf16.msra.mxu0 0
    %3021 = vmatprep.subr.bf16.mxu0 0
    %3022 = vmatpush1.bf16.msra.mxu0 0
    %3023 = vmatprep.subr.bf16.mxu0 0
    %3024 = vmatpush1.bf16.msra.mxu0 0
    %3025 = vmatprep.subr.bf16.mxu0 0
    %3026 = vmatpush1.bf16.msra.mxu0 0
    %3027 = vmatprep.subr.bf16.mxu0 0
    %3028 = vmatpush1.bf16.msra.mxu0 0
    %3029 = vmatprep.subr.bf16.mxu0 0
    %3030 = vmatpush1.bf16.msra.mxu0 0
    %3031 = vmatprep.subr.bf16.mxu0 0
    %3032 = vmatpush1.bf16.msra.mxu0 0
    %3033 = vmatprep.mubr.bf16.mxu0 0
    %3034 = vmatmul.mubr.bf16.gmra.mrb[0].mxu0 %v2784
    %v3035 = vpop.f32.mrb[0].mxu0
    %v3036 = vadd.f32 0.0, %v3035
    %v3037 = vpop.f32.mrb[0].mxu0
    %v3038 = vadd.f32 0.0, %v3037
    %v3039 = vpop.f32.mrb[0].mxu0
    %v3040 = vadd.f32 0.0, %v3039
    %v3041 = vpop.f32.mrb[0].mxu0
    %v3042 = vadd.f32 0.0, %v3041
    %3043 = vmatprep.mubr.bf16.mxu0 0
    %3044 = vmatmul.mubr.bf16.gmra.mrb[0].mxu0 %v2787
    %v3045 = vpop.f32.mrb[0].mxu0
    %v3046 = vadd.f32 0.0, %v3045
    %v3047 = vpop.f32.mrb[0].mxu0
    %v3048 = vadd.f32 0.0, %v3047
    %v3049 = vpop.f32.mrb[0].mxu0
    %v3050 = vadd.f32 0.0, %v3049
    %v3051 = vpop.f32.mrb[0].mxu0
    %v3052 = vadd.f32 0.0, %v3051
    %3053 = vdwg.mxu0
    %3054 = vmatprep.subr.bf16.mxu0 %v2730
    %3055 = vmatpush1.bf16.msra.mxu0 %v2729
    %3056 = vmatprep.subr.bf16.mxu0 %v2746
    %3057 = vmatpush1.bf16.msra.mxu0 %v2745
    %3058 = vmatprep.subr.bf16.mxu0 0
    %3059 = vmatpush1.bf16.msra.mxu0 0
    %3060 = vmatprep.subr.bf16.mxu0 0
    %3061 = vmatpush1.bf16.msra.mxu0 0
    %3062 = vmatprep.subr.bf16.mxu0 0
    %3063 = vmatpush1.bf16.msra.mxu0 0
    %3064 = vmatprep.subr.bf16.mxu0 0
    %3065 = vmatpush1.bf16.msra.mxu0 0
    %3066 = vmatprep.subr.bf16.mxu0 0
    %3067 = vmatpush1.bf16.msra.mxu0 0
    %3068 = vmatprep.subr.bf16.mxu0 0
    %3069 = vmatpush1.bf16.msra.mxu0 0
    %3070 = vmatprep.subr.bf16.mxu0 0
    %3071 = vmatpush1.bf16.msra.mxu0 0
    %3072 = vmatprep.subr.bf16.mxu0 0
    %3073 = vmatpush1.bf16.msra.mxu0 0
    %3074 = vmatprep.subr.bf16.mxu0 0
    %3075 = vmatpush1.bf16.msra.mxu0 0
    %3076 = vmatprep.subr.bf16.mxu0 0
    %3077 = vmatpush1.bf16.msra.mxu0 0
    %3078 = vmatprep.subr.bf16.mxu0 0
    %3079 = vmatpush1.bf16.msra.mxu0 0
    %3080 = vmatprep.subr.bf16.mxu0 0
    %3081 = vmatpush1.bf16.msra.mxu0 0
    %3082 = vmatprep.subr.bf16.mxu0 0
    %3083 = vmatpush1.bf16.msra.mxu0 0
    %3084 = vmatprep.subr.bf16.mxu0 0
    %3085 = vmatpush1.bf16.msra.mxu0 0
    %3086 = vmatprep.mubr.bf16.mxu0 0
    %3087 = vmatmul.mubr.bf16.gmra.mrb[0].mxu0 %v2784
    %v3088 = vpop.f32.mrb[0].mxu0
    %v3089 = vadd.f32 0.0, %v3088
    %v3090 = vpop.f32.mrb[0].mxu0
    %v3091 = vadd.f32 0.0, %v3090
    %v3092 = vpop.f32.mrb[0].mxu0
    %v3093 = vadd.f32 0.0, %v3092
    %v3094 = vpop.f32.mrb[0].mxu0
    %v3095 = vadd.f32 0.0, %v3094
    %3096 = vmatprep.mubr.bf16.mxu0 0
    %3097 = vmatmul.mubr.bf16.gmra.mrb[0].mxu0 %v2787
    %v3098 = vpop.f32.mrb[0].mxu0
    %v3099 = vadd.f32 0.0, %v3098
    %v3100 = vpop.f32.mrb[0].mxu0
    %v3101 = vadd.f32 0.0, %v3100
    %v3102 = vpop.f32.mrb[0].mxu0
    %v3103 = vadd.f32 0.0, %v3102
    %v3104 = vpop.f32.mrb[0].mxu0
    %v3105 = vadd.f32 0.0, %v3104
    %3106 = vdwg.mxu0
    %3107 = vmatprep.subr.bf16.mxu0 %v2732
    %3108 = vmatpush1.bf16.msra.mxu0 %v2731
    %3109 = vmatprep.subr.bf16.mxu0 %v2748
    %3110 = vmatpush1.bf16.msra.mxu0 %v2747
    %3111 = vmatprep.subr.bf16.mxu0 0
    %3112 = vmatpush1.bf16.msra.mxu0 0
    %3113 = vmatprep.subr.bf16.mxu0 0
    %3114 = vmatpush1.bf16.msra.mxu0 0
    %3115 = vmatprep.subr.bf16.mxu0 0
    %3116 = vmatpush1.bf16.msra.mxu0 0
    %3117 = vmatprep.subr.bf16.mxu0 0
    %3118 = vmatpush1.bf16.msra.mxu0 0
    %3119 = vmatprep.subr.bf16.mxu0 0
    %3120 = vmatpush1.bf16.msra.mxu0 0
    %3121 = vmatprep.subr.bf16.mxu0 0
    %3122 = vmatpush1.bf16.msra.mxu0 0
    %3123 = vmatprep.subr.bf16.mxu0 0
    %3124 = vmatpush1.bf16.msra.mxu0 0
    %3125 = vmatprep.subr.bf16.mxu0 0
    %3126 = vmatpush1.bf16.msra.mxu0 0
    %3127 = vmatprep.subr.bf16.mxu0 0
    %3128 = vmatpush1.bf16.msra.mxu0 0
    %3129 = vmatprep.subr.bf16.mxu0 0
    %3130 = vmatpush1.bf16.msra.mxu0 0
    %3131 = vmatprep.subr.bf16.mxu0 0
    %3132 = vmatpush1.bf16.msra.mxu0 0
    %3133 = vmatprep.subr.bf16.mxu0 0
    %3134 = vmatpush1.bf16.msra.mxu0 0
    %3135 = vmatprep.subr.bf16.mxu0 0
    %3136 = vmatpush1.bf16.msra.mxu0 0
    %3137 = vmatprep.subr.bf16.mxu0 0
    %3138 = vmatpush1.bf16.msra.mxu0 0
    %3139 = vmatprep.mubr.bf16.mxu0 0
    %3140 = vmatmul.mubr.bf16.gmra.mrb[0].mxu0 %v2784
    %v3141 = vpop.f32.mrb[0].mxu0
    %v3142 = vadd.f32 0.0, %v3141
    %v3143 = vpop.f32.mrb[0].mxu0
    %v3144 = vadd.f32 0.0, %v3143
    %v3145 = vpop.f32.mrb[0].mxu0
    %v3146 = vadd.f32 0.0, %v3145
    %v3147 = vpop.f32.mrb[0].mxu0
    %v3148 = vadd.f32 0.0, %v3147
    %3149 = vmatprep.mubr.bf16.mxu0 0
    %3150 = vmatmul.mubr.bf16.gmra.mrb[0].mxu0 %v2787
    %v3151 = vpop.f32.mrb[0].mxu0
    %v3152 = vadd.f32 0.0, %v3151
    %v3153 = vpop.f32.mrb[0].mxu0
    %v3154 = vadd.f32 0.0, %v3153
    %v3155 = vpop.f32.mrb[0].mxu0
    %v3156 = vadd.f32 0.0, %v3155
    %v3157 = vpop.f32.mrb[0].mxu0
    %v3158 = vadd.f32 0.0, %v3157
    %3159 = vdwg.mxu0
    %3160 = vmatprep.subr.bf16.mxu0 %v2734
    %3161 = vmatpush1.bf16.msra.mxu0 %v2733
    %3162 = vmatprep.subr.bf16.mxu0 %v2750
    %3163 = vmatpush1.bf16.msra.mxu0 %v2749
    %3164 = vmatprep.subr.bf16.mxu0 0
    %3165 = vmatpush1.bf16.msra.mxu0 0
    %3166 = vmatprep.subr.bf16.mxu0 0
    %3167 = vmatpush1.bf16.msra.mxu0 0
    %3168 = vmatprep.subr.bf16.mxu0 0
    %3169 = vmatpush1.bf16.msra.mxu0 0
    %3170 = vmatprep.subr.bf16.mxu0 0
    %3171 = vmatpush1.bf16.msra.mxu0 0
    %3172 = vmatprep.subr.bf16.mxu0 0
    %3173 = vmatpush1.bf16.msra.mxu0 0
    %3174 = vmatprep.subr.bf16.mxu0 0
    %3175 = vmatpush1.bf16.msra.mxu0 0
    %3176 = vmatprep.subr.bf16.mxu0 0
    %3177 = vmatpush1.bf16.msra.mxu0 0
    %3178 = vmatprep.subr.bf16.mxu0 0
    %3179 = vmatpush1.bf16.msra.mxu0 0
    %3180 = vmatprep.subr.bf16.mxu0 0
    %3181 = vmatpush1.bf16.msra.mxu0 0
    %3182 = vmatprep.subr.bf16.mxu0 0
    %3183 = vmatpush1.bf16.msra.mxu0 0
    %3184 = vmatprep.subr.bf16.mxu0 0
    %3185 = vmatpush1.bf16.msra.mxu0 0
    %3186 = vmatprep.subr.bf16.mxu0 0
    %3187 = vmatpush1.bf16.msra.mxu0 0
    %3188 = vmatprep.subr.bf16.mxu0 0
    %3189 = vmatpush1.bf16.msra.mxu0 0
    %3190 = vmatprep.subr.bf16.mxu0 0
    %3191 = vmatpush1.bf16.msra.mxu0 0
    %3192 = vmatprep.mubr.bf16.mxu0 0
    %3193 = vmatmul.mubr.bf16.gmra.mrb[0].mxu0 %v2784
    %v3194 = vpop.f32.mrb[0].mxu0
    %v3195 = vadd.f32 0.0, %v3194
    %v3196 = vpop.f32.mrb[0].mxu0
    %v3197 = vadd.f32 0.0, %v3196
    %v3198 = vpop.f32.mrb[0].mxu0
    %v3199 = vadd.f32 0.0, %v3198
    %v3200 = vpop.f32.mrb[0].mxu0
    %v3201 = vadd.f32 0.0, %v3200
    %3202 = vmatprep.mubr.bf16.mxu0 0
    %3203 = vmatmul.mubr.bf16.gmra.mrb[0].mxu0 %v2787
    %v3204 = vpop.f32.mrb[0].mxu0
    %v3205 = vadd.f32 0.0, %v3204
    %v3206 = vpop.f32.mrb[0].mxu0
    %v3207 = vadd.f32 0.0, %v3206
    %v3208 = vpop.f32.mrb[0].mxu0
    %v3209 = vadd.f32 0.0, %v3208
    %v3210 = vpop.f32.mrb[0].mxu0
    %v3211 = vadd.f32 0.0, %v3210
    %3212 = vdwg.mxu0
    %v3213 = vmul.f32 %v2824, %v2151
    %v3214 = vmul.f32 %v2826, %v2153
    %v3215 = vmul.f32 %v2877, %v2204
    %v3216 = vmul.f32 %v2879, %v2206
    %v3217 = vmul.f32 %v2930, %v2257
    %v3218 = vmul.f32 %v2932, %v2259
    %v3219 = vmul.f32 %v2983, %v2310
    %v3220 = vmul.f32 %v2985, %v2312
    %v3221 = vmul.f32 %v3036, %v2363
    %v3222 = vmul.f32 %v3038, %v2365
    %v3223 = vmul.f32 %v3089, %v2416
    %v3224 = vmul.f32 %v3091, %v2418
    %v3225 = vmul.f32 %v3142, %v2469
    %v3226 = vmul.f32 %v3144, %v2471
    %v3227 = vmul.f32 %v3195, %v2522
    %v3228 = vmul.f32 %v3197, %v2524
    %v3229 = vmul.f32 %v2828, %v2155
    %v3230 = vmul.f32 %v2830, %v2157
    %v3231 = vmul.f32 %v2881, %v2208
    %v3232 = vmul.f32 %v2883, %v2210
    %v3233 = vmul.f32 %v2934, %v2261
    %v3234 = vmul.f32 %v2936, %v2263
    %v3235 = vmul.f32 %v2987, %v2314
    %v3236 = vmul.f32 %v2989, %v2316
    %v3237 = vmul.f32 %v3040, %v2367
    %v3238 = vmul.f32 %v3042, %v2369
    %v3239 = vmul.f32 %v3093, %v2420
    %v3240 = vmul.f32 %v3095, %v2422
    %v3241 = vmul.f32 %v3146, %v2473
    %v3242 = vmul.f32 %v3148, %v2475
    %v3243 = vmul.f32 %v3199, %v2526
    %v3244 = vmul.f32 %v3201, %v2528
    %v3245 = vmul.f32 %v2834, %v2161
    %v3246 = vmul.f32 %v2836, %v2163
    %v3247 = vmul.f32 %v2887, %v2214
    %v3248 = vmul.f32 %v2889, %v2216
    %v3249 = vmul.f32 %v2940, %v2267
    %v3250 = vmul.f32 %v2942, %v2269
    %v3251 = vmul.f32 %v2993, %v2320
    %v3252 = vmul.f32 %v2995, %v2322
    %v3253 = vmul.f32 %v3046, %v2373
    %v3254 = vmul.f32 %v3048, %v2375
    %v3255 = vmul.f32 %v3099, %v2426
    %v3256 = vmul.f32 %v3101, %v2428
    %v3257 = vmul.f32 %v3152, %v2479
    %v3258 = vmul.f32 %v3154, %v2481
    %v3259 = vmul.f32 %v3205, %v2532
    %v3260 = vmul.f32 %v3207, %v2534
    %v3261 = vmul.f32 %v2838, %v2165
    %v3262 = vmul.f32 %v2840, %v2167
    %v3263 = vmul.f32 %v2891, %v2218
    %v3264 = vmul.f32 %v2893, %v2220
    %v3265 = vmul.f32 %v2944, %v2271
    %v3266 = vmul.f32 %v2946, %v2273
    %v3267 = vmul.f32 %v2997, %v2324
    %v3268 = vmul.f32 %v2999, %v2326
    %v3269 = vmul.f32 %v3050, %v2377
    %v3270 = vmul.f32 %v3052, %v2379
    %v3271 = vmul.f32 %v3103, %v2430
    %v3272 = vmul.f32 %v3105, %v2432
    %v3273 = vmul.f32 %v3156, %v2483
    %v3274 = vmul.f32 %v3158, %v2485
    %v3275 = vmul.f32 %v3209, %v2536
    %v3276 = vmul.f32 %v3211, %v2538
    %v3277 = vpack.c.bf16 %v3229, %v3213
    %v3278 = vpack.c.bf16 %v3230, %v3214
    %v3279 = vpack.c.bf16 %v3231, %v3215
    %v3280 = vpack.c.bf16 %v3232, %v3216
    %v3281 = vpack.c.bf16 %v3233, %v3217
    %v3282 = vpack.c.bf16 %v3234, %v3218
    %v3283 = vpack.c.bf16 %v3235, %v3219
    %v3284 = vpack.c.bf16 %v3236, %v3220
    %v3285 = vpack.c.bf16 %v3237, %v3221
    %v3286 = vpack.c.bf16 %v3238, %v3222
    %v3287 = vpack.c.bf16 %v3239, %v3223
    %v3288 = vpack.c.bf16 %v3240, %v3224
    %v3289 = vpack.c.bf16 %v3241, %v3225
    %v3290 = vpack.c.bf16 %v3242, %v3226
    %v3291 = vpack.c.bf16 %v3243, %v3227
    %v3292 = vpack.c.bf16 %v3244, %v3228
    %v3293 = vpack.c.bf16 %v3261, %v3245
    %v3294 = vpack.c.bf16 %v3262, %v3246
    %v3295 = vpack.c.bf16 %v3263, %v3247
    %v3296 = vpack.c.bf16 %v3264, %v3248
    %v3297 = vpack.c.bf16 %v3265, %v3249
    %v3298 = vpack.c.bf16 %v3266, %v3250
    %v3299 = vpack.c.bf16 %v3267, %v3251
    %v3300 = vpack.c.bf16 %v3268, %v3252
    %v3301 = vpack.c.bf16 %v3269, %v3253
    %v3302 = vpack.c.bf16 %v3270, %v3254
    %v3303 = vpack.c.bf16 %v3271, %v3255
    %v3304 = vpack.c.bf16 %v3272, %v3256
    %v3305 = vpack.c.bf16 %v3273, %v3257
    %v3306 = vpack.c.bf16 %v3274, %v3258
    %v3307 = vpack.c.bf16 %v3275, %v3259
    %v3308 = vpack.c.bf16 %v3276, %v3260
    %v3309 = vld [vmem:[%s11 + $0xd0] sm:$0xf]
    %v3310 = vld [vmem:[%s11 + $0xd4] sm:$0xf]
    %v3311 = vld [vmem:[%s11 + $0xd8] sm:$0xf]
    %v3312 = vld [vmem:[%s11 + $0xdc] sm:$0xf]
    %v3313 = vld [vmem:[%s11 + $0xe0] sm:$0xf]
    %v3314 = vld [vmem:[%s11 + $0xe4] sm:$0xf]
    %v3315 = vld [vmem:[%s11 + $0xe8] sm:$0xf]
    %v3316 = vld [vmem:[%s11 + $0xec] sm:$0xf]
    %v3317 = vld [vmem:[%s11 + $0xf0] sm:$0xf]
    %v3318 = vld [vmem:[%s11 + $0xf4] sm:$0xf]
    %v3319 = vld [vmem:[%s11 + $0xf8] sm:$0xf]
    %v3320 = vld [vmem:[%s11 + $0xfc] sm:$0xf]
    %v3321 = vld [vmem:[%s11 + $0x100] sm:$0xf]
    %v3322 = vld [vmem:[%s11 + $0x104] sm:$0xf]
    %v3323 = vld [vmem:[%s11 + $0x108] sm:$0xf]
    %v3324 = vld [vmem:[%s11 + $0x10c] sm:$0xf]
    %v3325 = vld [vmem:[%s11 + $0x110] sm:$0xf]
    %v3326 = vld [vmem:[%s11 + $0x114] sm:$0xf]
    %v3327 = vld [vmem:[%s11 + $0x118] sm:$0xf]
    %v3328 = vld [vmem:[%s11 + $0x11c] sm:$0xf]
    %v3329 = vld [vmem:[%s11 + $0x120] sm:$0xf]
    %v3330 = vld [vmem:[%s11 + $0x124] sm:$0xf]
    %v3331 = vld [vmem:[%s11 + $0x128] sm:$0xf]
    %v3332 = vld [vmem:[%s11 + $0x12c] sm:$0xf]
    %v3333 = vld [vmem:[%s11 + $0x130] sm:$0xf]
    %v3334 = vld [vmem:[%s11 + $0x134] sm:$0xf]
    %v3335 = vld [vmem:[%s11 + $0x138] sm:$0xf]
    %v3336 = vld [vmem:[%s11 + $0x13c] sm:$0xf]
    %v3337 = vld [vmem:[%s11 + $0x140] sm:$0xf]
    %v3338 = vld [vmem:[%s11 + $0x144] sm:$0xf]
    %v3339 = vld [vmem:[%s11 + $0x148] sm:$0xf]
    %v3340 = vld [vmem:[%s11 + $0x14c] sm:$0xf]
    %v3341 = vld [vmem:[%s11 + $0x150] sm:$0xf]
    %v3342 = vld [vmem:[%s11 + $0x154] sm:$0xf]
    %v3343 = vld [vmem:[%s11 + $0x158] sm:$0xf]
    %v3344 = vld [vmem:[%s11 + $0x15c] sm:$0xf]
    %v3345 = vld [vmem:[%s11 + $0x160] sm:$0xf]
    %v3346 = vld [vmem:[%s11 + $0x164] sm:$0xf]
    %v3347 = vld [vmem:[%s11 + $0x168] sm:$0xf]
    %v3348 = vld [vmem:[%s11 + $0x16c] sm:$0xf]
    %v3349 = vld [vmem:[%s11 + $0x170] sm:$0xf]
    %v3350 = vld [vmem:[%s11 + $0x174] sm:$0xf]
    %v3351 = vld [vmem:[%s11 + $0x178] sm:$0xf]
    %v3352 = vld [vmem:[%s11 + $0x17c] sm:$0xf]
    %v3353 = vld [vmem:[%s11 + $0x180] sm:$0xf]
    %v3354 = vld [vmem:[%s11 + $0x184] sm:$0xf]
    %v3355 = vld [vmem:[%s11 + $0x188] sm:$0xf]
    %v3356 = vld [vmem:[%s11 + $0x18c] sm:$0xf]
    %v3357 = vld [vmem:[%s11 + $0x190] sm:$0xf]
    %v3358 = vld [vmem:[%s11 + $0x194] sm:$0xf]
    %v3359 = vld [vmem:[%s11 + $0x198] sm:$0xf]
    %v3360 = vld [vmem:[%s11 + $0x19c] sm:$0xf]
    %v3361 = vld [vmem:[%s11 + $0x1a0] sm:$0xf]
    %v3362 = vld [vmem:[%s11 + $0x1a4] sm:$0xf]
    %v3363 = vld [vmem:[%s11 + $0x1a8] sm:$0xf]
    %v3364 = vld [vmem:[%s11 + $0x1ac] sm:$0xf]
    %v3365 = vld [vmem:[%s11 + $0x1b0] sm:$0xf]
    %v3366 = vld [vmem:[%s11 + $0x1b4] sm:$0xf]
    %v3367 = vld [vmem:[%s11 + $0x1b8] sm:$0xf]
    %v3368 = vld [vmem:[%s11 + $0x1bc] sm:$0xf]
    %v3369 = vld [vmem:[%s11 + $0x1c0] sm:$0xf]
    %v3370 = vld [vmem:[%s11 + $0x1c4] sm:$0xf]
    %v3371 = vld [vmem:[%s11 + $0x1c8] sm:$0xf]
    %v3372 = vld [vmem:[%s11 + $0x1cc] sm:$0xf]
    %v3373 = vld [vmem:[%s11 + $0x1d0] sm:$0xf]
    %v3374 = vld [vmem:[%s11 + $0x1d4] sm:$0xf]
    %v3375 = vld [vmem:[%s11 + $0x1d8] sm:$0xf]
    %v3376 = vld [vmem:[%s11 + $0x1dc] sm:$0xf]
    %v3377 = vld [vmem:[%s11 + $0x1e0] sm:$0xf]
    %v3378 = vld [vmem:[%s11 + $0x1e4] sm:$0xf]
    %v3379 = vld [vmem:[%s11 + $0x1e8] sm:$0xf]
    %v3380 = vld [vmem:[%s11 + $0x1ec] sm:$0xf]
    %v3381 = vld [vmem:[%s11 + $0x1f0] sm:$0xf]
    %v3382 = vld [vmem:[%s11 + $0x1f4] sm:$0xf]
    %v3383 = vld [vmem:[%s11 + $0x1f8] sm:$0xf]
    %v3384 = vld [vmem:[%s11 + $0x1fc] sm:$0xf]
    %v3385 = vld [vmem:[%s11 + $0x200] sm:$0xf]
    %v3386 = vld [vmem:[%s11 + $0x204] sm:$0xf]
    %v3387 = vld [vmem:[%s11 + $0x208] sm:$0xf]
    %v3388 = vld [vmem:[%s11 + $0x20c] sm:$0xf]
    %v3389 = vld [vmem:[%s11 + $0x210] sm:$0xf]
    %v3390 = vld [vmem:[%s11 + $0x214] sm:$0xf]
    %v3391 = vld [vmem:[%s11 + $0x218] sm:$0xf]
    %v3392 = vld [vmem:[%s11 + $0x21c] sm:$0xf]
    %v3393 = vld [vmem:[%s11 + $0x220] sm:$0xf]
    %v3394 = vld [vmem:[%s11 + $0x224] sm:$0xf]
    %v3395 = vld [vmem:[%s11 + $0x228] sm:$0xf]
    %v3396 = vld [vmem:[%s11 + $0x22c] sm:$0xf]
    %v3397 = vld [vmem:[%s11 + $0x230] sm:$0xf]
    %v3398 = vld [vmem:[%s11 + $0x234] sm:$0xf]
    %v3399 = vld [vmem:[%s11 + $0x238] sm:$0xf]
    %v3400 = vld [vmem:[%s11 + $0x23c] sm:$0xf]
    %v3401 = vld [vmem:[%s11 + $0x240] sm:$0xf]
    %v3402 = vld [vmem:[%s11 + $0x244] sm:$0xf]
    %v3403 = vld [vmem:[%s11 + $0x248] sm:$0xf]
    %v3404 = vld [vmem:[%s11 + $0x24c] sm:$0xf]
    %v3405 = vld [vmem:[%s11 + $0x250] sm:$0xf]
    %v3406 = vld [vmem:[%s11 + $0x254] sm:$0xf]
    %v3407 = vld [vmem:[%s11 + $0x258] sm:$0xf]
    %v3408 = vld [vmem:[%s11 + $0x25c] sm:$0xf]
    %v3409 = vld [vmem:[%s11 + $0x260] sm:$0xf]
    %v3410 = vld [vmem:[%s11 + $0x264] sm:$0xf]
    %v3411 = vld [vmem:[%s11 + $0x268] sm:$0xf]
    %v3412 = vld [vmem:[%s11 + $0x26c] sm:$0xf]
    %v3413 = vld [vmem:[%s11 + $0x270] sm:$0xf]
    %v3414 = vld [vmem:[%s11 + $0x274] sm:$0xf]
    %v3415 = vld [vmem:[%s11 + $0x278] sm:$0xf]
    %v3416 = vld [vmem:[%s11 + $0x27c] sm:$0xf]
    %v3417 = vld [vmem:[%s11 + $0x280] sm:$0xf]
    %v3418 = vld [vmem:[%s11 + $0x284] sm:$0xf]
    %v3419 = vld [vmem:[%s11 + $0x288] sm:$0xf]
    %v3420 = vld [vmem:[%s11 + $0x28c] sm:$0xf]
    %v3421 = vld [vmem:[%s11 + $0x290] sm:$0xf]
    %v3422 = vld [vmem:[%s11 + $0x294] sm:$0xf]
    %v3423 = vld [vmem:[%s11 + $0x298] sm:$0xf]
    %v3424 = vld [vmem:[%s11 + $0x29c] sm:$0xf]
    %v3425 = vld [vmem:[%s11 + $0x2a0] sm:$0xf]
    %v3426 = vld [vmem:[%s11 + $0x2a4] sm:$0xf]
    %v3427 = vld [vmem:[%s11 + $0x2a8] sm:$0xf]
    %v3428 = vld [vmem:[%s11 + $0x2ac] sm:$0xf]
    %v3429 = vld [vmem:[%s11 + $0x2b0] sm:$0xf]
    %v3430 = vld [vmem:[%s11 + $0x2b4] sm:$0xf]
    %v3431 = vld [vmem:[%s11 + $0x2b8] sm:$0xf]
    %v3432 = vld [vmem:[%s11 + $0x2bc] sm:$0xf]
    %v3433 = vld [vmem:[%s11 + $0x2c0] sm:$0xf]
    %v3434 = vld [vmem:[%s11 + $0x2c4] sm:$0xf]
    %v3435 = vld [vmem:[%s11 + $0x2c8] sm:$0xf]
    %v3436 = vld [vmem:[%s11 + $0x2cc] sm:$0xf]
    %v3437 = vld [vmem:[%s11 + $0x2d0] sm:$0xf]
    %v3438 = vld [vmem:[%s11 + $0x2d4] sm:$0xf]
    %v3439 = vld [vmem:[%s11 + $0x2d8] sm:$0xf]
    %v3440 = vld [vmem:[%s11 + $0x2dc] sm:$0xf]
    %v3441 = vld [vmem:[%s11 + $0x2e0] sm:$0xf]
    %v3442 = vld [vmem:[%s11 + $0x2e4] sm:$0xf]
    %v3443 = vld [vmem:[%s11 + $0x2e8] sm:$0xf]
    %v3444 = vld [vmem:[%s11 + $0x2ec] sm:$0xf]
    %v3445 = vld [vmem:[%s11 + $0x2f0] sm:$0xf]
    %v3446 = vld [vmem:[%s11 + $0x2f4] sm:$0xf]
    %v3447 = vld [vmem:[%s11 + $0x2f8] sm:$0xf]
    %v3448 = vld [vmem:[%s11 + $0x2fc] sm:$0xf]
    %v3449 = vld [vmem:[%s11 + $0x300] sm:$0xf]
    %v3450 = vld [vmem:[%s11 + $0x304] sm:$0xf]
    %v3451 = vld [vmem:[%s11 + $0x308] sm:$0xf]
    %v3452 = vld [vmem:[%s11 + $0x30c] sm:$0xf]
    %v3453 = vld [vmem:[%s11 + $0x310] sm:$0xf]
    %v3454 = vld [vmem:[%s11 + $0x314] sm:$0xf]
    %v3455 = vld [vmem:[%s11 + $0x318] sm:$0xf]
    %v3456 = vld [vmem:[%s11 + $0x31c] sm:$0xf]
    %v3457 = vld [vmem:[%s11 + $0x320] sm:$0xf]
    %v3458 = vld [vmem:[%s11 + $0x324] sm:$0xf]
    %v3459 = vld [vmem:[%s11 + $0x328] sm:$0xf]
    %v3460 = vld [vmem:[%s11 + $0x32c] sm:$0xf]
    %v3461 = vld [vmem:[%s11 + $0x330] sm:$0xf]
    %v3462 = vld [vmem:[%s11 + $0x334] sm:$0xf]
    %v3463 = vld [vmem:[%s11 + $0x338] sm:$0xf]
    %v3464 = vld [vmem:[%s11 + $0x33c] sm:$0xf]
    %v3465 = vld [vmem:[%s11 + $0x340] sm:$0xf]
    %v3466 = vld [vmem:[%s11 + $0x344] sm:$0xf]
    %v3467 = vld [vmem:[%s11 + $0x348] sm:$0xf]
    %v3468 = vld [vmem:[%s11 + $0x34c] sm:$0xf]
    %v3469 = vld [vmem:[%s11 + $0x350] sm:$0xf]
    %v3470 = vld [vmem:[%s11 + $0x354] sm:$0xf]
    %v3471 = vld [vmem:[%s11 + $0x358] sm:$0xf]
    %v3472 = vld [vmem:[%s11 + $0x35c] sm:$0xf]
    %v3473 = vld [vmem:[%s11 + $0x360] sm:$0xf]
    %v3474 = vld [vmem:[%s11 + $0x364] sm:$0xf]
    %v3475 = vld [vmem:[%s11 + $0x368] sm:$0xf]
    %v3476 = vld [vmem:[%s11 + $0x36c] sm:$0xf]
    %v3477 = vld [vmem:[%s11 + $0x370] sm:$0xf]
    %v3478 = vld [vmem:[%s11 + $0x374] sm:$0xf]
    %v3479 = vld [vmem:[%s11 + $0x378] sm:$0xf]
    %v3480 = vld [vmem:[%s11 + $0x37c] sm:$0xf]
    %v3481 = vld [vmem:[%s11 + $0x380] sm:$0xf]
    %v3482 = vld [vmem:[%s11 + $0x384] sm:$0xf]
    %v3483 = vld [vmem:[%s11 + $0x388] sm:$0xf]
    %v3484 = vld [vmem:[%s11 + $0x38c] sm:$0xf]
    %v3485 = vld [vmem:[%s11 + $0x390] sm:$0xf]
    %v3486 = vld [vmem:[%s11 + $0x394] sm:$0xf]
    %v3487 = vld [vmem:[%s11 + $0x398] sm:$0xf]
    %v3488 = vld [vmem:[%s11 + $0x39c] sm:$0xf]
    %v3489 = vld [vmem:[%s11 + $0x3a0] sm:$0xf]
    %v3490 = vld [vmem:[%s11 + $0x3a4] sm:$0xf]
    %v3491 = vld [vmem:[%s11 + $0x3a8] sm:$0xf]
    %v3492 = vld [vmem:[%s11 + $0x3ac] sm:$0xf]
    %v3493 = vld [vmem:[%s11 + $0x3b0] sm:$0xf]
    %v3494 = vld [vmem:[%s11 + $0x3b4] sm:$0xf]
    %v3495 = vld [vmem:[%s11 + $0x3b8] sm:$0xf]
    %v3496 = vld [vmem:[%s11 + $0x3bc] sm:$0xf]
    %v3497 = vld [vmem:[%s11 + $0x3c0] sm:$0xf]
    %v3498 = vld [vmem:[%s11 + $0x3c4] sm:$0xf]
    %v3499 = vld [vmem:[%s11 + $0x3c8] sm:$0xf]
    %v3500 = vld [vmem:[%s11 + $0x3cc] sm:$0xf]
    %v3501 = vld [vmem:[%s11 + $0x3d0] sm:$0xf]
    %v3502 = vld [vmem:[%s11 + $0x3d4] sm:$0xf]
    %v3503 = vld [vmem:[%s11 + $0x3d8] sm:$0xf]
    %v3504 = vld [vmem:[%s11 + $0x3dc] sm:$0xf]
    %v3505 = vld [vmem:[%s11 + $0x3e0] sm:$0xf]
    %v3506 = vld [vmem:[%s11 + $0x3e4] sm:$0xf]
    %v3507 = vld [vmem:[%s11 + $0x3e8] sm:$0xf]
    %v3508 = vld [vmem:[%s11 + $0x3ec] sm:$0xf]
    %v3509 = vld [vmem:[%s11 + $0x3f0] sm:$0xf]
    %v3510 = vld [vmem:[%s11 + $0x3f4] sm:$0xf]
    %v3511 = vld [vmem:[%s11 + $0x3f8] sm:$0xf]
    %v3512 = vld [vmem:[%s11 + $0x3fc] sm:$0xf]
    %v3513 = vld [vmem:[%s11 + $0x400] sm:$0xf]
    %v3514 = vld [vmem:[%s11 + $0x404] sm:$0xf]
    %v3515 = vld [vmem:[%s11 + $0x408] sm:$0xf]
    %v3516 = vld [vmem:[%s11 + $0x40c] sm:$0xf]
    %v3517 = vld [vmem:[%s11 + $0x410] sm:$0xf]
    %v3518 = vld [vmem:[%s11 + $0x414] sm:$0xf]
    %v3519 = vld [vmem:[%s11 + $0x418] sm:$0xf]
    %v3520 = vld [vmem:[%s11 + $0x41c] sm:$0xf]
    %v3521 = vld [vmem:[%s11 + $0x420] sm:$0xf]
    %v3522 = vld [vmem:[%s11 + $0x424] sm:$0xf]
    %v3523 = vld [vmem:[%s11 + $0x428] sm:$0xf]
    %v3524 = vld [vmem:[%s11 + $0x42c] sm:$0xf]
    %v3525 = vld [vmem:[%s11 + $0x430] sm:$0xf]
    %v3526 = vld [vmem:[%s11 + $0x434] sm:$0xf]
    %v3527 = vld [vmem:[%s11 + $0x438] sm:$0xf]
    %v3528 = vld [vmem:[%s11 + $0x43c] sm:$0xf]
    %v3529 = vld [vmem:[%s11 + $0x440] sm:$0xf]
    %v3530 = vld [vmem:[%s11 + $0x444] sm:$0xf]
    %v3531 = vld [vmem:[%s11 + $0x448] sm:$0xf]
    %v3532 = vld [vmem:[%s11 + $0x44c] sm:$0xf]
    %v3533 = vld [vmem:[%s11 + $0x450] sm:$0xf]
    %v3534 = vld [vmem:[%s11 + $0x454] sm:$0xf]
    %v3535 = vld [vmem:[%s11 + $0x458] sm:$0xf]
    %v3536 = vld [vmem:[%s11 + $0x45c] sm:$0xf]
    %v3537 = vld [vmem:[%s11 + $0x460] sm:$0xf]
    %v3538 = vld [vmem:[%s11 + $0x464] sm:$0xf]
    %v3539 = vld [vmem:[%s11 + $0x468] sm:$0xf]
    %v3540 = vld [vmem:[%s11 + $0x46c] sm:$0xf]
    %v3541 = vld [vmem:[%s11 + $0x470] sm:$0xf]
    %v3542 = vld [vmem:[%s11 + $0x474] sm:$0xf]
    %v3543 = vld [vmem:[%s11 + $0x478] sm:$0xf]
    %v3544 = vld [vmem:[%s11 + $0x47c] sm:$0xf]
    %v3545 = vld [vmem:[%s11 + $0x480] sm:$0xf]
    %v3546 = vld [vmem:[%s11 + $0x484] sm:$0xf]
    %v3547 = vld [vmem:[%s11 + $0x488] sm:$0xf]
    %v3548 = vld [vmem:[%s11 + $0x48c] sm:$0xf]
    %v3549 = vld [vmem:[%s11 + $0x490] sm:$0xf]
    %v3550 = vld [vmem:[%s11 + $0x494] sm:$0xf]
    %v3551 = vld [vmem:[%s11 + $0x498] sm:$0xf]
    %v3552 = vld [vmem:[%s11 + $0x49c] sm:$0xf]
    %v3553 = vld [vmem:[%s11 + $0x4a0] sm:$0xf]
    %v3554 = vld [vmem:[%s11 + $0x4a4] sm:$0xf]
    %v3555 = vld [vmem:[%s11 + $0x4a8] sm:$0xf]
    %v3556 = vld [vmem:[%s11 + $0x4ac] sm:$0xf]
    %v3557 = vld [vmem:[%s11 + $0x4b0] sm:$0xf]
    %v3558 = vld [vmem:[%s11 + $0x4b4] sm:$0xf]
    %v3559 = vld [vmem:[%s11 + $0x4b8] sm:$0xf]
    %v3560 = vld [vmem:[%s11 + $0x4bc] sm:$0xf]
    %v3561 = vld [vmem:[%s11 + $0x4c0] sm:$0xf]
    %v3562 = vld [vmem:[%s11 + $0x4c4] sm:$0xf]
    %v3563 = vld [vmem:[%s11 + $0x4c8] sm:$0xf]
    %v3564 = vld [vmem:[%s11 + $0x4cc] sm:$0xf]
    %v3821 = vunpack.c.l.b16 %v3309
    %v3822 = vunpack.c.l.b16 %v3310
    %v3823 = vunpack.c.l.b16 %v3311
    %v3824 = vunpack.c.l.b16 %v3312
    %v3825 = vunpack.c.l.b16 %v3313
    %v3826 = vunpack.c.l.b16 %v3314
    %v3827 = vunpack.c.l.b16 %v3315
    %v3828 = vunpack.c.l.b16 %v3316
    %v3829 = vunpack.c.l.b16 %v3317
    %v3830 = vunpack.c.l.b16 %v3318
    %v3831 = vunpack.c.l.b16 %v3319
    %v3832 = vunpack.c.l.b16 %v3320
    %v3833 = vunpack.c.l.b16 %v3321
    %v3834 = vunpack.c.l.b16 %v3322
    %v3835 = vunpack.c.l.b16 %v3323
    %v3836 = vunpack.c.l.b16 %v3324
    %v3837 = vunpack.c.l.b16 %v3325
    %v3838 = vunpack.c.l.b16 %v3326
    %v3839 = vunpack.c.l.b16 %v3327
    %v3840 = vunpack.c.l.b16 %v3328
    %v3841 = vunpack.c.l.b16 %v3329
    %v3842 = vunpack.c.l.b16 %v3330
    %v3843 = vunpack.c.l.b16 %v3331
    %v3844 = vunpack.c.l.b16 %v3332
    %v3845 = vunpack.c.l.b16 %v3333
    %v3846 = vunpack.c.l.b16 %v3334
    %v3847 = vunpack.c.l.b16 %v3335
    %v3848 = vunpack.c.l.b16 %v3336
    %v3849 = vunpack.c.l.b16 %v3337
    %v3850 = vunpack.c.l.b16 %v3338
    %v3851 = vunpack.c.l.b16 %v3339
    %v3852 = vunpack.c.l.b16 %v3340
    %v3853 = vunpack.c.l.b16 %v3341
    %v3854 = vunpack.c.l.b16 %v3342
    %v3855 = vunpack.c.l.b16 %v3343
    %v3856 = vunpack.c.l.b16 %v3344
    %v3857 = vunpack.c.l.b16 %v3345
    %v3858 = vunpack.c.l.b16 %v3346
    %v3859 = vunpack.c.l.b16 %v3347
    %v3860 = vunpack.c.l.b16 %v3348
    %v3861 = vunpack.c.l.b16 %v3349
    %v3862 = vunpack.c.l.b16 %v3350
    %v3863 = vunpack.c.l.b16 %v3351
    %v3864 = vunpack.c.l.b16 %v3352
    %v3865 = vunpack.c.l.b16 %v3353
    %v3866 = vunpack.c.l.b16 %v3354
    %v3867 = vunpack.c.l.b16 %v3355
    %v3868 = vunpack.c.l.b16 %v3356
    %v3869 = vunpack.c.l.b16 %v3357
    %v3870 = vunpack.c.l.b16 %v3358
    %v3871 = vunpack.c.l.b16 %v3359
    %v3872 = vunpack.c.l.b16 %v3360
    %v3873 = vunpack.c.l.b16 %v3361
    %v3874 = vunpack.c.l.b16 %v3362
    %v3875 = vunpack.c.l.b16 %v3363
    %v3876 = vunpack.c.l.b16 %v3364
    %v3877 = vunpack.c.l.b16 %v3365
    %v3878 = vunpack.c.l.b16 %v3366
    %v3879 = vunpack.c.l.b16 %v3367
    %v3880 = vunpack.c.l.b16 %v3368
    %v3881 = vunpack.c.l.b16 %v3369
    %v3882 = vunpack.c.l.b16 %v3370
    %v3883 = vunpack.c.l.b16 %v3371
    %v3884 = vunpack.c.l.b16 %v3372
    %v3885 = vunpack.c.l.b16 %v3373
    %v3886 = vunpack.c.l.b16 %v3374
    %v3887 = vunpack.c.l.b16 %v3375
    %v3888 = vunpack.c.l.b16 %v3376
    %v3889 = vunpack.c.l.b16 %v3377
    %v3890 = vunpack.c.l.b16 %v3378
    %v3891 = vunpack.c.l.b16 %v3379
    %v3892 = vunpack.c.l.b16 %v3380
    %v3893 = vunpack.c.l.b16 %v3381
    %v3894 = vunpack.c.l.b16 %v3382
    %v3895 = vunpack.c.l.b16 %v3383
    %v3896 = vunpack.c.l.b16 %v3384
    %v3897 = vunpack.c.l.b16 %v3385
    %v3898 = vunpack.c.l.b16 %v3386
    %v3899 = vunpack.c.l.b16 %v3387
    %v3900 = vunpack.c.l.b16 %v3388
    %v3901 = vunpack.c.l.b16 %v3389
    %v3902 = vunpack.c.l.b16 %v3390
    %v3903 = vunpack.c.l.b16 %v3391
    %v3904 = vunpack.c.l.b16 %v3392
    %v3905 = vunpack.c.l.b16 %v3393
    %v3906 = vunpack.c.l.b16 %v3394
    %v3907 = vunpack.c.l.b16 %v3395
    %v3908 = vunpack.c.l.b16 %v3396
    %v3909 = vunpack.c.l.b16 %v3397
    %v3910 = vunpack.c.l.b16 %v3398
    %v3911 = vunpack.c.l.b16 %v3399
    %v3912 = vunpack.c.l.b16 %v3400
    %v3913 = vunpack.c.l.b16 %v3401
    %v3914 = vunpack.c.l.b16 %v3402
    %v3915 = vunpack.c.l.b16 %v3403
    %v3916 = vunpack.c.l.b16 %v3404
    %v3917 = vunpack.c.l.b16 %v3405
    %v3918 = vunpack.c.l.b16 %v3406
    %v3919 = vunpack.c.l.b16 %v3407
    %v3920 = vunpack.c.l.b16 %v3408
    %v3921 = vunpack.c.l.b16 %v3409
    %v3922 = vunpack.c.l.b16 %v3410
    %v3923 = vunpack.c.l.b16 %v3411
    %v3924 = vunpack.c.l.b16 %v3412
    %v3925 = vunpack.c.l.b16 %v3413
    %v3926 = vunpack.c.l.b16 %v3414
    %v3927 = vunpack.c.l.b16 %v3415
    %v3928 = vunpack.c.l.b16 %v3416
    %v3929 = vunpack.c.l.b16 %v3417
    %v3930 = vunpack.c.l.b16 %v3418
    %v3931 = vunpack.c.l.b16 %v3419
    %v3932 = vunpack.c.l.b16 %v3420
    %v3933 = vunpack.c.l.b16 %v3421
    %v3934 = vunpack.c.l.b16 %v3422
    %v3935 = vunpack.c.l.b16 %v3423
    %v3936 = vunpack.c.l.b16 %v3424
    %v3937 = vunpack.c.l.b16 %v3425
    %v3938 = vunpack.c.l.b16 %v3426
    %v3939 = vunpack.c.l.b16 %v3427
    %v3940 = vunpack.c.l.b16 %v3428
    %v3941 = vunpack.c.l.b16 %v3429
    %v3942 = vunpack.c.l.b16 %v3430
    %v3943 = vunpack.c.l.b16 %v3431
    %v3944 = vunpack.c.l.b16 %v3432
    %v3945 = vunpack.c.l.b16 %v3433
    %v3946 = vunpack.c.l.b16 %v3434
    %v3947 = vunpack.c.l.b16 %v3435
    %v3948 = vunpack.c.l.b16 %v3436
    %v3949 = vunpack.c.l.b16 %v3437
    %v3950 = vunpack.c.l.b16 %v3438
    %v3951 = vunpack.c.l.b16 %v3439
    %v3952 = vunpack.c.l.b16 %v3440
    %v3953 = vunpack.c.l.b16 %v3441
    %v3954 = vunpack.c.l.b16 %v3442
    %v3955 = vunpack.c.l.b16 %v3443
    %v3956 = vunpack.c.l.b16 %v3444
    %v3957 = vunpack.c.l.b16 %v3445
    %v3958 = vunpack.c.l.b16 %v3446
    %v3959 = vunpack.c.l.b16 %v3447
    %v3960 = vunpack.c.l.b16 %v3448
    %v3961 = vunpack.c.l.b16 %v3449
    %v3962 = vunpack.c.l.b16 %v3450
    %v3963 = vunpack.c.l.b16 %v3451
    %v3964 = vunpack.c.l.b16 %v3452
    %v3965 = vunpack.c.l.b16 %v3453
    %v3966 = vunpack.c.l.b16 %v3454
    %v3967 = vunpack.c.l.b16 %v3455
    %v3968 = vunpack.c.l.b16 %v3456
    %v3969 = vunpack.c.l.b16 %v3457
    %v3970 = vunpack.c.l.b16 %v3458
    %v3971 = vunpack.c.l.b16 %v3459
    %v3972 = vunpack.c.l.b16 %v3460
    %v3973 = vunpack.c.l.b16 %v3461
    %v3974 = vunpack.c.l.b16 %v3462
    %v3975 = vunpack.c.l.b16 %v3463
    %v3976 = vunpack.c.l.b16 %v3464
    %v3977 = vunpack.c.l.b16 %v3465
    %v3978 = vunpack.c.l.b16 %v3466
    %v3979 = vunpack.c.l.b16 %v3467
    %v3980 = vunpack.c.l.b16 %v3468
    %v3981 = vunpack.c.l.b16 %v3469
    %v3982 = vunpack.c.l.b16 %v3470
    %v3983 = vunpack.c.l.b16 %v3471
    %v3984 = vunpack.c.l.b16 %v3472
    %v3985 = vunpack.c.l.b16 %v3473
    %v3986 = vunpack.c.l.b16 %v3474
    %v3987 = vunpack.c.l.b16 %v3475
    %v3988 = vunpack.c.l.b16 %v3476
    %v3989 = vunpack.c.l.b16 %v3477
    %v3990 = vunpack.c.l.b16 %v3478
    %v3991 = vunpack.c.l.b16 %v3479
    %v3992 = vunpack.c.l.b16 %v3480
    %v3993 = vunpack.c.l.b16 %v3481
    %v3994 = vunpack.c.l.b16 %v3482
    %v3995 = vunpack.c.l.b16 %v3483
    %v3996 = vunpack.c.l.b16 %v3484
    %v3997 = vunpack.c.l.b16 %v3485
    %v3998 = vunpack.c.l.b16 %v3486
    %v3999 = vunpack.c.l.b16 %v3487
    %v4000 = vunpack.c.l.b16 %v3488
    %v4001 = vunpack.c.l.b16 %v3489
    %v4002 = vunpack.c.l.b16 %v3490
    %v4003 = vunpack.c.l.b16 %v3491
    %v4004 = vunpack.c.l.b16 %v3492
    %v4005 = vunpack.c.l.b16 %v3493
    %v4006 = vunpack.c.l.b16 %v3494
    %v4007 = vunpack.c.l.b16 %v3495
    %v4008 = vunpack.c.l.b16 %v3496
    %v4009 = vunpack.c.l.b16 %v3497
    %v4010 = vunpack.c.l.b16 %v3498
    %v4011 = vunpack.c.l.b16 %v3499
    %v4012 = vunpack.c.l.b16 %v3500
    %v4013 = vunpack.c.l.b16 %v3501
    %v4014 = vunpack.c.l.b16 %v3502
    %v4015 = vunpack.c.l.b16 %v3503
    %v4016 = vunpack.c.l.b16 %v3504
    %v4017 = vunpack.c.l.b16 %v3505
    %v4018 = vunpack.c.l.b16 %v3506
    %v4019 = vunpack.c.l.b16 %v3507
    %v4020 = vunpack.c.l.b16 %v3508
    %v4021 = vunpack.c.l.b16 %v3509
    %v4022 = vunpack.c.l.b16 %v3510
    %v4023 = vunpack.c.l.b16 %v3511
    %v4024 = vunpack.c.l.b16 %v3512
    %v4025 = vunpack.c.l.b16 %v3513
    %v4026 = vunpack.c.l.b16 %v3514
    %v4027 = vunpack.c.l.b16 %v3515
    %v4028 = vunpack.c.l.b16 %v3516
    %v4029 = vunpack.c.l.b16 %v3517
    %v4030 = vunpack.c.l.b16 %v3518
    %v4031 = vunpack.c.l.b16 %v3519
    %v4032 = vunpack.c.l.b16 %v3520
    %v4033 = vunpack.c.l.b16 %v3521
    %v4034 = vunpack.c.l.b16 %v3522
    %v4035 = vunpack.c.l.b16 %v3523
    %v4036 = vunpack.c.l.b16 %v3524
    %v4037 = vunpack.c.l.b16 %v3525
    %v4038 = vunpack.c.l.b16 %v3526
    %v4039 = vunpack.c.l.b16 %v3527
    %v4040 = vunpack.c.l.b16 %v3528
    %v4041 = vunpack.c.l.b16 %v3529
    %v4042 = vunpack.c.l.b16 %v3530
    %v4043 = vunpack.c.l.b16 %v3531
    %v4044 = vunpack.c.l.b16 %v3532
    %v4045 = vunpack.c.l.b16 %v3533
    %v4046 = vunpack.c.l.b16 %v3534
    %v4047 = vunpack.c.l.b16 %v3535
    %v4048 = vunpack.c.l.b16 %v3536
    %v4049 = vunpack.c.l.b16 %v3537
    %v4050 = vunpack.c.l.b16 %v3538
    %v4051 = vunpack.c.l.b16 %v3539
    %v4052 = vunpack.c.l.b16 %v3540
    %v4053 = vunpack.c.l.b16 %v3541
    %v4054 = vunpack.c.l.b16 %v3542
    %v4055 = vunpack.c.l.b16 %v3543
    %v4056 = vunpack.c.l.b16 %v3544
    %v4057 = vunpack.c.l.b16 %v3545
    %v4058 = vunpack.c.l.b16 %v3546
    %v4059 = vunpack.c.l.b16 %v3547
    %v4060 = vunpack.c.l.b16 %v3548
    %v4061 = vunpack.c.l.b16 %v3549
    %v4062 = vunpack.c.l.b16 %v3550
    %v4063 = vunpack.c.l.b16 %v3551
    %v4064 = vunpack.c.l.b16 %v3552
    %v4065 = vunpack.c.l.b16 %v3553
    %v4066 = vunpack.c.l.b16 %v3554
    %v4067 = vunpack.c.l.b16 %v3555
    %v4068 = vunpack.c.l.b16 %v3556
    %v4069 = vunpack.c.l.b16 %v3557
    %v4070 = vunpack.c.l.b16 %v3558
    %v4071 = vunpack.c.l.b16 %v3559
    %v4072 = vunpack.c.l.b16 %v3560
    %v4073 = vunpack.c.l.b16 %v3561
    %v4074 = vunpack.c.l.b16 %v3562
    %v4075 = vunpack.c.l.b16 %v3563
    %v4076 = vunpack.c.l.b16 %v3564
    %v4077 = vpack.c.b16 %v3822, %v3821
    %v4078 = vpack.c.b16 %v3824, %v3823
    %v4079 = vpack.c.b16 %v3826, %v3825
    %v4080 = vpack.c.b16 %v3828, %v3827
    %v4081 = vpack.c.b16 %v3830, %v3829
    %v4082 = vpack.c.b16 %v3832, %v3831
    %v4083 = vpack.c.b16 %v3834, %v3833
    %v4084 = vpack.c.b16 %v3836, %v3835
    %v4085 = vpack.c.b16 %v3838, %v3837
    %v4086 = vpack.c.b16 %v3840, %v3839
    %v4087 = vpack.c.b16 %v3842, %v3841
    %v4088 = vpack.c.b16 %v3844, %v3843
    %v4089 = vpack.c.b16 %v3846, %v3845
    %v4090 = vpack.c.b16 %v3848, %v3847
    %v4091 = vpack.c.b16 %v3850, %v3849
    %v4092 = vpack.c.b16 %v3852, %v3851
    %v4093 = vpack.c.b16 %v3854, %v3853
    %v4094 = vpack.c.b16 %v3856, %v3855
    %v4095 = vpack.c.b16 %v3858, %v3857
    %v4096 = vpack.c.b16 %v3860, %v3859
    %v4097 = vpack.c.b16 %v3862, %v3861
    %v4098 = vpack.c.b16 %v3864, %v3863
    %v4099 = vpack.c.b16 %v3866, %v3865
    %v4100 = vpack.c.b16 %v3868, %v3867
    %v4101 = vpack.c.b16 %v3870, %v3869
    %v4102 = vpack.c.b16 %v3872, %v3871
    %v4103 = vpack.c.b16 %v3874, %v3873
    %v4104 = vpack.c.b16 %v3876, %v3875
    %v4105 = vpack.c.b16 %v3878, %v3877
    %v4106 = vpack.c.b16 %v3880, %v3879
    %v4107 = vpack.c.b16 %v3882, %v3881
    %v4108 = vpack.c.b16 %v3884, %v3883
    %v4109 = vpack.c.b16 %v3886, %v3885
    %v4110 = vpack.c.b16 %v3888, %v3887
    %v4111 = vpack.c.b16 %v3890, %v3889
    %v4112 = vpack.c.b16 %v3892, %v3891
    %v4113 = vpack.c.b16 %v3894, %v3893
    %v4114 = vpack.c.b16 %v3896, %v3895
    %v4115 = vpack.c.b16 %v3898, %v3897
    %v4116 = vpack.c.b16 %v3900, %v3899
    %v4117 = vpack.c.b16 %v3902, %v3901
    %v4118 = vpack.c.b16 %v3904, %v3903
    %v4119 = vpack.c.b16 %v3906, %v3905
    %v4120 = vpack.c.b16 %v3908, %v3907
    %v4121 = vpack.c.b16 %v3910, %v3909
    %v4122 = vpack.c.b16 %v3912, %v3911
    %v4123 = vpack.c.b16 %v3914, %v3913
    %v4124 = vpack.c.b16 %v3916, %v3915
    %v4125 = vpack.c.b16 %v3918, %v3917
    %v4126 = vpack.c.b16 %v3920, %v3919
    %v4127 = vpack.c.b16 %v3922, %v3921
    %v4128 = vpack.c.b16 %v3924, %v3923
    %v4129 = vpack.c.b16 %v3926, %v3925
    %v4130 = vpack.c.b16 %v3928, %v3927
    %v4131 = vpack.c.b16 %v3930, %v3929
    %v4132 = vpack.c.b16 %v3932, %v3931
    %v4133 = vpack.c.b16 %v3934, %v3933
    %v4134 = vpack.c.b16 %v3936, %v3935
    %v4135 = vpack.c.b16 %v3938, %v3937
    %v4136 = vpack.c.b16 %v3940, %v3939
    %v4137 = vpack.c.b16 %v3942, %v3941
    %v4138 = vpack.c.b16 %v3944, %v3943
    %v4139 = vpack.c.b16 %v3946, %v3945
    %v4140 = vpack.c.b16 %v3948, %v3947
    %v4141 = vpack.c.b16 %v3950, %v3949
    %v4142 = vpack.c.b16 %v3952, %v3951
    %v4143 = vpack.c.b16 %v3954, %v3953
    %v4144 = vpack.c.b16 %v3956, %v3955
    %v4145 = vpack.c.b16 %v3958, %v3957
    %v4146 = vpack.c.b16 %v3960, %v3959
    %v4147 = vpack.c.b16 %v3962, %v3961
    %v4148 = vpack.c.b16 %v3964, %v3963
    %v4149 = vpack.c.b16 %v3966, %v3965
    %v4150 = vpack.c.b16 %v3968, %v3967
    %v4151 = vpack.c.b16 %v3970, %v3969
    %v4152 = vpack.c.b16 %v3972, %v3971
    %v4153 = vpack.c.b16 %v3974, %v3973
    %v4154 = vpack.c.b16 %v3976, %v3975
    %v4155 = vpack.c.b16 %v3978, %v3977
    %v4156 = vpack.c.b16 %v3980, %v3979
    %v4157 = vpack.c.b16 %v3982, %v3981
    %v4158 = vpack.c.b16 %v3984, %v3983
    %v4159 = vpack.c.b16 %v3986, %v3985
    %v4160 = vpack.c.b16 %v3988, %v3987
    %v4161 = vpack.c.b16 %v3990, %v3989
    %v4162 = vpack.c.b16 %v3992, %v3991
    %v4163 = vpack.c.b16 %v3994, %v3993
    %v4164 = vpack.c.b16 %v3996, %v3995
    %v4165 = vpack.c.b16 %v3998, %v3997
    %v4166 = vpack.c.b16 %v4000, %v3999
    %v4167 = vpack.c.b16 %v4002, %v4001
    %v4168 = vpack.c.b16 %v4004, %v4003
    %v4169 = vpack.c.b16 %v4006, %v4005
    %v4170 = vpack.c.b16 %v4008, %v4007
    %v4171 = vpack.c.b16 %v4010, %v4009
    %v4172 = vpack.c.b16 %v4012, %v4011
    %v4173 = vpack.c.b16 %v4014, %v4013
    %v4174 = vpack.c.b16 %v4016, %v4015
    %v4175 = vpack.c.b16 %v4018, %v4017
    %v4176 = vpack.c.b16 %v4020, %v4019
    %v4177 = vpack.c.b16 %v4022, %v4021
    %v4178 = vpack.c.b16 %v4024, %v4023
    %v4179 = vpack.c.b16 %v4026, %v4025
    %v4180 = vpack.c.b16 %v4028, %v4027
    %v4181 = vpack.c.b16 %v4030, %v4029
    %v4182 = vpack.c.b16 %v4032, %v4031
    %v4183 = vpack.c.b16 %v4034, %v4033
    %v4184 = vpack.c.b16 %v4036, %v4035
    %v4185 = vpack.c.b16 %v4038, %v4037
    %v4186 = vpack.c.b16 %v4040, %v4039
    %v4187 = vpack.c.b16 %v4042, %v4041
    %v4188 = vpack.c.b16 %v4044, %v4043
    %v4189 = vpack.c.b16 %v4046, %v4045
    %v4190 = vpack.c.b16 %v4048, %v4047
    %v4191 = vpack.c.b16 %v4050, %v4049
    %v4192 = vpack.c.b16 %v4052, %v4051
    %v4193 = vpack.c.b16 %v4054, %v4053
    %v4194 = vpack.c.b16 %v4056, %v4055
    %v4195 = vpack.c.b16 %v4058, %v4057
    %v4196 = vpack.c.b16 %v4060, %v4059
    %v4197 = vpack.c.b16 %v4062, %v4061
    %v4198 = vpack.c.b16 %v4064, %v4063
    %v4199 = vpack.c.b16 %v4066, %v4065
    %v4200 = vpack.c.b16 %v4068, %v4067
    %v4201 = vpack.c.b16 %v4070, %v4069
    %v4202 = vpack.c.b16 %v4072, %v4071
    %v4203 = vpack.c.b16 %v4074, %v4073
    %v4204 = vpack.c.b16 %v4076, %v4075
    %4333 = vmatprep.subr.bf16.mxu0 0
    %4334 = vmatpush1.bf16.msra.mxu0 %v4077
    %4335 = vmatprep.subr.bf16.mxu0 0
    %4336 = vmatpush1.bf16.msra.mxu0 %v4078
    %4337 = vmatprep.subr.bf16.mxu0 0
    %4338 = vmatpush1.bf16.msra.mxu0 %v4079
    %4339 = vmatprep.subr.bf16.mxu0 0
    %4340 = vmatpush1.bf16.msra.mxu0 %v4080
    %4341 = vmatprep.subr.bf16.mxu0 0
    %4342 = vmatpush1.bf16.msra.mxu0 %v4081
    %4343 = vmatprep.subr.bf16.mxu0 0
    %4344 = vmatpush1.bf16.msra.mxu0 %v4082
    %4345 = vmatprep.subr.bf16.mxu0 0
    %4346 = vmatpush1.bf16.msra.mxu0 %v4083
    %4347 = vmatprep.subr.bf16.mxu0 0
    %4348 = vmatpush1.bf16.msra.mxu0 %v4084
    %4349 = vmatprep.subr.bf16.mxu0 0
    %4350 = vmatpush1.bf16.msra.mxu0 %v4085
    %4351 = vmatprep.subr.bf16.mxu0 0
    %4352 = vmatpush1.bf16.msra.mxu0 %v4086
    %4353 = vmatprep.subr.bf16.mxu0 0
    %4354 = vmatpush1.bf16.msra.mxu0 %v4087
    %4355 = vmatprep.subr.bf16.mxu0 0
    %4356 = vmatpush1.bf16.msra.mxu0 %v4088
    %4357 = vmatprep.subr.bf16.mxu0 0
    %4358 = vmatpush1.bf16.msra.mxu0 %v4089
    %4359 = vmatprep.subr.bf16.mxu0 0
    %4360 = vmatpush1.bf16.msra.mxu0 %v4090
    %4361 = vmatprep.subr.bf16.mxu0 0
    %4362 = vmatpush1.bf16.msra.mxu0 %v4091
    %4363 = vmatprep.subr.bf16.mxu0 0
    %4364 = vmatpush1.bf16.msra.mxu0 %v4092
    %4365 = vmatprep.mubr.bf16.mxu0 %v3278
    %4366 = vmatmul.mubr.bf16.gmra.mrb[0].mxu0 %v3277
    %v4367 = vpop.f32.mrb[0].mxu0
    %v4368 = vadd.f32 0.0, %v4367
    %v4369 = vpop.f32.mrb[0].mxu0
    %v4370 = vpop.f32.mrb[0].mxu0
    %v4371 = vadd.f32 0.0, %v4370
    %v4372 = vpop.f32.mrb[0].mxu0
    %4373 = vmatprep.mubr.bf16.mxu0 %v3294
    %4374 = vmatmul.mubr.bf16.gmra.mrb[0].mxu0 %v3293
    %v4375 = vpop.f32.mrb[0].mxu0
    %v4376 = vadd.f32 0.0, %v4375
    %v4377 = vpop.f32.mrb[0].mxu0
    %v4378 = vpop.f32.mrb[0].mxu0
    %v4379 = vadd.f32 0.0, %v4378
    %v4380 = vpop.f32.mrb[0].mxu0
    %4381 = vdwg.mxu0
    %4382 = vmatprep.subr.bf16.mxu0 0
    %4383 = vmatpush1.bf16.msra.mxu0 %v4093
    %4384 = vmatprep.subr.bf16.mxu0 0
    %4385 = vmatpush1.bf16.msra.mxu0 %v4094
    %4386 = vmatprep.subr.bf16.mxu0 0
    %4387 = vmatpush1.bf16.msra.mxu0 %v4095
    %4388 = vmatprep.subr.bf16.mxu0 0
    %4389 = vmatpush1.bf16.msra.mxu0 %v4096
    %4390 = vmatprep.subr.bf16.mxu0 0
    %4391 = vmatpush1.bf16.msra.mxu0 %v4097
    %4392 = vmatprep.subr.bf16.mxu0 0
    %4393 = vmatpush1.bf16.msra.mxu0 %v4098
    %4394 = vmatprep.subr.bf16.mxu0 0
    %4395 = vmatpush1.bf16.msra.mxu0 %v4099
    %4396 = vmatprep.subr.bf16.mxu0 0
    %4397 = vmatpush1.bf16.msra.mxu0 %v4100
    %4398 = vmatprep.subr.bf16.mxu0 0
    %4399 = vmatpush1.bf16.msra.mxu0 %v4101
    %4400 = vmatprep.subr.bf16.mxu0 0
    %4401 = vmatpush1.bf16.msra.mxu0 %v4102
    %4402 = vmatprep.subr.bf16.mxu0 0
    %4403 = vmatpush1.bf16.msra.mxu0 %v4103
    %4404 = vmatprep.subr.bf16.mxu0 0
    %4405 = vmatpush1.bf16.msra.mxu0 %v4104
    %4406 = vmatprep.subr.bf16.mxu0 0
    %4407 = vmatpush1.bf16.msra.mxu0 %v4105
    %4408 = vmatprep.subr.bf16.mxu0 0
    %4409 = vmatpush1.bf16.msra.mxu0 %v4106
    %4410 = vmatprep.subr.bf16.mxu0 0
    %4411 = vmatpush1.bf16.msra.mxu0 %v4107
    %4412 = vmatprep.subr.bf16.mxu0 0
    %4413 = vmatpush1.bf16.msra.mxu0 %v4108
    %4414 = vmatprep.mubr.bf16.mxu0 %v3280
    %4415 = vmatmul.mubr.bf16.gmra.mrb[0].mxu0 %v3279
    %v4416 = vpop.f32.mrb[0].mxu0
    %v4417 = vadd.f32 %v4368, %v4416
    %v4418 = vpop.f32.mrb[0].mxu0
    %v4419 = vpop.f32.mrb[0].mxu0
    %v4420 = vadd.f32 %v4371, %v4419
    %v4421 = vpop.f32.mrb[0].mxu0
    %4422 = vmatprep.mubr.bf16.mxu0 %v3296
    %4423 = vmatmul.mubr.bf16.gmra.mrb[0].mxu0 %v3295
    %v4424 = vpop.f32.mrb[0].mxu0
    %v4425 = vadd.f32 %v4376, %v4424
    %v4426 = vpop.f32.mrb[0].mxu0
    %v4427 = vpop.f32.mrb[0].mxu0
    %v4428 = vadd.f32 %v4379, %v4427
    %v4429 = vpop.f32.mrb[0].mxu0
    %4430 = vdwg.mxu0
    %4431 = vmatprep.subr.bf16.mxu0 0
    %4432 = vmatpush1.bf16.msra.mxu0 %v4109
    %4433 = vmatprep.subr.bf16.mxu0 0
    %4434 = vmatpush1.bf16.msra.mxu0 %v4110
    %4435 = vmatprep.subr.bf16.mxu0 0
    %4436 = vmatpush1.bf16.msra.mxu0 %v4111
    %4437 = vmatprep.subr.bf16.mxu0 0
    %4438 = vmatpush1.bf16.msra.mxu0 %v4112
    %4439 = vmatprep.subr.bf16.mxu0 0
    %4440 = vmatpush1.bf16.msra.mxu0 %v4113
    %4441 = vmatprep.subr.bf16.mxu0 0
    %4442 = vmatpush1.bf16.msra.mxu0 %v4114
    %4443 = vmatprep.subr.bf16.mxu0 0
    %4444 = vmatpush1.bf16.msra.mxu0 %v4115
    %4445 = vmatprep.subr.bf16.mxu0 0
    %4446 = vmatpush1.bf16.msra.mxu0 %v4116
    %4447 = vmatprep.subr.bf16.mxu0 0
    %4448 = vmatpush1.bf16.msra.mxu0 %v4117
    %4449 = vmatprep.subr.bf16.mxu0 0
    %4450 = vmatpush1.bf16.msra.mxu0 %v4118
    %4451 = vmatprep.subr.bf16.mxu0 0
    %4452 = vmatpush1.bf16.msra.mxu0 %v4119
    %4453 = vmatprep.subr.bf16.mxu0 0
    %4454 = vmatpush1.bf16.msra.mxu0 %v4120
    %4455 = vmatprep.subr.bf16.mxu0 0
    %4456 = vmatpush1.bf16.msra.mxu0 %v4121
    %4457 = vmatprep.subr.bf16.mxu0 0
    %4458 = vmatpush1.bf16.msra.mxu0 %v4122
    %4459 = vmatprep.subr.bf16.mxu0 0
    %4460 = vmatpush1.bf16.msra.mxu0 %v4123
    %4461 = vmatprep.subr.bf16.mxu0 0
    %4462 = vmatpush1.bf16.msra.mxu0 %v4124
    %4463 = vmatprep.mubr.bf16.mxu0 %v3282
    %4464 = vmatmul.mubr.bf16.gmra.mrb[0].mxu0 %v3281
    %v4465 = vpop.f32.mrb[0].mxu0
    %v4466 = vadd.f32 %v4417, %v4465
    %v4467 = vpop.f32.mrb[0].mxu0
    %v4468 = vpop.f32.mrb[0].mxu0
    %v4469 = vadd.f32 %v4420, %v4468
    %v4470 = vpop.f32.mrb[0].mxu0
    %4471 = vmatprep.mubr.bf16.mxu0 %v3298
    %4472 = vmatmul.mubr.bf16.gmra.mrb[0].mxu0 %v3297
    %v4473 = vpop.f32.mrb[0].mxu0
    %v4474 = vadd.f32 %v4425, %v4473
    %v4475 = vpop.f32.mrb[0].mxu0
    %v4476 = vpop.f32.mrb[0].mxu0
    %v4477 = vadd.f32 %v4428, %v4476
    %v4478 = vpop.f32.mrb[0].mxu0
    %4479 = vdwg.mxu0
    %4480 = vmatprep.subr.bf16.mxu0 0
    %4481 = vmatpush1.bf16.msra.mxu0 %v4125
    %4482 = vmatprep.subr.bf16.mxu0 0
    %4483 = vmatpush1.bf16.msra.mxu0 %v4126
    %4484 = vmatprep.subr.bf16.mxu0 0
    %4485 = vmatpush1.bf16.msra.mxu0 %v4127
    %4486 = vmatprep.subr.bf16.mxu0 0
    %4487 = vmatpush1.bf16.msra.mxu0 %v4128
    %4488 = vmatprep.subr.bf16.mxu0 0
    %4489 = vmatpush1.bf16.msra.mxu0 %v4129
    %4490 = vmatprep.subr.bf16.mxu0 0
    %4491 = vmatpush1.bf16.msra.mxu0 %v4130
    %4492 = vmatprep.subr.bf16.mxu0 0
    %4493 = vmatpush1.bf16.msra.mxu0 %v4131
    %4494 = vmatprep.subr.bf16.mxu0 0
    %4495 = vmatpush1.bf16.msra.mxu0 %v4132
    %4496 = vmatprep.subr.bf16.mxu0 0
    %4497 = vmatpush1.bf16.msra.mxu0 %v4133
    %4498 = vmatprep.subr.bf16.mxu0 0
    %4499 = vmatpush1.bf16.msra.mxu0 %v4134
    %4500 = vmatprep.subr.bf16.mxu0 0
    %4501 = vmatpush1.bf16.msra.mxu0 %v4135
    %4502 = vmatprep.subr.bf16.mxu0 0
    %4503 = vmatpush1.bf16.msra.mxu0 %v4136
    %4504 = vmatprep.subr.bf16.mxu0 0
    %4505 = vmatpush1.bf16.msra.mxu0 %v4137
    %4506 = vmatprep.subr.bf16.mxu0 0
    %4507 = vmatpush1.bf16.msra.mxu0 %v4138
    %4508 = vmatprep.subr.bf16.mxu0 0
    %4509 = vmatpush1.bf16.msra.mxu0 %v4139
    %4510 = vmatprep.subr.bf16.mxu0 0
    %4511 = vmatpush1.bf16.msra.mxu0 %v4140
    %4512 = vmatprep.mubr.bf16.mxu0 %v3284
    %4513 = vmatmul.mubr.bf16.gmra.mrb[0].mxu0 %v3283
    %v4514 = vpop.f32.mrb[0].mxu0
    %v4515 = vadd.f32 %v4466, %v4514
    %v4516 = vpop.f32.mrb[0].mxu0
    %v4517 = vpop.f32.mrb[0].mxu0
    %v4518 = vadd.f32 %v4469, %v4517
    %v4519 = vpop.f32.mrb[0].mxu0
    %4520 = vmatprep.mubr.bf16.mxu0 %v3300
    %4521 = vmatmul.mubr.bf16.gmra.mrb[0].mxu0 %v3299
    %v4522 = vpop.f32.mrb[0].mxu0
    %v4523 = vadd.f32 %v4474, %v4522
    %v4524 = vpop.f32.mrb[0].mxu0
    %v4525 = vpop.f32.mrb[0].mxu0
    %v4526 = vadd.f32 %v4477, %v4525
    %v4527 = vpop.f32.mrb[0].mxu0
    %4528 = vdwg.mxu0
    %4529 = vmatprep.subr.bf16.mxu0 0
    %4530 = vmatpush1.bf16.msra.mxu0 %v4141
    %4531 = vmatprep.subr.bf16.mxu0 0
    %4532 = vmatpush1.bf16.msra.mxu0 %v4142
    %4533 = vmatprep.subr.bf16.mxu0 0
    %4534 = vmatpush1.bf16.msra.mxu0 %v4143
    %4535 = vmatprep.subr.bf16.mxu0 0
    %4536 = vmatpush1.bf16.msra.mxu0 %v4144
    %4537 = vmatprep.subr.bf16.mxu0 0
    %4538 = vmatpush1.bf16.msra.mxu0 %v4145
    %4539 = vmatprep.subr.bf16.mxu0 0
    %4540 = vmatpush1.bf16.msra.mxu0 %v4146
    %4541 = vmatprep.subr.bf16.mxu0 0
    %4542 = vmatpush1.bf16.msra.mxu0 %v4147
    %4543 = vmatprep.subr.bf16.mxu0 0
    %4544 = vmatpush1.bf16.msra.mxu0 %v4148
    %4545 = vmatprep.subr.bf16.mxu0 0
    %4546 = vmatpush1.bf16.msra.mxu0 %v4149
    %4547 = vmatprep.subr.bf16.mxu0 0
    %4548 = vmatpush1.bf16.msra.mxu0 %v4150
    %4549 = vmatprep.subr.bf16.mxu0 0
    %4550 = vmatpush1.bf16.msra.mxu0 %v4151
    %4551 = vmatprep.subr.bf16.mxu0 0
    %4552 = vmatpush1.bf16.msra.mxu0 %v4152
    %4553 = vmatprep.subr.bf16.mxu0 0
    %4554 = vmatpush1.bf16.msra.mxu0 %v4153
    %4555 = vmatprep.subr.bf16.mxu0 0
    %4556 = vmatpush1.bf16.msra.mxu0 %v4154
    %4557 = vmatprep.subr.bf16.mxu0 0
    %4558 = vmatpush1.bf16.msra.mxu0 %v4155
    %4559 = vmatprep.subr.bf16.mxu0 0
    %4560 = vmatpush1.bf16.msra.mxu0 %v4156
    %4561 = vmatprep.mubr.bf16.mxu0 %v3286
    %4562 = vmatmul.mubr.bf16.gmra.mrb[0].mxu0 %v3285
    %v4563 = vpop.f32.mrb[0].mxu0
    %v4564 = vadd.f32 %v4515, %v4563
    %v4565 = vpop.f32.mrb[0].mxu0
    %v4566 = vpop.f32.mrb[0].mxu0
    %v4567 = vadd.f32 %v4518, %v4566
    %v4568 = vpop.f32.mrb[0].mxu0
    %4569 = vmatprep.mubr.bf16.mxu0 %v3302
    %4570 = vmatmul.mubr.bf16.gmra.mrb[0].mxu0 %v3301
    %v4571 = vpop.f32.mrb[0].mxu0
    %v4572 = vadd.f32 %v4523, %v4571
    %v4573 = vpop.f32.mrb[0].mxu0
    %v4574 = vpop.f32.mrb[0].mxu0
    %v4575 = vadd.f32 %v4526, %v4574
    %v4576 = vpop.f32.mrb[0].mxu0
    %4577 = vdwg.mxu0
    %4578 = vmatprep.subr.bf16.mxu0 0
    %4579 = vmatpush1.bf16.msra.mxu0 %v4157
    %4580 = vmatprep.subr.bf16.mxu0 0
    %4581 = vmatpush1.bf16.msra.mxu0 %v4158
    %4582 = vmatprep.subr.bf16.mxu0 0
    %4583 = vmatpush1.bf16.msra.mxu0 %v4159
    %4584 = vmatprep.subr.bf16.mxu0 0
    %4585 = vmatpush1.bf16.msra.mxu0 %v4160
    %4586 = vmatprep.subr.bf16.mxu0 0
    %4587 = vmatpush1.bf16.msra.mxu0 %v4161
    %4588 = vmatprep.subr.bf16.mxu0 0
    %4589 = vmatpush1.bf16.msra.mxu0 %v4162
    %4590 = vmatprep.subr.bf16.mxu0 0
    %4591 = vmatpush1.bf16.msra.mxu0 %v4163
    %4592 = vmatprep.subr.bf16.mxu0 0
    %4593 = vmatpush1.bf16.msra.mxu0 %v4164
    %4594 = vmatprep.subr.bf16.mxu0 0
    %4595 = vmatpush1.bf16.msra.mxu0 %v4165
    %4596 = vmatprep.subr.bf16.mxu0 0
    %4597 = vmatpush1.bf16.msra.mxu0 %v4166
    %4598 = vmatprep.subr.bf16.mxu0 0
    %4599 = vmatpush1.bf16.msra.mxu0 %v4167
    %4600 = vmatprep.subr.bf16.mxu0 0
    %4601 = vmatpush1.bf16.msra.mxu0 %v4168
    %4602 = vmatprep.subr.bf16.mxu0 0
    %4603 = vmatpush1.bf16.msra.mxu0 %v4169
    %4604 = vmatprep.subr.bf16.mxu0 0
    %4605 = vmatpush1.bf16.msra.mxu0 %v4170
    %4606 = vmatprep.subr.bf16.mxu0 0
    %4607 = vmatpush1.bf16.msra.mxu0 %v4171
    %4608 = vmatprep.subr.bf16.mxu0 0
    %4609 = vmatpush1.bf16.msra.mxu0 %v4172
    %4610 = vmatprep.mubr.bf16.mxu0 %v3288
    %4611 = vmatmul.mubr.bf16.gmra.mrb[0].mxu0 %v3287
    %v4612 = vpop.f32.mrb[0].mxu0
    %v4613 = vadd.f32 %v4564, %v4612
    %v4614 = vpop.f32.mrb[0].mxu0
    %v4615 = vpop.f32.mrb[0].mxu0
    %v4616 = vadd.f32 %v4567, %v4615
    %v4617 = vpop.f32.mrb[0].mxu0
    %4618 = vmatprep.mubr.bf16.mxu0 %v3304
    %4619 = vmatmul.mubr.bf16.gmra.mrb[0].mxu0 %v3303
    %v4620 = vpop.f32.mrb[0].mxu0
    %v4621 = vadd.f32 %v4572, %v4620
    %v4622 = vpop.f32.mrb[0].mxu0
    %v4623 = vpop.f32.mrb[0].mxu0
    %v4624 = vadd.f32 %v4575, %v4623
    %v4625 = vpop.f32.mrb[0].mxu0
    %4626 = vdwg.mxu0
    %4627 = vmatprep.subr.bf16.mxu0 0
    %4628 = vmatpush1.bf16.msra.mxu0 %v4173
    %4629 = vmatprep.subr.bf16.mxu0 0
    %4630 = vmatpush1.bf16.msra.mxu0 %v4174
    %4631 = vmatprep.subr.bf16.mxu0 0
    %4632 = vmatpush1.bf16.msra.mxu0 %v4175
    %4633 = vmatprep.subr.bf16.mxu0 0
    %4634 = vmatpush1.bf16.msra.mxu0 %v4176
    %4635 = vmatprep.subr.bf16.mxu0 0
    %4636 = vmatpush1.bf16.msra.mxu0 %v4177
    %4637 = vmatprep.subr.bf16.mxu0 0
    %4638 = vmatpush1.bf16.msra.mxu0 %v4178
    %4639 = vmatprep.subr.bf16.mxu0 0
    %4640 = vmatpush1.bf16.msra.mxu0 %v4179
    %4641 = vmatprep.subr.bf16.mxu0 0
    %4642 = vmatpush1.bf16.msra.mxu0 %v4180
    %4643 = vmatprep.subr.bf16.mxu0 0
    %4644 = vmatpush1.bf16.msra.mxu0 %v4181
    %4645 = vmatprep.subr.bf16.mxu0 0
    %4646 = vmatpush1.bf16.msra.mxu0 %v4182
    %4647 = vmatprep.subr.bf16.mxu0 0
    %4648 = vmatpush1.bf16.msra.mxu0 %v4183
    %4649 = vmatprep.subr.bf16.mxu0 0
    %4650 = vmatpush1.bf16.msra.mxu0 %v4184
    %4651 = vmatprep.subr.bf16.mxu0 0
    %4652 = vmatpush1.bf16.msra.mxu0 %v4185
    %4653 = vmatprep.subr.bf16.mxu0 0
    %4654 = vmatpush1.bf16.msra.mxu0 %v4186
    %4655 = vmatprep.subr.bf16.mxu0 0
    %4656 = vmatpush1.bf16.msra.mxu0 %v4187
    %4657 = vmatprep.subr.bf16.mxu0 0
    %4658 = vmatpush1.bf16.msra.mxu0 %v4188
    %4659 = vmatprep.mubr.bf16.mxu0 %v3290
    %4660 = vmatmul.mubr.bf16.gmra.mrb[0].mxu0 %v3289
    %v4661 = vpop.f32.mrb[0].mxu0
    %v4662 = vadd.f32 %v4613, %v4661
    %v4663 = vpop.f32.mrb[0].mxu0
    %v4664 = vpop.f32.mrb[0].mxu0
    %v4665 = vadd.f32 %v4616, %v4664
    %v4666 = vpop.f32.mrb[0].mxu0
    %4667 = vmatprep.mubr.bf16.mxu0 %v3306
    %4668 = vmatmul.mubr.bf16.gmra.mrb[0].mxu0 %v3305
    %v4669 = vpop.f32.mrb[0].mxu0
    %v4670 = vadd.f32 %v4621, %v4669
    %v4671 = vpop.f32.mrb[0].mxu0
    %v4672 = vpop.f32.mrb[0].mxu0
    %v4673 = vadd.f32 %v4624, %v4672
    %v4674 = vpop.f32.mrb[0].mxu0
    %4675 = vdwg.mxu0
    %4676 = vmatprep.subr.bf16.mxu0 0
    %4677 = vmatpush1.bf16.msra.mxu0 %v4189
    %4678 = vmatprep.subr.bf16.mxu0 0
    %4679 = vmatpush1.bf16.msra.mxu0 %v4190
    %4680 = vmatprep.subr.bf16.mxu0 0
    %4681 = vmatpush1.bf16.msra.mxu0 %v4191
    %4682 = vmatprep.subr.bf16.mxu0 0
    %4683 = vmatpush1.bf16.msra.mxu0 %v4192
    %4684 = vmatprep.subr.bf16.mxu0 0
    %4685 = vmatpush1.bf16.msra.mxu0 %v4193
    %4686 = vmatprep.subr.bf16.mxu0 0
    %4687 = vmatpush1.bf16.msra.mxu0 %v4194
    %4688 = vmatprep.subr.bf16.mxu0 0
    %4689 = vmatpush1.bf16.msra.mxu0 %v4195
    %4690 = vmatprep.subr.bf16.mxu0 0
    %4691 = vmatpush1.bf16.msra.mxu0 %v4196
    %4692 = vmatprep.subr.bf16.mxu0 0
    %4693 = vmatpush1.bf16.msra.mxu0 %v4197
    %4694 = vmatprep.subr.bf16.mxu0 0
    %4695 = vmatpush1.bf16.msra.mxu0 %v4198
    %4696 = vmatprep.subr.bf16.mxu0 0
    %4697 = vmatpush1.bf16.msra.mxu0 %v4199
    %4698 = vmatprep.subr.bf16.mxu0 0
    %4699 = vmatpush1.bf16.msra.mxu0 %v4200
    %4700 = vmatprep.subr.bf16.mxu0 0
    %4701 = vmatpush1.bf16.msra.mxu0 %v4201
    %4702 = vmatprep.subr.bf16.mxu0 0
    %4703 = vmatpush1.bf16.msra.mxu0 %v4202
    %4704 = vmatprep.subr.bf16.mxu0 0
    %4705 = vmatpush1.bf16.msra.mxu0 %v4203
    %4706 = vmatprep.subr.bf16.mxu0 0
    %4707 = vmatpush1.bf16.msra.mxu0 %v4204
    %4708 = vmatprep.mubr.bf16.mxu0 %v3292
    %4709 = vmatmul.mubr.bf16.gmra.mrb[0].mxu0 %v3291
    %v4710 = vpop.f32.mrb[0].mxu0
    %v4711 = vadd.f32 %v4662, %v4710
    %v4712 = vpop.f32.mrb[0].mxu0
    %v4713 = vpop.f32.mrb[0].mxu0
    %v4714 = vadd.f32 %v4665, %v4713
    %v4715 = vpop.f32.mrb[0].mxu0
    %4716 = vmatprep.mubr.bf16.mxu0 %v3308
    %4717 = vmatmul.mubr.bf16.gmra.mrb[0].mxu0 %v3307
    %v4718 = vpop.f32.mrb[0].mxu0
    %v4719 = vadd.f32 %v4670, %v4718
    %v4720 = vpop.f32.mrb[0].mxu0
    %v4721 = vpop.f32.mrb[0].mxu0
    %v4722 = vadd.f32 %v4673, %v4721
    %v4723 = vpop.f32.mrb[0].mxu0
    %4724 = vdwg.mxu0
    %v4725 = vpack.c.bf16 %v4714, %v4711
    %v4726 = vpack.c.bf16 %v4722, %v4719
    %4727 = vmatprep.subr.bf16.mxu0 0
    %4728 = vmatpush1.bf16.msra.mxu0 %v4725
    %4729 = vmatprep.subr.bf16.mxu0 0
    %4730 = vmatpush1.bf16.msra.mxu0 %v4726
    %4731 = vmatprep.subr.bf16.mxu0 0
    %4732 = vmatpush1.bf16.msra.mxu0 0
    %4733 = vmatprep.subr.bf16.mxu0 0
    %4734 = vmatpush1.bf16.msra.mxu0 0
    %4735 = vmatprep.subr.bf16.mxu0 0
    %4736 = vmatpush1.bf16.msra.mxu0 0
    %4737 = vmatprep.subr.bf16.mxu0 0
    %4738 = vmatpush1.bf16.msra.mxu0 0
    %4739 = vmatprep.subr.bf16.mxu0 0
    %4740 = vmatpush1.bf16.msra.mxu0 0
    %4741 = vmatprep.subr.bf16.mxu0 0
    %4742 = vmatpush1.bf16.msra.mxu0 0
    %4743 = vmatprep.subr.bf16.mxu0 0
    %4744 = vmatpush1.bf16.msra.mxu0 0
    %4745 = vmatprep.subr.bf16.mxu0 0
    %4746 = vmatpush1.bf16.msra.mxu0 0
    %4747 = vmatprep.subr.bf16.mxu0 0
    %4748 = vmatpush1.bf16.msra.mxu0 0
    %4749 = vmatprep.subr.bf16.mxu0 0
    %4750 = vmatpush1.bf16.msra.mxu0 0
    %4751 = vmatprep.subr.bf16.mxu0 0
    %4752 = vmatpush1.bf16.msra.mxu0 0
    %4753 = vmatprep.subr.bf16.mxu0 0
    %4754 = vmatpush1.bf16.msra.mxu0 0
    %4755 = vmatprep.subr.bf16.mxu0 0
    %4756 = vmatpush1.bf16.msra.mxu0 0
    %4757 = vmatprep.subr.bf16.mxu0 0
    %4758 = vmatpush1.bf16.msra.mxu0 0
    %4759 = vmatprep.mubr.bf16.mxu0 0
    %4760 = vmatmul.mubr.bf16.gmra.mrb[0].mxu0 %v1139
    %v4761 = vpop.f32.mrb[0].mxu0
    %v4762 = vadd.f32 0.0, %v4761
    %v4763 = vpop.f32.mrb[0].mxu0
    %v4764 = vpop.f32.mrb[0].mxu0
    %v4765 = vadd.f32 0.0, %v4764
    %v4766 = vpop.f32.mrb[0].mxu0
    %4767 = vdwg.mxu0
    %v4768 = vld [vmem:[#allocation2 + $0x8] sm:$0xf]
    %v4769 = vld [vmem:[#allocation2 + $0xc] sm:$0xf]
    %v4770 = vld [vmem:[#allocation2 + $0x10] sm:$0xf]
    %v4771 = vld [vmem:[#allocation2 + $0x14] sm:$0xf]
    %v4776 = vunpack.c.l.b16 %v4768
    %v4777 = vunpack.c.l.b16 %v4769
    %v4778 = vunpack.c.l.b16 %v4770
    %v4779 = vunpack.c.l.b16 %v4771
    %v4780 = vpack.c.b16 %v4777, %v4776
    %v4781 = vpack.c.b16 %v4779, %v4778
    %v4785 = vsel %vm1026, %v1257, 0
    %4787 = vmatprep.subr.bf16.mxu0 0
    %4788 = vmatpush1.bf16.msra.mxu0 %v4780
    %4789 = vmatprep.subr.bf16.mxu0 0
    %4790 = vmatpush1.bf16.msra.mxu0 %v4781
    %4791 = vmatprep.subr.bf16.mxu0 0
    %4792 = vmatpush1.bf16.msra.mxu0 0
    %4793 = vmatprep.subr.bf16.mxu0 0
    %4794 = vmatpush1.bf16.msra.mxu0 0
    %4795 = vmatprep.subr.bf16.mxu0 0
    %4796 = vmatpush1.bf16.msra.mxu0 0
    %4797 = vmatprep.subr.bf16.mxu0 0
    %4798 = vmatpush1.bf16.msra.mxu0 0
    %4799 = vmatprep.subr.bf16.mxu0 0
    %4800 = vmatpush1.bf16.msra.mxu0 0
    %4801 = vmatprep.subr.bf16.mxu0 0
    %4802 = vmatpush1.bf16.msra.mxu0 0
    %4803 = vmatprep.subr.bf16.mxu0 0
    %4804 = vmatpush1.bf16.msra.mxu0 0
    %4805 = vmatprep.subr.bf16.mxu0 0
    %4806 = vmatpush1.bf16.msra.mxu0 0
    %4807 = vmatprep.subr.bf16.mxu0 0
    %4808 = vmatpush1.bf16.msra.mxu0 0
    %4809 = vmatprep.subr.bf16.mxu0 0
    %4810 = vmatpush1.bf16.msra.mxu0 0
    %4811 = vmatprep.subr.bf16.mxu0 0
    %4812 = vmatpush1.bf16.msra.mxu0 0
    %4813 = vmatprep.subr.bf16.mxu0 0
    %4814 = vmatpush1.bf16.msra.mxu0 0
    %4815 = vmatprep.subr.bf16.mxu0 0
    %4816 = vmatpush1.bf16.msra.mxu0 0
    %4817 = vmatprep.subr.bf16.mxu0 0
    %4818 = vmatpush1.bf16.msra.mxu0 0
    %4819 = vmatprep.mubr.bf16.mxu0 0
    %4820 = vmatmul.mubr.bf16.gmra.mrb[0].mxu0 %v4785
    %v4821 = vpop.f32.mrb[0].mxu0
    %v4822 = vadd.f32 %v4762, %v4821
    %v4823 = vpop.f32.mrb[0].mxu0
    %v4824 = vpop.f32.mrb[0].mxu0
    %v4825 = vadd.f32 %v4765, %v4824
    %v4826 = vpop.f32.mrb[0].mxu0
    %4827 = vdwg.mxu0
    %v4828 = vld [vmem:[#allocation5 + $0x5] ss:$0 sm:$0xff]
    %v4829 = vadd.f32 %v4822, %v4828
    %v4830 = vadd.f32 %v4825, %v4828
    %v4831 = vmin.f32 %v4829, 0.0
    %v4832 = vmin.f32 %v4830, 0.0
    %v4833 = vmul.f32 %v4831, 0.5
    %v4834 = vmul.f32 %v4832, 0.5
    %v4835 = vtanh.pop %v4833
    %v4836 = vtanh.pop %v4834
    %v4837 = vmul.f32 %v4835, 2.0
    %v4838 = vmul.f32 %v4836, 2.0
    %v4839 = vsub.f32 1.0, %v4835
    %v4840 = vsub.f32 1.0, %v4836
    %v4841 = vrcp.pop %v4839
    %v4842 = vrcp.pop %v4840
    %v4843 = vmul.f32 %v4837, %v4841
    %v4844 = vmul.f32 %v4838, %v4842
    %vm4845 = vcmp.gt.f32.partialorder %v4829, 0.0
    %vm4846 = vcmp.gt.f32.partialorder %v4830, 0.0
    %v4847 = vsel %vm4845, %v4829, %v4843
    %v4848 = vsel %vm4846, %v4830, %v4844
    %v4849 = vpack.c.bf16 %v4848, %v4847
    %v4850 = vld [vmem:[%s9 + $0x50] sm:$0xff]
    %v4851 = vld [vmem:[%s9 + $0x58] sm:$0xff]
    %v4852 = vld [vmem:[%s9 + $0x60] sm:$0xff]
    %v4853 = vld [vmem:[%s9 + $0x68] sm:$0xff]
    %v4854 = vld [vmem:[%s9 + $0x70] sm:$0xff]
    %v4855 = vld [vmem:[%s9 + $0x78] sm:$0xff]
    %v4856 = vld [vmem:[%s9 + $0x80] sm:$0xff]
    %v4857 = vld [vmem:[%s9 + $0x88] sm:$0xff]
    %v4858 = vld [vmem:[%s9 + $0x90] sm:$0xff]
    %v4859 = vld [vmem:[%s9 + $0x98] sm:$0xff]
    %v4860 = vld [vmem:[%s9 + $0xa0] sm:$0xff]
    %v4861 = vld [vmem:[%s9 + $0xa8] sm:$0xff]
    %v4862 = vld [vmem:[%s9 + $0xb0] sm:$0xff]
    %v4863 = vld [vmem:[%s9 + $0xb8] sm:$0xff]
    %v4864 = vld [vmem:[%s9 + $0xc0] sm:$0xff]
    %v4865 = vld [vmem:[%s9 + $0xc8] sm:$0xff]
    %v4866 = vld [vmem:[%s9 + $0x120] sm:$0xff]
    %v4867 = vld [vmem:[%s9 + $0x128] sm:$0xff]
    %v4868 = vld [vmem:[%s9 + $0x130] sm:$0xff]
    %v4869 = vld [vmem:[%s9 + $0x138] sm:$0xff]
    %v4870 = vld [vmem:[%s9 + $0x140] sm:$0xff]
    %v4871 = vld [vmem:[%s9 + $0x148] sm:$0xff]
    %v4872 = vld [vmem:[%s9 + $0x150] sm:$0xff]
    %v4873 = vld [vmem:[%s9 + $0x158] sm:$0xff]
    %v4874 = vld [vmem:[%s9 + $0x160] sm:$0xff]
    %v4875 = vld [vmem:[%s9 + $0x168] sm:$0xff]
    %v4876 = vld [vmem:[%s9 + $0x170] sm:$0xff]
    %v4877 = vld [vmem:[%s9 + $0x178] sm:$0xff]
    %v4878 = vld [vmem:[%s9 + $0x180] sm:$0xff]
    %v4879 = vld [vmem:[%s9 + $0x188] sm:$0xff]
    %v4880 = vld [vmem:[%s9 + $0x190] sm:$0xff]
    %v4881 = vld [vmem:[%s9 + $0x198] sm:$0xff]
    %v4882 = vld [vmem:[%s9 + $0x1f0] sm:$0xff]
    %v4883 = vld [vmem:[%s9 + $0x1f8] sm:$0xff]
    %v4884 = vld [vmem:[%s9 + $0x200] sm:$0xff]
    %v4885 = vld [vmem:[%s9 + $0x208] sm:$0xff]
    %v4886 = vld [vmem:[%s9 + $0x210] sm:$0xff]
    %v4887 = vld [vmem:[%s9 + $0x218] sm:$0xff]
    %v4888 = vld [vmem:[%s9 + $0x220] sm:$0xff]
    %v4889 = vld [vmem:[%s9 + $0x228] sm:$0xff]
    %v4890 = vld [vmem:[%s9 + $0x230] sm:$0xff]
    %v4891 = vld [vmem:[%s9 + $0x238] sm:$0xff]
    %v4892 = vld [vmem:[%s9 + $0x240] sm:$0xff]
    %v4893 = vld [vmem:[%s9 + $0x248] sm:$0xff]
    %v4894 = vld [vmem:[%s9 + $0x250] sm:$0xff]
    %v4895 = vld [vmem:[%s9 + $0x258] sm:$0xff]
    %v4896 = vld [vmem:[%s9 + $0x260] sm:$0xff]
    %v4897 = vld [vmem:[%s9 + $0x268] sm:$0xff]
    %v4898 = vld [vmem:[%s9 + $0x2c0] sm:$0xff]
    %v4899 = vld [vmem:[%s9 + $0x2c8] sm:$0xff]
    %v4900 = vld [vmem:[%s9 + $0x2d0] sm:$0xff]
    %v4901 = vld [vmem:[%s9 + $0x2d8] sm:$0xff]
    %v4902 = vld [vmem:[%s9 + $0x2e0] sm:$0xff]
    %v4903 = vld [vmem:[%s9 + $0x2e8] sm:$0xff]
    %v4904 = vld [vmem:[%s9 + $0x2f0] sm:$0xff]
    %v4905 = vld [vmem:[%s9 + $0x2f8] sm:$0xff]
    %v4906 = vld [vmem:[%s9 + $0x300] sm:$0xff]
    %v4907 = vld [vmem:[%s9 + $0x308] sm:$0xff]
    %v4908 = vld [vmem:[%s9 + $0x310] sm:$0xff]
    %v4909 = vld [vmem:[%s9 + $0x318] sm:$0xff]
    %v4910 = vld [vmem:[%s9 + $0x320] sm:$0xff]
    %v4911 = vld [vmem:[%s9 + $0x328] sm:$0xff]
    %v4912 = vld [vmem:[%s9 + $0x330] sm:$0xff]
    %v4913 = vld [vmem:[%s9 + $0x338] sm:$0xff]
    %v4914 = vld [vmem:[%s9 + $0x390] sm:$0xff]
    %v4915 = vld [vmem:[%s9 + $0x398] sm:$0xff]
    %v4916 = vld [vmem:[%s9 + $0x3a0] sm:$0xff]
    %v4917 = vld [vmem:[%s9 + $0x3a8] sm:$0xff]
    %v4918 = vld [vmem:[%s9 + $0x3b0] sm:$0xff]
    %v4919 = vld [vmem:[%s9 + $0x3b8] sm:$0xff]
    %v4920 = vld [vmem:[%s9 + $0x3c0] sm:$0xff]
    %v4921 = vld [vmem:[%s9 + $0x3c8] sm:$0xff]
    %v4922 = vld [vmem:[%s9 + $0x3d0] sm:$0xff]
    %v4923 = vld [vmem:[%s9 + $0x3d8] sm:$0xff]
    %v4924 = vld [vmem:[%s9 + $0x3e0] sm:$0xff]
    %v4925 = vld [vmem:[%s9 + $0x3e8] sm:$0xff]
    %v4926 = vld [vmem:[%s9 + $0x3f0] sm:$0xff]
    %v4927 = vld [vmem:[%s9 + $0x3f8] sm:$0xff]
    %v4928 = vld [vmem:[%s9 + $0x400] sm:$0xff]
    %v4929 = vld [vmem:[%s9 + $0x408] sm:$0xff]
    %v4930 = vld [vmem:[%s9 + $0x460] sm:$0xff]
    %v4931 = vld [vmem:[%s9 + $0x468] sm:$0xff]
    %v4932 = vld [vmem:[%s9 + $0x470] sm:$0xff]
    %v4933 = vld [vmem:[%s9 + $0x478] sm:$0xff]
    %v4934 = vld [vmem:[%s9 + $0x480] sm:$0xff]
    %v4935 = vld [vmem:[%s9 + $0x488] sm:$0xff]
    %v4936 = vld [vmem:[%s9 + $0x490] sm:$0xff]
    %v4937 = vld [vmem:[%s9 + $0x498] sm:$0xff]
    %v4938 = vld [vmem:[%s9 + $0x4a0] sm:$0xff]
    %v4939 = vld [vmem:[%s9 + $0x4a8] sm:$0xff]
    %v4940 = vld [vmem:[%s9 + $0x4b0] sm:$0xff]
    %v4941 = vld [vmem:[%s9 + $0x4b8] sm:$0xff]
    %v4942 = vld [vmem:[%s9 + $0x4c0] sm:$0xff]
    %v4943 = vld [vmem:[%s9 + $0x4c8] sm:$0xff]
    %v4944 = vld [vmem:[%s9 + $0x4d0] sm:$0xff]
    %v4945 = vld [vmem:[%s9 + $0x4d8] sm:$0xff]
    %v4946 = vld [vmem:[%s9 + $0x530] sm:$0xff]
    %v4947 = vld [vmem:[%s9 + $0x538] sm:$0xff]
    %v4948 = vld [vmem:[%s9 + $0x540] sm:$0xff]
    %v4949 = vld [vmem:[%s9 + $0x548] sm:$0xff]
    %v4950 = vld [vmem:[%s9 + $0x550] sm:$0xff]
    %v4951 = vld [vmem:[%s9 + $0x558] sm:$0xff]
    %v4952 = vld [vmem:[%s9 + $0x560] sm:$0xff]
    %v4953 = vld [vmem:[%s9 + $0x568] sm:$0xff]
    %v4954 = vld [vmem:[%s9 + $0x570] sm:$0xff]
    %v4955 = vld [vmem:[%s9 + $0x578] sm:$0xff]
    %v4956 = vld [vmem:[%s9 + $0x580] sm:$0xff]
    %v4957 = vld [vmem:[%s9 + $0x588] sm:$0xff]
    %v4958 = vld [vmem:[%s9 + $0x590] sm:$0xff]
    %v4959 = vld [vmem:[%s9 + $0x598] sm:$0xff]
    %v4960 = vld [vmem:[%s9 + $0x5a0] sm:$0xff]
    %v4961 = vld [vmem:[%s9 + $0x5a8] sm:$0xff]
    %v4962 = vld [vmem:[%s9 + $0x600] sm:$0xff]
    %v4963 = vld [vmem:[%s9 + $0x608] sm:$0xff]
    %v4964 = vld [vmem:[%s9 + $0x610] sm:$0xff]
    %v4965 = vld [vmem:[%s9 + $0x618] sm:$0xff]
    %v4966 = vld [vmem:[%s9 + $0x620] sm:$0xff]
    %v4967 = vld [vmem:[%s9 + $0x628] sm:$0xff]
    %v4968 = vld [vmem:[%s9 + $0x630] sm:$0xff]
    %v4969 = vld [vmem:[%s9 + $0x638] sm:$0xff]
    %v4970 = vld [vmem:[%s9 + $0x640] sm:$0xff]
    %v4971 = vld [vmem:[%s9 + $0x648] sm:$0xff]
    %v4972 = vld [vmem:[%s9 + $0x650] sm:$0xff]
    %v4973 = vld [vmem:[%s9 + $0x658] sm:$0xff]
    %v4974 = vld [vmem:[%s9 + $0x660] sm:$0xff]
    %v4975 = vld [vmem:[%s9 + $0x668] sm:$0xff]
    %v4976 = vld [vmem:[%s9 + $0x670] sm:$0xff]
    %v4977 = vld [vmem:[%s9 + $0x678] sm:$0xff]
    %v4978 = vld [vmem:[%s9 + $0x6d0] sm:$0xff]
    %v4979 = vld [vmem:[%s9 + $0x6d8] sm:$0xff]
    %v4980 = vld [vmem:[%s9 + $0x6e0] sm:$0xff]
    %v4981 = vld [vmem:[%s9 + $0x6e8] sm:$0xff]
    %v4982 = vld [vmem:[%s9 + $0x6f0] sm:$0xff]
    %v4983 = vld [vmem:[%s9 + $0x6f8] sm:$0xff]
    %v4984 = vld [vmem:[%s9 + $0x700] sm:$0xff]
    %v4985 = vld [vmem:[%s9 + $0x708] sm:$0xff]
    %v4986 = vld [vmem:[%s9 + $0x710] sm:$0xff]
    %v4987 = vld [vmem:[%s9 + $0x718] sm:$0xff]
    %v4988 = vld [vmem:[%s9 + $0x720] sm:$0xff]
    %v4989 = vld [vmem:[%s9 + $0x728] sm:$0xff]
    %v4990 = vld [vmem:[%s9 + $0x730] sm:$0xff]
    %v4991 = vld [vmem:[%s9 + $0x738] sm:$0xff]
    %v4992 = vld [vmem:[%s9 + $0x740] sm:$0xff]
    %v4993 = vld [vmem:[%s9 + $0x748] sm:$0xff]
    %v4994 = vld [vmem:[%s9 + $0x7a0] sm:$0xff]
    %v4995 = vld [vmem:[%s9 + $0x7a8] sm:$0xff]
    %v4996 = vld [vmem:[%s9 + $0x7b0] sm:$0xff]
    %v4997 = vld [vmem:[%s9 + $0x7b8] sm:$0xff]
    %v4998 = vld [vmem:[%s9 + $0x7c0] sm:$0xff]
    %v4999 = vld [vmem:[%s9 + $0x7c8] sm:$0xff]
    %v5000 = vld [vmem:[%s9 + $0x7d0] sm:$0xff]
    %v5001 = vld [vmem:[%s9 + $0x7d8] sm:$0xff]
    %v5002 = vld [vmem:[%s9 + $0x7e0] sm:$0xff]
    %v5003 = vld [vmem:[%s9 + $0x7e8] sm:$0xff]
    %v5004 = vld [vmem:[%s9 + $0x7f0] sm:$0xff]
    %v5005 = vld [vmem:[%s9 + $0x7f8] sm:$0xff]
    %v5006 = vld [vmem:[%s9 + $0x800] sm:$0xff]
    %v5007 = vld [vmem:[%s9 + $0x808] sm:$0xff]
    %v5008 = vld [vmem:[%s9 + $0x810] sm:$0xff]
    %v5009 = vld [vmem:[%s9 + $0x818] sm:$0xff]
    %v5010 = vld [vmem:[%s9 + $0x870] sm:$0xff]
    %v5011 = vld [vmem:[%s9 + $0x878] sm:$0xff]
    %v5012 = vld [vmem:[%s9 + $0x880] sm:$0xff]
    %v5013 = vld [vmem:[%s9 + $0x888] sm:$0xff]
    %v5014 = vld [vmem:[%s9 + $0x890] sm:$0xff]
    %v5015 = vld [vmem:[%s9 + $0x898] sm:$0xff]
    %v5016 = vld [vmem:[%s9 + $0x8a0] sm:$0xff]
    %v5017 = vld [vmem:[%s9 + $0x8a8] sm:$0xff]
    %v5018 = vld [vmem:[%s9 + $0x8b0] sm:$0xff]
    %v5019 = vld [vmem:[%s9 + $0x8b8] sm:$0xff]
    %v5020 = vld [vmem:[%s9 + $0x8c0] sm:$0xff]
    %v5021 = vld [vmem:[%s9 + $0x8c8] sm:$0xff]
    %v5022 = vld [vmem:[%s9 + $0x8d0] sm:$0xff]
    %v5023 = vld [vmem:[%s9 + $0x8d8] sm:$0xff]
    %v5024 = vld [vmem:[%s9 + $0x8e0] sm:$0xff]
    %v5025 = vld [vmem:[%s9 + $0x8e8] sm:$0xff]
    %v5026 = vld [vmem:[%s9 + $0x940] sm:$0xff]
    %v5027 = vld [vmem:[%s9 + $0x948] sm:$0xff]
    %v5028 = vld [vmem:[%s9 + $0x950] sm:$0xff]
    %v5029 = vld [vmem:[%s9 + $0x958] sm:$0xff]
    %v5030 = vld [vmem:[%s9 + $0x960] sm:$0xff]
    %v5031 = vld [vmem:[%s9 + $0x968] sm:$0xff]
    %v5032 = vld [vmem:[%s9 + $0x970] sm:$0xff]
    %v5033 = vld [vmem:[%s9 + $0x978] sm:$0xff]
    %v5034 = vld [vmem:[%s9 + $0x980] sm:$0xff]
    %v5035 = vld [vmem:[%s9 + $0x988] sm:$0xff]
    %v5036 = vld [vmem:[%s9 + $0x990] sm:$0xff]
    %v5037 = vld [vmem:[%s9 + $0x998] sm:$0xff]
    %v5038 = vld [vmem:[%s9 + $0x9a0] sm:$0xff]
    %v5039 = vld [vmem:[%s9 + $0x9a8] sm:$0xff]
    %v5040 = vld [vmem:[%s9 + $0x9b0] sm:$0xff]
    %v5041 = vld [vmem:[%s9 + $0x9b8] sm:$0xff]
    %v5042 = vld [vmem:[%s9 + $0xa10] sm:$0xff]
    %v5043 = vld [vmem:[%s9 + $0xa18] sm:$0xff]
    %v5044 = vld [vmem:[%s9 + $0xa20] sm:$0xff]
    %v5045 = vld [vmem:[%s9 + $0xa28] sm:$0xff]
    %v5046 = vld [vmem:[%s9 + $0xa30] sm:$0xff]
    %v5047 = vld [vmem:[%s9 + $0xa38] sm:$0xff]
    %v5048 = vld [vmem:[%s9 + $0xa40] sm:$0xff]
    %v5049 = vld [vmem:[%s9 + $0xa48] sm:$0xff]
    %v5050 = vld [vmem:[%s9 + $0xa50] sm:$0xff]
    %v5051 = vld [vmem:[%s9 + $0xa58] sm:$0xff]
    %v5052 = vld [vmem:[%s9 + $0xa60] sm:$0xff]
    %v5053 = vld [vmem:[%s9 + $0xa68] sm:$0xff]
    %v5054 = vld [vmem:[%s9 + $0xa70] sm:$0xff]
    %v5055 = vld [vmem:[%s9 + $0xa78] sm:$0xff]
    %v5056 = vld [vmem:[%s9 + $0xa80] sm:$0xff]
    %v5057 = vld [vmem:[%s9 + $0xa88] sm:$0xff]
    %v5058 = vld [vmem:[%s9 + $0xae0] sm:$0xff]
    %v5059 = vld [vmem:[%s9 + $0xae8] sm:$0xff]
    %v5060 = vld [vmem:[%s9 + $0xaf0] sm:$0xff]
    %v5061 = vld [vmem:[%s9 + $0xaf8] sm:$0xff]
    %v5062 = vld [vmem:[%s9 + $0xb00] sm:$0xff]
    %v5063 = vld [vmem:[%s9 + $0xb08] sm:$0xff]
    %v5064 = vld [vmem:[%s9 + $0xb10] sm:$0xff]
    %v5065 = vld [vmem:[%s9 + $0xb18] sm:$0xff]
    %v5066 = vld [vmem:[%s9 + $0xb20] sm:$0xff]
    %v5067 = vld [vmem:[%s9 + $0xb28] sm:$0xff]
    %v5068 = vld [vmem:[%s9 + $0xb30] sm:$0xff]
    %v5069 = vld [vmem:[%s9 + $0xb38] sm:$0xff]
    %v5070 = vld [vmem:[%s9 + $0xb40] sm:$0xff]
    %v5071 = vld [vmem:[%s9 + $0xb48] sm:$0xff]
    %v5072 = vld [vmem:[%s9 + $0xb50] sm:$0xff]
    %v5073 = vld [vmem:[%s9 + $0xb58] sm:$0xff]
    %v5074 = vld [vmem:[%s9 + $0xbb0] sm:$0xff]
    %v5075 = vld [vmem:[%s9 + $0xbb8] sm:$0xff]
    %v5076 = vld [vmem:[%s9 + $0xbc0] sm:$0xff]
    %v5077 = vld [vmem:[%s9 + $0xbc8] sm:$0xff]
    %v5078 = vld [vmem:[%s9 + $0xbd0] sm:$0xff]
    %v5079 = vld [vmem:[%s9 + $0xbd8] sm:$0xff]
    %v5080 = vld [vmem:[%s9 + $0xbe0] sm:$0xff]
    %v5081 = vld [vmem:[%s9 + $0xbe8] sm:$0xff]
    %v5082 = vld [vmem:[%s9 + $0xbf0] sm:$0xff]
    %v5083 = vld [vmem:[%s9 + $0xbf8] sm:$0xff]
    %v5084 = vld [vmem:[%s9 + $0xc00] sm:$0xff]
    %v5085 = vld [vmem:[%s9 + $0xc08] sm:$0xff]
    %v5086 = vld [vmem:[%s9 + $0xc10] sm:$0xff]
    %v5087 = vld [vmem:[%s9 + $0xc18] sm:$0xff]
    %v5088 = vld [vmem:[%s9 + $0xc20] sm:$0xff]
    %v5089 = vld [vmem:[%s9 + $0xc28] sm:$0xff]
    %v5090 = vld [vmem:[%s9 + $0xc80] sm:$0xff]
    %v5091 = vld [vmem:[%s9 + $0xc88] sm:$0xff]
    %v5092 = vld [vmem:[%s9 + $0xc90] sm:$0xff]
    %v5093 = vld [vmem:[%s9 + $0xc98] sm:$0xff]
    %v5094 = vld [vmem:[%s9 + $0xca0] sm:$0xff]
    %v5095 = vld [vmem:[%s9 + $0xca8] sm:$0xff]
    %v5096 = vld [vmem:[%s9 + $0xcb0] sm:$0xff]
    %v5097 = vld [vmem:[%s9 + $0xcb8] sm:$0xff]
    %v5098 = vld [vmem:[%s9 + $0xcc0] sm:$0xff]
    %v5099 = vld [vmem:[%s9 + $0xcc8] sm:$0xff]
    %v5100 = vld [vmem:[%s9 + $0xcd0] sm:$0xff]
    %v5101 = vld [vmem:[%s9 + $0xcd8] sm:$0xff]
    %v5102 = vld [vmem:[%s9 + $0xce0] sm:$0xff]
    %v5103 = vld [vmem:[%s9 + $0xce8] sm:$0xff]
    %v5104 = vld [vmem:[%s9 + $0xcf0] sm:$0xff]
    %v5105 = vld [vmem:[%s9 + $0xcf8] sm:$0xff]
    %s5106 = scalar_lea.vmem [#allocation5], 3
    %v5107 = vld [vmem:[%s5106] ss:$8 sm:$0xf]
    %v5108 = vld [vmem:[%s5106] ss:$8 sm:$0xf0]
    %v5109 = vor.u32 %v5107, %v5108
    %s5110 = scalar_lea.vmem [#allocation5], 67
    %v5111 = vld [vmem:[%s5110] ss:$8 sm:$0xf]
    %v5112 = vld [vmem:[%s5110] ss:$8 sm:$0xf0]
    %v5113 = vor.u32 %v5111, %v5112
    %s5114 = scalar_lea.vmem [#allocation5], 131
    %v5115 = vld [vmem:[%s5114] ss:$8 sm:$0xf]
    %v5116 = vld [vmem:[%s5114] ss:$8 sm:$0xf0]
    %v5117 = vor.u32 %v5115, %v5116
    %s5118 = scalar_lea.vmem [#allocation5], 195
    %v5119 = vld [vmem:[%s5118] ss:$8 sm:$0xf]
    %v5120 = vld [vmem:[%s5118] ss:$8 sm:$0xf0]
    %v5121 = vor.u32 %v5119, %v5120
    %v5126 = vlaneseq
    %v5127 = vshrl.u32 %v5126, 7
    %v5128 = vsub.s32 0, %v5127
    %v5129 = vrot.slane %v5109, %v5128
    %v5130 = vlaneseq
    %v5131 = vshrl.u32 %v5130, 7
    %v5132 = vsub.s32 1, %v5131
    %v5133 = vrot.slane %v5109, %v5132
    %v5134 = vlaneseq
    %v5135 = vshrl.u32 %v5134, 7
    %v5136 = vsub.s32 2, %v5135
    %v5137 = vrot.slane %v5109, %v5136
    %v5138 = vlaneseq
    %v5139 = vshrl.u32 %v5138, 7
    %v5140 = vsub.s32 3, %v5139
    %v5141 = vrot.slane %v5109, %v5140
    %v5142 = vlaneseq
    %v5143 = vshrl.u32 %v5142, 7
    %v5144 = vsub.s32 4, %v5143
    %v5145 = vrot.slane %v5109, %v5144
    %v5146 = vlaneseq
    %v5147 = vshrl.u32 %v5146, 7
    %v5148 = vsub.s32 5, %v5147
    %v5149 = vrot.slane %v5109, %v5148
    %v5150 = vlaneseq
    %v5151 = vshrl.u32 %v5150, 7
    %v5152 = vsub.s32 6, %v5151
    %v5153 = vrot.slane %v5109, %v5152
    %v5154 = vlaneseq
    %v5155 = vshrl.u32 %v5154, 7
    %v5156 = vsub.s32 7, %v5155
    %v5157 = vrot.slane %v5109, %v5156
    %v5158 = vlaneseq
    %v5159 = vshrl.u32 %v5158, 7
    %v5160 = vsub.s32 0, %v5159
    %v5161 = vrot.slane %v5113, %v5160
    %v5162 = vlaneseq
    %v5163 = vshrl.u32 %v5162, 7
    %v5164 = vsub.s32 1, %v5163
    %v5165 = vrot.slane %v5113, %v5164
    %v5166 = vlaneseq
    %v5167 = vshrl.u32 %v5166, 7
    %v5168 = vsub.s32 2, %v5167
    %v5169 = vrot.slane %v5113, %v5168
    %v5170 = vlaneseq
    %v5171 = vshrl.u32 %v5170, 7
    %v5172 = vsub.s32 3, %v5171
    %v5173 = vrot.slane %v5113, %v5172
    %v5174 = vlaneseq
    %v5175 = vshrl.u32 %v5174, 7
    %v5176 = vsub.s32 4, %v5175
    %v5177 = vrot.slane %v5113, %v5176
    %v5178 = vlaneseq
    %v5179 = vshrl.u32 %v5178, 7
    %v5180 = vsub.s32 5, %v5179
    %v5181 = vrot.slane %v5113, %v5180
    %v5182 = vlaneseq
    %v5183 = vshrl.u32 %v5182, 7
    %v5184 = vsub.s32 6, %v5183
    %v5185 = vrot.slane %v5113, %v5184
    %v5186 = vlaneseq
    %v5187 = vshrl.u32 %v5186, 7
    %v5188 = vsub.s32 7, %v5187
    %v5189 = vrot.slane %v5113, %v5188
    %v5190 = vlaneseq
    %v5191 = vshrl.u32 %v5190, 7
    %v5192 = vsub.s32 0, %v5191
    %v5193 = vrot.slane %v5117, %v5192
    %v5194 = vlaneseq
    %v5195 = vshrl.u32 %v5194, 7
    %v5196 = vsub.s32 1, %v5195
    %v5197 = vrot.slane %v5117, %v5196
    %v5198 = vlaneseq
    %v5199 = vshrl.u32 %v5198, 7
    %v5200 = vsub.s32 2, %v5199
    %v5201 = vrot.slane %v5117, %v5200
    %v5202 = vlaneseq
    %v5203 = vshrl.u32 %v5202, 7
    %v5204 = vsub.s32 3, %v5203
    %v5205 = vrot.slane %v5117, %v5204
    %v5206 = vlaneseq
    %v5207 = vshrl.u32 %v5206, 7
    %v5208 = vsub.s32 4, %v5207
    %v5209 = vrot.slane %v5117, %v5208
    %v5210 = vlaneseq
    %v5211 = vshrl.u32 %v5210, 7
    %v5212 = vsub.s32 5, %v5211
    %v5213 = vrot.slane %v5117, %v5212
    %v5214 = vlaneseq
    %v5215 = vshrl.u32 %v5214, 7
    %v5216 = vsub.s32 6, %v5215
    %v5217 = vrot.slane %v5117, %v5216
    %v5218 = vlaneseq
    %v5219 = vshrl.u32 %v5218, 7
    %v5220 = vsub.s32 7, %v5219
    %v5221 = vrot.slane %v5117, %v5220
    %v5222 = vlaneseq
    %v5223 = vshrl.u32 %v5222, 7
    %v5224 = vsub.s32 0, %v5223
    %v5225 = vrot.slane %v5121, %v5224
    %v5226 = vlaneseq
    %v5227 = vshrl.u32 %v5226, 7
    %v5228 = vsub.s32 1, %v5227
    %v5229 = vrot.slane %v5121, %v5228
    %v5230 = vlaneseq
    %v5231 = vshrl.u32 %v5230, 7
    %v5232 = vsub.s32 2, %v5231
    %v5233 = vrot.slane %v5121, %v5232
    %v5234 = vlaneseq
    %v5235 = vshrl.u32 %v5234, 7
    %v5236 = vsub.s32 3, %v5235
    %v5237 = vrot.slane %v5121, %v5236
    %v5238 = vlaneseq
    %v5239 = vshrl.u32 %v5238, 7
    %v5240 = vsub.s32 4, %v5239
    %v5241 = vrot.slane %v5121, %v5240
    %v5242 = vlaneseq
    %v5243 = vshrl.u32 %v5242, 7
    %v5244 = vsub.s32 5, %v5243
    %v5245 = vrot.slane %v5121, %v5244
    %v5246 = vlaneseq
    %v5247 = vshrl.u32 %v5246, 7
    %v5248 = vsub.s32 6, %v5247
    %v5249 = vrot.slane %v5121, %v5248
    %v5250 = vlaneseq
    %v5251 = vshrl.u32 %v5250, 7
    %v5252 = vsub.s32 7, %v5251
    %v5253 = vrot.slane %v5121, %v5252
    %v5542 = vunpack.c.l.b16 %v4850
    %v5543 = vunpack.c.h.b16 %v4850
    %v5544 = vunpack.c.l.b16 %v4851
    %v5545 = vunpack.c.h.b16 %v4851
    %v5546 = vunpack.c.l.b16 %v4852
    %v5547 = vunpack.c.h.b16 %v4852
    %v5548 = vunpack.c.l.b16 %v4853
    %v5549 = vunpack.c.h.b16 %v4853
    %v5550 = vunpack.c.l.b16 %v4854
    %v5551 = vunpack.c.h.b16 %v4854
    %v5552 = vunpack.c.l.b16 %v4855
    %v5553 = vunpack.c.h.b16 %v4855
    %v5554 = vunpack.c.l.b16 %v4856
    %v5555 = vunpack.c.h.b16 %v4856
    %v5556 = vunpack.c.l.b16 %v4857
    %v5557 = vunpack.c.h.b16 %v4857
    %v5558 = vunpack.c.l.b16 %v4858
    %v5559 = vunpack.c.h.b16 %v4858
    %v5560 = vunpack.c.l.b16 %v4859
    %v5561 = vunpack.c.h.b16 %v4859
    %v5562 = vunpack.c.l.b16 %v4860
    %v5563 = vunpack.c.h.b16 %v4860
    %v5564 = vunpack.c.l.b16 %v4861
    %v5565 = vunpack.c.h.b16 %v4861
    %v5566 = vunpack.c.l.b16 %v4862
    %v5567 = vunpack.c.h.b16 %v4862
    %v5568 = vunpack.c.l.b16 %v4863
    %v5569 = vunpack.c.h.b16 %v4863
    %v5570 = vunpack.c.l.b16 %v4864
    %v5571 = vunpack.c.h.b16 %v4864
    %v5572 = vunpack.c.l.b16 %v4865
    %v5573 = vunpack.c.h.b16 %v4865
    %v5574 = vunpack.c.l.b16 %v4866
    %v5575 = vunpack.c.h.b16 %v4866
    %v5576 = vunpack.c.l.b16 %v4867
    %v5577 = vunpack.c.h.b16 %v4867
    %v5578 = vunpack.c.l.b16 %v4868
    %v5579 = vunpack.c.h.b16 %v4868
    %v5580 = vunpack.c.l.b16 %v4869
    %v5581 = vunpack.c.h.b16 %v4869
    %v5582 = vunpack.c.l.b16 %v4870
    %v5583 = vunpack.c.h.b16 %v4870
    %v5584 = vunpack.c.l.b16 %v4871
    %v5585 = vunpack.c.h.b16 %v4871
    %v5586 = vunpack.c.l.b16 %v4872
    %v5587 = vunpack.c.h.b16 %v4872
    %v5588 = vunpack.c.l.b16 %v4873
    %v5589 = vunpack.c.h.b16 %v4873
    %v5590 = vunpack.c.l.b16 %v4874
    %v5591 = vunpack.c.h.b16 %v4874
    %v5592 = vunpack.c.l.b16 %v4875
    %v5593 = vunpack.c.h.b16 %v4875
    %v5594 = vunpack.c.l.b16 %v4876
    %v5595 = vunpack.c.h.b16 %v4876
    %v5596 = vunpack.c.l.b16 %v4877
    %v5597 = vunpack.c.h.b16 %v4877
    %v5598 = vunpack.c.l.b16 %v4878
    %v5599 = vunpack.c.h.b16 %v4878
    %v5600 = vunpack.c.l.b16 %v4879
    %v5601 = vunpack.c.h.b16 %v4879
    %v5602 = vunpack.c.l.b16 %v4880
    %v5603 = vunpack.c.h.b16 %v4880
    %v5604 = vunpack.c.l.b16 %v4881
    %v5605 = vunpack.c.h.b16 %v4881
    %v5606 = vunpack.c.l.b16 %v4882
    %v5607 = vunpack.c.h.b16 %v4882
    %v5608 = vunpack.c.l.b16 %v4883
    %v5609 = vunpack.c.h.b16 %v4883
    %v5610 = vunpack.c.l.b16 %v4884
    %v5611 = vunpack.c.h.b16 %v4884
    %v5612 = vunpack.c.l.b16 %v4885
    %v5613 = vunpack.c.h.b16 %v4885
    %v5614 = vunpack.c.l.b16 %v4886
    %v5615 = vunpack.c.h.b16 %v4886
    %v5616 = vunpack.c.l.b16 %v4887
    %v5617 = vunpack.c.h.b16 %v4887
    %v5618 = vunpack.c.l.b16 %v4888
    %v5619 = vunpack.c.h.b16 %v4888
    %v5620 = vunpack.c.l.b16 %v4889
    %v5621 = vunpack.c.h.b16 %v4889
    %v5622 = vunpack.c.l.b16 %v4890
    %v5623 = vunpack.c.h.b16 %v4890
    %v5624 = vunpack.c.l.b16 %v4891
    %v5625 = vunpack.c.h.b16 %v4891
    %v5626 = vunpack.c.l.b16 %v4892
    %v5627 = vunpack.c.h.b16 %v4892
    %v5628 = vunpack.c.l.b16 %v4893
    %v5629 = vunpack.c.h.b16 %v4893
    %v5630 = vunpack.c.l.b16 %v4894
    %v5631 = vunpack.c.h.b16 %v4894
    %v5632 = vunpack.c.l.b16 %v4895
    %v5633 = vunpack.c.h.b16 %v4895
    %v5634 = vunpack.c.l.b16 %v4896
    %v5635 = vunpack.c.h.b16 %v4896
    %v5636 = vunpack.c.l.b16 %v4897
    %v5637 = vunpack.c.h.b16 %v4897
    %v5638 = vunpack.c.l.b16 %v4898
    %v5639 = vunpack.c.h.b16 %v4898
    %v5640 = vunpack.c.l.b16 %v4899
    %v5641 = vunpack.c.h.b16 %v4899
    %v5642 = vunpack.c.l.b16 %v4900
    %v5643 = vunpack.c.h.b16 %v4900
    %v5644 = vunpack.c.l.b16 %v4901
    %v5645 = vunpack.c.h.b16 %v4901
    %v5646 = vunpack.c.l.b16 %v4902
    %v5647 = vunpack.c.h.b16 %v4902
    %v5648 = vunpack.c.l.b16 %v4903
    %v5649 = vunpack.c.h.b16 %v4903
    %v5650 = vunpack.c.l.b16 %v4904
    %v5651 = vunpack.c.h.b16 %v4904
    %v5652 = vunpack.c.l.b16 %v4905
    %v5653 = vunpack.c.h.b16 %v4905
    %v5654 = vunpack.c.l.b16 %v4906
    %v5655 = vunpack.c.h.b16 %v4906
    %v5656 = vunpack.c.l.b16 %v4907
    %v5657 = vunpack.c.h.b16 %v4907
    %v5658 = vunpack.c.l.b16 %v4908
    %v5659 = vunpack.c.h.b16 %v4908
    %v5660 = vunpack.c.l.b16 %v4909
    %v5661 = vunpack.c.h.b16 %v4909
    %v5662 = vunpack.c.l.b16 %v4910
    %v5663 = vunpack.c.h.b16 %v4910
    %v5664 = vunpack.c.l.b16 %v4911
    %v5665 = vunpack.c.h.b16 %v4911
    %v5666 = vunpack.c.l.b16 %v4912
    %v5667 = vunpack.c.h.b16 %v4912
    %v5668 = vunpack.c.l.b16 %v4913
    %v5669 = vunpack.c.h.b16 %v4913
    %v5670 = vunpack.c.l.b16 %v4914
    %v5671 = vunpack.c.h.b16 %v4914
    %v5672 = vunpack.c.l.b16 %v4915
    %v5673 = vunpack.c.h.b16 %v4915
    %v5674 = vunpack.c.l.b16 %v4916
    %v5675 = vunpack.c.h.b16 %v4916
    %v5676 = vunpack.c.l.b16 %v4917
    %v5677 = vunpack.c.h.b16 %v4917
    %v5678 = vunpack.c.l.b16 %v4918
    %v5679 = vunpack.c.h.b16 %v4918
    %v5680 = vunpack.c.l.b16 %v4919
    %v5681 = vunpack.c.h.b16 %v4919
    %v5682 = vunpack.c.l.b16 %v4920
    %v5683 = vunpack.c.h.b16 %v4920
    %v5684 = vunpack.c.l.b16 %v4921
    %v5685 = vunpack.c.h.b16 %v4921
    %v5686 = vunpack.c.l.b16 %v4922
    %v5687 = vunpack.c.h.b16 %v4922
    %v5688 = vunpack.c.l.b16 %v4923
    %v5689 = vunpack.c.h.b16 %v4923
    %v5690 = vunpack.c.l.b16 %v4924
    %v5691 = vunpack.c.h.b16 %v4924
    %v5692 = vunpack.c.l.b16 %v4925
    %v5693 = vunpack.c.h.b16 %v4925
    %v5694 = vunpack.c.l.b16 %v4926
    %v5695 = vunpack.c.h.b16 %v4926
    %v5696 = vunpack.c.l.b16 %v4927
    %v5697 = vunpack.c.h.b16 %v4927
    %v5698 = vunpack.c.l.b16 %v4928
    %v5699 = vunpack.c.h.b16 %v4928
    %v5700 = vunpack.c.l.b16 %v4929
    %v5701 = vunpack.c.h.b16 %v4929
    %v5702 = vunpack.c.l.b16 %v4930
    %v5703 = vunpack.c.h.b16 %v4930
    %v5704 = vunpack.c.l.b16 %v4931
    %v5705 = vunpack.c.h.b16 %v4931
    %v5706 = vunpack.c.l.b16 %v4932
    %v5707 = vunpack.c.h.b16 %v4932
    %v5708 = vunpack.c.l.b16 %v4933
    %v5709 = vunpack.c.h.b16 %v4933
    %v5710 = vunpack.c.l.b16 %v4934
    %v5711 = vunpack.c.h.b16 %v4934
    %v5712 = vunpack.c.l.b16 %v4935
    %v5713 = vunpack.c.h.b16 %v4935
    %v5714 = vunpack.c.l.b16 %v4936
    %v5715 = vunpack.c.h.b16 %v4936
    %v5716 = vunpack.c.l.b16 %v4937
    %v5717 = vunpack.c.h.b16 %v4937
    %v5718 = vunpack.c.l.b16 %v4938
    %v5719 = vunpack.c.h.b16 %v4938
    %v5720 = vunpack.c.l.b16 %v4939
    %v5721 = vunpack.c.h.b16 %v4939
    %v5722 = vunpack.c.l.b16 %v4940
    %v5723 = vunpack.c.h.b16 %v4940
    %v5724 = vunpack.c.l.b16 %v4941
    %v5725 = vunpack.c.h.b16 %v4941
    %v5726 = vunpack.c.l.b16 %v4942
    %v5727 = vunpack.c.h.b16 %v4942
    %v5728 = vunpack.c.l.b16 %v4943
    %v5729 = vunpack.c.h.b16 %v4943
    %v5730 = vunpack.c.l.b16 %v4944
    %v5731 = vunpack.c.h.b16 %v4944
    %v5732 = vunpack.c.l.b16 %v4945
    %v5733 = vunpack.c.h.b16 %v4945
    %v5734 = vunpack.c.l.b16 %v4946
    %v5735 = vunpack.c.h.b16 %v4946
    %v5736 = vunpack.c.l.b16 %v4947
    %v5737 = vunpack.c.h.b16 %v4947
    %v5738 = vunpack.c.l.b16 %v4948
    %v5739 = vunpack.c.h.b16 %v4948
    %v5740 = vunpack.c.l.b16 %v4949
    %v5741 = vunpack.c.h.b16 %v4949
    %v5742 = vunpack.c.l.b16 %v4950
    %v5743 = vunpack.c.h.b16 %v4950
    %v5744 = vunpack.c.l.b16 %v4951
    %v5745 = vunpack.c.h.b16 %v4951
    %v5746 = vunpack.c.l.b16 %v4952
    %v5747 = vunpack.c.h.b16 %v4952
    %v5748 = vunpack.c.l.b16 %v4953
    %v5749 = vunpack.c.h.b16 %v4953
    %v5750 = vunpack.c.l.b16 %v4954
    %v5751 = vunpack.c.h.b16 %v4954
    %v5752 = vunpack.c.l.b16 %v4955
    %v5753 = vunpack.c.h.b16 %v4955
    %v5754 = vunpack.c.l.b16 %v4956
    %v5755 = vunpack.c.h.b16 %v4956
    %v5756 = vunpack.c.l.b16 %v4957
    %v5757 = vunpack.c.h.b16 %v4957
    %v5758 = vunpack.c.l.b16 %v4958
    %v5759 = vunpack.c.h.b16 %v4958
    %v5760 = vunpack.c.l.b16 %v4959
    %v5761 = vunpack.c.h.b16 %v4959
    %v5762 = vunpack.c.l.b16 %v4960
    %v5763 = vunpack.c.h.b16 %v4960
    %v5764 = vunpack.c.l.b16 %v4961
    %v5765 = vunpack.c.h.b16 %v4961
    %v5766 = vunpack.c.l.b16 %v4962
    %v5767 = vunpack.c.h.b16 %v4962
    %v5768 = vunpack.c.l.b16 %v4963
    %v5769 = vunpack.c.h.b16 %v4963
    %v5770 = vunpack.c.l.b16 %v4964
    %v5771 = vunpack.c.h.b16 %v4964
    %v5772 = vunpack.c.l.b16 %v4965
    %v5773 = vunpack.c.h.b16 %v4965
    %v5774 = vunpack.c.l.b16 %v4966
    %v5775 = vunpack.c.h.b16 %v4966
    %v5776 = vunpack.c.l.b16 %v4967
    %v5777 = vunpack.c.h.b16 %v4967
    %v5778 = vunpack.c.l.b16 %v4968
    %v5779 = vunpack.c.h.b16 %v4968
    %v5780 = vunpack.c.l.b16 %v4969
    %v5781 = vunpack.c.h.b16 %v4969
    %v5782 = vunpack.c.l.b16 %v4970
    %v5783 = vunpack.c.h.b16 %v4970
    %v5784 = vunpack.c.l.b16 %v4971
    %v5785 = vunpack.c.h.b16 %v4971
    %v5786 = vunpack.c.l.b16 %v4972
    %v5787 = vunpack.c.h.b16 %v4972
    %v5788 = vunpack.c.l.b16 %v4973
    %v5789 = vunpack.c.h.b16 %v4973
    %v5790 = vunpack.c.l.b16 %v4974
    %v5791 = vunpack.c.h.b16 %v4974
    %v5792 = vunpack.c.l.b16 %v4975
    %v5793 = vunpack.c.h.b16 %v4975
    %v5794 = vunpack.c.l.b16 %v4976
    %v5795 = vunpack.c.h.b16 %v4976
    %v5796 = vunpack.c.l.b16 %v4977
    %v5797 = vunpack.c.h.b16 %v4977
    %v5798 = vunpack.c.l.b16 %v4978
    %v5799 = vunpack.c.h.b16 %v4978
    %v5800 = vunpack.c.l.b16 %v4979
    %v5801 = vunpack.c.h.b16 %v4979
    %v5802 = vunpack.c.l.b16 %v4980
    %v5803 = vunpack.c.h.b16 %v4980
    %v5804 = vunpack.c.l.b16 %v4981
    %v5805 = vunpack.c.h.b16 %v4981
    %v5806 = vunpack.c.l.b16 %v4982
    %v5807 = vunpack.c.h.b16 %v4982
    %v5808 = vunpack.c.l.b16 %v4983
    %v5809 = vunpack.c.h.b16 %v4983
    %v5810 = vunpack.c.l.b16 %v4984
    %v5811 = vunpack.c.h.b16 %v4984
    %v5812 = vunpack.c.l.b16 %v4985
    %v5813 = vunpack.c.h.b16 %v4985
    %v5814 = vunpack.c.l.b16 %v4986
    %v5815 = vunpack.c.h.b16 %v4986
    %v5816 = vunpack.c.l.b16 %v4987
    %v5817 = vunpack.c.h.b16 %v4987
    %v5818 = vunpack.c.l.b16 %v4988
    %v5819 = vunpack.c.h.b16 %v4988
    %v5820 = vunpack.c.l.b16 %v4989
    %v5821 = vunpack.c.h.b16 %v4989
    %v5822 = vunpack.c.l.b16 %v4990
    %v5823 = vunpack.c.h.b16 %v4990
    %v5824 = vunpack.c.l.b16 %v4991
    %v5825 = vunpack.c.h.b16 %v4991
    %v5826 = vunpack.c.l.b16 %v4992
    %v5827 = vunpack.c.h.b16 %v4992
    %v5828 = vunpack.c.l.b16 %v4993
    %v5829 = vunpack.c.h.b16 %v4993
    %v5830 = vunpack.c.l.b16 %v4994
    %v5831 = vunpack.c.h.b16 %v4994
    %v5832 = vunpack.c.l.b16 %v4995
    %v5833 = vunpack.c.h.b16 %v4995
    %v5834 = vunpack.c.l.b16 %v4996
    %v5835 = vunpack.c.h.b16 %v4996
    %v5836 = vunpack.c.l.b16 %v4997
    %v5837 = vunpack.c.h.b16 %v4997
    %v5838 = vunpack.c.l.b16 %v4998
    %v5839 = vunpack.c.h.b16 %v4998
    %v5840 = vunpack.c.l.b16 %v4999
    %v5841 = vunpack.c.h.b16 %v4999
    %v5842 = vunpack.c.l.b16 %v5000
    %v5843 = vunpack.c.h.b16 %v5000
    %v5844 = vunpack.c.l.b16 %v5001
    %v5845 = vunpack.c.h.b16 %v5001
    %v5846 = vunpack.c.l.b16 %v5002
    %v5847 = vunpack.c.h.b16 %v5002
    %v5848 = vunpack.c.l.b16 %v5003
    %v5849 = vunpack.c.h.b16 %v5003
    %v5850 = vunpack.c.l.b16 %v5004
    %v5851 = vunpack.c.h.b16 %v5004
    %v5852 = vunpack.c.l.b16 %v5005
    %v5853 = vunpack.c.h.b16 %v5005
    %v5854 = vunpack.c.l.b16 %v5006
    %v5855 = vunpack.c.h.b16 %v5006
    %v5856 = vunpack.c.l.b16 %v5007
    %v5857 = vunpack.c.h.b16 %v5007
    %v5858 = vunpack.c.l.b16 %v5008
    %v5859 = vunpack.c.h.b16 %v5008
    %v5860 = vunpack.c.l.b16 %v5009
    %v5861 = vunpack.c.h.b16 %v5009
    %v5862 = vunpack.c.l.b16 %v5010
    %v5863 = vunpack.c.h.b16 %v5010
    %v5864 = vunpack.c.l.b16 %v5011
    %v5865 = vunpack.c.h.b16 %v5011
    %v5866 = vunpack.c.l.b16 %v5012
    %v5867 = vunpack.c.h.b16 %v5012
    %v5868 = vunpack.c.l.b16 %v5013
    %v5869 = vunpack.c.h.b16 %v5013
    %v5870 = vunpack.c.l.b16 %v5014
    %v5871 = vunpack.c.h.b16 %v5014
    %v5872 = vunpack.c.l.b16 %v5015
    %v5873 = vunpack.c.h.b16 %v5015
    %v5874 = vunpack.c.l.b16 %v5016
    %v5875 = vunpack.c.h.b16 %v5016
    %v5876 = vunpack.c.l.b16 %v5017
    %v5877 = vunpack.c.h.b16 %v5017
    %v5878 = vunpack.c.l.b16 %v5018
    %v5879 = vunpack.c.h.b16 %v5018
    %v5880 = vunpack.c.l.b16 %v5019
    %v5881 = vunpack.c.h.b16 %v5019
    %v5882 = vunpack.c.l.b16 %v5020
    %v5883 = vunpack.c.h.b16 %v5020
    %v5884 = vunpack.c.l.b16 %v5021
    %v5885 = vunpack.c.h.b16 %v5021
    %v5886 = vunpack.c.l.b16 %v5022
    %v5887 = vunpack.c.h.b16 %v5022
    %v5888 = vunpack.c.l.b16 %v5023
    %v5889 = vunpack.c.h.b16 %v5023
    %v5890 = vunpack.c.l.b16 %v5024
    %v5891 = vunpack.c.h.b16 %v5024
    %v5892 = vunpack.c.l.b16 %v5025
    %v5893 = vunpack.c.h.b16 %v5025
    %v5894 = vunpack.c.l.b16 %v5026
    %v5895 = vunpack.c.h.b16 %v5026
    %v5896 = vunpack.c.l.b16 %v5027
    %v5897 = vunpack.c.h.b16 %v5027
    %v5898 = vunpack.c.l.b16 %v5028
    %v5899 = vunpack.c.h.b16 %v5028
    %v5900 = vunpack.c.l.b16 %v5029
    %v5901 = vunpack.c.h.b16 %v5029
    %v5902 = vunpack.c.l.b16 %v5030
    %v5903 = vunpack.c.h.b16 %v5030
    %v5904 = vunpack.c.l.b16 %v5031
    %v5905 = vunpack.c.h.b16 %v5031
    %v5906 = vunpack.c.l.b16 %v5032
    %v5907 = vunpack.c.h.b16 %v5032
    %v5908 = vunpack.c.l.b16 %v5033
    %v5909 = vunpack.c.h.b16 %v5033
    %v5910 = vunpack.c.l.b16 %v5034
    %v5911 = vunpack.c.h.b16 %v5034
    %v5912 = vunpack.c.l.b16 %v5035
    %v5913 = vunpack.c.h.b16 %v5035
    %v5914 = vunpack.c.l.b16 %v5036
    %v5915 = vunpack.c.h.b16 %v5036
    %v5916 = vunpack.c.l.b16 %v5037
    %v5917 = vunpack.c.h.b16 %v5037
    %v5918 = vunpack.c.l.b16 %v5038
    %v5919 = vunpack.c.h.b16 %v5038
    %v5920 = vunpack.c.l.b16 %v5039
    %v5921 = vunpack.c.h.b16 %v5039
    %v5922 = vunpack.c.l.b16 %v5040
    %v5923 = vunpack.c.h.b16 %v5040
    %v5924 = vunpack.c.l.b16 %v5041
    %v5925 = vunpack.c.h.b16 %v5041
    %v5926 = vunpack.c.l.b16 %v5042
    %v5927 = vunpack.c.h.b16 %v5042
    %v5928 = vunpack.c.l.b16 %v5043
    %v5929 = vunpack.c.h.b16 %v5043
    %v5930 = vunpack.c.l.b16 %v5044
    %v5931 = vunpack.c.h.b16 %v5044
    %v5932 = vunpack.c.l.b16 %v5045
    %v5933 = vunpack.c.h.b16 %v5045
    %v5934 = vunpack.c.l.b16 %v5046
    %v5935 = vunpack.c.h.b16 %v5046
    %v5936 = vunpack.c.l.b16 %v5047
    %v5937 = vunpack.c.h.b16 %v5047
    %v5938 = vunpack.c.l.b16 %v5048
    %v5939 = vunpack.c.h.b16 %v5048
    %v5940 = vunpack.c.l.b16 %v5049
    %v5941 = vunpack.c.h.b16 %v5049
    %v5942 = vunpack.c.l.b16 %v5050
    %v5943 = vunpack.c.h.b16 %v5050
    %v5944 = vunpack.c.l.b16 %v5051
    %v5945 = vunpack.c.h.b16 %v5051
    %v5946 = vunpack.c.l.b16 %v5052
    %v5947 = vunpack.c.h.b16 %v5052
    %v5948 = vunpack.c.l.b16 %v5053
    %v5949 = vunpack.c.h.b16 %v5053
    %v5950 = vunpack.c.l.b16 %v5054
    %v5951 = vunpack.c.h.b16 %v5054
    %v5952 = vunpack.c.l.b16 %v5055
    %v5953 = vunpack.c.h.b16 %v5055
    %v5954 = vunpack.c.l.b16 %v5056
    %v5955 = vunpack.c.h.b16 %v5056
    %v5956 = vunpack.c.l.b16 %v5057
    %v5957 = vunpack.c.h.b16 %v5057
    %v5958 = vunpack.c.l.b16 %v5058
    %v5959 = vunpack.c.h.b16 %v5058
    %v5960 = vunpack.c.l.b16 %v5059
    %v5961 = vunpack.c.h.b16 %v5059
    %v5962 = vunpack.c.l.b16 %v5060
    %v5963 = vunpack.c.h.b16 %v5060
    %v5964 = vunpack.c.l.b16 %v5061
    %v5965 = vunpack.c.h.b16 %v5061
    %v5966 = vunpack.c.l.b16 %v5062
    %v5967 = vunpack.c.h.b16 %v5062
    %v5968 = vunpack.c.l.b16 %v5063
    %v5969 = vunpack.c.h.b16 %v5063
    %v5970 = vunpack.c.l.b16 %v5064
    %v5971 = vunpack.c.h.b16 %v5064
    %v5972 = vunpack.c.l.b16 %v5065
    %v5973 = vunpack.c.h.b16 %v5065
    %v5974 = vunpack.c.l.b16 %v5066
    %v5975 = vunpack.c.h.b16 %v5066
    %v5976 = vunpack.c.l.b16 %v5067
    %v5977 = vunpack.c.h.b16 %v5067
    %v5978 = vunpack.c.l.b16 %v5068
    %v5979 = vunpack.c.h.b16 %v5068
    %v5980 = vunpack.c.l.b16 %v5069
    %v5981 = vunpack.c.h.b16 %v5069
    %v5982 = vunpack.c.l.b16 %v5070
    %v5983 = vunpack.c.h.b16 %v5070
    %v5984 = vunpack.c.l.b16 %v5071
    %v5985 = vunpack.c.h.b16 %v5071
    %v5986 = vunpack.c.l.b16 %v5072
    %v5987 = vunpack.c.h.b16 %v5072
    %v5988 = vunpack.c.l.b16 %v5073
    %v5989 = vunpack.c.h.b16 %v5073
    %v5990 = vunpack.c.l.b16 %v5074
    %v5991 = vunpack.c.h.b16 %v5074
    %v5992 = vunpack.c.l.b16 %v5075
    %v5993 = vunpack.c.h.b16 %v5075
    %v5994 = vunpack.c.l.b16 %v5076
    %v5995 = vunpack.c.h.b16 %v5076
    %v5996 = vunpack.c.l.b16 %v5077
    %v5997 = vunpack.c.h.b16 %v5077
    %v5998 = vunpack.c.l.b16 %v5078
    %v5999 = vunpack.c.h.b16 %v5078
    %v6000 = vunpack.c.l.b16 %v5079
    %v6001 = vunpack.c.h.b16 %v5079
    %v6002 = vunpack.c.l.b16 %v5080
    %v6003 = vunpack.c.h.b16 %v5080
    %v6004 = vunpack.c.l.b16 %v5081
    %v6005 = vunpack.c.h.b16 %v5081
    %v6006 = vunpack.c.l.b16 %v5082
    %v6007 = vunpack.c.h.b16 %v5082
    %v6008 = vunpack.c.l.b16 %v5083
    %v6009 = vunpack.c.h.b16 %v5083
    %v6010 = vunpack.c.l.b16 %v5084
    %v6011 = vunpack.c.h.b16 %v5084
    %v6012 = vunpack.c.l.b16 %v5085
    %v6013 = vunpack.c.h.b16 %v5085
    %v6014 = vunpack.c.l.b16 %v5086
    %v6015 = vunpack.c.h.b16 %v5086
    %v6016 = vunpack.c.l.b16 %v5087
    %v6017 = vunpack.c.h.b16 %v5087
    %v6018 = vunpack.c.l.b16 %v5088
    %v6019 = vunpack.c.h.b16 %v5088
    %v6020 = vunpack.c.l.b16 %v5089
    %v6021 = vunpack.c.h.b16 %v5089
    %v6022 = vunpack.c.l.b16 %v5090
    %v6023 = vunpack.c.h.b16 %v5090
    %v6024 = vunpack.c.l.b16 %v5091
    %v6025 = vunpack.c.h.b16 %v5091
    %v6026 = vunpack.c.l.b16 %v5092
    %v6027 = vunpack.c.h.b16 %v5092
    %v6028 = vunpack.c.l.b16 %v5093
    %v6029 = vunpack.c.h.b16 %v5093
    %v6030 = vunpack.c.l.b16 %v5094
    %v6031 = vunpack.c.h.b16 %v5094
    %v6032 = vunpack.c.l.b16 %v5095
    %v6033 = vunpack.c.h.b16 %v5095
    %v6034 = vunpack.c.l.b16 %v5096
    %v6035 = vunpack.c.h.b16 %v5096
    %v6036 = vunpack.c.l.b16 %v5097
    %v6037 = vunpack.c.h.b16 %v5097
    %v6038 = vunpack.c.l.b16 %v5098
    %v6039 = vunpack.c.h.b16 %v5098
    %v6040 = vunpack.c.l.b16 %v5099
    %v6041 = vunpack.c.h.b16 %v5099
    %v6042 = vunpack.c.l.b16 %v5100
    %v6043 = vunpack.c.h.b16 %v5100
    %v6044 = vunpack.c.l.b16 %v5101
    %v6045 = vunpack.c.h.b16 %v5101
    %v6046 = vunpack.c.l.b16 %v5102
    %v6047 = vunpack.c.h.b16 %v5102
    %v6048 = vunpack.c.l.b16 %v5103
    %v6049 = vunpack.c.h.b16 %v5103
    %v6050 = vunpack.c.l.b16 %v5104
    %v6051 = vunpack.c.h.b16 %v5104
    %v6052 = vunpack.c.l.b16 %v5105
    %v6053 = vunpack.c.h.b16 %v5105
    %v6054 = vpack.c.b16 %v5574, %v5542
    %v6055 = vpack.c.b16 %v5575, %v5543
    %v6056 = vpack.c.b16 %v5576, %v5544
    %v6057 = vpack.c.b16 %v5577, %v5545
    %v6058 = vpack.c.b16 %v5578, %v5546
    %v6059 = vpack.c.b16 %v5579, %v5547
    %v6060 = vpack.c.b16 %v5580, %v5548
    %v6061 = vpack.c.b16 %v5581, %v5549
    %v6062 = vpack.c.b16 %v5582, %v5550
    %v6063 = vpack.c.b16 %v5583, %v5551
    %v6064 = vpack.c.b16 %v5584, %v5552
    %v6065 = vpack.c.b16 %v5585, %v5553
    %v6066 = vpack.c.b16 %v5586, %v5554
    %v6067 = vpack.c.b16 %v5587, %v5555
    %v6068 = vpack.c.b16 %v5588, %v5556
    %v6069 = vpack.c.b16 %v5589, %v5557
    %v6070 = vpack.c.b16 %v5590, %v5558
    %v6071 = vpack.c.b16 %v5591, %v5559
    %v6072 = vpack.c.b16 %v5592, %v5560
    %v6073 = vpack.c.b16 %v5593, %v5561
    %v6074 = vpack.c.b16 %v5594, %v5562
    %v6075 = vpack.c.b16 %v5595, %v5563
    %v6076 = vpack.c.b16 %v5596, %v5564
    %v6077 = vpack.c.b16 %v5597, %v5565
    %v6078 = vpack.c.b16 %v5598, %v5566
    %v6079 = vpack.c.b16 %v5599, %v5567
    %v6080 = vpack.c.b16 %v5600, %v5568
    %v6081 = vpack.c.b16 %v5601, %v5569
    %v6082 = vpack.c.b16 %v5602, %v5570
    %v6083 = vpack.c.b16 %v5603, %v5571
    %v6084 = vpack.c.b16 %v5604, %v5572
    %v6085 = vpack.c.b16 %v5605, %v5573
    %v6086 = vpack.c.b16 %v5638, %v5606
    %v6087 = vpack.c.b16 %v5639, %v5607
    %v6088 = vpack.c.b16 %v5640, %v5608
    %v6089 = vpack.c.b16 %v5641, %v5609
    %v6090 = vpack.c.b16 %v5642, %v5610
    %v6091 = vpack.c.b16 %v5643, %v5611
    %v6092 = vpack.c.b16 %v5644, %v5612
    %v6093 = vpack.c.b16 %v5645, %v5613
    %v6094 = vpack.c.b16 %v5646, %v5614
    %v6095 = vpack.c.b16 %v5647, %v5615
    %v6096 = vpack.c.b16 %v5648, %v5616
    %v6097 = vpack.c.b16 %v5649, %v5617
    %v6098 = vpack.c.b16 %v5650, %v5618
    %v6099 = vpack.c.b16 %v5651, %v5619
    %v6100 = vpack.c.b16 %v5652, %v5620
    %v6101 = vpack.c.b16 %v5653, %v5621
    %v6102 = vpack.c.b16 %v5654, %v5622
    %v6103 = vpack.c.b16 %v5655, %v5623
    %v6104 = vpack.c.b16 %v5656, %v5624
    %v6105 = vpack.c.b16 %v5657, %v5625
    %v6106 = vpack.c.b16 %v5658, %v5626
    %v6107 = vpack.c.b16 %v5659, %v5627
    %v6108 = vpack.c.b16 %v5660, %v5628
    %v6109 = vpack.c.b16 %v5661, %v5629
    %v6110 = vpack.c.b16 %v5662, %v5630
    %v6111 = vpack.c.b16 %v5663, %v5631
    %v6112 = vpack.c.b16 %v5664, %v5632
    %v6113 = vpack.c.b16 %v5665, %v5633
    %v6114 = vpack.c.b16 %v5666, %v5634
    %v6115 = vpack.c.b16 %v5667, %v5635
    %v6116 = vpack.c.b16 %v5668, %v5636
    %v6117 = vpack.c.b16 %v5669, %v5637
    %v6118 = vpack.c.b16 %v5702, %v5670
    %v6119 = vpack.c.b16 %v5703, %v5671
    %v6120 = vpack.c.b16 %v5704, %v5672
    %v6121 = vpack.c.b16 %v5705, %v5673
    %v6122 = vpack.c.b16 %v5706, %v5674
    %v6123 = vpack.c.b16 %v5707, %v5675
    %v6124 = vpack.c.b16 %v5708, %v5676
    %v6125 = vpack.c.b16 %v5709, %v5677
    %v6126 = vpack.c.b16 %v5710, %v5678
    %v6127 = vpack.c.b16 %v5711, %v5679
    %v6128 = vpack.c.b16 %v5712, %v5680
    %v6129 = vpack.c.b16 %v5713, %v5681
    %v6130 = vpack.c.b16 %v5714, %v5682
    %v6131 = vpack.c.b16 %v5715, %v5683
    %v6132 = vpack.c.b16 %v5716, %v5684
    %v6133 = vpack.c.b16 %v5717, %v5685
    %v6134 = vpack.c.b16 %v5718, %v5686
    %v6135 = vpack.c.b16 %v5719, %v5687
    %v6136 = vpack.c.b16 %v5720, %v5688
    %v6137 = vpack.c.b16 %v5721, %v5689
    %v6138 = vpack.c.b16 %v5722, %v5690
    %v6139 = vpack.c.b16 %v5723, %v5691
    %v6140 = vpack.c.b16 %v5724, %v5692
    %v6141 = vpack.c.b16 %v5725, %v5693
    %v6142 = vpack.c.b16 %v5726, %v5694
    %v6143 = vpack.c.b16 %v5727, %v5695
    %v6144 = vpack.c.b16 %v5728, %v5696
    %v6145 = vpack.c.b16 %v5729, %v5697
    %v6146 = vpack.c.b16 %v5730, %v5698
    %v6147 = vpack.c.b16 %v5731, %v5699
    %v6148 = vpack.c.b16 %v5732, %v5700
    %v6149 = vpack.c.b16 %v5733, %v5701
    %v6150 = vpack.c.b16 %v5766, %v5734
    %v6151 = vpack.c.b16 %v5767, %v5735
    %v6152 = vpack.c.b16 %v5768, %v5736
    %v6153 = vpack.c.b16 %v5769, %v5737
    %v6154 = vpack.c.b16 %v5770, %v5738
    %v6155 = vpack.c.b16 %v5771, %v5739
    %v6156 = vpack.c.b16 %v5772, %v5740
    %v6157 = vpack.c.b16 %v5773, %v5741
    %v6158 = vpack.c.b16 %v5774, %v5742
    %v6159 = vpack.c.b16 %v5775, %v5743
    %v6160 = vpack.c.b16 %v5776, %v5744
    %v6161 = vpack.c.b16 %v5777, %v5745
    %v6162 = vpack.c.b16 %v5778, %v5746
    %v6163 = vpack.c.b16 %v5779, %v5747
    %v6164 = vpack.c.b16 %v5780, %v5748
    %v6165 = vpack.c.b16 %v5781, %v5749
    %v6166 = vpack.c.b16 %v5782, %v5750
    %v6167 = vpack.c.b16 %v5783, %v5751
    %v6168 = vpack.c.b16 %v5784, %v5752
    %v6169 = vpack.c.b16 %v5785, %v5753
    %v6170 = vpack.c.b16 %v5786, %v5754
    %v6171 = vpack.c.b16 %v5787, %v5755
    %v6172 = vpack.c.b16 %v5788, %v5756
    %v6173 = vpack.c.b16 %v5789, %v5757
    %v6174 = vpack.c.b16 %v5790, %v5758
    %v6175 = vpack.c.b16 %v5791, %v5759
    %v6176 = vpack.c.b16 %v5792, %v5760
    %v6177 = vpack.c.b16 %v5793, %v5761
    %v6178 = vpack.c.b16 %v5794, %v5762
    %v6179 = vpack.c.b16 %v5795, %v5763
    %v6180 = vpack.c.b16 %v5796, %v5764
    %v6181 = vpack.c.b16 %v5797, %v5765
    %v6182 = vpack.c.b16 %v5830, %v5798
    %v6183 = vpack.c.b16 %v5831, %v5799
    %v6184 = vpack.c.b16 %v5832, %v5800
    %v6185 = vpack.c.b16 %v5833, %v5801
    %v6186 = vpack.c.b16 %v5834, %v5802
    %v6187 = vpack.c.b16 %v5835, %v5803
    %v6188 = vpack.c.b16 %v5836, %v5804
    %v6189 = vpack.c.b16 %v5837, %v5805
    %v6190 = vpack.c.b16 %v5838, %v5806
    %v6191 = vpack.c.b16 %v5839, %v5807
    %v6192 = vpack.c.b16 %v5840, %v5808
    %v6193 = vpack.c.b16 %v5841, %v5809
    %v6194 = vpack.c.b16 %v5842, %v5810
    %v6195 = vpack.c.b16 %v5843, %v5811
    %v6196 = vpack.c.b16 %v5844, %v5812
    %v6197 = vpack.c.b16 %v5845, %v5813
    %v6198 = vpack.c.b16 %v5846, %v5814
    %v6199 = vpack.c.b16 %v5847, %v5815
    %v6200 = vpack.c.b16 %v5848, %v5816
    %v6201 = vpack.c.b16 %v5849, %v5817
    %v6202 = vpack.c.b16 %v5850, %v5818
    %v6203 = vpack.c.b16 %v5851, %v5819
    %v6204 = vpack.c.b16 %v5852, %v5820
    %v6205 = vpack.c.b16 %v5853, %v5821
    %v6206 = vpack.c.b16 %v5854, %v5822
    %v6207 = vpack.c.b16 %v5855, %v5823
    %v6208 = vpack.c.b16 %v5856, %v5824
    %v6209 = vpack.c.b16 %v5857, %v5825
    %v6210 = vpack.c.b16 %v5858, %v5826
    %v6211 = vpack.c.b16 %v5859, %v5827
    %v6212 = vpack.c.b16 %v5860, %v5828
    %v6213 = vpack.c.b16 %v5861, %v5829
    %v6214 = vpack.c.b16 %v5894, %v5862
    %v6215 = vpack.c.b16 %v5895, %v5863
    %v6216 = vpack.c.b16 %v5896, %v5864
    %v6217 = vpack.c.b16 %v5897, %v5865
    %v6218 = vpack.c.b16 %v5898, %v5866
    %v6219 = vpack.c.b16 %v5899, %v5867
    %v6220 = vpack.c.b16 %v5900, %v5868
    %v6221 = vpack.c.b16 %v5901, %v5869
    %v6222 = vpack.c.b16 %v5902, %v5870
    %v6223 = vpack.c.b16 %v5903, %v5871
    %v6224 = vpack.c.b16 %v5904, %v5872
    %v6225 = vpack.c.b16 %v5905, %v5873
    %v6226 = vpack.c.b16 %v5906, %v5874
    %v6227 = vpack.c.b16 %v5907, %v5875
    %v6228 = vpack.c.b16 %v5908, %v5876
    %v6229 = vpack.c.b16 %v5909, %v5877
    %v6230 = vpack.c.b16 %v5910, %v5878
    %v6231 = vpack.c.b16 %v5911, %v5879
    %v6232 = vpack.c.b16 %v5912, %v5880
    %v6233 = vpack.c.b16 %v5913, %v5881
    %v6234 = vpack.c.b16 %v5914, %v5882
    %v6235 = vpack.c.b16 %v5915, %v5883
    %v6236 = vpack.c.b16 %v5916, %v5884
    %v6237 = vpack.c.b16 %v5917, %v5885
    %v6238 = vpack.c.b16 %v5918, %v5886
    %v6239 = vpack.c.b16 %v5919, %v5887
    %v6240 = vpack.c.b16 %v5920, %v5888
    %v6241 = vpack.c.b16 %v5921, %v5889
    %v6242 = vpack.c.b16 %v5922, %v5890
    %v6243 = vpack.c.b16 %v5923, %v5891
    %v6244 = vpack.c.b16 %v5924, %v5892
    %v6245 = vpack.c.b16 %v5925, %v5893
    %v6246 = vpack.c.b16 %v5958, %v5926
    %v6247 = vpack.c.b16 %v5959, %v5927
    %v6248 = vpack.c.b16 %v5960, %v5928
    %v6249 = vpack.c.b16 %v5961, %v5929
    %v6250 = vpack.c.b16 %v5962, %v5930
    %v6251 = vpack.c.b16 %v5963, %v5931
    %v6252 = vpack.c.b16 %v5964, %v5932
    %v6253 = vpack.c.b16 %v5965, %v5933
    %v6254 = vpack.c.b16 %v5966, %v5934
    %v6255 = vpack.c.b16 %v5967, %v5935
    %v6256 = vpack.c.b16 %v5968, %v5936
    %v6257 = vpack.c.b16 %v5969, %v5937
    %v6258 = vpack.c.b16 %v5970, %v5938
    %v6259 = vpack.c.b16 %v5971, %v5939
    %v6260 = vpack.c.b16 %v5972, %v5940
    %v6261 = vpack.c.b16 %v5973, %v5941
    %v6262 = vpack.c.b16 %v5974, %v5942
    %v6263 = vpack.c.b16 %v5975, %v5943
    %v6264 = vpack.c.b16 %v5976, %v5944
    %v6265 = vpack.c.b16 %v5977, %v5945
    %v6266 = vpack.c.b16 %v5978, %v5946
    %v6267 = vpack.c.b16 %v5979, %v5947
    %v6268 = vpack.c.b16 %v5980, %v5948
    %v6269 = vpack.c.b16 %v5981, %v5949
    %v6270 = vpack.c.b16 %v5982, %v5950
    %v6271 = vpack.c.b16 %v5983, %v5951
    %v6272 = vpack.c.b16 %v5984, %v5952
    %v6273 = vpack.c.b16 %v5985, %v5953
    %v6274 = vpack.c.b16 %v5986, %v5954
    %v6275 = vpack.c.b16 %v5987, %v5955
    %v6276 = vpack.c.b16 %v5988, %v5956
    %v6277 = vpack.c.b16 %v5989, %v5957
    %v6278 = vpack.c.b16 %v6022, %v5990
    %v6279 = vpack.c.b16 %v6023, %v5991
    %v6280 = vpack.c.b16 %v6024, %v5992
    %v6281 = vpack.c.b16 %v6025, %v5993
    %v6282 = vpack.c.b16 %v6026, %v5994
    %v6283 = vpack.c.b16 %v6027, %v5995
    %v6284 = vpack.c.b16 %v6028, %v5996
    %v6285 = vpack.c.b16 %v6029, %v5997
    %v6286 = vpack.c.b16 %v6030, %v5998
    %v6287 = vpack.c.b16 %v6031, %v5999
    %v6288 = vpack.c.b16 %v6032, %v6000
    %v6289 = vpack.c.b16 %v6033, %v6001
    %v6290 = vpack.c.b16 %v6034, %v6002
    %v6291 = vpack.c.b16 %v6035, %v6003
    %v6292 = vpack.c.b16 %v6036, %v6004
    %v6293 = vpack.c.b16 %v6037, %v6005
    %v6294 = vpack.c.b16 %v6038, %v6006
    %v6295 = vpack.c.b16 %v6039, %v6007
    %v6296 = vpack.c.b16 %v6040, %v6008
    %v6297 = vpack.c.b16 %v6041, %v6009
    %v6298 = vpack.c.b16 %v6042, %v6010
    %v6299 = vpack.c.b16 %v6043, %v6011
    %v6300 = vpack.c.b16 %v6044, %v6012
    %v6301 = vpack.c.b16 %v6045, %v6013
    %v6302 = vpack.c.b16 %v6046, %v6014
    %v6303 = vpack.c.b16 %v6047, %v6015
    %v6304 = vpack.c.b16 %v6048, %v6016
    %v6305 = vpack.c.b16 %v6049, %v6017
    %v6306 = vpack.c.b16 %v6050, %v6018
    %v6307 = vpack.c.b16 %v6051, %v6019
    %v6308 = vpack.c.b16 %v6052, %v6020
    %v6309 = vpack.c.b16 %v6053, %v6021
    %6566 = vmatprep.subr.bf16.mxu0 %v6055
    %6567 = vmatpush1.bf16.msra.mxu0 %v6054
    %6568 = vmatprep.subr.bf16.mxu0 %v6087
    %6569 = vmatpush1.bf16.msra.mxu0 %v6086
    %6570 = vmatprep.subr.bf16.mxu0 %v6119
    %6571 = vmatpush1.bf16.msra.mxu0 %v6118
    %6572 = vmatprep.subr.bf16.mxu0 %v6151
    %6573 = vmatpush1.bf16.msra.mxu0 %v6150
    %6574 = vmatprep.subr.bf16.mxu0 %v6183
    %6575 = vmatpush1.bf16.msra.mxu0 %v6182
    %6576 = vmatprep.subr.bf16.mxu0 %v6215
    %6577 = vmatpush1.bf16.msra.mxu0 %v6214
    %6578 = vmatprep.subr.bf16.mxu0 %v6247
    %6579 = vmatpush1.bf16.msra.mxu0 %v6246
    %6580 = vmatprep.subr.bf16.mxu0 %v6279
    %6581 = vmatpush1.bf16.msra.mxu0 %v6278
    %6582 = vmatprep.subr.bf16.mxu0 0
    %6583 = vmatpush1.bf16.msra.mxu0 0
    %6584 = vmatprep.subr.bf16.mxu0 0
    %6585 = vmatpush1.bf16.msra.mxu0 0
    %6586 = vmatprep.subr.bf16.mxu0 0
    %6587 = vmatpush1.bf16.msra.mxu0 0
    %6588 = vmatprep.subr.bf16.mxu0 0
    %6589 = vmatpush1.bf16.msra.mxu0 0
    %6590 = vmatprep.subr.bf16.mxu0 0
    %6591 = vmatpush1.bf16.msra.mxu0 0
    %6592 = vmatprep.subr.bf16.mxu0 0
    %6593 = vmatpush1.bf16.msra.mxu0 0
    %6594 = vmatprep.subr.bf16.mxu0 0
    %6595 = vmatpush1.bf16.msra.mxu0 0
    %6596 = vmatprep.subr.bf16.mxu0 0
    %6597 = vmatpush1.bf16.msra.mxu0 0
    %6598 = vmatprep.mubr.bf16.mxu0 0
    %6599 = vmatmul.mubr.bf16.gmra.mrb[0].mxu0 %v245
    %v6600 = vpop.f32.mrb[0].mxu0
    %v6601 = vadd.f32 %v5129, %v6600
    %v6602 = vpop.f32.mrb[0].mxu0
    %v6603 = vadd.f32 %v5133, %v6602
    %v6604 = vpop.f32.mrb[0].mxu0
    %v6605 = vadd.f32 %v5129, %v6604
    %v6606 = vpop.f32.mrb[0].mxu0
    %v6607 = vadd.f32 %v5133, %v6606
    %6608 = vmatprep.mubr.bf16.mxu0 0
    %6609 = vmatmul.mubr.bf16.gmra.mrb[0].mxu0 %v248
    %v6610 = vpop.f32.mrb[0].mxu0
    %v6611 = vadd.f32 %v5129, %v6610
    %v6612 = vpop.f32.mrb[0].mxu0
    %v6613 = vadd.f32 %v5133, %v6612
    %v6614 = vpop.f32.mrb[0].mxu0
    %v6615 = vadd.f32 %v5129, %v6614
    %v6616 = vpop.f32.mrb[0].mxu0
    %v6617 = vadd.f32 %v5133, %v6616
    %6618 = vdwg.mxu0
    %6619 = vmatprep.subr.bf16.mxu0 %v6057
    %6620 = vmatpush1.bf16.msra.mxu0 %v6056
    %6621 = vmatprep.subr.bf16.mxu0 %v6089
    %6622 = vmatpush1.bf16.msra.mxu0 %v6088
    %6623 = vmatprep.subr.bf16.mxu0 %v6121
    %6624 = vmatpush1.bf16.msra.mxu0 %v6120
    %6625 = vmatprep.subr.bf16.mxu0 %v6153
    %6626 = vmatpush1.bf16.msra.mxu0 %v6152
    %6627 = vmatprep.subr.bf16.mxu0 %v6185
    %6628 = vmatpush1.bf16.msra.mxu0 %v6184
    %6629 = vmatprep.subr.bf16.mxu0 %v6217
    %6630 = vmatpush1.bf16.msra.mxu0 %v6216
    %6631 = vmatprep.subr.bf16.mxu0 %v6249
    %6632 = vmatpush1.bf16.msra.mxu0 %v6248
    %6633 = vmatprep.subr.bf16.mxu0 %v6281
    %6634 = vmatpush1.bf16.msra.mxu0 %v6280
    %6635 = vmatprep.subr.bf16.mxu0 0
    %6636 = vmatpush1.bf16.msra.mxu0 0
    %6637 = vmatprep.subr.bf16.mxu0 0
    %6638 = vmatpush1.bf16.msra.mxu0 0
    %6639 = vmatprep.subr.bf16.mxu0 0
    %6640 = vmatpush1.bf16.msra.mxu0 0
    %6641 = vmatprep.subr.bf16.mxu0 0
    %6642 = vmatpush1.bf16.msra.mxu0 0
    %6643 = vmatprep.subr.bf16.mxu0 0
    %6644 = vmatpush1.bf16.msra.mxu0 0
    %6645 = vmatprep.subr.bf16.mxu0 0
    %6646 = vmatpush1.bf16.msra.mxu0 0
    %6647 = vmatprep.subr.bf16.mxu0 0
    %6648 = vmatpush1.bf16.msra.mxu0 0
    %6649 = vmatprep.subr.bf16.mxu0 0
    %6650 = vmatpush1.bf16.msra.mxu0 0
    %6651 = vmatprep.mubr.bf16.mxu0 0
    %6652 = vmatmul.mubr.bf16.gmra.mrb[0].mxu0 %v245
    %v6653 = vpop.f32.mrb[0].mxu0
    %v6654 = vadd.f32 %v5137, %v6653
    %v6655 = vpop.f32.mrb[0].mxu0
    %v6656 = vadd.f32 %v5141, %v6655
    %v6657 = vpop.f32.mrb[0].mxu0
    %v6658 = vadd.f32 %v5137, %v6657
    %v6659 = vpop.f32.mrb[0].mxu0
    %v6660 = vadd.f32 %v5141, %v6659
    %6661 = vmatprep.mubr.bf16.mxu0 0
    %6662 = vmatmul.mubr.bf16.gmra.mrb[0].mxu0 %v248
    %v6663 = vpop.f32.mrb[0].mxu0
    %v6664 = vadd.f32 %v5137, %v6663
    %v6665 = vpop.f32.mrb[0].mxu0
    %v6666 = vadd.f32 %v5141, %v6665
    %v6667 = vpop.f32.mrb[0].mxu0
    %v6668 = vadd.f32 %v5137, %v6667
    %v6669 = vpop.f32.mrb[0].mxu0
    %v6670 = vadd.f32 %v5141, %v6669
    %6671 = vdwg.mxu0
    %6672 = vmatprep.subr.bf16.mxu0 %v6059
    %6673 = vmatpush1.bf16.msra.mxu0 %v6058
    %6674 = vmatprep.subr.bf16.mxu0 %v6091
    %6675 = vmatpush1.bf16.msra.mxu0 %v6090
    %6676 = vmatprep.subr.bf16.mxu0 %v6123
    %6677 = vmatpush1.bf16.msra.mxu0 %v6122
    %6678 = vmatprep.subr.bf16.mxu0 %v6155
    %6679 = vmatpush1.bf16.msra.mxu0 %v6154
    %6680 = vmatprep.subr.bf16.mxu0 %v6187
    %6681 = vmatpush1.bf16.msra.mxu0 %v6186
    %6682 = vmatprep.subr.bf16.mxu0 %v6219
    %6683 = vmatpush1.bf16.msra.mxu0 %v6218
    %6684 = vmatprep.subr.bf16.mxu0 %v6251
    %6685 = vmatpush1.bf16.msra.mxu0 %v6250
    %6686 = vmatprep.subr.bf16.mxu0 %v6283
    %6687 = vmatpush1.bf16.msra.mxu0 %v6282
    %6688 = vmatprep.subr.bf16.mxu0 0
    %6689 = vmatpush1.bf16.msra.mxu0 0
    %6690 = vmatprep.subr.bf16.mxu0 0
    %6691 = vmatpush1.bf16.msra.mxu0 0
    %6692 = vmatprep.subr.bf16.mxu0 0
    %6693 = vmatpush1.bf16.msra.mxu0 0
    %6694 = vmatprep.subr.bf16.mxu0 0
    %6695 = vmatpush1.bf16.msra.mxu0 0
    %6696 = vmatprep.subr.bf16.mxu0 0
    %6697 = vmatpush1.bf16.msra.mxu0 0
    %6698 = vmatprep.subr.bf16.mxu0 0
    %6699 = vmatpush1.bf16.msra.mxu0 0
    %6700 = vmatprep.subr.bf16.mxu0 0
    %6701 = vmatpush1.bf16.msra.mxu0 0
    %6702 = vmatprep.subr.bf16.mxu0 0
    %6703 = vmatpush1.bf16.msra.mxu0 0
    %6704 = vmatprep.mubr.bf16.mxu0 0
    %6705 = vmatmul.mubr.bf16.gmra.mrb[0].mxu0 %v245
    %v6706 = vpop.f32.mrb[0].mxu0
    %v6707 = vadd.f32 %v5145, %v6706
    %v6708 = vpop.f32.mrb[0].mxu0
    %v6709 = vadd.f32 %v5149, %v6708
    %v6710 = vpop.f32.mrb[0].mxu0
    %v6711 = vadd.f32 %v5145, %v6710
    %v6712 = vpop.f32.mrb[0].mxu0
    %v6713 = vadd.f32 %v5149, %v6712
    %6714 = vmatprep.mubr.bf16.mxu0 0
    %6715 = vmatmul.mubr.bf16.gmra.mrb[0].mxu0 %v248
    %v6716 = vpop.f32.mrb[0].mxu0
    %v6717 = vadd.f32 %v5145, %v6716
    %v6718 = vpop.f32.mrb[0].mxu0
    %v6719 = vadd.f32 %v5149, %v6718
    %v6720 = vpop.f32.mrb[0].mxu0
    %v6721 = vadd.f32 %v5145, %v6720
    %v6722 = vpop.f32.mrb[0].mxu0
    %v6723 = vadd.f32 %v5149, %v6722
    %6724 = vdwg.mxu0
    %6725 = vmatprep.subr.bf16.mxu0 %v6061
    %6726 = vmatpush1.bf16.msra.mxu0 %v6060
    %6727 = vmatprep.subr.bf16.mxu0 %v6093
    %6728 = vmatpush1.bf16.msra.mxu0 %v6092
    %6729 = vmatprep.subr.bf16.mxu0 %v6125
    %6730 = vmatpush1.bf16.msra.mxu0 %v6124
    %6731 = vmatprep.subr.bf16.mxu0 %v6157
    %6732 = vmatpush1.bf16.msra.mxu0 %v6156
    %6733 = vmatprep.subr.bf16.mxu0 %v6189
    %6734 = vmatpush1.bf16.msra.mxu0 %v6188
    %6735 = vmatprep.subr.bf16.mxu0 %v6221
    %6736 = vmatpush1.bf16.msra.mxu0 %v6220
    %6737 = vmatprep.subr.bf16.mxu0 %v6253
    %6738 = vmatpush1.bf16.msra.mxu0 %v6252
    %6739 = vmatprep.subr.bf16.mxu0 %v6285
    %6740 = vmatpush1.bf16.msra.mxu0 %v6284
    %6741 = vmatprep.subr.bf16.mxu0 0
    %6742 = vmatpush1.bf16.msra.mxu0 0
    %6743 = vmatprep.subr.bf16.mxu0 0
    %6744 = vmatpush1.bf16.msra.mxu0 0
    %6745 = vmatprep.subr.bf16.mxu0 0
    %6746 = vmatpush1.bf16.msra.mxu0 0
    %6747 = vmatprep.subr.bf16.mxu0 0
    %6748 = vmatpush1.bf16.msra.mxu0 0
    %6749 = vmatprep.subr.bf16.mxu0 0
    %6750 = vmatpush1.bf16.msra.mxu0 0
    %6751 = vmatprep.subr.bf16.mxu0 0
    %6752 = vmatpush1.bf16.msra.mxu0 0
    %6753 = vmatprep.subr.bf16.mxu0 0
    %6754 = vmatpush1.bf16.msra.mxu0 0
    %6755 = vmatprep.subr.bf16.mxu0 0
    %6756 = vmatpush1.bf16.msra.mxu0 0
    %6757 = vmatprep.mubr.bf16.mxu0 0
    %6758 = vmatmul.mubr.bf16.gmra.mrb[0].mxu0 %v245
    %v6759 = vpop.f32.mrb[0].mxu0
    %v6760 = vadd.f32 %v5153, %v6759
    %v6761 = vpop.f32.mrb[0].mxu0
    %v6762 = vadd.f32 %v5157, %v6761
    %v6763 = vpop.f32.mrb[0].mxu0
    %v6764 = vadd.f32 %v5153, %v6763
    %v6765 = vpop.f32.mrb[0].mxu0
    %v6766 = vadd.f32 %v5157, %v6765
    %6767 = vmatprep.mubr.bf16.mxu0 0
    %6768 = vmatmul.mubr.bf16.gmra.mrb[0].mxu0 %v248
    %v6769 = vpop.f32.mrb[0].mxu0
    %v6770 = vadd.f32 %v5153, %v6769
    %v6771 = vpop.f32.mrb[0].mxu0
    %v6772 = vadd.f32 %v5157, %v6771
    %v6773 = vpop.f32.mrb[0].mxu0
    %v6774 = vadd.f32 %v5153, %v6773
    %v6775 = vpop.f32.mrb[0].mxu0
    %v6776 = vadd.f32 %v5157, %v6775
    %6777 = vdwg.mxu0
    %6778 = vmatprep.subr.bf16.mxu0 %v6063
    %6779 = vmatpush1.bf16.msra.mxu0 %v6062
    %6780 = vmatprep.subr.bf16.mxu0 %v6095
    %6781 = vmatpush1.bf16.msra.mxu0 %v6094
    %6782 = vmatprep.subr.bf16.mxu0 %v6127
    %6783 = vmatpush1.bf16.msra.mxu0 %v6126
    %6784 = vmatprep.subr.bf16.mxu0 %v6159
    %6785 = vmatpush1.bf16.msra.mxu0 %v6158
    %6786 = vmatprep.subr.bf16.mxu0 %v6191
    %6787 = vmatpush1.bf16.msra.mxu0 %v6190
    %6788 = vmatprep.subr.bf16.mxu0 %v6223
    %6789 = vmatpush1.bf16.msra.mxu0 %v6222
    %6790 = vmatprep.subr.bf16.mxu0 %v6255
    %6791 = vmatpush1.bf16.msra.mxu0 %v6254
    %6792 = vmatprep.subr.bf16.mxu0 %v6287
    %6793 = vmatpush1.bf16.msra.mxu0 %v6286
    %6794 = vmatprep.subr.bf16.mxu0 0
    %6795 = vmatpush1.bf16.msra.mxu0 0
    %6796 = vmatprep.subr.bf16.mxu0 0
    %6797 = vmatpush1.bf16.msra.mxu0 0
    %6798 = vmatprep.subr.bf16.mxu0 0
    %6799 = vmatpush1.bf16.msra.mxu0 0
    %6800 = vmatprep.subr.bf16.mxu0 0
    %6801 = vmatpush1.bf16.msra.mxu0 0
    %6802 = vmatprep.subr.bf16.mxu0 0
    %6803 = vmatpush1.bf16.msra.mxu0 0
    %6804 = vmatprep.subr.bf16.mxu0 0
    %6805 = vmatpush1.bf16.msra.mxu0 0
    %6806 = vmatprep.subr.bf16.mxu0 0
    %6807 = vmatpush1.bf16.msra.mxu0 0
    %6808 = vmatprep.subr.bf16.mxu0 0
    %6809 = vmatpush1.bf16.msra.mxu0 0
    %6810 = vmatprep.mubr.bf16.mxu0 0
    %6811 = vmatmul.mubr.bf16.gmra.mrb[0].mxu0 %v245
    %v6812 = vpop.f32.mrb[0].mxu0
    %v6813 = vadd.f32 %v5161, %v6812
    %v6814 = vpop.f32.mrb[0].mxu0
    %v6815 = vadd.f32 %v5165, %v6814
    %v6816 = vpop.f32.mrb[0].mxu0
    %v6817 = vadd.f32 %v5161, %v6816
    %v6818 = vpop.f32.mrb[0].mxu0
    %v6819 = vadd.f32 %v5165, %v6818
    %6820 = vmatprep.mubr.bf16.mxu0 0
    %6821 = vmatmul.mubr.bf16.gmra.mrb[0].mxu0 %v248
    %v6822 = vpop.f32.mrb[0].mxu0
    %v6823 = vadd.f32 %v5161, %v6822
    %v6824 = vpop.f32.mrb[0].mxu0
    %v6825 = vadd.f32 %v5165, %v6824
    %v6826 = vpop.f32.mrb[0].mxu0
    %v6827 = vadd.f32 %v5161, %v6826
    %v6828 = vpop.f32.mrb[0].mxu0
    %v6829 = vadd.f32 %v5165, %v6828
    %6830 = vdwg.mxu0
    %6831 = vmatprep.subr.bf16.mxu0 %v6065
    %6832 = vmatpush1.bf16.msra.mxu0 %v6064
    %6833 = vmatprep.subr.bf16.mxu0 %v6097
    %6834 = vmatpush1.bf16.msra.mxu0 %v6096
    %6835 = vmatprep.subr.bf16.mxu0 %v6129
    %6836 = vmatpush1.bf16.msra.mxu0 %v6128
    %6837 = vmatprep.subr.bf16.mxu0 %v6161
    %6838 = vmatpush1.bf16.msra.mxu0 %v6160
    %6839 = vmatprep.subr.bf16.mxu0 %v6193
    %6840 = vmatpush1.bf16.msra.mxu0 %v6192
    %6841 = vmatprep.subr.bf16.mxu0 %v6225
    %6842 = vmatpush1.bf16.msra.mxu0 %v6224
    %6843 = vmatprep.subr.bf16.mxu0 %v6257
    %6844 = vmatpush1.bf16.msra.mxu0 %v6256
    %6845 = vmatprep.subr.bf16.mxu0 %v6289
    %6846 = vmatpush1.bf16.msra.mxu0 %v6288
    %6847 = vmatprep.subr.bf16.mxu0 0
    %6848 = vmatpush1.bf16.msra.mxu0 0
    %6849 = vmatprep.subr.bf16.mxu0 0
    %6850 = vmatpush1.bf16.msra.mxu0 0
    %6851 = vmatprep.subr.bf16.mxu0 0
    %6852 = vmatpush1.bf16.msra.mxu0 0
    %6853 = vmatprep.subr.bf16.mxu0 0
    %6854 = vmatpush1.bf16.msra.mxu0 0
    %6855 = vmatprep.subr.bf16.mxu0 0
    %6856 = vmatpush1.bf16.msra.mxu0 0
    %6857 = vmatprep.subr.bf16.mxu0 0
    %6858 = vmatpush1.bf16.msra.mxu0 0
    %6859 = vmatprep.subr.bf16.mxu0 0
    %6860 = vmatpush1.bf16.msra.mxu0 0
    %6861 = vmatprep.subr.bf16.mxu0 0
    %6862 = vmatpush1.bf16.msra.mxu0 0
    %6863 = vmatprep.mubr.bf16.mxu0 0
    %6864 = vmatmul.mubr.bf16.gmra.mrb[0].mxu0 %v245
    %v6865 = vpop.f32.mrb[0].mxu0
    %v6866 = vadd.f32 %v5169, %v6865
    %v6867 = vpop.f32.mrb[0].mxu0
    %v6868 = vadd.f32 %v5173, %v6867
    %v6869 = vpop.f32.mrb[0].mxu0
    %v6870 = vadd.f32 %v5169, %v6869
    %v6871 = vpop.f32.mrb[0].mxu0
    %v6872 = vadd.f32 %v5173, %v6871
    %6873 = vmatprep.mubr.bf16.mxu0 0
    %6874 = vmatmul.mubr.bf16.gmra.mrb[0].mxu0 %v248
    %v6875 = vpop.f32.mrb[0].mxu0
    %v6876 = vadd.f32 %v5169, %v6875
    %v6877 = vpop.f32.mrb[0].mxu0
    %v6878 = vadd.f32 %v5173, %v6877
    %v6879 = vpop.f32.mrb[0].mxu0
    %v6880 = vadd.f32 %v5169, %v6879
    %v6881 = vpop.f32.mrb[0].mxu0
    %v6882 = vadd.f32 %v5173, %v6881
    %6883 = vdwg.mxu0
    %6884 = vmatprep.subr.bf16.mxu0 %v6067
    %6885 = vmatpush1.bf16.msra.mxu0 %v6066
    %6886 = vmatprep.subr.bf16.mxu0 %v6099
    %6887 = vmatpush1.bf16.msra.mxu0 %v6098
    %6888 = vmatprep.subr.bf16.mxu0 %v6131
    %6889 = vmatpush1.bf16.msra.mxu0 %v6130
    %6890 = vmatprep.subr.bf16.mxu0 %v6163
    %6891 = vmatpush1.bf16.msra.mxu0 %v6162
    %6892 = vmatprep.subr.bf16.mxu0 %v6195
    %6893 = vmatpush1.bf16.msra.mxu0 %v6194
    %6894 = vmatprep.subr.bf16.mxu0 %v6227
    %6895 = vmatpush1.bf16.msra.mxu0 %v6226
    %6896 = vmatprep.subr.bf16.mxu0 %v6259
    %6897 = vmatpush1.bf16.msra.mxu0 %v6258
    %6898 = vmatprep.subr.bf16.mxu0 %v6291
    %6899 = vmatpush1.bf16.msra.mxu0 %v6290
    %6900 = vmatprep.subr.bf16.mxu0 0
    %6901 = vmatpush1.bf16.msra.mxu0 0
    %6902 = vmatprep.subr.bf16.mxu0 0
    %6903 = vmatpush1.bf16.msra.mxu0 0
    %6904 = vmatprep.subr.bf16.mxu0 0
    %6905 = vmatpush1.bf16.msra.mxu0 0
    %6906 = vmatprep.subr.bf16.mxu0 0
    %6907 = vmatpush1.bf16.msra.mxu0 0
    %6908 = vmatprep.subr.bf16.mxu0 0
    %6909 = vmatpush1.bf16.msra.mxu0 0
    %6910 = vmatprep.subr.bf16.mxu0 0
    %6911 = vmatpush1.bf16.msra.mxu0 0
    %6912 = vmatprep.subr.bf16.mxu0 0
    %6913 = vmatpush1.bf16.msra.mxu0 0
    %6914 = vmatprep.subr.bf16.mxu0 0
    %6915 = vmatpush1.bf16.msra.mxu0 0
    %6916 = vmatprep.mubr.bf16.mxu0 0
    %6917 = vmatmul.mubr.bf16.gmra.mrb[0].mxu0 %v245
    %v6918 = vpop.f32.mrb[0].mxu0
    %v6919 = vadd.f32 %v5177, %v6918
    %v6920 = vpop.f32.mrb[0].mxu0
    %v6921 = vadd.f32 %v5181, %v6920
    %v6922 = vpop.f32.mrb[0].mxu0
    %v6923 = vadd.f32 %v5177, %v6922
    %v6924 = vpop.f32.mrb[0].mxu0
    %v6925 = vadd.f32 %v5181, %v6924
    %6926 = vmatprep.mubr.bf16.mxu0 0
    %6927 = vmatmul.mubr.bf16.gmra.mrb[0].mxu0 %v248
    %v6928 = vpop.f32.mrb[0].mxu0
    %v6929 = vadd.f32 %v5177, %v6928
    %v6930 = vpop.f32.mrb[0].mxu0
    %v6931 = vadd.f32 %v5181, %v6930
    %v6932 = vpop.f32.mrb[0].mxu0
    %v6933 = vadd.f32 %v5177, %v6932
    %v6934 = vpop.f32.mrb[0].mxu0
    %v6935 = vadd.f32 %v5181, %v6934
    %6936 = vdwg.mxu0
    %6937 = vmatprep.subr.bf16.mxu0 %v6069
    %6938 = vmatpush1.bf16.msra.mxu0 %v6068
    %6939 = vmatprep.subr.bf16.mxu0 %v6101
    %6940 = vmatpush1.bf16.msra.mxu0 %v6100
    %6941 = vmatprep.subr.bf16.mxu0 %v6133
    %6942 = vmatpush1.bf16.msra.mxu0 %v6132
    %6943 = vmatprep.subr.bf16.mxu0 %v6165
    %6944 = vmatpush1.bf16.msra.mxu0 %v6164
    %6945 = vmatprep.subr.bf16.mxu0 %v6197
    %6946 = vmatpush1.bf16.msra.mxu0 %v6196
    %6947 = vmatprep.subr.bf16.mxu0 %v6229
    %6948 = vmatpush1.bf16.msra.mxu0 %v6228
    %6949 = vmatprep.subr.bf16.mxu0 %v6261
    %6950 = vmatpush1.bf16.msra.mxu0 %v6260
    %6951 = vmatprep.subr.bf16.mxu0 %v6293
    %6952 = vmatpush1.bf16.msra.mxu0 %v6292
    %6953 = vmatprep.subr.bf16.mxu0 0
    %6954 = vmatpush1.bf16.msra.mxu0 0
    %6955 = vmatprep.subr.bf16.mxu0 0
    %6956 = vmatpush1.bf16.msra.mxu0 0
    %6957 = vmatprep.subr.bf16.mxu0 0
    %6958 = vmatpush1.bf16.msra.mxu0 0
    %6959 = vmatprep.subr.bf16.mxu0 0
    %6960 = vmatpush1.bf16.msra.mxu0 0
    %6961 = vmatprep.subr.bf16.mxu0 0
    %6962 = vmatpush1.bf16.msra.mxu0 0
    %6963 = vmatprep.subr.bf16.mxu0 0
    %6964 = vmatpush1.bf16.msra.mxu0 0
    %6965 = vmatprep.subr.bf16.mxu0 0
    %6966 = vmatpush1.bf16.msra.mxu0 0
    %6967 = vmatprep.subr.bf16.mxu0 0
    %6968 = vmatpush1.bf16.msra.mxu0 0
    %6969 = vmatprep.mubr.bf16.mxu0 0
    %6970 = vmatmul.mubr.bf16.gmra.mrb[0].mxu0 %v245
    %v6971 = vpop.f32.mrb[0].mxu0
    %v6972 = vadd.f32 %v5185, %v6971
    %v6973 = vpop.f32.mrb[0].mxu0
    %v6974 = vadd.f32 %v5189, %v6973
    %v6975 = vpop.f32.mrb[0].mxu0
    %v6976 = vadd.f32 %v5185, %v6975
    %v6977 = vpop.f32.mrb[0].mxu0
    %v6978 = vadd.f32 %v5189, %v6977
    %6979 = vmatprep.mubr.bf16.mxu0 0
    %6980 = vmatmul.mubr.bf16.gmra.mrb[0].mxu0 %v248
    %v6981 = vpop.f32.mrb[0].mxu0
    %v6982 = vadd.f32 %v5185, %v6981
    %v6983 = vpop.f32.mrb[0].mxu0
    %v6984 = vadd.f32 %v5189, %v6983
    %v6985 = vpop.f32.mrb[0].mxu0
    %v6986 = vadd.f32 %v5185, %v6985
    %v6987 = vpop.f32.mrb[0].mxu0
    %v6988 = vadd.f32 %v5189, %v6987
    %6989 = vdwg.mxu0
    %6990 = vmatprep.subr.bf16.mxu0 %v6071
    %6991 = vmatpush1.bf16.msra.mxu0 %v6070
    %6992 = vmatprep.subr.bf16.mxu0 %v6103
    %6993 = vmatpush1.bf16.msra.mxu0 %v6102
    %6994 = vmatprep.subr.bf16.mxu0 %v6135
    %6995 = vmatpush1.bf16.msra.mxu0 %v6134
    %6996 = vmatprep.subr.bf16.mxu0 %v6167
    %6997 = vmatpush1.bf16.msra.mxu0 %v6166
    %6998 = vmatprep.subr.bf16.mxu0 %v6199
    %6999 = vmatpush1.bf16.msra.mxu0 %v6198
    %7000 = vmatprep.subr.bf16.mxu0 %v6231
    %7001 = vmatpush1.bf16.msra.mxu0 %v6230
    %7002 = vmatprep.subr.bf16.mxu0 %v6263
    %7003 = vmatpush1.bf16.msra.mxu0 %v6262
    %7004 = vmatprep.subr.bf16.mxu0 %v6295
    %7005 = vmatpush1.bf16.msra.mxu0 %v6294
    %7006 = vmatprep.subr.bf16.mxu0 0
    %7007 = vmatpush1.bf16.msra.mxu0 0
    %7008 = vmatprep.subr.bf16.mxu0 0
    %7009 = vmatpush1.bf16.msra.mxu0 0
    %7010 = vmatprep.subr.bf16.mxu0 0
    %7011 = vmatpush1.bf16.msra.mxu0 0
    %7012 = vmatprep.subr.bf16.mxu0 0
    %7013 = vmatpush1.bf16.msra.mxu0 0
    %7014 = vmatprep.subr.bf16.mxu0 0
    %7015 = vmatpush1.bf16.msra.mxu0 0
    %7016 = vmatprep.subr.bf16.mxu0 0
    %7017 = vmatpush1.bf16.msra.mxu0 0
    %7018 = vmatprep.subr.bf16.mxu0 0
    %7019 = vmatpush1.bf16.msra.mxu0 0
    %7020 = vmatprep.subr.bf16.mxu0 0
    %7021 = vmatpush1.bf16.msra.mxu0 0
    %7022 = vmatprep.mubr.bf16.mxu0 0
    %7023 = vmatmul.mubr.bf16.gmra.mrb[0].mxu0 %v245
    %v7024 = vpop.f32.mrb[0].mxu0
    %v7025 = vadd.f32 %v5193, %v7024
    %v7026 = vpop.f32.mrb[0].mxu0
    %v7027 = vadd.f32 %v5197, %v7026
    %v7028 = vpop.f32.mrb[0].mxu0
    %v7029 = vadd.f32 %v5193, %v7028
    %v7030 = vpop.f32.mrb[0].mxu0
    %v7031 = vadd.f32 %v5197, %v7030
    %7032 = vmatprep.mubr.bf16.mxu0 0
    %7033 = vmatmul.mubr.bf16.gmra.mrb[0].mxu0 %v248
    %v7034 = vpop.f32.mrb[0].mxu0
    %v7035 = vadd.f32 %v5193, %v7034
    %v7036 = vpop.f32.mrb[0].mxu0
    %v7037 = vadd.f32 %v5197, %v7036
    %v7038 = vpop.f32.mrb[0].mxu0
    %v7039 = vadd.f32 %v5193, %v7038
    %v7040 = vpop.f32.mrb[0].mxu0
    %v7041 = vadd.f32 %v5197, %v7040
    %7042 = vdwg.mxu0
    %7043 = vmatprep.subr.bf16.mxu0 %v6073
    %7044 = vmatpush1.bf16.msra.mxu0 %v6072
    %7045 = vmatprep.subr.bf16.mxu0 %v6105
    %7046 = vmatpush1.bf16.msra.mxu0 %v6104
    %7047 = vmatprep.subr.bf16.mxu0 %v6137
    %7048 = vmatpush1.bf16.msra.mxu0 %v6136
    %7049 = vmatprep.subr.bf16.mxu0 %v6169
    %7050 = vmatpush1.bf16.msra.mxu0 %v6168
    %7051 = vmatprep.subr.bf16.mxu0 %v6201
    %7052 = vmatpush1.bf16.msra.mxu0 %v6200
    %7053 = vmatprep.subr.bf16.mxu0 %v6233
    %7054 = vmatpush1.bf16.msra.mxu0 %v6232
    %7055 = vmatprep.subr.bf16.mxu0 %v6265
    %7056 = vmatpush1.bf16.msra.mxu0 %v6264
    %7057 = vmatprep.subr.bf16.mxu0 %v6297
    %7058 = vmatpush1.bf16.msra.mxu0 %v6296
    %7059 = vmatprep.subr.bf16.mxu0 0
    %7060 = vmatpush1.bf16.msra.mxu0 0
    %7061 = vmatprep.subr.bf16.mxu0 0
    %7062 = vmatpush1.bf16.msra.mxu0 0
    %7063 = vmatprep.subr.bf16.mxu0 0
    %7064 = vmatpush1.bf16.msra.mxu0 0
    %7065 = vmatprep.subr.bf16.mxu0 0
    %7066 = vmatpush1.bf16.msra.mxu0 0
    %7067 = vmatprep.subr.bf16.mxu0 0
    %7068 = vmatpush1.bf16.msra.mxu0 0
    %7069 = vmatprep.subr.bf16.mxu0 0
    %7070 = vmatpush1.bf16.msra.mxu0 0
    %7071 = vmatprep.subr.bf16.mxu0 0
    %7072 = vmatpush1.bf16.msra.mxu0 0
    %7073 = vmatprep.subr.bf16.mxu0 0
    %7074 = vmatpush1.bf16.msra.mxu0 0
    %7075 = vmatprep.mubr.bf16.mxu0 0
    %7076 = vmatmul.mubr.bf16.gmra.mrb[0].mxu0 %v245
    %v7077 = vpop.f32.mrb[0].mxu0
    %v7078 = vadd.f32 %v5201, %v7077
    %v7079 = vpop.f32.mrb[0].mxu0
    %v7080 = vadd.f32 %v5205, %v7079
    %v7081 = vpop.f32.mrb[0].mxu0
    %v7082 = vadd.f32 %v5201, %v7081
    %v7083 = vpop.f32.mrb[0].mxu0
    %v7084 = vadd.f32 %v5205, %v7083
    %7085 = vmatprep.mubr.bf16.mxu0 0
    %7086 = vmatmul.mubr.bf16.gmra.mrb[0].mxu0 %v248
    %v7087 = vpop.f32.mrb[0].mxu0
    %v7088 = vadd.f32 %v5201, %v7087
    %v7089 = vpop.f32.mrb[0].mxu0
    %v7090 = vadd.f32 %v5205, %v7089
    %v7091 = vpop.f32.mrb[0].mxu0
    %v7092 = vadd.f32 %v5201, %v7091
    %v7093 = vpop.f32.mrb[0].mxu0
    %v7094 = vadd.f32 %v5205, %v7093
    %7095 = vdwg.mxu0
    %7096 = vmatprep.subr.bf16.mxu0 %v6075
    %7097 = vmatpush1.bf16.msra.mxu0 %v6074
    %7098 = vmatprep.subr.bf16.mxu0 %v6107
    %7099 = vmatpush1.bf16.msra.mxu0 %v6106
    %7100 = vmatprep.subr.bf16.mxu0 %v6139
    %7101 = vmatpush1.bf16.msra.mxu0 %v6138
    %7102 = vmatprep.subr.bf16.mxu0 %v6171
    %7103 = vmatpush1.bf16.msra.mxu0 %v6170
    %7104 = vmatprep.subr.bf16.mxu0 %v6203
    %7105 = vmatpush1.bf16.msra.mxu0 %v6202
    %7106 = vmatprep.subr.bf16.mxu0 %v6235
    %7107 = vmatpush1.bf16.msra.mxu0 %v6234
    %7108 = vmatprep.subr.bf16.mxu0 %v6267
    %7109 = vmatpush1.bf16.msra.mxu0 %v6266
    %7110 = vmatprep.subr.bf16.mxu0 %v6299
    %7111 = vmatpush1.bf16.msra.mxu0 %v6298
    %7112 = vmatprep.subr.bf16.mxu0 0
    %7113 = vmatpush1.bf16.msra.mxu0 0
    %7114 = vmatprep.subr.bf16.mxu0 0
    %7115 = vmatpush1.bf16.msra.mxu0 0
    %7116 = vmatprep.subr.bf16.mxu0 0
    %7117 = vmatpush1.bf16.msra.mxu0 0
    %7118 = vmatprep.subr.bf16.mxu0 0
    %7119 = vmatpush1.bf16.msra.mxu0 0
    %7120 = vmatprep.subr.bf16.mxu0 0
    %7121 = vmatpush1.bf16.msra.mxu0 0
    %7122 = vmatprep.subr.bf16.mxu0 0
    %7123 = vmatpush1.bf16.msra.mxu0 0
    %7124 = vmatprep.subr.bf16.mxu0 0
    %7125 = vmatpush1.bf16.msra.mxu0 0
    %7126 = vmatprep.subr.bf16.mxu0 0
    %7127 = vmatpush1.bf16.msra.mxu0 0
    %7128 = vmatprep.mubr.bf16.mxu0 0
    %7129 = vmatmul.mubr.bf16.gmra.mrb[0].mxu0 %v245
    %v7130 = vpop.f32.mrb[0].mxu0
    %v7131 = vadd.f32 %v5209, %v7130
    %v7132 = vpop.f32.mrb[0].mxu0
    %v7133 = vadd.f32 %v5213, %v7132
    %v7134 = vpop.f32.mrb[0].mxu0
    %v7135 = vadd.f32 %v5209, %v7134
    %v7136 = vpop.f32.mrb[0].mxu0
    %v7137 = vadd.f32 %v5213, %v7136
    %7138 = vmatprep.mubr.bf16.mxu0 0
    %7139 = vmatmul.mubr.bf16.gmra.mrb[0].mxu0 %v248
    %v7140 = vpop.f32.mrb[0].mxu0
    %v7141 = vadd.f32 %v5209, %v7140
    %v7142 = vpop.f32.mrb[0].mxu0
    %v7143 = vadd.f32 %v5213, %v7142
    %v7144 = vpop.f32.mrb[0].mxu0
    %v7145 = vadd.f32 %v5209, %v7144
    %v7146 = vpop.f32.mrb[0].mxu0
    %v7147 = vadd.f32 %v5213, %v7146
    %7148 = vdwg.mxu0
    %7149 = vmatprep.subr.bf16.mxu0 %v6077
    %7150 = vmatpush1.bf16.msra.mxu0 %v6076
    %7151 = vmatprep.subr.bf16.mxu0 %v6109
    %7152 = vmatpush1.bf16.msra.mxu0 %v6108
    %7153 = vmatprep.subr.bf16.mxu0 %v6141
    %7154 = vmatpush1.bf16.msra.mxu0 %v6140
    %7155 = vmatprep.subr.bf16.mxu0 %v6173
    %7156 = vmatpush1.bf16.msra.mxu0 %v6172
    %7157 = vmatprep.subr.bf16.mxu0 %v6205
    %7158 = vmatpush1.bf16.msra.mxu0 %v6204
    %7159 = vmatprep.subr.bf16.mxu0 %v6237
    %7160 = vmatpush1.bf16.msra.mxu0 %v6236
    %7161 = vmatprep.subr.bf16.mxu0 %v6269
    %7162 = vmatpush1.bf16.msra.mxu0 %v6268
    %7163 = vmatprep.subr.bf16.mxu0 %v6301
    %7164 = vmatpush1.bf16.msra.mxu0 %v6300
    %7165 = vmatprep.subr.bf16.mxu0 0
    %7166 = vmatpush1.bf16.msra.mxu0 0
    %7167 = vmatprep.subr.bf16.mxu0 0
    %7168 = vmatpush1.bf16.msra.mxu0 0
    %7169 = vmatprep.subr.bf16.mxu0 0
    %7170 = vmatpush1.bf16.msra.mxu0 0
    %7171 = vmatprep.subr.bf16.mxu0 0
    %7172 = vmatpush1.bf16.msra.mxu0 0
    %7173 = vmatprep.subr.bf16.mxu0 0
    %7174 = vmatpush1.bf16.msra.mxu0 0
    %7175 = vmatprep.subr.bf16.mxu0 0
    %7176 = vmatpush1.bf16.msra.mxu0 0
    %7177 = vmatprep.subr.bf16.mxu0 0
    %7178 = vmatpush1.bf16.msra.mxu0 0
    %7179 = vmatprep.subr.bf16.mxu0 0
    %7180 = vmatpush1.bf16.msra.mxu0 0
    %7181 = vmatprep.mubr.bf16.mxu0 0
    %7182 = vmatmul.mubr.bf16.gmra.mrb[0].mxu0 %v245
    %v7183 = vpop.f32.mrb[0].mxu0
    %v7184 = vadd.f32 %v5217, %v7183
    %v7185 = vpop.f32.mrb[0].mxu0
    %v7186 = vadd.f32 %v5221, %v7185
    %v7187 = vpop.f32.mrb[0].mxu0
    %v7188 = vadd.f32 %v5217, %v7187
    %v7189 = vpop.f32.mrb[0].mxu0
    %v7190 = vadd.f32 %v5221, %v7189
    %7191 = vmatprep.mubr.bf16.mxu0 0
    %7192 = vmatmul.mubr.bf16.gmra.mrb[0].mxu0 %v248
    %v7193 = vpop.f32.mrb[0].mxu0
    %v7194 = vadd.f32 %v5217, %v7193
    %v7195 = vpop.f32.mrb[0].mxu0
    %v7196 = vadd.f32 %v5221, %v7195
    %v7197 = vpop.f32.mrb[0].mxu0
    %v7198 = vadd.f32 %v5217, %v7197
    %v7199 = vpop.f32.mrb[0].mxu0
    %v7200 = vadd.f32 %v5221, %v7199
    %7201 = vdwg.mxu0
    %7202 = vmatprep.subr.bf16.mxu0 %v6079
    %7203 = vmatpush1.bf16.msra.mxu0 %v6078
    %7204 = vmatprep.subr.bf16.mxu0 %v6111
    %7205 = vmatpush1.bf16.msra.mxu0 %v6110
    %7206 = vmatprep.subr.bf16.mxu0 %v6143
    %7207 = vmatpush1.bf16.msra.mxu0 %v6142
    %7208 = vmatprep.subr.bf16.mxu0 %v6175
    %7209 = vmatpush1.bf16.msra.mxu0 %v6174
    %7210 = vmatprep.subr.bf16.mxu0 %v6207
    %7211 = vmatpush1.bf16.msra.mxu0 %v6206
    %7212 = vmatprep.subr.bf16.mxu0 %v6239
    %7213 = vmatpush1.bf16.msra.mxu0 %v6238
    %7214 = vmatprep.subr.bf16.mxu0 %v6271
    %7215 = vmatpush1.bf16.msra.mxu0 %v6270
    %7216 = vmatprep.subr.bf16.mxu0 %v6303
    %7217 = vmatpush1.bf16.msra.mxu0 %v6302
    %7218 = vmatprep.subr.bf16.mxu0 0
    %7219 = vmatpush1.bf16.msra.mxu0 0
    %7220 = vmatprep.subr.bf16.mxu0 0
    %7221 = vmatpush1.bf16.msra.mxu0 0
    %7222 = vmatprep.subr.bf16.mxu0 0
    %7223 = vmatpush1.bf16.msra.mxu0 0
    %7224 = vmatprep.subr.bf16.mxu0 0
    %7225 = vmatpush1.bf16.msra.mxu0 0
    %7226 = vmatprep.subr.bf16.mxu0 0
    %7227 = vmatpush1.bf16.msra.mxu0 0
    %7228 = vmatprep.subr.bf16.mxu0 0
    %7229 = vmatpush1.bf16.msra.mxu0 0
    %7230 = vmatprep.subr.bf16.mxu0 0
    %7231 = vmatpush1.bf16.msra.mxu0 0
    %7232 = vmatprep.subr.bf16.mxu0 0
    %7233 = vmatpush1.bf16.msra.mxu0 0
    %7234 = vmatprep.mubr.bf16.mxu0 0
    %7235 = vmatmul.mubr.bf16.gmra.mrb[0].mxu0 %v245
    %v7236 = vpop.f32.mrb[0].mxu0
    %v7237 = vadd.f32 %v5225, %v7236
    %v7238 = vpop.f32.mrb[0].mxu0
    %v7239 = vadd.f32 %v5229, %v7238
    %v7240 = vpop.f32.mrb[0].mxu0
    %v7241 = vadd.f32 %v5225, %v7240
    %v7242 = vpop.f32.mrb[0].mxu0
    %v7243 = vadd.f32 %v5229, %v7242
    %7244 = vmatprep.mubr.bf16.mxu0 0
    %7245 = vmatmul.mubr.bf16.gmra.mrb[0].mxu0 %v248
    %v7246 = vpop.f32.mrb[0].mxu0
    %v7247 = vadd.f32 %v5225, %v7246
    %v7248 = vpop.f32.mrb[0].mxu0
    %v7249 = vadd.f32 %v5229, %v7248
    %v7250 = vpop.f32.mrb[0].mxu0
    %v7251 = vadd.f32 %v5225, %v7250
    %v7252 = vpop.f32.mrb[0].mxu0
    %v7253 = vadd.f32 %v5229, %v7252
    %7254 = vdwg.mxu0
    %7255 = vmatprep.subr.bf16.mxu0 %v6081
    %7256 = vmatpush1.bf16.msra.mxu0 %v6080
    %7257 = vmatprep.subr.bf16.mxu0 %v6113
    %7258 = vmatpush1.bf16.msra.mxu0 %v6112
    %7259 = vmatprep.subr.bf16.mxu0 %v6145
    %7260 = vmatpush1.bf16.msra.mxu0 %v6144
    %7261 = vmatprep.subr.bf16.mxu0 %v6177
    %7262 = vmatpush1.bf16.msra.mxu0 %v6176
    %7263 = vmatprep.subr.bf16.mxu0 %v6209
    %7264 = vmatpush1.bf16.msra.mxu0 %v6208
    %7265 = vmatprep.subr.bf16.mxu0 %v6241
    %7266 = vmatpush1.bf16.msra.mxu0 %v6240
    %7267 = vmatprep.subr.bf16.mxu0 %v6273
    %7268 = vmatpush1.bf16.msra.mxu0 %v6272
    %7269 = vmatprep.subr.bf16.mxu0 %v6305
    %7270 = vmatpush1.bf16.msra.mxu0 %v6304
    %7271 = vmatprep.subr.bf16.mxu0 0
    %7272 = vmatpush1.bf16.msra.mxu0 0
    %7273 = vmatprep.subr.bf16.mxu0 0
    %7274 = vmatpush1.bf16.msra.mxu0 0
    %7275 = vmatprep.subr.bf16.mxu0 0
    %7276 = vmatpush1.bf16.msra.mxu0 0
    %7277 = vmatprep.subr.bf16.mxu0 0
    %7278 = vmatpush1.bf16.msra.mxu0 0
    %7279 = vmatprep.subr.bf16.mxu0 0
    %7280 = vmatpush1.bf16.msra.mxu0 0
    %7281 = vmatprep.subr.bf16.mxu0 0
    %7282 = vmatpush1.bf16.msra.mxu0 0
    %7283 = vmatprep.subr.bf16.mxu0 0
    %7284 = vmatpush1.bf16.msra.mxu0 0
    %7285 = vmatprep.subr.bf16.mxu0 0
    %7286 = vmatpush1.bf16.msra.mxu0 0
    %7287 = vmatprep.mubr.bf16.mxu0 0
    %7288 = vmatmul.mubr.bf16.gmra.mrb[0].mxu0 %v245
    %v7289 = vpop.f32.mrb[0].mxu0
    %v7290 = vadd.f32 %v5233, %v7289
    %v7291 = vpop.f32.mrb[0].mxu0
    %v7292 = vadd.f32 %v5237, %v7291
    %v7293 = vpop.f32.mrb[0].mxu0
    %v7294 = vadd.f32 %v5233, %v7293
    %v7295 = vpop.f32.mrb[0].mxu0
    %v7296 = vadd.f32 %v5237, %v7295
    %7297 = vmatprep.mubr.bf16.mxu0 0
    %7298 = vmatmul.mubr.bf16.gmra.mrb[0].mxu0 %v248
    %v7299 = vpop.f32.mrb[0].mxu0
    %v7300 = vadd.f32 %v5233, %v7299
    %v7301 = vpop.f32.mrb[0].mxu0
    %v7302 = vadd.f32 %v5237, %v7301
    %v7303 = vpop.f32.mrb[0].mxu0
    %v7304 = vadd.f32 %v5233, %v7303
    %v7305 = vpop.f32.mrb[0].mxu0
    %v7306 = vadd.f32 %v5237, %v7305
    %7307 = vdwg.mxu0
    %7308 = vmatprep.subr.bf16.mxu0 %v6083
    %7309 = vmatpush1.bf16.msra.mxu0 %v6082
    %7310 = vmatprep.subr.bf16.mxu0 %v6115
    %7311 = vmatpush1.bf16.msra.mxu0 %v6114
    %7312 = vmatprep.subr.bf16.mxu0 %v6147
    %7313 = vmatpush1.bf16.msra.mxu0 %v6146
    %7314 = vmatprep.subr.bf16.mxu0 %v6179
    %7315 = vmatpush1.bf16.msra.mxu0 %v6178
    %7316 = vmatprep.subr.bf16.mxu0 %v6211
    %7317 = vmatpush1.bf16.msra.mxu0 %v6210
    %7318 = vmatprep.subr.bf16.mxu0 %v6243
    %7319 = vmatpush1.bf16.msra.mxu0 %v6242
    %7320 = vmatprep.subr.bf16.mxu0 %v6275
    %7321 = vmatpush1.bf16.msra.mxu0 %v6274
    %7322 = vmatprep.subr.bf16.mxu0 %v6307
    %7323 = vmatpush1.bf16.msra.mxu0 %v6306
    %7324 = vmatprep.subr.bf16.mxu0 0
    %7325 = vmatpush1.bf16.msra.mxu0 0
    %7326 = vmatprep.subr.bf16.mxu0 0
    %7327 = vmatpush1.bf16.msra.mxu0 0
    %7328 = vmatprep.subr.bf16.mxu0 0
    %7329 = vmatpush1.bf16.msra.mxu0 0
    %7330 = vmatprep.subr.bf16.mxu0 0
    %7331 = vmatpush1.bf16.msra.mxu0 0
    %7332 = vmatprep.subr.bf16.mxu0 0
    %7333 = vmatpush1.bf16.msra.mxu0 0
    %7334 = vmatprep.subr.bf16.mxu0 0
    %7335 = vmatpush1.bf16.msra.mxu0 0
    %7336 = vmatprep.subr.bf16.mxu0 0
    %7337 = vmatpush1.bf16.msra.mxu0 0
    %7338 = vmatprep.subr.bf16.mxu0 0
    %7339 = vmatpush1.bf16.msra.mxu0 0
    %7340 = vmatprep.mubr.bf16.mxu0 0
    %7341 = vmatmul.mubr.bf16.gmra.mrb[0].mxu0 %v245
    %v7342 = vpop.f32.mrb[0].mxu0
    %v7343 = vadd.f32 %v5241, %v7342
    %v7344 = vpop.f32.mrb[0].mxu0
    %v7345 = vadd.f32 %v5245, %v7344
    %v7346 = vpop.f32.mrb[0].mxu0
    %v7347 = vadd.f32 %v5241, %v7346
    %v7348 = vpop.f32.mrb[0].mxu0
    %v7349 = vadd.f32 %v5245, %v7348
    %7350 = vmatprep.mubr.bf16.mxu0 0
    %7351 = vmatmul.mubr.bf16.gmra.mrb[0].mxu0 %v248
    %v7352 = vpop.f32.mrb[0].mxu0
    %v7353 = vadd.f32 %v5241, %v7352
    %v7354 = vpop.f32.mrb[0].mxu0
    %v7355 = vadd.f32 %v5245, %v7354
    %v7356 = vpop.f32.mrb[0].mxu0
    %v7357 = vadd.f32 %v5241, %v7356
    %v7358 = vpop.f32.mrb[0].mxu0
    %v7359 = vadd.f32 %v5245, %v7358
    %7360 = vdwg.mxu0
    %7361 = vmatprep.subr.bf16.mxu0 %v6085
    %7362 = vmatpush1.bf16.msra.mxu0 %v6084
    %7363 = vmatprep.subr.bf16.mxu0 %v6117
    %7364 = vmatpush1.bf16.msra.mxu0 %v6116
    %7365 = vmatprep.subr.bf16.mxu0 %v6149
    %7366 = vmatpush1.bf16.msra.mxu0 %v6148
    %7367 = vmatprep.subr.bf16.mxu0 %v6181
    %7368 = vmatpush1.bf16.msra.mxu0 %v6180
    %7369 = vmatprep.subr.bf16.mxu0 %v6213
    %7370 = vmatpush1.bf16.msra.mxu0 %v6212
    %7371 = vmatprep.subr.bf16.mxu0 %v6245
    %7372 = vmatpush1.bf16.msra.mxu0 %v6244
    %7373 = vmatprep.subr.bf16.mxu0 %v6277
    %7374 = vmatpush1.bf16.msra.mxu0 %v6276
    %7375 = vmatprep.subr.bf16.mxu0 %v6309
    %7376 = vmatpush1.bf16.msra.mxu0 %v6308
    %7377 = vmatprep.subr.bf16.mxu0 0
    %7378 = vmatpush1.bf16.msra.mxu0 0
    %7379 = vmatprep.subr.bf16.mxu0 0
    %7380 = vmatpush1.bf16.msra.mxu0 0
    %7381 = vmatprep.subr.bf16.mxu0 0
    %7382 = vmatpush1.bf16.msra.mxu0 0
    %7383 = vmatprep.subr.bf16.mxu0 0
    %7384 = vmatpush1.bf16.msra.mxu0 0
    %7385 = vmatprep.subr.bf16.mxu0 0
    %7386 = vmatpush1.bf16.msra.mxu0 0
    %7387 = vmatprep.subr.bf16.mxu0 0
    %7388 = vmatpush1.bf16.msra.mxu0 0
    %7389 = vmatprep.subr.bf16.mxu0 0
    %7390 = vmatpush1.bf16.msra.mxu0 0
    %7391 = vmatprep.subr.bf16.mxu0 0
    %7392 = vmatpush1.bf16.msra.mxu0 0
    %7393 = vmatprep.mubr.bf16.mxu0 0
    %7394 = vmatmul.mubr.bf16.gmra.mrb[0].mxu0 %v245
    %v7395 = vpop.f32.mrb[0].mxu0
    %v7396 = vadd.f32 %v5249, %v7395
    %v7397 = vpop.f32.mrb[0].mxu0
    %v7398 = vadd.f32 %v5253, %v7397
    %v7399 = vpop.f32.mrb[0].mxu0
    %v7400 = vadd.f32 %v5249, %v7399
    %v7401 = vpop.f32.mrb[0].mxu0
    %v7402 = vadd.f32 %v5253, %v7401
    %7403 = vmatprep.mubr.bf16.mxu0 0
    %7404 = vmatmul.mubr.bf16.gmra.mrb[0].mxu0 %v248
    %v7405 = vpop.f32.mrb[0].mxu0
    %v7406 = vadd.f32 %v5249, %v7405
    %v7407 = vpop.f32.mrb[0].mxu0
    %v7408 = vadd.f32 %v5253, %v7407
    %v7409 = vpop.f32.mrb[0].mxu0
    %v7410 = vadd.f32 %v5249, %v7409
    %v7411 = vpop.f32.mrb[0].mxu0
    %v7412 = vadd.f32 %v5253, %v7411
    %7413 = vdwg.mxu0
    %7414 = vmatprep.subr.bf16.mxu0 0
    %7415 = vmatpush1.bf16.msra.mxu0 %v4849
    %7416 = vmatprep.subr.bf16.mxu0 0
    %7417 = vmatpush1.bf16.msra.mxu0 0
    %7418 = vmatprep.subr.bf16.mxu0 0
    %7419 = vmatpush1.bf16.msra.mxu0 0
    %7420 = vmatprep.subr.bf16.mxu0 0
    %7421 = vmatpush1.bf16.msra.mxu0 0
    %7422 = vmatprep.subr.bf16.mxu0 0
    %7423 = vmatpush1.bf16.msra.mxu0 0
    %7424 = vmatprep.subr.bf16.mxu0 0
    %7425 = vmatpush1.bf16.msra.mxu0 0
    %7426 = vmatprep.subr.bf16.mxu0 0
    %7427 = vmatpush1.bf16.msra.mxu0 0
    %7428 = vmatprep.subr.bf16.mxu0 0
    %7429 = vmatpush1.bf16.msra.mxu0 0
    %7430 = vmatprep.subr.bf16.mxu0 0
    %7431 = vmatpush1.bf16.msra.mxu0 0
    %7432 = vmatprep.subr.bf16.mxu0 0
    %7433 = vmatpush1.bf16.msra.mxu0 0
    %7434 = vmatprep.subr.bf16.mxu0 0
    %7435 = vmatpush1.bf16.msra.mxu0 0
    %7436 = vmatprep.subr.bf16.mxu0 0
    %7437 = vmatpush1.bf16.msra.mxu0 0
    %7438 = vmatprep.subr.bf16.mxu0 0
    %7439 = vmatpush1.bf16.msra.mxu0 0
    %7440 = vmatprep.subr.bf16.mxu0 0
    %7441 = vmatpush1.bf16.msra.mxu0 0
    %7442 = vmatprep.subr.bf16.mxu0 0
    %7443 = vmatpush1.bf16.msra.mxu0 0
    %7444 = vmatprep.subr.bf16.mxu0 0
    %7445 = vmatpush1.bf16.msra.mxu0 0
    %7446 = vmatprep.mubr.bf16.mxu0 0
    %7447 = vmatmul.mubr.bf16.gmra.mrb[0].mxu0 %v589
    %v7448 = vpop.f32.mrb[0].mxu0
    %v7449 = vadd.f32 0.0, %v7448
    %v7450 = vpop.f32.mrb[0].mxu0
    %v7451 = vpop.f32.mrb[0].mxu0
    %v7452 = vadd.f32 0.0, %v7451
    %v7453 = vpop.f32.mrb[0].mxu0
    %7454 = vmatprep.mubr.bf16.mxu0 0
    %7455 = vmatmul.mubr.bf16.gmra.mrb[0].mxu0 %v592
    %v7456 = vpop.f32.mrb[0].mxu0
    %v7457 = vadd.f32 0.0, %v7456
    %v7458 = vpop.f32.mrb[0].mxu0
    %v7459 = vpop.f32.mrb[0].mxu0
    %v7460 = vadd.f32 0.0, %v7459
    %v7461 = vpop.f32.mrb[0].mxu0
    %7462 = vdwg.mxu0
    %v7463 = vpack.c.bf16 %v7452, %v7449
    %v7464 = vpack.c.bf16 %v7460, %v7457
    %v7465 = vld [vmem:[%s10 + $0x50] sm:$0xff]
    %v7466 = vld [vmem:[%s10 + $0x58] sm:$0xff]
    %v7467 = vld [vmem:[%s10 + $0x60] sm:$0xff]
    %v7468 = vld [vmem:[%s10 + $0x68] sm:$0xff]
    %v7469 = vld [vmem:[%s10 + $0x70] sm:$0xff]
    %v7470 = vld [vmem:[%s10 + $0x78] sm:$0xff]
    %v7471 = vld [vmem:[%s10 + $0x80] sm:$0xff]
    %v7472 = vld [vmem:[%s10 + $0x88] sm:$0xff]
    %v7473 = vld [vmem:[%s10 + $0x90] sm:$0xff]
    %v7474 = vld [vmem:[%s10 + $0x98] sm:$0xff]
    %v7475 = vld [vmem:[%s10 + $0xa0] sm:$0xff]
    %v7476 = vld [vmem:[%s10 + $0xa8] sm:$0xff]
    %v7477 = vld [vmem:[%s10 + $0xb0] sm:$0xff]
    %v7478 = vld [vmem:[%s10 + $0xb8] sm:$0xff]
    %v7479 = vld [vmem:[%s10 + $0xc0] sm:$0xff]
    %v7480 = vld [vmem:[%s10 + $0xc8] sm:$0xff]
    %v7481 = vld [vmem:[%s10 + $0x120] sm:$0xff]
    %v7482 = vld [vmem:[%s10 + $0x128] sm:$0xff]
    %v7483 = vld [vmem:[%s10 + $0x130] sm:$0xff]
    %v7484 = vld [vmem:[%s10 + $0x138] sm:$0xff]
    %v7485 = vld [vmem:[%s10 + $0x140] sm:$0xff]
    %v7486 = vld [vmem:[%s10 + $0x148] sm:$0xff]
    %v7487 = vld [vmem:[%s10 + $0x150] sm:$0xff]
    %v7488 = vld [vmem:[%s10 + $0x158] sm:$0xff]
    %v7489 = vld [vmem:[%s10 + $0x160] sm:$0xff]
    %v7490 = vld [vmem:[%s10 + $0x168] sm:$0xff]
    %v7491 = vld [vmem:[%s10 + $0x170] sm:$0xff]
    %v7492 = vld [vmem:[%s10 + $0x178] sm:$0xff]
    %v7493 = vld [vmem:[%s10 + $0x180] sm:$0xff]
    %v7494 = vld [vmem:[%s10 + $0x188] sm:$0xff]
    %v7495 = vld [vmem:[%s10 + $0x190] sm:$0xff]
    %v7496 = vld [vmem:[%s10 + $0x198] sm:$0xff]
    %v7497 = vld [vmem:[%s10 + $0x1f0] sm:$0xff]
    %v7498 = vld [vmem:[%s10 + $0x1f8] sm:$0xff]
    %v7499 = vld [vmem:[%s10 + $0x200] sm:$0xff]
    %v7500 = vld [vmem:[%s10 + $0x208] sm:$0xff]
    %v7501 = vld [vmem:[%s10 + $0x210] sm:$0xff]
    %v7502 = vld [vmem:[%s10 + $0x218] sm:$0xff]
    %v7503 = vld [vmem:[%s10 + $0x220] sm:$0xff]
    %v7504 = vld [vmem:[%s10 + $0x228] sm:$0xff]
    %v7505 = vld [vmem:[%s10 + $0x230] sm:$0xff]
    %v7506 = vld [vmem:[%s10 + $0x238] sm:$0xff]
    %v7507 = vld [vmem:[%s10 + $0x240] sm:$0xff]
    %v7508 = vld [vmem:[%s10 + $0x248] sm:$0xff]
    %v7509 = vld [vmem:[%s10 + $0x250] sm:$0xff]
    %v7510 = vld [vmem:[%s10 + $0x258] sm:$0xff]
    %v7511 = vld [vmem:[%s10 + $0x260] sm:$0xff]
    %v7512 = vld [vmem:[%s10 + $0x268] sm:$0xff]
    %v7513 = vld [vmem:[%s10 + $0x2c0] sm:$0xff]
    %v7514 = vld [vmem:[%s10 + $0x2c8] sm:$0xff]
    %v7515 = vld [vmem:[%s10 + $0x2d0] sm:$0xff]
    %v7516 = vld [vmem:[%s10 + $0x2d8] sm:$0xff]
    %v7517 = vld [vmem:[%s10 + $0x2e0] sm:$0xff]
    %v7518 = vld [vmem:[%s10 + $0x2e8] sm:$0xff]
    %v7519 = vld [vmem:[%s10 + $0x2f0] sm:$0xff]
    %v7520 = vld [vmem:[%s10 + $0x2f8] sm:$0xff]
    %v7521 = vld [vmem:[%s10 + $0x300] sm:$0xff]
    %v7522 = vld [vmem:[%s10 + $0x308] sm:$0xff]
    %v7523 = vld [vmem:[%s10 + $0x310] sm:$0xff]
    %v7524 = vld [vmem:[%s10 + $0x318] sm:$0xff]
    %v7525 = vld [vmem:[%s10 + $0x320] sm:$0xff]
    %v7526 = vld [vmem:[%s10 + $0x328] sm:$0xff]
    %v7527 = vld [vmem:[%s10 + $0x330] sm:$0xff]
    %v7528 = vld [vmem:[%s10 + $0x338] sm:$0xff]
    %v7529 = vld [vmem:[%s10 + $0x390] sm:$0xff]
    %v7530 = vld [vmem:[%s10 + $0x398] sm:$0xff]
    %v7531 = vld [vmem:[%s10 + $0x3a0] sm:$0xff]
    %v7532 = vld [vmem:[%s10 + $0x3a8] sm:$0xff]
    %v7533 = vld [vmem:[%s10 + $0x3b0] sm:$0xff]
    %v7534 = vld [vmem:[%s10 + $0x3b8] sm:$0xff]
    %v7535 = vld [vmem:[%s10 + $0x3c0] sm:$0xff]
    %v7536 = vld [vmem:[%s10 + $0x3c8] sm:$0xff]
    %v7537 = vld [vmem:[%s10 + $0x3d0] sm:$0xff]
    %v7538 = vld [vmem:[%s10 + $0x3d8] sm:$0xff]
    %v7539 = vld [vmem:[%s10 + $0x3e0] sm:$0xff]
    %v7540 = vld [vmem:[%s10 + $0x3e8] sm:$0xff]
    %v7541 = vld [vmem:[%s10 + $0x3f0] sm:$0xff]
    %v7542 = vld [vmem:[%s10 + $0x3f8] sm:$0xff]
    %v7543 = vld [vmem:[%s10 + $0x400] sm:$0xff]
    %v7544 = vld [vmem:[%s10 + $0x408] sm:$0xff]
    %v7545 = vld [vmem:[%s10 + $0x460] sm:$0xff]
    %v7546 = vld [vmem:[%s10 + $0x468] sm:$0xff]
    %v7547 = vld [vmem:[%s10 + $0x470] sm:$0xff]
    %v7548 = vld [vmem:[%s10 + $0x478] sm:$0xff]
    %v7549 = vld [vmem:[%s10 + $0x480] sm:$0xff]
    %v7550 = vld [vmem:[%s10 + $0x488] sm:$0xff]
    %v7551 = vld [vmem:[%s10 + $0x490] sm:$0xff]
    %v7552 = vld [vmem:[%s10 + $0x498] sm:$0xff]
    %v7553 = vld [vmem:[%s10 + $0x4a0] sm:$0xff]
    %v7554 = vld [vmem:[%s10 + $0x4a8] sm:$0xff]
    %v7555 = vld [vmem:[%s10 + $0x4b0] sm:$0xff]
    %v7556 = vld [vmem:[%s10 + $0x4b8] sm:$0xff]
    %v7557 = vld [vmem:[%s10 + $0x4c0] sm:$0xff]
    %v7558 = vld [vmem:[%s10 + $0x4c8] sm:$0xff]
    %v7559 = vld [vmem:[%s10 + $0x4d0] sm:$0xff]
    %v7560 = vld [vmem:[%s10 + $0x4d8] sm:$0xff]
    %v7561 = vld [vmem:[%s10 + $0x530] sm:$0xff]
    %v7562 = vld [vmem:[%s10 + $0x538] sm:$0xff]
    %v7563 = vld [vmem:[%s10 + $0x540] sm:$0xff]
    %v7564 = vld [vmem:[%s10 + $0x548] sm:$0xff]
    %v7565 = vld [vmem:[%s10 + $0x550] sm:$0xff]
    %v7566 = vld [vmem:[%s10 + $0x558] sm:$0xff]
    %v7567 = vld [vmem:[%s10 + $0x560] sm:$0xff]
    %v7568 = vld [vmem:[%s10 + $0x568] sm:$0xff]
    %v7569 = vld [vmem:[%s10 + $0x570] sm:$0xff]
    %v7570 = vld [vmem:[%s10 + $0x578] sm:$0xff]
    %v7571 = vld [vmem:[%s10 + $0x580] sm:$0xff]
    %v7572 = vld [vmem:[%s10 + $0x588] sm:$0xff]
    %v7573 = vld [vmem:[%s10 + $0x590] sm:$0xff]
    %v7574 = vld [vmem:[%s10 + $0x598] sm:$0xff]
    %v7575 = vld [vmem:[%s10 + $0x5a0] sm:$0xff]
    %v7576 = vld [vmem:[%s10 + $0x5a8] sm:$0xff]
    %v7577 = vld [vmem:[%s10 + $0x600] sm:$0xff]
    %v7578 = vld [vmem:[%s10 + $0x608] sm:$0xff]
    %v7579 = vld [vmem:[%s10 + $0x610] sm:$0xff]
    %v7580 = vld [vmem:[%s10 + $0x618] sm:$0xff]
    %v7581 = vld [vmem:[%s10 + $0x620] sm:$0xff]
    %v7582 = vld [vmem:[%s10 + $0x628] sm:$0xff]
    %v7583 = vld [vmem:[%s10 + $0x630] sm:$0xff]
    %v7584 = vld [vmem:[%s10 + $0x638] sm:$0xff]
    %v7585 = vld [vmem:[%s10 + $0x640] sm:$0xff]
    %v7586 = vld [vmem:[%s10 + $0x648] sm:$0xff]
    %v7587 = vld [vmem:[%s10 + $0x650] sm:$0xff]
    %v7588 = vld [vmem:[%s10 + $0x658] sm:$0xff]
    %v7589 = vld [vmem:[%s10 + $0x660] sm:$0xff]
    %v7590 = vld [vmem:[%s10 + $0x668] sm:$0xff]
    %v7591 = vld [vmem:[%s10 + $0x670] sm:$0xff]
    %v7592 = vld [vmem:[%s10 + $0x678] sm:$0xff]
    %v7721 = vunpack.c.l.b16 %v7465
    %v7722 = vunpack.c.h.b16 %v7465
    %v7723 = vunpack.c.l.b16 %v7466
    %v7724 = vunpack.c.h.b16 %v7466
    %v7725 = vunpack.c.l.b16 %v7467
    %v7726 = vunpack.c.h.b16 %v7467
    %v7727 = vunpack.c.l.b16 %v7468
    %v7728 = vunpack.c.h.b16 %v7468
    %v7729 = vunpack.c.l.b16 %v7469
    %v7730 = vunpack.c.h.b16 %v7469
    %v7731 = vunpack.c.l.b16 %v7470
    %v7732 = vunpack.c.h.b16 %v7470
    %v7733 = vunpack.c.l.b16 %v7471
    %v7734 = vunpack.c.h.b16 %v7471
    %v7735 = vunpack.c.l.b16 %v7472
    %v7736 = vunpack.c.h.b16 %v7472
    %v7737 = vunpack.c.l.b16 %v7473
    %v7738 = vunpack.c.h.b16 %v7473
    %v7739 = vunpack.c.l.b16 %v7474
    %v7740 = vunpack.c.h.b16 %v7474
    %v7741 = vunpack.c.l.b16 %v7475
    %v7742 = vunpack.c.h.b16 %v7475
    %v7743 = vunpack.c.l.b16 %v7476
    %v7744 = vunpack.c.h.b16 %v7476
    %v7745 = vunpack.c.l.b16 %v7477
    %v7746 = vunpack.c.h.b16 %v7477
    %v7747 = vunpack.c.l.b16 %v7478
    %v7748 = vunpack.c.h.b16 %v7478
    %v7749 = vunpack.c.l.b16 %v7479
    %v7750 = vunpack.c.h.b16 %v7479
    %v7751 = vunpack.c.l.b16 %v7480
    %v7752 = vunpack.c.h.b16 %v7480
    %v7753 = vunpack.c.l.b16 %v7481
    %v7754 = vunpack.c.h.b16 %v7481
    %v7755 = vunpack.c.l.b16 %v7482
    %v7756 = vunpack.c.h.b16 %v7482
    %v7757 = vunpack.c.l.b16 %v7483
    %v7758 = vunpack.c.h.b16 %v7483
    %v7759 = vunpack.c.l.b16 %v7484
    %v7760 = vunpack.c.h.b16 %v7484
    %v7761 = vunpack.c.l.b16 %v7485
    %v7762 = vunpack.c.h.b16 %v7485
    %v7763 = vunpack.c.l.b16 %v7486
    %v7764 = vunpack.c.h.b16 %v7486
    %v7765 = vunpack.c.l.b16 %v7487
    %v7766 = vunpack.c.h.b16 %v7487
    %v7767 = vunpack.c.l.b16 %v7488
    %v7768 = vunpack.c.h.b16 %v7488
    %v7769 = vunpack.c.l.b16 %v7489
    %v7770 = vunpack.c.h.b16 %v7489
    %v7771 = vunpack.c.l.b16 %v7490
    %v7772 = vunpack.c.h.b16 %v7490
    %v7773 = vunpack.c.l.b16 %v7491
    %v7774 = vunpack.c.h.b16 %v7491
    %v7775 = vunpack.c.l.b16 %v7492
    %v7776 = vunpack.c.h.b16 %v7492
    %v7777 = vunpack.c.l.b16 %v7493
    %v7778 = vunpack.c.h.b16 %v7493
    %v7779 = vunpack.c.l.b16 %v7494
    %v7780 = vunpack.c.h.b16 %v7494
    %v7781 = vunpack.c.l.b16 %v7495
    %v7782 = vunpack.c.h.b16 %v7495
    %v7783 = vunpack.c.l.b16 %v7496
    %v7784 = vunpack.c.h.b16 %v7496
    %v7785 = vunpack.c.l.b16 %v7497
    %v7786 = vunpack.c.h.b16 %v7497
    %v7787 = vunpack.c.l.b16 %v7498
    %v7788 = vunpack.c.h.b16 %v7498
    %v7789 = vunpack.c.l.b16 %v7499
    %v7790 = vunpack.c.h.b16 %v7499
    %v7791 = vunpack.c.l.b16 %v7500
    %v7792 = vunpack.c.h.b16 %v7500
    %v7793 = vunpack.c.l.b16 %v7501
    %v7794 = vunpack.c.h.b16 %v7501
    %v7795 = vunpack.c.l.b16 %v7502
    %v7796 = vunpack.c.h.b16 %v7502
    %v7797 = vunpack.c.l.b16 %v7503
    %v7798 = vunpack.c.h.b16 %v7503
    %v7799 = vunpack.c.l.b16 %v7504
    %v7800 = vunpack.c.h.b16 %v7504
    %v7801 = vunpack.c.l.b16 %v7505
    %v7802 = vunpack.c.h.b16 %v7505
    %v7803 = vunpack.c.l.b16 %v7506
    %v7804 = vunpack.c.h.b16 %v7506
    %v7805 = vunpack.c.l.b16 %v7507
    %v7806 = vunpack.c.h.b16 %v7507
    %v7807 = vunpack.c.l.b16 %v7508
    %v7808 = vunpack.c.h.b16 %v7508
    %v7809 = vunpack.c.l.b16 %v7509
    %v7810 = vunpack.c.h.b16 %v7509
    %v7811 = vunpack.c.l.b16 %v7510
    %v7812 = vunpack.c.h.b16 %v7510
    %v7813 = vunpack.c.l.b16 %v7511
    %v7814 = vunpack.c.h.b16 %v7511
    %v7815 = vunpack.c.l.b16 %v7512
    %v7816 = vunpack.c.h.b16 %v7512
    %v7817 = vunpack.c.l.b16 %v7513
    %v7818 = vunpack.c.h.b16 %v7513
    %v7819 = vunpack.c.l.b16 %v7514
    %v7820 = vunpack.c.h.b16 %v7514
    %v7821 = vunpack.c.l.b16 %v7515
    %v7822 = vunpack.c.h.b16 %v7515
    %v7823 = vunpack.c.l.b16 %v7516
    %v7824 = vunpack.c.h.b16 %v7516
    %v7825 = vunpack.c.l.b16 %v7517
    %v7826 = vunpack.c.h.b16 %v7517
    %v7827 = vunpack.c.l.b16 %v7518
    %v7828 = vunpack.c.h.b16 %v7518
    %v7829 = vunpack.c.l.b16 %v7519
    %v7830 = vunpack.c.h.b16 %v7519
    %v7831 = vunpack.c.l.b16 %v7520
    %v7832 = vunpack.c.h.b16 %v7520
    %v7833 = vunpack.c.l.b16 %v7521
    %v7834 = vunpack.c.h.b16 %v7521
    %v7835 = vunpack.c.l.b16 %v7522
    %v7836 = vunpack.c.h.b16 %v7522
    %v7837 = vunpack.c.l.b16 %v7523
    %v7838 = vunpack.c.h.b16 %v7523
    %v7839 = vunpack.c.l.b16 %v7524
    %v7840 = vunpack.c.h.b16 %v7524
    %v7841 = vunpack.c.l.b16 %v7525
    %v7842 = vunpack.c.h.b16 %v7525
    %v7843 = vunpack.c.l.b16 %v7526
    %v7844 = vunpack.c.h.b16 %v7526
    %v7845 = vunpack.c.l.b16 %v7527
    %v7846 = vunpack.c.h.b16 %v7527
    %v7847 = vunpack.c.l.b16 %v7528
    %v7848 = vunpack.c.h.b16 %v7528
    %v7849 = vunpack.c.l.b16 %v7529
    %v7850 = vunpack.c.h.b16 %v7529
    %v7851 = vunpack.c.l.b16 %v7530
    %v7852 = vunpack.c.h.b16 %v7530
    %v7853 = vunpack.c.l.b16 %v7531
    %v7854 = vunpack.c.h.b16 %v7531
    %v7855 = vunpack.c.l.b16 %v7532
    %v7856 = vunpack.c.h.b16 %v7532
    %v7857 = vunpack.c.l.b16 %v7533
    %v7858 = vunpack.c.h.b16 %v7533
    %v7859 = vunpack.c.l.b16 %v7534
    %v7860 = vunpack.c.h.b16 %v7534
    %v7861 = vunpack.c.l.b16 %v7535
    %v7862 = vunpack.c.h.b16 %v7535
    %v7863 = vunpack.c.l.b16 %v7536
    %v7864 = vunpack.c.h.b16 %v7536
    %v7865 = vunpack.c.l.b16 %v7537
    %v7866 = vunpack.c.h.b16 %v7537
    %v7867 = vunpack.c.l.b16 %v7538
    %v7868 = vunpack.c.h.b16 %v7538
    %v7869 = vunpack.c.l.b16 %v7539
    %v7870 = vunpack.c.h.b16 %v7539
    %v7871 = vunpack.c.l.b16 %v7540
    %v7872 = vunpack.c.h.b16 %v7540
    %v7873 = vunpack.c.l.b16 %v7541
    %v7874 = vunpack.c.h.b16 %v7541
    %v7875 = vunpack.c.l.b16 %v7542
    %v7876 = vunpack.c.h.b16 %v7542
    %v7877 = vunpack.c.l.b16 %v7543
    %v7878 = vunpack.c.h.b16 %v7543
    %v7879 = vunpack.c.l.b16 %v7544
    %v7880 = vunpack.c.h.b16 %v7544
    %v7881 = vunpack.c.l.b16 %v7545
    %v7882 = vunpack.c.h.b16 %v7545
    %v7883 = vunpack.c.l.b16 %v7546
    %v7884 = vunpack.c.h.b16 %v7546
    %v7885 = vunpack.c.l.b16 %v7547
    %v7886 = vunpack.c.h.b16 %v7547
    %v7887 = vunpack.c.l.b16 %v7548
    %v7888 = vunpack.c.h.b16 %v7548
    %v7889 = vunpack.c.l.b16 %v7549
    %v7890 = vunpack.c.h.b16 %v7549
    %v7891 = vunpack.c.l.b16 %v7550
    %v7892 = vunpack.c.h.b16 %v7550
    %v7893 = vunpack.c.l.b16 %v7551
    %v7894 = vunpack.c.h.b16 %v7551
    %v7895 = vunpack.c.l.b16 %v7552
    %v7896 = vunpack.c.h.b16 %v7552
    %v7897 = vunpack.c.l.b16 %v7553
    %v7898 = vunpack.c.h.b16 %v7553
    %v7899 = vunpack.c.l.b16 %v7554
    %v7900 = vunpack.c.h.b16 %v7554
    %v7901 = vunpack.c.l.b16 %v7555
    %v7902 = vunpack.c.h.b16 %v7555
    %v7903 = vunpack.c.l.b16 %v7556
    %v7904 = vunpack.c.h.b16 %v7556
    %v7905 = vunpack.c.l.b16 %v7557
    %v7906 = vunpack.c.h.b16 %v7557
    %v7907 = vunpack.c.l.b16 %v7558
    %v7908 = vunpack.c.h.b16 %v7558
    %v7909 = vunpack.c.l.b16 %v7559
    %v7910 = vunpack.c.h.b16 %v7559
    %v7911 = vunpack.c.l.b16 %v7560
    %v7912 = vunpack.c.h.b16 %v7560
    %v7913 = vunpack.c.l.b16 %v7561
    %v7914 = vunpack.c.h.b16 %v7561
    %v7915 = vunpack.c.l.b16 %v7562
    %v7916 = vunpack.c.h.b16 %v7562
    %v7917 = vunpack.c.l.b16 %v7563
    %v7918 = vunpack.c.h.b16 %v7563
    %v7919 = vunpack.c.l.b16 %v7564
    %v7920 = vunpack.c.h.b16 %v7564
    %v7921 = vunpack.c.l.b16 %v7565
    %v7922 = vunpack.c.h.b16 %v7565
    %v7923 = vunpack.c.l.b16 %v7566
    %v7924 = vunpack.c.h.b16 %v7566
    %v7925 = vunpack.c.l.b16 %v7567
    %v7926 = vunpack.c.h.b16 %v7567
    %v7927 = vunpack.c.l.b16 %v7568
    %v7928 = vunpack.c.h.b16 %v7568
    %v7929 = vunpack.c.l.b16 %v7569
    %v7930 = vunpack.c.h.b16 %v7569
    %v7931 = vunpack.c.l.b16 %v7570
    %v7932 = vunpack.c.h.b16 %v7570
    %v7933 = vunpack.c.l.b16 %v7571
    %v7934 = vunpack.c.h.b16 %v7571
    %v7935 = vunpack.c.l.b16 %v7572
    %v7936 = vunpack.c.h.b16 %v7572
    %v7937 = vunpack.c.l.b16 %v7573
    %v7938 = vunpack.c.h.b16 %v7573
    %v7939 = vunpack.c.l.b16 %v7574
    %v7940 = vunpack.c.h.b16 %v7574
    %v7941 = vunpack.c.l.b16 %v7575
    %v7942 = vunpack.c.h.b16 %v7575
    %v7943 = vunpack.c.l.b16 %v7576
    %v7944 = vunpack.c.h.b16 %v7576
    %v7945 = vunpack.c.l.b16 %v7577
    %v7946 = vunpack.c.h.b16 %v7577
    %v7947 = vunpack.c.l.b16 %v7578
    %v7948 = vunpack.c.h.b16 %v7578
    %v7949 = vunpack.c.l.b16 %v7579
    %v7950 = vunpack.c.h.b16 %v7579
    %v7951 = vunpack.c.l.b16 %v7580
    %v7952 = vunpack.c.h.b16 %v7580
    %v7953 = vunpack.c.l.b16 %v7581
    %v7954 = vunpack.c.h.b16 %v7581
    %v7955 = vunpack.c.l.b16 %v7582
    %v7956 = vunpack.c.h.b16 %v7582
    %v7957 = vunpack.c.l.b16 %v7583
    %v7958 = vunpack.c.h.b16 %v7583
    %v7959 = vunpack.c.l.b16 %v7584
    %v7960 = vunpack.c.h.b16 %v7584
    %v7961 = vunpack.c.l.b16 %v7585
    %v7962 = vunpack.c.h.b16 %v7585
    %v7963 = vunpack.c.l.b16 %v7586
    %v7964 = vunpack.c.h.b16 %v7586
    %v7965 = vunpack.c.l.b16 %v7587
    %v7966 = vunpack.c.h.b16 %v7587
    %v7967 = vunpack.c.l.b16 %v7588
    %v7968 = vunpack.c.h.b16 %v7588
    %v7969 = vunpack.c.l.b16 %v7589
    %v7970 = vunpack.c.h.b16 %v7589
    %v7971 = vunpack.c.l.b16 %v7590
    %v7972 = vunpack.c.h.b16 %v7590
    %v7973 = vunpack.c.l.b16 %v7591
    %v7974 = vunpack.c.h.b16 %v7591
    %v7975 = vunpack.c.l.b16 %v7592
    %v7976 = vunpack.c.h.b16 %v7592
    %v7977 = vpack.c.b16 %v7753, %v7721
    %v7978 = vpack.c.b16 %v7754, %v7722
    %v7979 = vpack.c.b16 %v7755, %v7723
    %v7980 = vpack.c.b16 %v7756, %v7724
    %v7981 = vpack.c.b16 %v7757, %v7725
    %v7982 = vpack.c.b16 %v7758, %v7726
    %v7983 = vpack.c.b16 %v7759, %v7727
    %v7984 = vpack.c.b16 %v7760, %v7728
    %v7985 = vpack.c.b16 %v7761, %v7729
    %v7986 = vpack.c.b16 %v7762, %v7730
    %v7987 = vpack.c.b16 %v7763, %v7731
    %v7988 = vpack.c.b16 %v7764, %v7732
    %v7989 = vpack.c.b16 %v7765, %v7733
    %v7990 = vpack.c.b16 %v7766, %v7734
    %v7991 = vpack.c.b16 %v7767, %v7735
    %v7992 = vpack.c.b16 %v7768, %v7736
    %v7993 = vpack.c.b16 %v7769, %v7737
    %v7994 = vpack.c.b16 %v7770, %v7738
    %v7995 = vpack.c.b16 %v7771, %v7739
    %v7996 = vpack.c.b16 %v7772, %v7740
    %v7997 = vpack.c.b16 %v7773, %v7741
    %v7998 = vpack.c.b16 %v7774, %v7742
    %v7999 = vpack.c.b16 %v7775, %v7743
    %v8000 = vpack.c.b16 %v7776, %v7744
    %v8001 = vpack.c.b16 %v7777, %v7745
    %v8002 = vpack.c.b16 %v7778, %v7746
    %v8003 = vpack.c.b16 %v7779, %v7747
    %v8004 = vpack.c.b16 %v7780, %v7748
    %v8005 = vpack.c.b16 %v7781, %v7749
    %v8006 = vpack.c.b16 %v7782, %v7750
    %v8007 = vpack.c.b16 %v7783, %v7751
    %v8008 = vpack.c.b16 %v7784, %v7752
    %v8009 = vpack.c.b16 %v7817, %v7785
    %v8010 = vpack.c.b16 %v7818, %v7786
    %v8011 = vpack.c.b16 %v7819, %v7787
    %v8012 = vpack.c.b16 %v7820, %v7788
    %v8013 = vpack.c.b16 %v7821, %v7789
    %v8014 = vpack.c.b16 %v7822, %v7790
    %v8015 = vpack.c.b16 %v7823, %v7791
    %v8016 = vpack.c.b16 %v7824, %v7792
    %v8017 = vpack.c.b16 %v7825, %v7793
    %v8018 = vpack.c.b16 %v7826, %v7794
    %v8019 = vpack.c.b16 %v7827, %v7795
    %v8020 = vpack.c.b16 %v7828, %v7796
    %v8021 = vpack.c.b16 %v7829, %v7797
    %v8022 = vpack.c.b16 %v7830, %v7798
    %v8023 = vpack.c.b16 %v7831, %v7799
    %v8024 = vpack.c.b16 %v7832, %v7800
    %v8025 = vpack.c.b16 %v7833, %v7801
    %v8026 = vpack.c.b16 %v7834, %v7802
    %v8027 = vpack.c.b16 %v7835, %v7803
    %v8028 = vpack.c.b16 %v7836, %v7804
    %v8029 = vpack.c.b16 %v7837, %v7805
    %v8030 = vpack.c.b16 %v7838, %v7806
    %v8031 = vpack.c.b16 %v7839, %v7807
    %v8032 = vpack.c.b16 %v7840, %v7808
    %v8033 = vpack.c.b16 %v7841, %v7809
    %v8034 = vpack.c.b16 %v7842, %v7810
    %v8035 = vpack.c.b16 %v7843, %v7811
    %v8036 = vpack.c.b16 %v7844, %v7812
    %v8037 = vpack.c.b16 %v7845, %v7813
    %v8038 = vpack.c.b16 %v7846, %v7814
    %v8039 = vpack.c.b16 %v7847, %v7815
    %v8040 = vpack.c.b16 %v7848, %v7816
    %v8041 = vpack.c.b16 %v7881, %v7849
    %v8042 = vpack.c.b16 %v7882, %v7850
    %v8043 = vpack.c.b16 %v7883, %v7851
    %v8044 = vpack.c.b16 %v7884, %v7852
    %v8045 = vpack.c.b16 %v7885, %v7853
    %v8046 = vpack.c.b16 %v7886, %v7854
    %v8047 = vpack.c.b16 %v7887, %v7855
    %v8048 = vpack.c.b16 %v7888, %v7856
    %v8049 = vpack.c.b16 %v7889, %v7857
    %v8050 = vpack.c.b16 %v7890, %v7858
    %v8051 = vpack.c.b16 %v7891, %v7859
    %v8052 = vpack.c.b16 %v7892, %v7860
    %v8053 = vpack.c.b16 %v7893, %v7861
    %v8054 = vpack.c.b16 %v7894, %v7862
    %v8055 = vpack.c.b16 %v7895, %v7863
    %v8056 = vpack.c.b16 %v7896, %v7864
    %v8057 = vpack.c.b16 %v7897, %v7865
    %v8058 = vpack.c.b16 %v7898, %v7866
    %v8059 = vpack.c.b16 %v7899, %v7867
    %v8060 = vpack.c.b16 %v7900, %v7868
    %v8061 = vpack.c.b16 %v7901, %v7869
    %v8062 = vpack.c.b16 %v7902, %v7870
    %v8063 = vpack.c.b16 %v7903, %v7871
    %v8064 = vpack.c.b16 %v7904, %v7872
    %v8065 = vpack.c.b16 %v7905, %v7873
    %v8066 = vpack.c.b16 %v7906, %v7874
    %v8067 = vpack.c.b16 %v7907, %v7875
    %v8068 = vpack.c.b16 %v7908, %v7876
    %v8069 = vpack.c.b16 %v7909, %v7877
    %v8070 = vpack.c.b16 %v7910, %v7878
    %v8071 = vpack.c.b16 %v7911, %v7879
    %v8072 = vpack.c.b16 %v7912, %v7880
    %v8073 = vpack.c.b16 %v7945, %v7913
    %v8074 = vpack.c.b16 %v7946, %v7914
    %v8075 = vpack.c.b16 %v7947, %v7915
    %v8076 = vpack.c.b16 %v7948, %v7916
    %v8077 = vpack.c.b16 %v7949, %v7917
    %v8078 = vpack.c.b16 %v7950, %v7918
    %v8079 = vpack.c.b16 %v7951, %v7919
    %v8080 = vpack.c.b16 %v7952, %v7920
    %v8081 = vpack.c.b16 %v7953, %v7921
    %v8082 = vpack.c.b16 %v7954, %v7922
    %v8083 = vpack.c.b16 %v7955, %v7923
    %v8084 = vpack.c.b16 %v7956, %v7924
    %v8085 = vpack.c.b16 %v7957, %v7925
    %v8086 = vpack.c.b16 %v7958, %v7926
    %v8087 = vpack.c.b16 %v7959, %v7927
    %v8088 = vpack.c.b16 %v7960, %v7928
    %v8089 = vpack.c.b16 %v7961, %v7929
    %v8090 = vpack.c.b16 %v7962, %v7930
    %v8091 = vpack.c.b16 %v7963, %v7931
    %v8092 = vpack.c.b16 %v7964, %v7932
    %v8093 = vpack.c.b16 %v7965, %v7933
    %v8094 = vpack.c.b16 %v7966, %v7934
    %v8095 = vpack.c.b16 %v7967, %v7935
    %v8096 = vpack.c.b16 %v7968, %v7936
    %v8097 = vpack.c.b16 %v7969, %v7937
    %v8098 = vpack.c.b16 %v7970, %v7938
    %v8099 = vpack.c.b16 %v7971, %v7939
    %v8100 = vpack.c.b16 %v7972, %v7940
    %v8101 = vpack.c.b16 %v7973, %v7941
    %v8102 = vpack.c.b16 %v7974, %v7942
    %v8103 = vpack.c.b16 %v7975, %v7943
    %v8104 = vpack.c.b16 %v7976, %v7944
    %vm8233 = vcmask 523264
    %v8235 = vsel %vm8233, %v7463, 0
    %v8238 = vsel %vm8233, %v7464, 0
    %8240 = vmatprep.subr.bf16.mxu0 %v7978
    %8241 = vmatpush1.bf16.msra.mxu0 %v7977
    %8242 = vmatprep.subr.bf16.mxu0 %v8010
    %8243 = vmatpush1.bf16.msra.mxu0 %v8009
    %8244 = vmatprep.subr.bf16.mxu0 %v8042
    %8245 = vmatpush1.bf16.msra.mxu0 %v8041
    %8246 = vmatprep.subr.bf16.mxu0 %v8074
    %8247 = vmatpush1.bf16.msra.mxu0 %v8073
    %8248 = vmatprep.subr.bf16.mxu0 0
    %8249 = vmatpush1.bf16.msra.mxu0 0
    %8250 = vmatprep.subr.bf16.mxu0 0
    %8251 = vmatpush1.bf16.msra.mxu0 0
    %8252 = vmatprep.subr.bf16.mxu0 0
    %8253 = vmatpush1.bf16.msra.mxu0 0
    %8254 = vmatprep.subr.bf16.mxu0 0
    %8255 = vmatpush1.bf16.msra.mxu0 0
    %8256 = vmatprep.subr.bf16.mxu0 0
    %8257 = vmatpush1.bf16.msra.mxu0 0
    %8258 = vmatprep.subr.bf16.mxu0 0
    %8259 = vmatpush1.bf16.msra.mxu0 0
    %8260 = vmatprep.subr.bf16.mxu0 0
    %8261 = vmatpush1.bf16.msra.mxu0 0
    %8262 = vmatprep.subr.bf16.mxu0 0
    %8263 = vmatpush1.bf16.msra.mxu0 0
    %8264 = vmatprep.subr.bf16.mxu0 0
    %8265 = vmatpush1.bf16.msra.mxu0 0
    %8266 = vmatprep.subr.bf16.mxu0 0
    %8267 = vmatpush1.bf16.msra.mxu0 0
    %8268 = vmatprep.subr.bf16.mxu0 0
    %8269 = vmatpush1.bf16.msra.mxu0 0
    %8270 = vmatprep.subr.bf16.mxu0 0
    %8271 = vmatpush1.bf16.msra.mxu0 0
    %8272 = vmatprep.mubr.bf16.mxu0 0
    %8273 = vmatmul.mubr.bf16.gmra.mrb[0].mxu0 %v8235
    %v8274 = vpop.f32.mrb[0].mxu0
    %v8275 = vadd.f32 0.0, %v8274
    %v8276 = vpop.f32.mrb[0].mxu0
    %v8277 = vadd.f32 0.0, %v8276
    %v8278 = vpop.f32.mrb[0].mxu0
    %v8279 = vadd.f32 0.0, %v8278
    %v8280 = vpop.f32.mrb[0].mxu0
    %v8281 = vadd.f32 0.0, %v8280
    %8282 = vmatprep.mubr.bf16.mxu0 0
    %8283 = vmatmul.mubr.bf16.gmra.mrb[0].mxu0 %v8238
    %v8284 = vpop.f32.mrb[0].mxu0
    %v8285 = vadd.f32 0.0, %v8284
    %v8286 = vpop.f32.mrb[0].mxu0
    %v8287 = vadd.f32 0.0, %v8286
    %v8288 = vpop.f32.mrb[0].mxu0
    %v8289 = vadd.f32 0.0, %v8288
    %v8290 = vpop.f32.mrb[0].mxu0
    %v8291 = vadd.f32 0.0, %v8290
    %8292 = vdwg.mxu0
    %8293 = vmatprep.subr.bf16.mxu0 %v7980
    %8294 = vmatpush1.bf16.msra.mxu0 %v7979
    %8295 = vmatprep.subr.bf16.mxu0 %v8012
    %8296 = vmatpush1.bf16.msra.mxu0 %v8011
    %8297 = vmatprep.subr.bf16.mxu0 %v8044
    %8298 = vmatpush1.bf16.msra.mxu0 %v8043
    %8299 = vmatprep.subr.bf16.mxu0 %v8076
    %8300 = vmatpush1.bf16.msra.mxu0 %v8075
    %8301 = vmatprep.subr.bf16.mxu0 0
    %8302 = vmatpush1.bf16.msra.mxu0 0
    %8303 = vmatprep.subr.bf16.mxu0 0
    %8304 = vmatpush1.bf16.msra.mxu0 0
    %8305 = vmatprep.subr.bf16.mxu0 0
    %8306 = vmatpush1.bf16.msra.mxu0 0
    %8307 = vmatprep.subr.bf16.mxu0 0
    %8308 = vmatpush1.bf16.msra.mxu0 0
    %8309 = vmatprep.subr.bf16.mxu0 0
    %8310 = vmatpush1.bf16.msra.mxu0 0
    %8311 = vmatprep.subr.bf16.mxu0 0
    %8312 = vmatpush1.bf16.msra.mxu0 0
    %8313 = vmatprep.subr.bf16.mxu0 0
    %8314 = vmatpush1.bf16.msra.mxu0 0
    %8315 = vmatprep.subr.bf16.mxu0 0
    %8316 = vmatpush1.bf16.msra.mxu0 0
    %8317 = vmatprep.subr.bf16.mxu0 0
    %8318 = vmatpush1.bf16.msra.mxu0 0
    %8319 = vmatprep.subr.bf16.mxu0 0
    %8320 = vmatpush1.bf16.msra.mxu0 0
    %8321 = vmatprep.subr.bf16.mxu0 0
    %8322 = vmatpush1.bf16.msra.mxu0 0
    %8323 = vmatprep.subr.bf16.mxu0 0
    %8324 = vmatpush1.bf16.msra.mxu0 0
    %8325 = vmatprep.mubr.bf16.mxu0 0
    %8326 = vmatmul.mubr.bf16.gmra.mrb[0].mxu0 %v8235
    %v8327 = vpop.f32.mrb[0].mxu0
    %v8328 = vadd.f32 0.0, %v8327
    %v8329 = vpop.f32.mrb[0].mxu0
    %v8330 = vadd.f32 0.0, %v8329
    %v8331 = vpop.f32.mrb[0].mxu0
    %v8332 = vadd.f32 0.0, %v8331
    %v8333 = vpop.f32.mrb[0].mxu0
    %v8334 = vadd.f32 0.0, %v8333
    %8335 = vmatprep.mubr.bf16.mxu0 0
    %8336 = vmatmul.mubr.bf16.gmra.mrb[0].mxu0 %v8238
    %v8337 = vpop.f32.mrb[0].mxu0
    %v8338 = vadd.f32 0.0, %v8337
    %v8339 = vpop.f32.mrb[0].mxu0
    %v8340 = vadd.f32 0.0, %v8339
    %v8341 = vpop.f32.mrb[0].mxu0
    %v8342 = vadd.f32 0.0, %v8341
    %v8343 = vpop.f32.mrb[0].mxu0
    %v8344 = vadd.f32 0.0, %v8343
    %8345 = vdwg.mxu0
    %8346 = vmatprep.subr.bf16.mxu0 %v7982
    %8347 = vmatpush1.bf16.msra.mxu0 %v7981
    %8348 = vmatprep.subr.bf16.mxu0 %v8014
    %8349 = vmatpush1.bf16.msra.mxu0 %v8013
    %8350 = vmatprep.subr.bf16.mxu0 %v8046
    %8351 = vmatpush1.bf16.msra.mxu0 %v8045
    %8352 = vmatprep.subr.bf16.mxu0 %v8078
    %8353 = vmatpush1.bf16.msra.mxu0 %v8077
    %8354 = vmatprep.subr.bf16.mxu0 0
    %8355 = vmatpush1.bf16.msra.mxu0 0
    %8356 = vmatprep.subr.bf16.mxu0 0
    %8357 = vmatpush1.bf16.msra.mxu0 0
    %8358 = vmatprep.subr.bf16.mxu0 0
    %8359 = vmatpush1.bf16.msra.mxu0 0
    %8360 = vmatprep.subr.bf16.mxu0 0
    %8361 = vmatpush1.bf16.msra.mxu0 0
    %8362 = vmatprep.subr.bf16.mxu0 0
    %8363 = vmatpush1.bf16.msra.mxu0 0
    %8364 = vmatprep.subr.bf16.mxu0 0
    %8365 = vmatpush1.bf16.msra.mxu0 0
    %8366 = vmatprep.subr.bf16.mxu0 0
    %8367 = vmatpush1.bf16.msra.mxu0 0
    %8368 = vmatprep.subr.bf16.mxu0 0
    %8369 = vmatpush1.bf16.msra.mxu0 0
    %8370 = vmatprep.subr.bf16.mxu0 0
    %8371 = vmatpush1.bf16.msra.mxu0 0
    %8372 = vmatprep.subr.bf16.mxu0 0
    %8373 = vmatpush1.bf16.msra.mxu0 0
    %8374 = vmatprep.subr.bf16.mxu0 0
    %8375 = vmatpush1.bf16.msra.mxu0 0
    %8376 = vmatprep.subr.bf16.mxu0 0
    %8377 = vmatpush1.bf16.msra.mxu0 0
    %8378 = vmatprep.mubr.bf16.mxu0 0
    %8379 = vmatmul.mubr.bf16.gmra.mrb[0].mxu0 %v8235
    %v8380 = vpop.f32.mrb[0].mxu0
    %v8381 = vadd.f32 0.0, %v8380
    %v8382 = vpop.f32.mrb[0].mxu0
    %v8383 = vadd.f32 0.0, %v8382
    %v8384 = vpop.f32.mrb[0].mxu0
    %v8385 = vadd.f32 0.0, %v8384
    %v8386 = vpop.f32.mrb[0].mxu0
    %v8387 = vadd.f32 0.0, %v8386
    %8388 = vmatprep.mubr.bf16.mxu0 0
    %8389 = vmatmul.mubr.bf16.gmra.mrb[0].mxu0 %v8238
    %v8390 = vpop.f32.mrb[0].mxu0
    %v8391 = vadd.f32 0.0, %v8390
    %v8392 = vpop.f32.mrb[0].mxu0
    %v8393 = vadd.f32 0.0, %v8392
    %v8394 = vpop.f32.mrb[0].mxu0
    %v8395 = vadd.f32 0.0, %v8394
    %v8396 = vpop.f32.mrb[0].mxu0
    %v8397 = vadd.f32 0.0, %v8396
    %8398 = vdwg.mxu0
    %8399 = vmatprep.subr.bf16.mxu0 %v7984
    %8400 = vmatpush1.bf16.msra.mxu0 %v7983
    %8401 = vmatprep.subr.bf16.mxu0 %v8016
    %8402 = vmatpush1.bf16.msra.mxu0 %v8015
    %8403 = vmatprep.subr.bf16.mxu0 %v8048
    %8404 = vmatpush1.bf16.msra.mxu0 %v8047
    %8405 = vmatprep.subr.bf16.mxu0 %v8080
    %8406 = vmatpush1.bf16.msra.mxu0 %v8079
    %8407 = vmatprep.subr.bf16.mxu0 0
    %8408 = vmatpush1.bf16.msra.mxu0 0
    %8409 = vmatprep.subr.bf16.mxu0 0
    %8410 = vmatpush1.bf16.msra.mxu0 0
    %8411 = vmatprep.subr.bf16.mxu0 0
    %8412 = vmatpush1.bf16.msra.mxu0 0
    %8413 = vmatprep.subr.bf16.mxu0 0
    %8414 = vmatpush1.bf16.msra.mxu0 0
    %8415 = vmatprep.subr.bf16.mxu0 0
    %8416 = vmatpush1.bf16.msra.mxu0 0
    %8417 = vmatprep.subr.bf16.mxu0 0
    %8418 = vmatpush1.bf16.msra.mxu0 0
    %8419 = vmatprep.subr.bf16.mxu0 0
    %8420 = vmatpush1.bf16.msra.mxu0 0
    %8421 = vmatprep.subr.bf16.mxu0 0
    %8422 = vmatpush1.bf16.msra.mxu0 0
    %8423 = vmatprep.subr.bf16.mxu0 0
    %8424 = vmatpush1.bf16.msra.mxu0 0
    %8425 = vmatprep.subr.bf16.mxu0 0
    %8426 = vmatpush1.bf16.msra.mxu0 0
    %8427 = vmatprep.subr.bf16.mxu0 0
    %8428 = vmatpush1.bf16.msra.mxu0 0
    %8429 = vmatprep.subr.bf16.mxu0 0
    %8430 = vmatpush1.bf16.msra.mxu0 0
    %8431 = vmatprep.mubr.bf16.mxu0 0
    %8432 = vmatmul.mubr.bf16.gmra.mrb[0].mxu0 %v8235
    %v8433 = vpop.f32.mrb[0].mxu0
    %v8434 = vadd.f32 0.0, %v8433
    %v8435 = vpop.f32.mrb[0].mxu0
    %v8436 = vadd.f32 0.0, %v8435
    %v8437 = vpop.f32.mrb[0].mxu0
    %v8438 = vadd.f32 0.0, %v8437
    %v8439 = vpop.f32.mrb[0].mxu0
    %v8440 = vadd.f32 0.0, %v8439
    %8441 = vmatprep.mubr.bf16.mxu0 0
    %8442 = vmatmul.mubr.bf16.gmra.mrb[0].mxu0 %v8238
    %v8443 = vpop.f32.mrb[0].mxu0
    %v8444 = vadd.f32 0.0, %v8443
    %v8445 = vpop.f32.mrb[0].mxu0
    %v8446 = vadd.f32 0.0, %v8445
    %v8447 = vpop.f32.mrb[0].mxu0
    %v8448 = vadd.f32 0.0, %v8447
    %v8449 = vpop.f32.mrb[0].mxu0
    %v8450 = vadd.f32 0.0, %v8449
    %8451 = vdwg.mxu0
    %8452 = vmatprep.subr.bf16.mxu0 %v7986
    %8453 = vmatpush1.bf16.msra.mxu0 %v7985
    %8454 = vmatprep.subr.bf16.mxu0 %v8018
    %8455 = vmatpush1.bf16.msra.mxu0 %v8017
    %8456 = vmatprep.subr.bf16.mxu0 %v8050
    %8457 = vmatpush1.bf16.msra.mxu0 %v8049
    %8458 = vmatprep.subr.bf16.mxu0 %v8082
    %8459 = vmatpush1.bf16.msra.mxu0 %v8081
    %8460 = vmatprep.subr.bf16.mxu0 0
    %8461 = vmatpush1.bf16.msra.mxu0 0
    %8462 = vmatprep.subr.bf16.mxu0 0
    %8463 = vmatpush1.bf16.msra.mxu0 0
    %8464 = vmatprep.subr.bf16.mxu0 0
    %8465 = vmatpush1.bf16.msra.mxu0 0
    %8466 = vmatprep.subr.bf16.mxu0 0
    %8467 = vmatpush1.bf16.msra.mxu0 0
    %8468 = vmatprep.subr.bf16.mxu0 0
    %8469 = vmatpush1.bf16.msra.mxu0 0
    %8470 = vmatprep.subr.bf16.mxu0 0
    %8471 = vmatpush1.bf16.msra.mxu0 0
    %8472 = vmatprep.subr.bf16.mxu0 0
    %8473 = vmatpush1.bf16.msra.mxu0 0
    %8474 = vmatprep.subr.bf16.mxu0 0
    %8475 = vmatpush1.bf16.msra.mxu0 0
    %8476 = vmatprep.subr.bf16.mxu0 0
    %8477 = vmatpush1.bf16.msra.mxu0 0
    %8478 = vmatprep.subr.bf16.mxu0 0
    %8479 = vmatpush1.bf16.msra.mxu0 0
    %8480 = vmatprep.subr.bf16.mxu0 0
    %8481 = vmatpush1.bf16.msra.mxu0 0
    %8482 = vmatprep.subr.bf16.mxu0 0
    %8483 = vmatpush1.bf16.msra.mxu0 0
    %8484 = vmatprep.mubr.bf16.mxu0 0
    %8485 = vmatmul.mubr.bf16.gmra.mrb[0].mxu0 %v8235
    %v8486 = vpop.f32.mrb[0].mxu0
    %v8487 = vadd.f32 0.0, %v8486
    %v8488 = vpop.f32.mrb[0].mxu0
    %v8489 = vadd.f32 0.0, %v8488
    %v8490 = vpop.f32.mrb[0].mxu0
    %v8491 = vadd.f32 0.0, %v8490
    %v8492 = vpop.f32.mrb[0].mxu0
    %v8493 = vadd.f32 0.0, %v8492
    %8494 = vmatprep.mubr.bf16.mxu0 0
    %8495 = vmatmul.mubr.bf16.gmra.mrb[0].mxu0 %v8238
    %v8496 = vpop.f32.mrb[0].mxu0
    %v8497 = vadd.f32 0.0, %v8496
    %v8498 = vpop.f32.mrb[0].mxu0
    %v8499 = vadd.f32 0.0, %v8498
    %v8500 = vpop.f32.mrb[0].mxu0
    %v8501 = vadd.f32 0.0, %v8500
    %v8502 = vpop.f32.mrb[0].mxu0
    %v8503 = vadd.f32 0.0, %v8502
    %8504 = vdwg.mxu0
    %8505 = vmatprep.subr.bf16.mxu0 %v7988
    %8506 = vmatpush1.bf16.msra.mxu0 %v7987
    %8507 = vmatprep.subr.bf16.mxu0 %v8020
    %8508 = vmatpush1.bf16.msra.mxu0 %v8019
    %8509 = vmatprep.subr.bf16.mxu0 %v8052
    %8510 = vmatpush1.bf16.msra.mxu0 %v8051
    %8511 = vmatprep.subr.bf16.mxu0 %v8084
    %8512 = vmatpush1.bf16.msra.mxu0 %v8083
    %8513 = vmatprep.subr.bf16.mxu0 0
    %8514 = vmatpush1.bf16.msra.mxu0 0
    %8515 = vmatprep.subr.bf16.mxu0 0
    %8516 = vmatpush1.bf16.msra.mxu0 0
    %8517 = vmatprep.subr.bf16.mxu0 0
    %8518 = vmatpush1.bf16.msra.mxu0 0
    %8519 = vmatprep.subr.bf16.mxu0 0
    %8520 = vmatpush1.bf16.msra.mxu0 0
    %8521 = vmatprep.subr.bf16.mxu0 0
    %8522 = vmatpush1.bf16.msra.mxu0 0
    %8523 = vmatprep.subr.bf16.mxu0 0
    %8524 = vmatpush1.bf16.msra.mxu0 0
    %8525 = vmatprep.subr.bf16.mxu0 0
    %8526 = vmatpush1.bf16.msra.mxu0 0
    %8527 = vmatprep.subr.bf16.mxu0 0
    %8528 = vmatpush1.bf16.msra.mxu0 0
    %8529 = vmatprep.subr.bf16.mxu0 0
    %8530 = vmatpush1.bf16.msra.mxu0 0
    %8531 = vmatprep.subr.bf16.mxu0 0
    %8532 = vmatpush1.bf16.msra.mxu0 0
    %8533 = vmatprep.subr.bf16.mxu0 0
    %8534 = vmatpush1.bf16.msra.mxu0 0
    %8535 = vmatprep.subr.bf16.mxu0 0
    %8536 = vmatpush1.bf16.msra.mxu0 0
    %8537 = vmatprep.mubr.bf16.mxu0 0
    %8538 = vmatmul.mubr.bf16.gmra.mrb[0].mxu0 %v8235
    %v8539 = vpop.f32.mrb[0].mxu0
    %v8540 = vadd.f32 0.0, %v8539
    %v8541 = vpop.f32.mrb[0].mxu0
    %v8542 = vadd.f32 0.0, %v8541
    %v8543 = vpop.f32.mrb[0].mxu0
    %v8544 = vadd.f32 0.0, %v8543
    %v8545 = vpop.f32.mrb[0].mxu0
    %v8546 = vadd.f32 0.0, %v8545
    %8547 = vmatprep.mubr.bf16.mxu0 0
    %8548 = vmatmul.mubr.bf16.gmra.mrb[0].mxu0 %v8238
    %v8549 = vpop.f32.mrb[0].mxu0
    %v8550 = vadd.f32 0.0, %v8549
    %v8551 = vpop.f32.mrb[0].mxu0
    %v8552 = vadd.f32 0.0, %v8551
    %v8553 = vpop.f32.mrb[0].mxu0
    %v8554 = vadd.f32 0.0, %v8553
    %v8555 = vpop.f32.mrb[0].mxu0
    %v8556 = vadd.f32 0.0, %v8555
    %8557 = vdwg.mxu0
    %8558 = vmatprep.subr.bf16.mxu0 %v7990
    %8559 = vmatpush1.bf16.msra.mxu0 %v7989
    %8560 = vmatprep.subr.bf16.mxu0 %v8022
    %8561 = vmatpush1.bf16.msra.mxu0 %v8021
    %8562 = vmatprep.subr.bf16.mxu0 %v8054
    %8563 = vmatpush1.bf16.msra.mxu0 %v8053
    %8564 = vmatprep.subr.bf16.mxu0 %v8086
    %8565 = vmatpush1.bf16.msra.mxu0 %v8085
    %8566 = vmatprep.subr.bf16.mxu0 0
    %8567 = vmatpush1.bf16.msra.mxu0 0
    %8568 = vmatprep.subr.bf16.mxu0 0
    %8569 = vmatpush1.bf16.msra.mxu0 0
    %8570 = vmatprep.subr.bf16.mxu0 0
    %8571 = vmatpush1.bf16.msra.mxu0 0
    %8572 = vmatprep.subr.bf16.mxu0 0
    %8573 = vmatpush1.bf16.msra.mxu0 0
    %8574 = vmatprep.subr.bf16.mxu0 0
    %8575 = vmatpush1.bf16.msra.mxu0 0
    %8576 = vmatprep.subr.bf16.mxu0 0
    %8577 = vmatpush1.bf16.msra.mxu0 0
    %8578 = vmatprep.subr.bf16.mxu0 0
    %8579 = vmatpush1.bf16.msra.mxu0 0
    %8580 = vmatprep.subr.bf16.mxu0 0
    %8581 = vmatpush1.bf16.msra.mxu0 0
    %8582 = vmatprep.subr.bf16.mxu0 0
    %8583 = vmatpush1.bf16.msra.mxu0 0
    %8584 = vmatprep.subr.bf16.mxu0 0
    %8585 = vmatpush1.bf16.msra.mxu0 0
    %8586 = vmatprep.subr.bf16.mxu0 0
    %8587 = vmatpush1.bf16.msra.mxu0 0
    %8588 = vmatprep.subr.bf16.mxu0 0
    %8589 = vmatpush1.bf16.msra.mxu0 0
    %8590 = vmatprep.mubr.bf16.mxu0 0
    %8591 = vmatmul.mubr.bf16.gmra.mrb[0].mxu0 %v8235
    %v8592 = vpop.f32.mrb[0].mxu0
    %v8593 = vadd.f32 0.0, %v8592
    %v8594 = vpop.f32.mrb[0].mxu0
    %v8595 = vadd.f32 0.0, %v8594
    %v8596 = vpop.f32.mrb[0].mxu0
    %v8597 = vadd.f32 0.0, %v8596
    %v8598 = vpop.f32.mrb[0].mxu0
    %v8599 = vadd.f32 0.0, %v8598
    %8600 = vmatprep.mubr.bf16.mxu0 0
    %8601 = vmatmul.mubr.bf16.gmra.mrb[0].mxu0 %v8238
    %v8602 = vpop.f32.mrb[0].mxu0
    %v8603 = vadd.f32 0.0, %v8602
    %v8604 = vpop.f32.mrb[0].mxu0
    %v8605 = vadd.f32 0.0, %v8604
    %v8606 = vpop.f32.mrb[0].mxu0
    %v8607 = vadd.f32 0.0, %v8606
    %v8608 = vpop.f32.mrb[0].mxu0
    %v8609 = vadd.f32 0.0, %v8608
    %8610 = vdwg.mxu0
    %8611 = vmatprep.subr.bf16.mxu0 %v7992
    %8612 = vmatpush1.bf16.msra.mxu0 %v7991
    %8613 = vmatprep.subr.bf16.mxu0 %v8024
    %8614 = vmatpush1.bf16.msra.mxu0 %v8023
    %8615 = vmatprep.subr.bf16.mxu0 %v8056
    %8616 = vmatpush1.bf16.msra.mxu0 %v8055
    %8617 = vmatprep.subr.bf16.mxu0 %v8088
    %8618 = vmatpush1.bf16.msra.mxu0 %v8087
    %8619 = vmatprep.subr.bf16.mxu0 0
    %8620 = vmatpush1.bf16.msra.mxu0 0
    %8621 = vmatprep.subr.bf16.mxu0 0
    %8622 = vmatpush1.bf16.msra.mxu0 0
    %8623 = vmatprep.subr.bf16.mxu0 0
    %8624 = vmatpush1.bf16.msra.mxu0 0
    %8625 = vmatprep.subr.bf16.mxu0 0
    %8626 = vmatpush1.bf16.msra.mxu0 0
    %8627 = vmatprep.subr.bf16.mxu0 0
    %8628 = vmatpush1.bf16.msra.mxu0 0
    %8629 = vmatprep.subr.bf16.mxu0 0
    %8630 = vmatpush1.bf16.msra.mxu0 0
    %8631 = vmatprep.subr.bf16.mxu0 0
    %8632 = vmatpush1.bf16.msra.mxu0 0
    %8633 = vmatprep.subr.bf16.mxu0 0
    %8634 = vmatpush1.bf16.msra.mxu0 0
    %8635 = vmatprep.subr.bf16.mxu0 0
    %8636 = vmatpush1.bf16.msra.mxu0 0
    %8637 = vmatprep.subr.bf16.mxu0 0
    %8638 = vmatpush1.bf16.msra.mxu0 0
    %8639 = vmatprep.subr.bf16.mxu0 0
    %8640 = vmatpush1.bf16.msra.mxu0 0
    %8641 = vmatprep.subr.bf16.mxu0 0
    %8642 = vmatpush1.bf16.msra.mxu0 0
    %8643 = vmatprep.mubr.bf16.mxu0 0
    %8644 = vmatmul.mubr.bf16.gmra.mrb[0].mxu0 %v8235
    %v8645 = vpop.f32.mrb[0].mxu0
    %v8646 = vadd.f32 0.0, %v8645
    %v8647 = vpop.f32.mrb[0].mxu0
    %v8648 = vadd.f32 0.0, %v8647
    %v8649 = vpop.f32.mrb[0].mxu0
    %v8650 = vadd.f32 0.0, %v8649
    %v8651 = vpop.f32.mrb[0].mxu0
    %v8652 = vadd.f32 0.0, %v8651
    %8653 = vmatprep.mubr.bf16.mxu0 0
    %8654 = vmatmul.mubr.bf16.gmra.mrb[0].mxu0 %v8238
    %v8655 = vpop.f32.mrb[0].mxu0
    %v8656 = vadd.f32 0.0, %v8655
    %v8657 = vpop.f32.mrb[0].mxu0
    %v8658 = vadd.f32 0.0, %v8657
    %v8659 = vpop.f32.mrb[0].mxu0
    %v8660 = vadd.f32 0.0, %v8659
    %v8661 = vpop.f32.mrb[0].mxu0
    %v8662 = vadd.f32 0.0, %v8661
    %8663 = vdwg.mxu0
    %8664 = vmatprep.subr.bf16.mxu0 %v7994
    %8665 = vmatpush1.bf16.msra.mxu0 %v7993
    %8666 = vmatprep.subr.bf16.mxu0 %v8026
    %8667 = vmatpush1.bf16.msra.mxu0 %v8025
    %8668 = vmatprep.subr.bf16.mxu0 %v8058
    %8669 = vmatpush1.bf16.msra.mxu0 %v8057
    %8670 = vmatprep.subr.bf16.mxu0 %v8090
    %8671 = vmatpush1.bf16.msra.mxu0 %v8089
    %8672 = vmatprep.subr.bf16.mxu0 0
    %8673 = vmatpush1.bf16.msra.mxu0 0
    %8674 = vmatprep.subr.bf16.mxu0 0
    %8675 = vmatpush1.bf16.msra.mxu0 0
    %8676 = vmatprep.subr.bf16.mxu0 0
    %8677 = vmatpush1.bf16.msra.mxu0 0
    %8678 = vmatprep.subr.bf16.mxu0 0
    %8679 = vmatpush1.bf16.msra.mxu0 0
    %8680 = vmatprep.subr.bf16.mxu0 0
    %8681 = vmatpush1.bf16.msra.mxu0 0
    %8682 = vmatprep.subr.bf16.mxu0 0
    %8683 = vmatpush1.bf16.msra.mxu0 0
    %8684 = vmatprep.subr.bf16.mxu0 0
    %8685 = vmatpush1.bf16.msra.mxu0 0
    %8686 = vmatprep.subr.bf16.mxu0 0
    %8687 = vmatpush1.bf16.msra.mxu0 0
    %8688 = vmatprep.subr.bf16.mxu0 0
    %8689 = vmatpush1.bf16.msra.mxu0 0
    %8690 = vmatprep.subr.bf16.mxu0 0
    %8691 = vmatpush1.bf16.msra.mxu0 0
    %8692 = vmatprep.subr.bf16.mxu0 0
    %8693 = vmatpush1.bf16.msra.mxu0 0
    %8694 = vmatprep.subr.bf16.mxu0 0
    %8695 = vmatpush1.bf16.msra.mxu0 0
    %8696 = vmatprep.mubr.bf16.mxu0 0
    %8697 = vmatmul.mubr.bf16.gmra.mrb[0].mxu0 %v8235
    %v8698 = vpop.f32.mrb[0].mxu0
    %v8699 = vadd.f32 0.0, %v8698
    %v8700 = vpop.f32.mrb[0].mxu0
    %v8701 = vadd.f32 0.0, %v8700
    %v8702 = vpop.f32.mrb[0].mxu0
    %v8703 = vadd.f32 0.0, %v8702
    %v8704 = vpop.f32.mrb[0].mxu0
    %v8705 = vadd.f32 0.0, %v8704
    %8706 = vmatprep.mubr.bf16.mxu0 0
    %8707 = vmatmul.mubr.bf16.gmra.mrb[0].mxu0 %v8238
    %v8708 = vpop.f32.mrb[0].mxu0
    %v8709 = vadd.f32 0.0, %v8708
    %v8710 = vpop.f32.mrb[0].mxu0
    %v8711 = vadd.f32 0.0, %v8710
    %v8712 = vpop.f32.mrb[0].mxu0
    %v8713 = vadd.f32 0.0, %v8712
    %v8714 = vpop.f32.mrb[0].mxu0
    %v8715 = vadd.f32 0.0, %v8714
    %8716 = vdwg.mxu0
    %8717 = vmatprep.subr.bf16.mxu0 %v7996
    %8718 = vmatpush1.bf16.msra.mxu0 %v7995
    %8719 = vmatprep.subr.bf16.mxu0 %v8028
    %8720 = vmatpush1.bf16.msra.mxu0 %v8027
    %8721 = vmatprep.subr.bf16.mxu0 %v8060
    %8722 = vmatpush1.bf16.msra.mxu0 %v8059
    %8723 = vmatprep.subr.bf16.mxu0 %v8092
    %8724 = vmatpush1.bf16.msra.mxu0 %v8091
    %8725 = vmatprep.subr.bf16.mxu0 0
    %8726 = vmatpush1.bf16.msra.mxu0 0
    %8727 = vmatprep.subr.bf16.mxu0 0
    %8728 = vmatpush1.bf16.msra.mxu0 0
    %8729 = vmatprep.subr.bf16.mxu0 0
    %8730 = vmatpush1.bf16.msra.mxu0 0
    %8731 = vmatprep.subr.bf16.mxu0 0
    %8732 = vmatpush1.bf16.msra.mxu0 0
    %8733 = vmatprep.subr.bf16.mxu0 0
    %8734 = vmatpush1.bf16.msra.mxu0 0
    %8735 = vmatprep.subr.bf16.mxu0 0
    %8736 = vmatpush1.bf16.msra.mxu0 0
    %8737 = vmatprep.subr.bf16.mxu0 0
    %8738 = vmatpush1.bf16.msra.mxu0 0
    %8739 = vmatprep.subr.bf16.mxu0 0
    %8740 = vmatpush1.bf16.msra.mxu0 0
    %8741 = vmatprep.subr.bf16.mxu0 0
    %8742 = vmatpush1.bf16.msra.mxu0 0
    %8743 = vmatprep.subr.bf16.mxu0 0
    %8744 = vmatpush1.bf16.msra.mxu0 0
    %8745 = vmatprep.subr.bf16.mxu0 0
    %8746 = vmatpush1.bf16.msra.mxu0 0
    %8747 = vmatprep.subr.bf16.mxu0 0
    %8748 = vmatpush1.bf16.msra.mxu0 0
    %8749 = vmatprep.mubr.bf16.mxu0 0
    %8750 = vmatmul.mubr.bf16.gmra.mrb[0].mxu0 %v8235
    %v8751 = vpop.f32.mrb[0].mxu0
    %v8752 = vadd.f32 0.0, %v8751
    %v8753 = vpop.f32.mrb[0].mxu0
    %v8754 = vadd.f32 0.0, %v8753
    %v8755 = vpop.f32.mrb[0].mxu0
    %v8756 = vadd.f32 0.0, %v8755
    %v8757 = vpop.f32.mrb[0].mxu0
    %v8758 = vadd.f32 0.0, %v8757
    %8759 = vmatprep.mubr.bf16.mxu0 0
    %8760 = vmatmul.mubr.bf16.gmra.mrb[0].mxu0 %v8238
    %v8761 = vpop.f32.mrb[0].mxu0
    %v8762 = vadd.f32 0.0, %v8761
    %v8763 = vpop.f32.mrb[0].mxu0
    %v8764 = vadd.f32 0.0, %v8763
    %v8765 = vpop.f32.mrb[0].mxu0
    %v8766 = vadd.f32 0.0, %v8765
    %v8767 = vpop.f32.mrb[0].mxu0
    %v8768 = vadd.f32 0.0, %v8767
    %8769 = vdwg.mxu0
    %8770 = vmatprep.subr.bf16.mxu0 %v7998
    %8771 = vmatpush1.bf16.msra.mxu0 %v7997
    %8772 = vmatprep.subr.bf16.mxu0 %v8030
    %8773 = vmatpush1.bf16.msra.mxu0 %v8029
    %8774 = vmatprep.subr.bf16.mxu0 %v8062
    %8775 = vmatpush1.bf16.msra.mxu0 %v8061
    %8776 = vmatprep.subr.bf16.mxu0 %v8094
    %8777 = vmatpush1.bf16.msra.mxu0 %v8093
    %8778 = vmatprep.subr.bf16.mxu0 0
    %8779 = vmatpush1.bf16.msra.mxu0 0
    %8780 = vmatprep.subr.bf16.mxu0 0
    %8781 = vmatpush1.bf16.msra.mxu0 0
    %8782 = vmatprep.subr.bf16.mxu0 0
    %8783 = vmatpush1.bf16.msra.mxu0 0
    %8784 = vmatprep.subr.bf16.mxu0 0
    %8785 = vmatpush1.bf16.msra.mxu0 0
    %8786 = vmatprep.subr.bf16.mxu0 0
    %8787 = vmatpush1.bf16.msra.mxu0 0
    %8788 = vmatprep.subr.bf16.mxu0 0
    %8789 = vmatpush1.bf16.msra.mxu0 0
    %8790 = vmatprep.subr.bf16.mxu0 0
    %8791 = vmatpush1.bf16.msra.mxu0 0
    %8792 = vmatprep.subr.bf16.mxu0 0
    %8793 = vmatpush1.bf16.msra.mxu0 0
    %8794 = vmatprep.subr.bf16.mxu0 0
    %8795 = vmatpush1.bf16.msra.mxu0 0
    %8796 = vmatprep.subr.bf16.mxu0 0
    %8797 = vmatpush1.bf16.msra.mxu0 0
    %8798 = vmatprep.subr.bf16.mxu0 0
    %8799 = vmatpush1.bf16.msra.mxu0 0
    %8800 = vmatprep.subr.bf16.mxu0 0
    %8801 = vmatpush1.bf16.msra.mxu0 0
    %8802 = vmatprep.mubr.bf16.mxu0 0
    %8803 = vmatmul.mubr.bf16.gmra.mrb[0].mxu0 %v8235
    %v8804 = vpop.f32.mrb[0].mxu0
    %v8805 = vadd.f32 0.0, %v8804
    %v8806 = vpop.f32.mrb[0].mxu0
    %v8807 = vadd.f32 0.0, %v8806
    %v8808 = vpop.f32.mrb[0].mxu0
    %v8809 = vadd.f32 0.0, %v8808
    %v8810 = vpop.f32.mrb[0].mxu0
    %v8811 = vadd.f32 0.0, %v8810
    %8812 = vmatprep.mubr.bf16.mxu0 0
    %8813 = vmatmul.mubr.bf16.gmra.mrb[0].mxu0 %v8238
    %v8814 = vpop.f32.mrb[0].mxu0
    %v8815 = vadd.f32 0.0, %v8814
    %v8816 = vpop.f32.mrb[0].mxu0
    %v8817 = vadd.f32 0.0, %v8816
    %v8818 = vpop.f32.mrb[0].mxu0
    %v8819 = vadd.f32 0.0, %v8818
    %v8820 = vpop.f32.mrb[0].mxu0
    %v8821 = vadd.f32 0.0, %v8820
    %8822 = vdwg.mxu0
    %8823 = vmatprep.subr.bf16.mxu0 %v8000
    %8824 = vmatpush1.bf16.msra.mxu0 %v7999
    %8825 = vmatprep.subr.bf16.mxu0 %v8032
    %8826 = vmatpush1.bf16.msra.mxu0 %v8031
    %8827 = vmatprep.subr.bf16.mxu0 %v8064
    %8828 = vmatpush1.bf16.msra.mxu0 %v8063
    %8829 = vmatprep.subr.bf16.mxu0 %v8096
    %8830 = vmatpush1.bf16.msra.mxu0 %v8095
    %8831 = vmatprep.subr.bf16.mxu0 0
    %8832 = vmatpush1.bf16.msra.mxu0 0
    %8833 = vmatprep.subr.bf16.mxu0 0
    %8834 = vmatpush1.bf16.msra.mxu0 0
    %8835 = vmatprep.subr.bf16.mxu0 0
    %8836 = vmatpush1.bf16.msra.mxu0 0
    %8837 = vmatprep.subr.bf16.mxu0 0
    %8838 = vmatpush1.bf16.msra.mxu0 0
    %8839 = vmatprep.subr.bf16.mxu0 0
    %8840 = vmatpush1.bf16.msra.mxu0 0
    %8841 = vmatprep.subr.bf16.mxu0 0
    %8842 = vmatpush1.bf16.msra.mxu0 0
    %8843 = vmatprep.subr.bf16.mxu0 0
    %8844 = vmatpush1.bf16.msra.mxu0 0
    %8845 = vmatprep.subr.bf16.mxu0 0
    %8846 = vmatpush1.bf16.msra.mxu0 0
    %8847 = vmatprep.subr.bf16.mxu0 0
    %8848 = vmatpush1.bf16.msra.mxu0 0
    %8849 = vmatprep.subr.bf16.mxu0 0
    %8850 = vmatpush1.bf16.msra.mxu0 0
    %8851 = vmatprep.subr.bf16.mxu0 0
    %8852 = vmatpush1.bf16.msra.mxu0 0
    %8853 = vmatprep.subr.bf16.mxu0 0
    %8854 = vmatpush1.bf16.msra.mxu0 0
    %8855 = vmatprep.mubr.bf16.mxu0 0
    %8856 = vmatmul.mubr.bf16.gmra.mrb[0].mxu0 %v8235
    %v8857 = vpop.f32.mrb[0].mxu0
    %v8858 = vadd.f32 0.0, %v8857
    %v8859 = vpop.f32.mrb[0].mxu0
    %v8860 = vadd.f32 0.0, %v8859
    %v8861 = vpop.f32.mrb[0].mxu0
    %v8862 = vadd.f32 0.0, %v8861
    %v8863 = vpop.f32.mrb[0].mxu0
    %v8864 = vadd.f32 0.0, %v8863
    %8865 = vmatprep.mubr.bf16.mxu0 0
    %8866 = vmatmul.mubr.bf16.gmra.mrb[0].mxu0 %v8238
    %v8867 = vpop.f32.mrb[0].mxu0
    %v8868 = vadd.f32 0.0, %v8867
    %v8869 = vpop.f32.mrb[0].mxu0
    %v8870 = vadd.f32 0.0, %v8869
    %v8871 = vpop.f32.mrb[0].mxu0
    %v8872 = vadd.f32 0.0, %v8871
    %v8873 = vpop.f32.mrb[0].mxu0
    %v8874 = vadd.f32 0.0, %v8873
    %8875 = vdwg.mxu0
    %8876 = vmatprep.subr.bf16.mxu0 %v8002
    %8877 = vmatpush1.bf16.msra.mxu0 %v8001
    %8878 = vmatprep.subr.bf16.mxu0 %v8034
    %8879 = vmatpush1.bf16.msra.mxu0 %v8033
    %8880 = vmatprep.subr.bf16.mxu0 %v8066
    %8881 = vmatpush1.bf16.msra.mxu0 %v8065
    %8882 = vmatprep.subr.bf16.mxu0 %v8098
    %8883 = vmatpush1.bf16.msra.mxu0 %v8097
    %8884 = vmatprep.subr.bf16.mxu0 0
    %8885 = vmatpush1.bf16.msra.mxu0 0
    %8886 = vmatprep.subr.bf16.mxu0 0
    %8887 = vmatpush1.bf16.msra.mxu0 0
    %8888 = vmatprep.subr.bf16.mxu0 0
    %8889 = vmatpush1.bf16.msra.mxu0 0
    %8890 = vmatprep.subr.bf16.mxu0 0
    %8891 = vmatpush1.bf16.msra.mxu0 0
    %8892 = vmatprep.subr.bf16.mxu0 0
    %8893 = vmatpush1.bf16.msra.mxu0 0
    %8894 = vmatprep.subr.bf16.mxu0 0
    %8895 = vmatpush1.bf16.msra.mxu0 0
    %8896 = vmatprep.subr.bf16.mxu0 0
    %8897 = vmatpush1.bf16.msra.mxu0 0
    %8898 = vmatprep.subr.bf16.mxu0 0
    %8899 = vmatpush1.bf16.msra.mxu0 0
    %8900 = vmatprep.subr.bf16.mxu0 0
    %8901 = vmatpush1.bf16.msra.mxu0 0
    %8902 = vmatprep.subr.bf16.mxu0 0
    %8903 = vmatpush1.bf16.msra.mxu0 0
    %8904 = vmatprep.subr.bf16.mxu0 0
    %8905 = vmatpush1.bf16.msra.mxu0 0
    %8906 = vmatprep.subr.bf16.mxu0 0
    %8907 = vmatpush1.bf16.msra.mxu0 0
    %8908 = vmatprep.mubr.bf16.mxu0 0
    %8909 = vmatmul.mubr.bf16.gmra.mrb[0].mxu0 %v8235
    %v8910 = vpop.f32.mrb[0].mxu0
    %v8911 = vadd.f32 0.0, %v8910
    %v8912 = vpop.f32.mrb[0].mxu0
    %v8913 = vadd.f32 0.0, %v8912
    %v8914 = vpop.f32.mrb[0].mxu0
    %v8915 = vadd.f32 0.0, %v8914
    %v8916 = vpop.f32.mrb[0].mxu0
    %v8917 = vadd.f32 0.0, %v8916
    %8918 = vmatprep.mubr.bf16.mxu0 0
    %8919 = vmatmul.mubr.bf16.gmra.mrb[0].mxu0 %v8238
    %v8920 = vpop.f32.mrb[0].mxu0
    %v8921 = vadd.f32 0.0, %v8920
    %v8922 = vpop.f32.mrb[0].mxu0
    %v8923 = vadd.f32 0.0, %v8922
    %v8924 = vpop.f32.mrb[0].mxu0
    %v8925 = vadd.f32 0.0, %v8924
    %v8926 = vpop.f32.mrb[0].mxu0
    %v8927 = vadd.f32 0.0, %v8926
    %8928 = vdwg.mxu0
    %8929 = vmatprep.subr.bf16.mxu0 %v8004
    %8930 = vmatpush1.bf16.msra.mxu0 %v8003
    %8931 = vmatprep.subr.bf16.mxu0 %v8036
    %8932 = vmatpush1.bf16.msra.mxu0 %v8035
    %8933 = vmatprep.subr.bf16.mxu0 %v8068
    %8934 = vmatpush1.bf16.msra.mxu0 %v8067
    %8935 = vmatprep.subr.bf16.mxu0 %v8100
    %8936 = vmatpush1.bf16.msra.mxu0 %v8099
    %8937 = vmatprep.subr.bf16.mxu0 0
    %8938 = vmatpush1.bf16.msra.mxu0 0
    %8939 = vmatprep.subr.bf16.mxu0 0
    %8940 = vmatpush1.bf16.msra.mxu0 0
    %8941 = vmatprep.subr.bf16.mxu0 0
    %8942 = vmatpush1.bf16.msra.mxu0 0
    %8943 = vmatprep.subr.bf16.mxu0 0
    %8944 = vmatpush1.bf16.msra.mxu0 0
    %8945 = vmatprep.subr.bf16.mxu0 0
    %8946 = vmatpush1.bf16.msra.mxu0 0
    %8947 = vmatprep.subr.bf16.mxu0 0
    %8948 = vmatpush1.bf16.msra.mxu0 0
    %8949 = vmatprep.subr.bf16.mxu0 0
    %8950 = vmatpush1.bf16.msra.mxu0 0
    %8951 = vmatprep.subr.bf16.mxu0 0
    %8952 = vmatpush1.bf16.msra.mxu0 0
    %8953 = vmatprep.subr.bf16.mxu0 0
    %8954 = vmatpush1.bf16.msra.mxu0 0
    %8955 = vmatprep.subr.bf16.mxu0 0
    %8956 = vmatpush1.bf16.msra.mxu0 0
    %8957 = vmatprep.subr.bf16.mxu0 0
    %8958 = vmatpush1.bf16.msra.mxu0 0
    %8959 = vmatprep.subr.bf16.mxu0 0
    %8960 = vmatpush1.bf16.msra.mxu0 0
    %8961 = vmatprep.mubr.bf16.mxu0 0
    %8962 = vmatmul.mubr.bf16.gmra.mrb[0].mxu0 %v8235
    %v8963 = vpop.f32.mrb[0].mxu0
    %v8964 = vadd.f32 0.0, %v8963
    %v8965 = vpop.f32.mrb[0].mxu0
    %v8966 = vadd.f32 0.0, %v8965
    %v8967 = vpop.f32.mrb[0].mxu0
    %v8968 = vadd.f32 0.0, %v8967
    %v8969 = vpop.f32.mrb[0].mxu0
    %v8970 = vadd.f32 0.0, %v8969
    %8971 = vmatprep.mubr.bf16.mxu0 0
    %8972 = vmatmul.mubr.bf16.gmra.mrb[0].mxu0 %v8238
    %v8973 = vpop.f32.mrb[0].mxu0
    %v8974 = vadd.f32 0.0, %v8973
    %v8975 = vpop.f32.mrb[0].mxu0
    %v8976 = vadd.f32 0.0, %v8975
    %v8977 = vpop.f32.mrb[0].mxu0
    %v8978 = vadd.f32 0.0, %v8977
    %v8979 = vpop.f32.mrb[0].mxu0
    %v8980 = vadd.f32 0.0, %v8979
    %8981 = vdwg.mxu0
    %8982 = vmatprep.subr.bf16.mxu0 %v8006
    %8983 = vmatpush1.bf16.msra.mxu0 %v8005
    %8984 = vmatprep.subr.bf16.mxu0 %v8038
    %8985 = vmatpush1.bf16.msra.mxu0 %v8037
    %8986 = vmatprep.subr.bf16.mxu0 %v8070
    %8987 = vmatpush1.bf16.msra.mxu0 %v8069
    %8988 = vmatprep.subr.bf16.mxu0 %v8102
    %8989 = vmatpush1.bf16.msra.mxu0 %v8101
    %8990 = vmatprep.subr.bf16.mxu0 0
    %8991 = vmatpush1.bf16.msra.mxu0 0
    %8992 = vmatprep.subr.bf16.mxu0 0
    %8993 = vmatpush1.bf16.msra.mxu0 0
    %8994 = vmatprep.subr.bf16.mxu0 0
    %8995 = vmatpush1.bf16.msra.mxu0 0
    %8996 = vmatprep.subr.bf16.mxu0 0
    %8997 = vmatpush1.bf16.msra.mxu0 0
    %8998 = vmatprep.subr.bf16.mxu0 0
    %8999 = vmatpush1.bf16.msra.mxu0 0
    %9000 = vmatprep.subr.bf16.mxu0 0
    %9001 = vmatpush1.bf16.msra.mxu0 0
    %9002 = vmatprep.subr.bf16.mxu0 0
    %9003 = vmatpush1.bf16.msra.mxu0 0
    %9004 = vmatprep.subr.bf16.mxu0 0
    %9005 = vmatpush1.bf16.msra.mxu0 0
    %9006 = vmatprep.subr.bf16.mxu0 0
    %9007 = vmatpush1.bf16.msra.mxu0 0
    %9008 = vmatprep.subr.bf16.mxu0 0
    %9009 = vmatpush1.bf16.msra.mxu0 0
    %9010 = vmatprep.subr.bf16.mxu0 0
    %9011 = vmatpush1.bf16.msra.mxu0 0
    %9012 = vmatprep.subr.bf16.mxu0 0
    %9013 = vmatpush1.bf16.msra.mxu0 0
    %9014 = vmatprep.mubr.bf16.mxu0 0
    %9015 = vmatmul.mubr.bf16.gmra.mrb[0].mxu0 %v8235
    %v9016 = vpop.f32.mrb[0].mxu0
    %v9017 = vadd.f32 0.0, %v9016
    %v9018 = vpop.f32.mrb[0].mxu0
    %v9019 = vadd.f32 0.0, %v9018
    %v9020 = vpop.f32.mrb[0].mxu0
    %v9021 = vadd.f32 0.0, %v9020
    %v9022 = vpop.f32.mrb[0].mxu0
    %v9023 = vadd.f32 0.0, %v9022
    %9024 = vmatprep.mubr.bf16.mxu0 0
    %9025 = vmatmul.mubr.bf16.gmra.mrb[0].mxu0 %v8238
    %v9026 = vpop.f32.mrb[0].mxu0
    %v9027 = vadd.f32 0.0, %v9026
    %v9028 = vpop.f32.mrb[0].mxu0
    %v9029 = vadd.f32 0.0, %v9028
    %v9030 = vpop.f32.mrb[0].mxu0
    %v9031 = vadd.f32 0.0, %v9030
    %v9032 = vpop.f32.mrb[0].mxu0
    %v9033 = vadd.f32 0.0, %v9032
    %9034 = vdwg.mxu0
    %9035 = vmatprep.subr.bf16.mxu0 %v8008
    %9036 = vmatpush1.bf16.msra.mxu0 %v8007
    %9037 = vmatprep.subr.bf16.mxu0 %v8040
    %9038 = vmatpush1.bf16.msra.mxu0 %v8039
    %9039 = vmatprep.subr.bf16.mxu0 %v8072
    %9040 = vmatpush1.bf16.msra.mxu0 %v8071
    %9041 = vmatprep.subr.bf16.mxu0 %v8104
    %9042 = vmatpush1.bf16.msra.mxu0 %v8103
    %9043 = vmatprep.subr.bf16.mxu0 0
    %9044 = vmatpush1.bf16.msra.mxu0 0
    %9045 = vmatprep.subr.bf16.mxu0 0
    %9046 = vmatpush1.bf16.msra.mxu0 0
    %9047 = vmatprep.subr.bf16.mxu0 0
    %9048 = vmatpush1.bf16.msra.mxu0 0
    %9049 = vmatprep.subr.bf16.mxu0 0
    %9050 = vmatpush1.bf16.msra.mxu0 0
    %9051 = vmatprep.subr.bf16.mxu0 0
    %9052 = vmatpush1.bf16.msra.mxu0 0
    %9053 = vmatprep.subr.bf16.mxu0 0
    %9054 = vmatpush1.bf16.msra.mxu0 0
    %9055 = vmatprep.subr.bf16.mxu0 0
    %9056 = vmatpush1.bf16.msra.mxu0 0
    %9057 = vmatprep.subr.bf16.mxu0 0
    %9058 = vmatpush1.bf16.msra.mxu0 0
    %9059 = vmatprep.subr.bf16.mxu0 0
    %9060 = vmatpush1.bf16.msra.mxu0 0
    %9061 = vmatprep.subr.bf16.mxu0 0
    %9062 = vmatpush1.bf16.msra.mxu0 0
    %9063 = vmatprep.subr.bf16.mxu0 0
    %9064 = vmatpush1.bf16.msra.mxu0 0
    %9065 = vmatprep.subr.bf16.mxu0 0
    %9066 = vmatpush1.bf16.msra.mxu0 0
    %9067 = vmatprep.mubr.bf16.mxu0 0
    %9068 = vmatmul.mubr.bf16.gmra.mrb[0].mxu0 %v8235
    %v9069 = vpop.f32.mrb[0].mxu0
    %v9070 = vadd.f32 0.0, %v9069
    %v9071 = vpop.f32.mrb[0].mxu0
    %v9072 = vadd.f32 0.0, %v9071
    %v9073 = vpop.f32.mrb[0].mxu0
    %v9074 = vadd.f32 0.0, %v9073
    %v9075 = vpop.f32.mrb[0].mxu0
    %v9076 = vadd.f32 0.0, %v9075
    %9077 = vmatprep.mubr.bf16.mxu0 0
    %9078 = vmatmul.mubr.bf16.gmra.mrb[0].mxu0 %v8238
    %v9079 = vpop.f32.mrb[0].mxu0
    %v9080 = vadd.f32 0.0, %v9079
    %v9081 = vpop.f32.mrb[0].mxu0
    %v9082 = vadd.f32 0.0, %v9081
    %v9083 = vpop.f32.mrb[0].mxu0
    %v9084 = vadd.f32 0.0, %v9083
    %v9085 = vpop.f32.mrb[0].mxu0
    %v9086 = vadd.f32 0.0, %v9085
    %9087 = vdwg.mxu0
    %v9088 = vmul.f32 %v8275, %v6601
    %v9089 = vmul.f32 %v8277, %v6603
    %v9090 = vmul.f32 %v8328, %v6654
    %v9091 = vmul.f32 %v8330, %v6656
    %v9092 = vmul.f32 %v8381, %v6707
    %v9093 = vmul.f32 %v8383, %v6709
    %v9094 = vmul.f32 %v8434, %v6760
    %v9095 = vmul.f32 %v8436, %v6762
    %v9096 = vmul.f32 %v8487, %v6813
    %v9097 = vmul.f32 %v8489, %v6815
    %v9098 = vmul.f32 %v8540, %v6866
    %v9099 = vmul.f32 %v8542, %v6868
    %v9100 = vmul.f32 %v8593, %v6919
    %v9101 = vmul.f32 %v8595, %v6921
    %v9102 = vmul.f32 %v8646, %v6972
    %v9103 = vmul.f32 %v8648, %v6974
    %v9104 = vmul.f32 %v8699, %v7025
    %v9105 = vmul.f32 %v8701, %v7027
    %v9106 = vmul.f32 %v8752, %v7078
    %v9107 = vmul.f32 %v8754, %v7080
    %v9108 = vmul.f32 %v8805, %v7131
    %v9109 = vmul.f32 %v8807, %v7133
    %v9110 = vmul.f32 %v8858, %v7184
    %v9111 = vmul.f32 %v8860, %v7186
    %v9112 = vmul.f32 %v8911, %v7237
    %v9113 = vmul.f32 %v8913, %v7239
    %v9114 = vmul.f32 %v8964, %v7290
    %v9115 = vmul.f32 %v8966, %v7292
    %v9116 = vmul.f32 %v9017, %v7343
    %v9117 = vmul.f32 %v9019, %v7345
    %v9118 = vmul.f32 %v9070, %v7396
    %v9119 = vmul.f32 %v9072, %v7398
    %v9120 = vmul.f32 %v8279, %v6605
    %v9121 = vmul.f32 %v8281, %v6607
    %v9122 = vmul.f32 %v8332, %v6658
    %v9123 = vmul.f32 %v8334, %v6660
    %v9124 = vmul.f32 %v8385, %v6711
    %v9125 = vmul.f32 %v8387, %v6713
    %v9126 = vmul.f32 %v8438, %v6764
    %v9127 = vmul.f32 %v8440, %v6766
    %v9128 = vmul.f32 %v8491, %v6817
    %v9129 = vmul.f32 %v8493, %v6819
    %v9130 = vmul.f32 %v8544, %v6870
    %v9131 = vmul.f32 %v8546, %v6872
    %v9132 = vmul.f32 %v8597, %v6923
    %v9133 = vmul.f32 %v8599, %v6925
    %v9134 = vmul.f32 %v8650, %v6976
    %v9135 = vmul.f32 %v8652, %v6978
    %v9136 = vmul.f32 %v8703, %v7029
    %v9137 = vmul.f32 %v8705, %v7031
    %v9138 = vmul.f32 %v8756, %v7082
    %v9139 = vmul.f32 %v8758, %v7084
    %v9140 = vmul.f32 %v8809, %v7135
    %v9141 = vmul.f32 %v8811, %v7137
    %v9142 = vmul.f32 %v8862, %v7188
    %v9143 = vmul.f32 %v8864, %v7190
    %v9144 = vmul.f32 %v8915, %v7241
    %v9145 = vmul.f32 %v8917, %v7243
    %v9146 = vmul.f32 %v8968, %v7294
    %v9147 = vmul.f32 %v8970, %v7296
    %v9148 = vmul.f32 %v9021, %v7347
    %v9149 = vmul.f32 %v9023, %v7349
    %v9150 = vmul.f32 %v9074, %v7400
    %v9151 = vmul.f32 %v9076, %v7402
    %v9152 = vmul.f32 %v8285, %v6611
    %v9153 = vmul.f32 %v8287, %v6613
    %v9154 = vmul.f32 %v8338, %v6664
    %v9155 = vmul.f32 %v8340, %v6666
    %v9156 = vmul.f32 %v8391, %v6717
    %v9157 = vmul.f32 %v8393, %v6719
    %v9158 = vmul.f32 %v8444, %v6770
    %v9159 = vmul.f32 %v8446, %v6772
    %v9160 = vmul.f32 %v8497, %v6823
    %v9161 = vmul.f32 %v8499, %v6825
    %v9162 = vmul.f32 %v8550, %v6876
    %v9163 = vmul.f32 %v8552, %v6878
    %v9164 = vmul.f32 %v8603, %v6929
    %v9165 = vmul.f32 %v8605, %v6931
    %v9166 = vmul.f32 %v8656, %v6982
    %v9167 = vmul.f32 %v8658, %v6984
    %v9168 = vmul.f32 %v8709, %v7035
    %v9169 = vmul.f32 %v8711, %v7037
    %v9170 = vmul.f32 %v8762, %v7088
    %v9171 = vmul.f32 %v8764, %v7090
    %v9172 = vmul.f32 %v8815, %v7141
    %v9173 = vmul.f32 %v8817, %v7143
    %v9174 = vmul.f32 %v8868, %v7194
    %v9175 = vmul.f32 %v8870, %v7196
    %v9176 = vmul.f32 %v8921, %v7247
    %v9177 = vmul.f32 %v8923, %v7249
    %v9178 = vmul.f32 %v8974, %v7300
    %v9179 = vmul.f32 %v8976, %v7302
    %v9180 = vmul.f32 %v9027, %v7353
    %v9181 = vmul.f32 %v9029, %v7355
    %v9182 = vmul.f32 %v9080, %v7406
    %v9183 = vmul.f32 %v9082, %v7408
    %v9184 = vmul.f32 %v8289, %v6615
    %v9185 = vmul.f32 %v8291, %v6617
    %v9186 = vmul.f32 %v8342, %v6668
    %v9187 = vmul.f32 %v8344, %v6670
    %v9188 = vmul.f32 %v8395, %v6721
    %v9189 = vmul.f32 %v8397, %v6723
    %v9190 = vmul.f32 %v8448, %v6774
    %v9191 = vmul.f32 %v8450, %v6776
    %v9192 = vmul.f32 %v8501, %v6827
    %v9193 = vmul.f32 %v8503, %v6829
    %v9194 = vmul.f32 %v8554, %v6880
    %v9195 = vmul.f32 %v8556, %v6882
    %v9196 = vmul.f32 %v8607, %v6933
    %v9197 = vmul.f32 %v8609, %v6935
    %v9198 = vmul.f32 %v8660, %v6986
    %v9199 = vmul.f32 %v8662, %v6988
    %v9200 = vmul.f32 %v8713, %v7039
    %v9201 = vmul.f32 %v8715, %v7041
    %v9202 = vmul.f32 %v8766, %v7092
    %v9203 = vmul.f32 %v8768, %v7094
    %v9204 = vmul.f32 %v8819, %v7145
    %v9205 = vmul.f32 %v8821, %v7147
    %v9206 = vmul.f32 %v8872, %v7198
    %v9207 = vmul.f32 %v8874, %v7200
    %v9208 = vmul.f32 %v8925, %v7251
    %v9209 = vmul.f32 %v8927, %v7253
    %v9210 = vmul.f32 %v8978, %v7304
    %v9211 = vmul.f32 %v8980, %v7306
    %v9212 = vmul.f32 %v9031, %v7357
    %v9213 = vmul.f32 %v9033, %v7359
    %v9214 = vmul.f32 %v9084, %v7410
    %v9215 = vmul.f32 %v9086, %v7412
    %v9216 = vpack.c.bf16 %v9120, %v9088
    %v9217 = vpack.c.bf16 %v9121, %v9089
    %v9218 = vpack.c.bf16 %v9122, %v9090
    %v9219 = vpack.c.bf16 %v9123, %v9091
    %v9220 = vpack.c.bf16 %v9124, %v9092
    %v9221 = vpack.c.bf16 %v9125, %v9093
    %v9222 = vpack.c.bf16 %v9126, %v9094
    %v9223 = vpack.c.bf16 %v9127, %v9095
    %v9224 = vpack.c.bf16 %v9128, %v9096
    %v9225 = vpack.c.bf16 %v9129, %v9097
    %v9226 = vpack.c.bf16 %v9130, %v9098
    %v9227 = vpack.c.bf16 %v9131, %v9099
    %v9228 = vpack.c.bf16 %v9132, %v9100
    %v9229 = vpack.c.bf16 %v9133, %v9101
    %v9230 = vpack.c.bf16 %v9134, %v9102
    %v9231 = vpack.c.bf16 %v9135, %v9103
    %v9232 = vpack.c.bf16 %v9136, %v9104
    %v9233 = vpack.c.bf16 %v9137, %v9105
    %v9234 = vpack.c.bf16 %v9138, %v9106
    %v9235 = vpack.c.bf16 %v9139, %v9107
    %v9236 = vpack.c.bf16 %v9140, %v9108
    %v9237 = vpack.c.bf16 %v9141, %v9109
    %v9238 = vpack.c.bf16 %v9142, %v9110
    %v9239 = vpack.c.bf16 %v9143, %v9111
    %v9240 = vpack.c.bf16 %v9144, %v9112
    %v9241 = vpack.c.bf16 %v9145, %v9113
    %v9242 = vpack.c.bf16 %v9146, %v9114
    %v9243 = vpack.c.bf16 %v9147, %v9115
    %v9244 = vpack.c.bf16 %v9148, %v9116
    %v9245 = vpack.c.bf16 %v9149, %v9117
    %v9246 = vpack.c.bf16 %v9150, %v9118
    %v9247 = vpack.c.bf16 %v9151, %v9119
    %v9248 = vpack.c.bf16 %v9184, %v9152
    %v9249 = vpack.c.bf16 %v9185, %v9153
    %v9250 = vpack.c.bf16 %v9186, %v9154
    %v9251 = vpack.c.bf16 %v9187, %v9155
    %v9252 = vpack.c.bf16 %v9188, %v9156
    %v9253 = vpack.c.bf16 %v9189, %v9157
    %v9254 = vpack.c.bf16 %v9190, %v9158
    %v9255 = vpack.c.bf16 %v9191, %v9159
    %v9256 = vpack.c.bf16 %v9192, %v9160
    %v9257 = vpack.c.bf16 %v9193, %v9161
    %v9258 = vpack.c.bf16 %v9194, %v9162
    %v9259 = vpack.c.bf16 %v9195, %v9163
    %v9260 = vpack.c.bf16 %v9196, %v9164
    %v9261 = vpack.c.bf16 %v9197, %v9165
    %v9262 = vpack.c.bf16 %v9198, %v9166
    %v9263 = vpack.c.bf16 %v9199, %v9167
    %v9264 = vpack.c.bf16 %v9200, %v9168
    %v9265 = vpack.c.bf16 %v9201, %v9169
    %v9266 = vpack.c.bf16 %v9202, %v9170
    %v9267 = vpack.c.bf16 %v9203, %v9171
    %v9268 = vpack.c.bf16 %v9204, %v9172
    %v9269 = vpack.c.bf16 %v9205, %v9173
    %v9270 = vpack.c.bf16 %v9206, %v9174
    %v9271 = vpack.c.bf16 %v9207, %v9175
    %v9272 = vpack.c.bf16 %v9208, %v9176
    %v9273 = vpack.c.bf16 %v9209, %v9177
    %v9274 = vpack.c.bf16 %v9210, %v9178
    %v9275 = vpack.c.bf16 %v9211, %v9179
    %v9276 = vpack.c.bf16 %v9212, %v9180
    %v9277 = vpack.c.bf16 %v9213, %v9181
    %v9278 = vpack.c.bf16 %v9214, %v9182
    %v9279 = vpack.c.bf16 %v9215, %v9183
    %v9280 = vld [vmem:[%s11 + $0x4d0] sm:$0xf]
    %v9281 = vld [vmem:[%s11 + $0x4d4] sm:$0xf]
    %v9282 = vld [vmem:[%s11 + $0x4d8] sm:$0xf]
    %v9283 = vld [vmem:[%s11 + $0x4dc] sm:$0xf]
    %v9284 = vld [vmem:[%s11 + $0x4e0] sm:$0xf]
    %v9285 = vld [vmem:[%s11 + $0x4e4] sm:$0xf]
    %v9286 = vld [vmem:[%s11 + $0x4e8] sm:$0xf]
    %v9287 = vld [vmem:[%s11 + $0x4ec] sm:$0xf]
    %v9288 = vld [vmem:[%s11 + $0x4f0] sm:$0xf]
    %v9289 = vld [vmem:[%s11 + $0x4f4] sm:$0xf]
    %v9290 = vld [vmem:[%s11 + $0x4f8] sm:$0xf]
    %v9291 = vld [vmem:[%s11 + $0x4fc] sm:$0xf]
    %v9292 = vld [vmem:[%s11 + $0x500] sm:$0xf]
    %v9293 = vld [vmem:[%s11 + $0x504] sm:$0xf]
    %v9294 = vld [vmem:[%s11 + $0x508] sm:$0xf]
    %v9295 = vld [vmem:[%s11 + $0x50c] sm:$0xf]
    %v9296 = vld [vmem:[%s11 + $0x510] sm:$0xf]
    %v9297 = vld [vmem:[%s11 + $0x514] sm:$0xf]
    %v9298 = vld [vmem:[%s11 + $0x518] sm:$0xf]
    %v9299 = vld [vmem:[%s11 + $0x51c] sm:$0xf]
    %v9300 = vld [vmem:[%s11 + $0x520] sm:$0xf]
    %v9301 = vld [vmem:[%s11 + $0x524] sm:$0xf]
    %v9302 = vld [vmem:[%s11 + $0x528] sm:$0xf]
    %v9303 = vld [vmem:[%s11 + $0x52c] sm:$0xf]
    %v9304 = vld [vmem:[%s11 + $0x530] sm:$0xf]
    %v9305 = vld [vmem:[%s11 + $0x534] sm:$0xf]
    %v9306 = vld [vmem:[%s11 + $0x538] sm:$0xf]
    %v9307 = vld [vmem:[%s11 + $0x53c] sm:$0xf]
    %v9308 = vld [vmem:[%s11 + $0x540] sm:$0xf]
    %v9309 = vld [vmem:[%s11 + $0x544] sm:$0xf]
    %v9310 = vld [vmem:[%s11 + $0x548] sm:$0xf]
    %v9311 = vld [vmem:[%s11 + $0x54c] sm:$0xf]
    %v9312 = vld [vmem:[%s11 + $0x550] sm:$0xf]
    %v9313 = vld [vmem:[%s11 + $0x554] sm:$0xf]
    %v9314 = vld [vmem:[%s11 + $0x558] sm:$0xf]
    %v9315 = vld [vmem:[%s11 + $0x55c] sm:$0xf]
    %v9316 = vld [vmem:[%s11 + $0x560] sm:$0xf]
    %v9317 = vld [vmem:[%s11 + $0x564] sm:$0xf]
    %v9318 = vld [vmem:[%s11 + $0x568] sm:$0xf]
    %v9319 = vld [vmem:[%s11 + $0x56c] sm:$0xf]
    %v9320 = vld [vmem:[%s11 + $0x570] sm:$0xf]
    %v9321 = vld [vmem:[%s11 + $0x574] sm:$0xf]
    %v9322 = vld [vmem:[%s11 + $0x578] sm:$0xf]
    %v9323 = vld [vmem:[%s11 + $0x57c] sm:$0xf]
    %v9324 = vld [vmem:[%s11 + $0x580] sm:$0xf]
    %v9325 = vld [vmem:[%s11 + $0x584] sm:$0xf]
    %v9326 = vld [vmem:[%s11 + $0x588] sm:$0xf]
    %v9327 = vld [vmem:[%s11 + $0x58c] sm:$0xf]
    %v9328 = vld [vmem:[%s11 + $0x590] sm:$0xf]
    %v9329 = vld [vmem:[%s11 + $0x594] sm:$0xf]
    %v9330 = vld [vmem:[%s11 + $0x598] sm:$0xf]
    %v9331 = vld [vmem:[%s11 + $0x59c] sm:$0xf]
    %v9332 = vld [vmem:[%s11 + $0x5a0] sm:$0xf]
    %v9333 = vld [vmem:[%s11 + $0x5a4] sm:$0xf]
    %v9334 = vld [vmem:[%s11 + $0x5a8] sm:$0xf]
    %v9335 = vld [vmem:[%s11 + $0x5ac] sm:$0xf]
    %v9336 = vld [vmem:[%s11 + $0x5b0] sm:$0xf]
    %v9337 = vld [vmem:[%s11 + $0x5b4] sm:$0xf]
    %v9338 = vld [vmem:[%s11 + $0x5b8] sm:$0xf]
    %v9339 = vld [vmem:[%s11 + $0x5bc] sm:$0xf]
    %v9340 = vld [vmem:[%s11 + $0x5c0] sm:$0xf]
    %v9341 = vld [vmem:[%s11 + $0x5c4] sm:$0xf]
    %v9342 = vld [vmem:[%s11 + $0x5c8] sm:$0xf]
    %v9343 = vld [vmem:[%s11 + $0x5cc] sm:$0xf]
    %v9344 = vld [vmem:[%s11 + $0x5d0] sm:$0xf]
    %v9345 = vld [vmem:[%s11 + $0x5d4] sm:$0xf]
    %v9346 = vld [vmem:[%s11 + $0x5d8] sm:$0xf]
    %v9347 = vld [vmem:[%s11 + $0x5dc] sm:$0xf]
    %v9348 = vld [vmem:[%s11 + $0x5e0] sm:$0xf]
    %v9349 = vld [vmem:[%s11 + $0x5e4] sm:$0xf]
    %v9350 = vld [vmem:[%s11 + $0x5e8] sm:$0xf]
    %v9351 = vld [vmem:[%s11 + $0x5ec] sm:$0xf]
    %v9352 = vld [vmem:[%s11 + $0x5f0] sm:$0xf]
    %v9353 = vld [vmem:[%s11 + $0x5f4] sm:$0xf]
    %v9354 = vld [vmem:[%s11 + $0x5f8] sm:$0xf]
    %v9355 = vld [vmem:[%s11 + $0x5fc] sm:$0xf]
    %v9356 = vld [vmem:[%s11 + $0x600] sm:$0xf]
    %v9357 = vld [vmem:[%s11 + $0x604] sm:$0xf]
    %v9358 = vld [vmem:[%s11 + $0x608] sm:$0xf]
    %v9359 = vld [vmem:[%s11 + $0x60c] sm:$0xf]
    %v9360 = vld [vmem:[%s11 + $0x610] sm:$0xf]
    %v9361 = vld [vmem:[%s11 + $0x614] sm:$0xf]
    %v9362 = vld [vmem:[%s11 + $0x618] sm:$0xf]
    %v9363 = vld [vmem:[%s11 + $0x61c] sm:$0xf]
    %v9364 = vld [vmem:[%s11 + $0x620] sm:$0xf]
    %v9365 = vld [vmem:[%s11 + $0x624] sm:$0xf]
    %v9366 = vld [vmem:[%s11 + $0x628] sm:$0xf]
    %v9367 = vld [vmem:[%s11 + $0x62c] sm:$0xf]
    %v9368 = vld [vmem:[%s11 + $0x630] sm:$0xf]
    %v9369 = vld [vmem:[%s11 + $0x634] sm:$0xf]
    %v9370 = vld [vmem:[%s11 + $0x638] sm:$0xf]
    %v9371 = vld [vmem:[%s11 + $0x63c] sm:$0xf]
    %v9372 = vld [vmem:[%s11 + $0x640] sm:$0xf]
    %v9373 = vld [vmem:[%s11 + $0x644] sm:$0xf]
    %v9374 = vld [vmem:[%s11 + $0x648] sm:$0xf]
    %v9375 = vld [vmem:[%s11 + $0x64c] sm:$0xf]
    %v9376 = vld [vmem:[%s11 + $0x650] sm:$0xf]
    %v9377 = vld [vmem:[%s11 + $0x654] sm:$0xf]
    %v9378 = vld [vmem:[%s11 + $0x658] sm:$0xf]
    %v9379 = vld [vmem:[%s11 + $0x65c] sm:$0xf]
    %v9380 = vld [vmem:[%s11 + $0x660] sm:$0xf]
    %v9381 = vld [vmem:[%s11 + $0x664] sm:$0xf]
    %v9382 = vld [vmem:[%s11 + $0x668] sm:$0xf]
    %v9383 = vld [vmem:[%s11 + $0x66c] sm:$0xf]
    %v9384 = vld [vmem:[%s11 + $0x670] sm:$0xf]
    %v9385 = vld [vmem:[%s11 + $0x674] sm:$0xf]
    %v9386 = vld [vmem:[%s11 + $0x678] sm:$0xf]
    %v9387 = vld [vmem:[%s11 + $0x67c] sm:$0xf]
    %v9388 = vld [vmem:[%s11 + $0x680] sm:$0xf]
    %v9389 = vld [vmem:[%s11 + $0x684] sm:$0xf]
    %v9390 = vld [vmem:[%s11 + $0x688] sm:$0xf]
    %v9391 = vld [vmem:[%s11 + $0x68c] sm:$0xf]
    %v9392 = vld [vmem:[%s11 + $0x690] sm:$0xf]
    %v9393 = vld [vmem:[%s11 + $0x694] sm:$0xf]
    %v9394 = vld [vmem:[%s11 + $0x698] sm:$0xf]
    %v9395 = vld [vmem:[%s11 + $0x69c] sm:$0xf]
    %v9396 = vld [vmem:[%s11 + $0x6a0] sm:$0xf]
    %v9397 = vld [vmem:[%s11 + $0x6a4] sm:$0xf]
    %v9398 = vld [vmem:[%s11 + $0x6a8] sm:$0xf]
    %v9399 = vld [vmem:[%s11 + $0x6ac] sm:$0xf]
    %v9400 = vld [vmem:[%s11 + $0x6b0] sm:$0xf]
    %v9401 = vld [vmem:[%s11 + $0x6b4] sm:$0xf]
    %v9402 = vld [vmem:[%s11 + $0x6b8] sm:$0xf]
    %v9403 = vld [vmem:[%s11 + $0x6bc] sm:$0xf]
    %v9404 = vld [vmem:[%s11 + $0x6c0] sm:$0xf]
    %v9405 = vld [vmem:[%s11 + $0x6c4] sm:$0xf]
    %v9406 = vld [vmem:[%s11 + $0x6c8] sm:$0xf]
    %v9407 = vld [vmem:[%s11 + $0x6cc] sm:$0xf]
    %v9408 = vld [vmem:[%s11 + $0x6d0] sm:$0xf]
    %v9409 = vld [vmem:[%s11 + $0x6d4] sm:$0xf]
    %v9410 = vld [vmem:[%s11 + $0x6d8] sm:$0xf]
    %v9411 = vld [vmem:[%s11 + $0x6dc] sm:$0xf]
    %v9412 = vld [vmem:[%s11 + $0x6e0] sm:$0xf]
    %v9413 = vld [vmem:[%s11 + $0x6e4] sm:$0xf]
    %v9414 = vld [vmem:[%s11 + $0x6e8] sm:$0xf]
    %v9415 = vld [vmem:[%s11 + $0x6ec] sm:$0xf]
    %v9416 = vld [vmem:[%s11 + $0x6f0] sm:$0xf]
    %v9417 = vld [vmem:[%s11 + $0x6f4] sm:$0xf]
    %v9418 = vld [vmem:[%s11 + $0x6f8] sm:$0xf]
    %v9419 = vld [vmem:[%s11 + $0x6fc] sm:$0xf]
    %v9420 = vld [vmem:[%s11 + $0x700] sm:$0xf]
    %v9421 = vld [vmem:[%s11 + $0x704] sm:$0xf]
    %v9422 = vld [vmem:[%s11 + $0x708] sm:$0xf]
    %v9423 = vld [vmem:[%s11 + $0x70c] sm:$0xf]
    %v9424 = vld [vmem:[%s11 + $0x710] sm:$0xf]
    %v9425 = vld [vmem:[%s11 + $0x714] sm:$0xf]
    %v9426 = vld [vmem:[%s11 + $0x718] sm:$0xf]
    %v9427 = vld [vmem:[%s11 + $0x71c] sm:$0xf]
    %v9428 = vld [vmem:[%s11 + $0x720] sm:$0xf]
    %v9429 = vld [vmem:[%s11 + $0x724] sm:$0xf]
    %v9430 = vld [vmem:[%s11 + $0x728] sm:$0xf]
    %v9431 = vld [vmem:[%s11 + $0x72c] sm:$0xf]
    %v9432 = vld [vmem:[%s11 + $0x730] sm:$0xf]
    %v9433 = vld [vmem:[%s11 + $0x734] sm:$0xf]
    %v9434 = vld [vmem:[%s11 + $0x738] sm:$0xf]
    %v9435 = vld [vmem:[%s11 + $0x73c] sm:$0xf]
    %v9436 = vld [vmem:[%s11 + $0x740] sm:$0xf]
    %v9437 = vld [vmem:[%s11 + $0x744] sm:$0xf]
    %v9438 = vld [vmem:[%s11 + $0x748] sm:$0xf]
    %v9439 = vld [vmem:[%s11 + $0x74c] sm:$0xf]
    %v9440 = vld [vmem:[%s11 + $0x750] sm:$0xf]
    %v9441 = vld [vmem:[%s11 + $0x754] sm:$0xf]
    %v9442 = vld [vmem:[%s11 + $0x758] sm:$0xf]
    %v9443 = vld [vmem:[%s11 + $0x75c] sm:$0xf]
    %v9444 = vld [vmem:[%s11 + $0x760] sm:$0xf]
    %v9445 = vld [vmem:[%s11 + $0x764] sm:$0xf]
    %v9446 = vld [vmem:[%s11 + $0x768] sm:$0xf]
    %v9447 = vld [vmem:[%s11 + $0x76c] sm:$0xf]
    %v9448 = vld [vmem:[%s11 + $0x770] sm:$0xf]
    %v9449 = vld [vmem:[%s11 + $0x774] sm:$0xf]
    %v9450 = vld [vmem:[%s11 + $0x778] sm:$0xf]
    %v9451 = vld [vmem:[%s11 + $0x77c] sm:$0xf]
    %v9452 = vld [vmem:[%s11 + $0x780] sm:$0xf]
    %v9453 = vld [vmem:[%s11 + $0x784] sm:$0xf]
    %v9454 = vld [vmem:[%s11 + $0x788] sm:$0xf]
    %v9455 = vld [vmem:[%s11 + $0x78c] sm:$0xf]
    %v9456 = vld [vmem:[%s11 + $0x790] sm:$0xf]
    %v9457 = vld [vmem:[%s11 + $0x794] sm:$0xf]
    %v9458 = vld [vmem:[%s11 + $0x798] sm:$0xf]
    %v9459 = vld [vmem:[%s11 + $0x79c] sm:$0xf]
    %v9460 = vld [vmem:[%s11 + $0x7a0] sm:$0xf]
    %v9461 = vld [vmem:[%s11 + $0x7a4] sm:$0xf]
    %v9462 = vld [vmem:[%s11 + $0x7a8] sm:$0xf]
    %v9463 = vld [vmem:[%s11 + $0x7ac] sm:$0xf]
    %v9464 = vld [vmem:[%s11 + $0x7b0] sm:$0xf]
    %v9465 = vld [vmem:[%s11 + $0x7b4] sm:$0xf]
    %v9466 = vld [vmem:[%s11 + $0x7b8] sm:$0xf]
    %v9467 = vld [vmem:[%s11 + $0x7bc] sm:$0xf]
    %v9468 = vld [vmem:[%s11 + $0x7c0] sm:$0xf]
    %v9469 = vld [vmem:[%s11 + $0x7c4] sm:$0xf]
    %v9470 = vld [vmem:[%s11 + $0x7c8] sm:$0xf]
    %v9471 = vld [vmem:[%s11 + $0x7cc] sm:$0xf]
    %v9472 = vld [vmem:[%s11 + $0x7d0] sm:$0xf]
    %v9473 = vld [vmem:[%s11 + $0x7d4] sm:$0xf]
    %v9474 = vld [vmem:[%s11 + $0x7d8] sm:$0xf]
    %v9475 = vld [vmem:[%s11 + $0x7dc] sm:$0xf]
    %v9476 = vld [vmem:[%s11 + $0x7e0] sm:$0xf]
    %v9477 = vld [vmem:[%s11 + $0x7e4] sm:$0xf]
    %v9478 = vld [vmem:[%s11 + $0x7e8] sm:$0xf]
    %v9479 = vld [vmem:[%s11 + $0x7ec] sm:$0xf]
    %v9480 = vld [vmem:[%s11 + $0x7f0] sm:$0xf]
    %v9481 = vld [vmem:[%s11 + $0x7f4] sm:$0xf]
    %v9482 = vld [vmem:[%s11 + $0x7f8] sm:$0xf]
    %v9483 = vld [vmem:[%s11 + $0x7fc] sm:$0xf]
    %v9484 = vld [vmem:[%s11 + $0x800] sm:$0xf]
    %v9485 = vld [vmem:[%s11 + $0x804] sm:$0xf]
    %v9486 = vld [vmem:[%s11 + $0x808] sm:$0xf]
    %v9487 = vld [vmem:[%s11 + $0x80c] sm:$0xf]
    %v9488 = vld [vmem:[%s11 + $0x810] sm:$0xf]
    %v9489 = vld [vmem:[%s11 + $0x814] sm:$0xf]
    %v9490 = vld [vmem:[%s11 + $0x818] sm:$0xf]
    %v9491 = vld [vmem:[%s11 + $0x81c] sm:$0xf]
    %v9492 = vld [vmem:[%s11 + $0x820] sm:$0xf]
    %v9493 = vld [vmem:[%s11 + $0x824] sm:$0xf]
    %v9494 = vld [vmem:[%s11 + $0x828] sm:$0xf]
    %v9495 = vld [vmem:[%s11 + $0x82c] sm:$0xf]
    %v9496 = vld [vmem:[%s11 + $0x830] sm:$0xf]
    %v9497 = vld [vmem:[%s11 + $0x834] sm:$0xf]
    %v9498 = vld [vmem:[%s11 + $0x838] sm:$0xf]
    %v9499 = vld [vmem:[%s11 + $0x83c] sm:$0xf]
    %v9500 = vld [vmem:[%s11 + $0x840] sm:$0xf]
    %v9501 = vld [vmem:[%s11 + $0x844] sm:$0xf]
    %v9502 = vld [vmem:[%s11 + $0x848] sm:$0xf]
    %v9503 = vld [vmem:[%s11 + $0x84c] sm:$0xf]
    %v9504 = vld [vmem:[%s11 + $0x850] sm:$0xf]
    %v9505 = vld [vmem:[%s11 + $0x854] sm:$0xf]
    %v9506 = vld [vmem:[%s11 + $0x858] sm:$0xf]
    %v9507 = vld [vmem:[%s11 + $0x85c] sm:$0xf]
    %v9508 = vld [vmem:[%s11 + $0x860] sm:$0xf]
    %v9509 = vld [vmem:[%s11 + $0x864] sm:$0xf]
    %v9510 = vld [vmem:[%s11 + $0x868] sm:$0xf]
    %v9511 = vld [vmem:[%s11 + $0x86c] sm:$0xf]
    %v9512 = vld [vmem:[%s11 + $0x870] sm:$0xf]
    %v9513 = vld [vmem:[%s11 + $0x874] sm:$0xf]
    %v9514 = vld [vmem:[%s11 + $0x878] sm:$0xf]
    %v9515 = vld [vmem:[%s11 + $0x87c] sm:$0xf]
    %v9516 = vld [vmem:[%s11 + $0x880] sm:$0xf]
    %v9517 = vld [vmem:[%s11 + $0x884] sm:$0xf]
    %v9518 = vld [vmem:[%s11 + $0x888] sm:$0xf]
    %v9519 = vld [vmem:[%s11 + $0x88c] sm:$0xf]
    %v9520 = vld [vmem:[%s11 + $0x890] sm:$0xf]
    %v9521 = vld [vmem:[%s11 + $0x894] sm:$0xf]
    %v9522 = vld [vmem:[%s11 + $0x898] sm:$0xf]
    %v9523 = vld [vmem:[%s11 + $0x89c] sm:$0xf]
    %v9524 = vld [vmem:[%s11 + $0x8a0] sm:$0xf]
    %v9525 = vld [vmem:[%s11 + $0x8a4] sm:$0xf]
    %v9526 = vld [vmem:[%s11 + $0x8a8] sm:$0xf]
    %v9527 = vld [vmem:[%s11 + $0x8ac] sm:$0xf]
    %v9528 = vld [vmem:[%s11 + $0x8b0] sm:$0xf]
    %v9529 = vld [vmem:[%s11 + $0x8b4] sm:$0xf]
    %v9530 = vld [vmem:[%s11 + $0x8b8] sm:$0xf]
    %v9531 = vld [vmem:[%s11 + $0x8bc] sm:$0xf]
    %v9532 = vld [vmem:[%s11 + $0x8c0] sm:$0xf]
    %v9533 = vld [vmem:[%s11 + $0x8c4] sm:$0xf]
    %v9534 = vld [vmem:[%s11 + $0x8c8] sm:$0xf]
    %v9535 = vld [vmem:[%s11 + $0x8cc] sm:$0xf]
    %v9536 = vld [vmem:[%s11 + $0x8d0] sm:$0xf]
    %v9537 = vld [vmem:[%s11 + $0x8d4] sm:$0xf]
    %v9538 = vld [vmem:[%s11 + $0x8d8] sm:$0xf]
    %v9539 = vld [vmem:[%s11 + $0x8dc] sm:$0xf]
    %v9540 = vld [vmem:[%s11 + $0x8e0] sm:$0xf]
    %v9541 = vld [vmem:[%s11 + $0x8e4] sm:$0xf]
    %v9542 = vld [vmem:[%s11 + $0x8e8] sm:$0xf]
    %v9543 = vld [vmem:[%s11 + $0x8ec] sm:$0xf]
    %v9544 = vld [vmem:[%s11 + $0x8f0] sm:$0xf]
    %v9545 = vld [vmem:[%s11 + $0x8f4] sm:$0xf]
    %v9546 = vld [vmem:[%s11 + $0x8f8] sm:$0xf]
    %v9547 = vld [vmem:[%s11 + $0x8fc] sm:$0xf]
    %v9548 = vld [vmem:[%s11 + $0x900] sm:$0xf]
    %v9549 = vld [vmem:[%s11 + $0x904] sm:$0xf]
    %v9550 = vld [vmem:[%s11 + $0x908] sm:$0xf]
    %v9551 = vld [vmem:[%s11 + $0x90c] sm:$0xf]
    %v9552 = vld [vmem:[%s11 + $0x910] sm:$0xf]
    %v9553 = vld [vmem:[%s11 + $0x914] sm:$0xf]
    %v9554 = vld [vmem:[%s11 + $0x918] sm:$0xf]
    %v9555 = vld [vmem:[%s11 + $0x91c] sm:$0xf]
    %v9556 = vld [vmem:[%s11 + $0x920] sm:$0xf]
    %v9557 = vld [vmem:[%s11 + $0x924] sm:$0xf]
    %v9558 = vld [vmem:[%s11 + $0x928] sm:$0xf]
    %v9559 = vld [vmem:[%s11 + $0x92c] sm:$0xf]
    %v9560 = vld [vmem:[%s11 + $0x930] sm:$0xf]
    %v9561 = vld [vmem:[%s11 + $0x934] sm:$0xf]
    %v9562 = vld [vmem:[%s11 + $0x938] sm:$0xf]
    %v9563 = vld [vmem:[%s11 + $0x93c] sm:$0xf]
    %v9564 = vld [vmem:[%s11 + $0x940] sm:$0xf]
    %v9565 = vld [vmem:[%s11 + $0x944] sm:$0xf]
    %v9566 = vld [vmem:[%s11 + $0x948] sm:$0xf]
    %v9567 = vld [vmem:[%s11 + $0x94c] sm:$0xf]
    %v9568 = vld [vmem:[%s11 + $0x950] sm:$0xf]
    %v9569 = vld [vmem:[%s11 + $0x954] sm:$0xf]
    %v9570 = vld [vmem:[%s11 + $0x958] sm:$0xf]
    %v9571 = vld [vmem:[%s11 + $0x95c] sm:$0xf]
    %v9572 = vld [vmem:[%s11 + $0x960] sm:$0xf]
    %v9573 = vld [vmem:[%s11 + $0x964] sm:$0xf]
    %v9574 = vld [vmem:[%s11 + $0x968] sm:$0xf]
    %v9575 = vld [vmem:[%s11 + $0x96c] sm:$0xf]
    %v9576 = vld [vmem:[%s11 + $0x970] sm:$0xf]
    %v9577 = vld [vmem:[%s11 + $0x974] sm:$0xf]
    %v9578 = vld [vmem:[%s11 + $0x978] sm:$0xf]
    %v9579 = vld [vmem:[%s11 + $0x97c] sm:$0xf]
    %v9580 = vld [vmem:[%s11 + $0x980] sm:$0xf]
    %v9581 = vld [vmem:[%s11 + $0x984] sm:$0xf]
    %v9582 = vld [vmem:[%s11 + $0x988] sm:$0xf]
    %v9583 = vld [vmem:[%s11 + $0x98c] sm:$0xf]
    %v9584 = vld [vmem:[%s11 + $0x990] sm:$0xf]
    %v9585 = vld [vmem:[%s11 + $0x994] sm:$0xf]
    %v9586 = vld [vmem:[%s11 + $0x998] sm:$0xf]
    %v9587 = vld [vmem:[%s11 + $0x99c] sm:$0xf]
    %v9588 = vld [vmem:[%s11 + $0x9a0] sm:$0xf]
    %v9589 = vld [vmem:[%s11 + $0x9a4] sm:$0xf]
    %v9590 = vld [vmem:[%s11 + $0x9a8] sm:$0xf]
    %v9591 = vld [vmem:[%s11 + $0x9ac] sm:$0xf]
    %v9592 = vld [vmem:[%s11 + $0x9b0] sm:$0xf]
    %v9593 = vld [vmem:[%s11 + $0x9b4] sm:$0xf]
    %v9594 = vld [vmem:[%s11 + $0x9b8] sm:$0xf]
    %v9595 = vld [vmem:[%s11 + $0x9bc] sm:$0xf]
    %v9596 = vld [vmem:[%s11 + $0x9c0] sm:$0xf]
    %v9597 = vld [vmem:[%s11 + $0x9c4] sm:$0xf]
    %v9598 = vld [vmem:[%s11 + $0x9c8] sm:$0xf]
    %v9599 = vld [vmem:[%s11 + $0x9cc] sm:$0xf]
    %v9600 = vld [vmem:[%s11 + $0x9d0] sm:$0xf]
    %v9601 = vld [vmem:[%s11 + $0x9d4] sm:$0xf]
    %v9602 = vld [vmem:[%s11 + $0x9d8] sm:$0xf]
    %v9603 = vld [vmem:[%s11 + $0x9dc] sm:$0xf]
    %v9604 = vld [vmem:[%s11 + $0x9e0] sm:$0xf]
    %v9605 = vld [vmem:[%s11 + $0x9e4] sm:$0xf]
    %v9606 = vld [vmem:[%s11 + $0x9e8] sm:$0xf]
    %v9607 = vld [vmem:[%s11 + $0x9ec] sm:$0xf]
    %v9608 = vld [vmem:[%s11 + $0x9f0] sm:$0xf]
    %v9609 = vld [vmem:[%s11 + $0x9f4] sm:$0xf]
    %v9610 = vld [vmem:[%s11 + $0x9f8] sm:$0xf]
    %v9611 = vld [vmem:[%s11 + $0x9fc] sm:$0xf]
    %v9612 = vld [vmem:[%s11 + $0xa00] sm:$0xf]
    %v9613 = vld [vmem:[%s11 + $0xa04] sm:$0xf]
    %v9614 = vld [vmem:[%s11 + $0xa08] sm:$0xf]
    %v9615 = vld [vmem:[%s11 + $0xa0c] sm:$0xf]
    %v9616 = vld [vmem:[%s11 + $0xa10] sm:$0xf]
    %v9617 = vld [vmem:[%s11 + $0xa14] sm:$0xf]
    %v9618 = vld [vmem:[%s11 + $0xa18] sm:$0xf]
    %v9619 = vld [vmem:[%s11 + $0xa1c] sm:$0xf]
    %v9620 = vld [vmem:[%s11 + $0xa20] sm:$0xf]
    %v9621 = vld [vmem:[%s11 + $0xa24] sm:$0xf]
    %v9622 = vld [vmem:[%s11 + $0xa28] sm:$0xf]
    %v9623 = vld [vmem:[%s11 + $0xa2c] sm:$0xf]
    %v9624 = vld [vmem:[%s11 + $0xa30] sm:$0xf]
    %v9625 = vld [vmem:[%s11 + $0xa34] sm:$0xf]
    %v9626 = vld [vmem:[%s11 + $0xa38] sm:$0xf]
    %v9627 = vld [vmem:[%s11 + $0xa3c] sm:$0xf]
    %v9628 = vld [vmem:[%s11 + $0xa40] sm:$0xf]
    %v9629 = vld [vmem:[%s11 + $0xa44] sm:$0xf]
    %v9630 = vld [vmem:[%s11 + $0xa48] sm:$0xf]
    %v9631 = vld [vmem:[%s11 + $0xa4c] sm:$0xf]
    %v9632 = vld [vmem:[%s11 + $0xa50] sm:$0xf]
    %v9633 = vld [vmem:[%s11 + $0xa54] sm:$0xf]
    %v9634 = vld [vmem:[%s11 + $0xa58] sm:$0xf]
    %v9635 = vld [vmem:[%s11 + $0xa5c] sm:$0xf]
    %v9636 = vld [vmem:[%s11 + $0xa60] sm:$0xf]
    %v9637 = vld [vmem:[%s11 + $0xa64] sm:$0xf]
    %v9638 = vld [vmem:[%s11 + $0xa68] sm:$0xf]
    %v9639 = vld [vmem:[%s11 + $0xa6c] sm:$0xf]
    %v9640 = vld [vmem:[%s11 + $0xa70] sm:$0xf]
    %v9641 = vld [vmem:[%s11 + $0xa74] sm:$0xf]
    %v9642 = vld [vmem:[%s11 + $0xa78] sm:$0xf]
    %v9643 = vld [vmem:[%s11 + $0xa7c] sm:$0xf]
    %v9644 = vld [vmem:[%s11 + $0xa80] sm:$0xf]
    %v9645 = vld [vmem:[%s11 + $0xa84] sm:$0xf]
    %v9646 = vld [vmem:[%s11 + $0xa88] sm:$0xf]
    %v9647 = vld [vmem:[%s11 + $0xa8c] sm:$0xf]
    %v9648 = vld [vmem:[%s11 + $0xa90] sm:$0xf]
    %v9649 = vld [vmem:[%s11 + $0xa94] sm:$0xf]
    %v9650 = vld [vmem:[%s11 + $0xa98] sm:$0xf]
    %v9651 = vld [vmem:[%s11 + $0xa9c] sm:$0xf]
    %v9652 = vld [vmem:[%s11 + $0xaa0] sm:$0xf]
    %v9653 = vld [vmem:[%s11 + $0xaa4] sm:$0xf]
    %v9654 = vld [vmem:[%s11 + $0xaa8] sm:$0xf]
    %v9655 = vld [vmem:[%s11 + $0xaac] sm:$0xf]
    %v9656 = vld [vmem:[%s11 + $0xab0] sm:$0xf]
    %v9657 = vld [vmem:[%s11 + $0xab4] sm:$0xf]
    %v9658 = vld [vmem:[%s11 + $0xab8] sm:$0xf]
    %v9659 = vld [vmem:[%s11 + $0xabc] sm:$0xf]
    %v9660 = vld [vmem:[%s11 + $0xac0] sm:$0xf]
    %v9661 = vld [vmem:[%s11 + $0xac4] sm:$0xf]
    %v9662 = vld [vmem:[%s11 + $0xac8] sm:$0xf]
    %v9663 = vld [vmem:[%s11 + $0xacc] sm:$0xf]
    %v9664 = vld [vmem:[%s11 + $0xad0] sm:$0xf]
    %v9665 = vld [vmem:[%s11 + $0xad4] sm:$0xf]
    %v9666 = vld [vmem:[%s11 + $0xad8] sm:$0xf]
    %v9667 = vld [vmem:[%s11 + $0xadc] sm:$0xf]
    %v9668 = vld [vmem:[%s11 + $0xae0] sm:$0xf]
    %v9669 = vld [vmem:[%s11 + $0xae4] sm:$0xf]
    %v9670 = vld [vmem:[%s11 + $0xae8] sm:$0xf]
    %v9671 = vld [vmem:[%s11 + $0xaec] sm:$0xf]
    %v9672 = vld [vmem:[%s11 + $0xaf0] sm:$0xf]
    %v9673 = vld [vmem:[%s11 + $0xaf4] sm:$0xf]
    %v9674 = vld [vmem:[%s11 + $0xaf8] sm:$0xf]
    %v9675 = vld [vmem:[%s11 + $0xafc] sm:$0xf]
    %v9676 = vld [vmem:[%s11 + $0xb00] sm:$0xf]
    %v9677 = vld [vmem:[%s11 + $0xb04] sm:$0xf]
    %v9678 = vld [vmem:[%s11 + $0xb08] sm:$0xf]
    %v9679 = vld [vmem:[%s11 + $0xb0c] sm:$0xf]
    %v9680 = vld [vmem:[%s11 + $0xb10] sm:$0xf]
    %v9681 = vld [vmem:[%s11 + $0xb14] sm:$0xf]
    %v9682 = vld [vmem:[%s11 + $0xb18] sm:$0xf]
    %v9683 = vld [vmem:[%s11 + $0xb1c] sm:$0xf]
    %v9684 = vld [vmem:[%s11 + $0xb20] sm:$0xf]
    %v9685 = vld [vmem:[%s11 + $0xb24] sm:$0xf]
    %v9686 = vld [vmem:[%s11 + $0xb28] sm:$0xf]
    %v9687 = vld [vmem:[%s11 + $0xb2c] sm:$0xf]
    %v9688 = vld [vmem:[%s11 + $0xb30] sm:$0xf]
    %v9689 = vld [vmem:[%s11 + $0xb34] sm:$0xf]
    %v9690 = vld [vmem:[%s11 + $0xb38] sm:$0xf]
    %v9691 = vld [vmem:[%s11 + $0xb3c] sm:$0xf]
    %v9692 = vld [vmem:[%s11 + $0xb40] sm:$0xf]
    %v9693 = vld [vmem:[%s11 + $0xb44] sm:$0xf]
    %v9694 = vld [vmem:[%s11 + $0xb48] sm:$0xf]
    %v9695 = vld [vmem:[%s11 + $0xb4c] sm:$0xf]
    %v9696 = vld [vmem:[%s11 + $0xb50] sm:$0xf]
    %v9697 = vld [vmem:[%s11 + $0xb54] sm:$0xf]
    %v9698 = vld [vmem:[%s11 + $0xb58] sm:$0xf]
    %v9699 = vld [vmem:[%s11 + $0xb5c] sm:$0xf]
    %v9700 = vld [vmem:[%s11 + $0xb60] sm:$0xf]
    %v9701 = vld [vmem:[%s11 + $0xb64] sm:$0xf]
    %v9702 = vld [vmem:[%s11 + $0xb68] sm:$0xf]
    %v9703 = vld [vmem:[%s11 + $0xb6c] sm:$0xf]
    %v9704 = vld [vmem:[%s11 + $0xb70] sm:$0xf]
    %v9705 = vld [vmem:[%s11 + $0xb74] sm:$0xf]
    %v9706 = vld [vmem:[%s11 + $0xb78] sm:$0xf]
    %v9707 = vld [vmem:[%s11 + $0xb7c] sm:$0xf]
    %v9708 = vld [vmem:[%s11 + $0xb80] sm:$0xf]
    %v9709 = vld [vmem:[%s11 + $0xb84] sm:$0xf]
    %v9710 = vld [vmem:[%s11 + $0xb88] sm:$0xf]
    %v9711 = vld [vmem:[%s11 + $0xb8c] sm:$0xf]
    %v9712 = vld [vmem:[%s11 + $0xb90] sm:$0xf]
    %v9713 = vld [vmem:[%s11 + $0xb94] sm:$0xf]
    %v9714 = vld [vmem:[%s11 + $0xb98] sm:$0xf]
    %v9715 = vld [vmem:[%s11 + $0xb9c] sm:$0xf]
    %v9716 = vld [vmem:[%s11 + $0xba0] sm:$0xf]
    %v9717 = vld [vmem:[%s11 + $0xba4] sm:$0xf]
    %v9718 = vld [vmem:[%s11 + $0xba8] sm:$0xf]
    %v9719 = vld [vmem:[%s11 + $0xbac] sm:$0xf]
    %v9720 = vld [vmem:[%s11 + $0xbb0] sm:$0xf]
    %v9721 = vld [vmem:[%s11 + $0xbb4] sm:$0xf]
    %v9722 = vld [vmem:[%s11 + $0xbb8] sm:$0xf]
    %v9723 = vld [vmem:[%s11 + $0xbbc] sm:$0xf]
    %v9724 = vld [vmem:[%s11 + $0xbc0] sm:$0xf]
    %v9725 = vld [vmem:[%s11 + $0xbc4] sm:$0xf]
    %v9726 = vld [vmem:[%s11 + $0xbc8] sm:$0xf]
    %v9727 = vld [vmem:[%s11 + $0xbcc] sm:$0xf]
    %v9728 = vld [vmem:[%s11 + $0xbd0] sm:$0xf]
    %v9729 = vld [vmem:[%s11 + $0xbd4] sm:$0xf]
    %v9730 = vld [vmem:[%s11 + $0xbd8] sm:$0xf]
    %v9731 = vld [vmem:[%s11 + $0xbdc] sm:$0xf]
    %v9732 = vld [vmem:[%s11 + $0xbe0] sm:$0xf]
    %v9733 = vld [vmem:[%s11 + $0xbe4] sm:$0xf]
    %v9734 = vld [vmem:[%s11 + $0xbe8] sm:$0xf]
    %v9735 = vld [vmem:[%s11 + $0xbec] sm:$0xf]
    %v9736 = vld [vmem:[%s11 + $0xbf0] sm:$0xf]
    %v9737 = vld [vmem:[%s11 + $0xbf4] sm:$0xf]
    %v9738 = vld [vmem:[%s11 + $0xbf8] sm:$0xf]
    %v9739 = vld [vmem:[%s11 + $0xbfc] sm:$0xf]
    %v9740 = vld [vmem:[%s11 + $0xc00] sm:$0xf]
    %v9741 = vld [vmem:[%s11 + $0xc04] sm:$0xf]
    %v9742 = vld [vmem:[%s11 + $0xc08] sm:$0xf]
    %v9743 = vld [vmem:[%s11 + $0xc0c] sm:$0xf]
    %v9744 = vld [vmem:[%s11 + $0xc10] sm:$0xf]
    %v9745 = vld [vmem:[%s11 + $0xc14] sm:$0xf]
    %v9746 = vld [vmem:[%s11 + $0xc18] sm:$0xf]
    %v9747 = vld [vmem:[%s11 + $0xc1c] sm:$0xf]
    %v9748 = vld [vmem:[%s11 + $0xc20] sm:$0xf]
    %v9749 = vld [vmem:[%s11 + $0xc24] sm:$0xf]
    %v9750 = vld [vmem:[%s11 + $0xc28] sm:$0xf]
    %v9751 = vld [vmem:[%s11 + $0xc2c] sm:$0xf]
    %v9752 = vld [vmem:[%s11 + $0xc30] sm:$0xf]
    %v9753 = vld [vmem:[%s11 + $0xc34] sm:$0xf]
    %v9754 = vld [vmem:[%s11 + $0xc38] sm:$0xf]
    %v9755 = vld [vmem:[%s11 + $0xc3c] sm:$0xf]
    %v9756 = vld [vmem:[%s11 + $0xc40] sm:$0xf]
    %v9757 = vld [vmem:[%s11 + $0xc44] sm:$0xf]
    %v9758 = vld [vmem:[%s11 + $0xc48] sm:$0xf]
    %v9759 = vld [vmem:[%s11 + $0xc4c] sm:$0xf]
    %v9760 = vld [vmem:[%s11 + $0xc50] sm:$0xf]
    %v9761 = vld [vmem:[%s11 + $0xc54] sm:$0xf]
    %v9762 = vld [vmem:[%s11 + $0xc58] sm:$0xf]
    %v9763 = vld [vmem:[%s11 + $0xc5c] sm:$0xf]
    %v9764 = vld [vmem:[%s11 + $0xc60] sm:$0xf]
    %v9765 = vld [vmem:[%s11 + $0xc64] sm:$0xf]
    %v9766 = vld [vmem:[%s11 + $0xc68] sm:$0xf]
    %v9767 = vld [vmem:[%s11 + $0xc6c] sm:$0xf]
    %v9768 = vld [vmem:[%s11 + $0xc70] sm:$0xf]
    %v9769 = vld [vmem:[%s11 + $0xc74] sm:$0xf]
    %v9770 = vld [vmem:[%s11 + $0xc78] sm:$0xf]
    %v9771 = vld [vmem:[%s11 + $0xc7c] sm:$0xf]
    %v9772 = vld [vmem:[%s11 + $0xc80] sm:$0xf]
    %v9773 = vld [vmem:[%s11 + $0xc84] sm:$0xf]
    %v9774 = vld [vmem:[%s11 + $0xc88] sm:$0xf]
    %v9775 = vld [vmem:[%s11 + $0xc8c] sm:$0xf]
    %v9776 = vld [vmem:[%s11 + $0xc90] sm:$0xf]
    %v9777 = vld [vmem:[%s11 + $0xc94] sm:$0xf]
    %v9778 = vld [vmem:[%s11 + $0xc98] sm:$0xf]
    %v9779 = vld [vmem:[%s11 + $0xc9c] sm:$0xf]
    %v9780 = vld [vmem:[%s11 + $0xca0] sm:$0xf]
    %v9781 = vld [vmem:[%s11 + $0xca4] sm:$0xf]
    %v9782 = vld [vmem:[%s11 + $0xca8] sm:$0xf]
    %v9783 = vld [vmem:[%s11 + $0xcac] sm:$0xf]
    %v9784 = vld [vmem:[%s11 + $0xcb0] sm:$0xf]
    %v9785 = vld [vmem:[%s11 + $0xcb4] sm:$0xf]
    %v9786 = vld [vmem:[%s11 + $0xcb8] sm:$0xf]
    %v9787 = vld [vmem:[%s11 + $0xcbc] sm:$0xf]
    %v9788 = vld [vmem:[%s11 + $0xcc0] sm:$0xf]
    %v9789 = vld [vmem:[%s11 + $0xcc4] sm:$0xf]
    %v9790 = vld [vmem:[%s11 + $0xcc8] sm:$0xf]
    %v9791 = vld [vmem:[%s11 + $0xccc] sm:$0xf]
    %v10304 = vunpack.c.l.b16 %v9280
    %v10305 = vunpack.c.l.b16 %v9281
    %v10306 = vunpack.c.l.b16 %v9282
    %v10307 = vunpack.c.l.b16 %v9283
    %v10308 = vunpack.c.l.b16 %v9284
    %v10309 = vunpack.c.l.b16 %v9285
    %v10310 = vunpack.c.l.b16 %v9286
    %v10311 = vunpack.c.l.b16 %v9287
    %v10312 = vunpack.c.l.b16 %v9288
    %v10313 = vunpack.c.l.b16 %v9289
    %v10314 = vunpack.c.l.b16 %v9290
    %v10315 = vunpack.c.l.b16 %v9291
    %v10316 = vunpack.c.l.b16 %v9292
    %v10317 = vunpack.c.l.b16 %v9293
    %v10318 = vunpack.c.l.b16 %v9294
    %v10319 = vunpack.c.l.b16 %v9295
    %v10320 = vunpack.c.l.b16 %v9296
    %v10321 = vunpack.c.l.b16 %v9297
    %v10322 = vunpack.c.l.b16 %v9298
    %v10323 = vunpack.c.l.b16 %v9299
    %v10324 = vunpack.c.l.b16 %v9300
    %v10325 = vunpack.c.l.b16 %v9301
    %v10326 = vunpack.c.l.b16 %v9302
    %v10327 = vunpack.c.l.b16 %v9303
    %v10328 = vunpack.c.l.b16 %v9304
    %v10329 = vunpack.c.l.b16 %v9305
    %v10330 = vunpack.c.l.b16 %v9306
    %v10331 = vunpack.c.l.b16 %v9307
    %v10332 = vunpack.c.l.b16 %v9308
    %v10333 = vunpack.c.l.b16 %v9309
    %v10334 = vunpack.c.l.b16 %v9310
    %v10335 = vunpack.c.l.b16 %v9311
    %v10336 = vunpack.c.l.b16 %v9312
    %v10337 = vunpack.c.l.b16 %v9313
    %v10338 = vunpack.c.l.b16 %v9314
    %v10339 = vunpack.c.l.b16 %v9315
    %v10340 = vunpack.c.l.b16 %v9316
    %v10341 = vunpack.c.l.b16 %v9317
    %v10342 = vunpack.c.l.b16 %v9318
    %v10343 = vunpack.c.l.b16 %v9319
    %v10344 = vunpack.c.l.b16 %v9320
    %v10345 = vunpack.c.l.b16 %v9321
    %v10346 = vunpack.c.l.b16 %v9322
    %v10347 = vunpack.c.l.b16 %v9323
    %v10348 = vunpack.c.l.b16 %v9324
    %v10349 = vunpack.c.l.b16 %v9325
    %v10350 = vunpack.c.l.b16 %v9326
    %v10351 = vunpack.c.l.b16 %v9327
    %v10352 = vunpack.c.l.b16 %v9328
    %v10353 = vunpack.c.l.b16 %v9329
    %v10354 = vunpack.c.l.b16 %v9330
    %v10355 = vunpack.c.l.b16 %v9331
    %v10356 = vunpack.c.l.b16 %v9332
    %v10357 = vunpack.c.l.b16 %v9333
    %v10358 = vunpack.c.l.b16 %v9334
    %v10359 = vunpack.c.l.b16 %v9335
    %v10360 = vunpack.c.l.b16 %v9336
    %v10361 = vunpack.c.l.b16 %v9337
    %v10362 = vunpack.c.l.b16 %v9338
    %v10363 = vunpack.c.l.b16 %v9339
    %v10364 = vunpack.c.l.b16 %v9340
    %v10365 = vunpack.c.l.b16 %v9341
    %v10366 = vunpack.c.l.b16 %v9342
    %v10367 = vunpack.c.l.b16 %v9343
    %v10368 = vunpack.c.l.b16 %v9344
    %v10369 = vunpack.c.l.b16 %v9345
    %v10370 = vunpack.c.l.b16 %v9346
    %v10371 = vunpack.c.l.b16 %v9347
    %v10372 = vunpack.c.l.b16 %v9348
    %v10373 = vunpack.c.l.b16 %v9349
    %v10374 = vunpack.c.l.b16 %v9350
    %v10375 = vunpack.c.l.b16 %v9351
    %v10376 = vunpack.c.l.b16 %v9352
    %v10377 = vunpack.c.l.b16 %v9353
    %v10378 = vunpack.c.l.b16 %v9354
    %v10379 = vunpack.c.l.b16 %v9355
    %v10380 = vunpack.c.l.b16 %v9356
    %v10381 = vunpack.c.l.b16 %v9357
    %v10382 = vunpack.c.l.b16 %v9358
    %v10383 = vunpack.c.l.b16 %v9359
    %v10384 = vunpack.c.l.b16 %v9360
    %v10385 = vunpack.c.l.b16 %v9361
    %v10386 = vunpack.c.l.b16 %v9362
    %v10387 = vunpack.c.l.b16 %v9363
    %v10388 = vunpack.c.l.b16 %v9364
    %v10389 = vunpack.c.l.b16 %v9365
    %v10390 = vunpack.c.l.b16 %v9366
    %v10391 = vunpack.c.l.b16 %v9367
    %v10392 = vunpack.c.l.b16 %v9368
    %v10393 = vunpack.c.l.b16 %v9369
    %v10394 = vunpack.c.l.b16 %v9370
    %v10395 = vunpack.c.l.b16 %v9371
    %v10396 = vunpack.c.l.b16 %v9372
    %v10397 = vunpack.c.l.b16 %v9373
    %v10398 = vunpack.c.l.b16 %v9374
    %v10399 = vunpack.c.l.b16 %v9375
    %v10400 = vunpack.c.l.b16 %v9376
    %v10401 = vunpack.c.l.b16 %v9377
    %v10402 = vunpack.c.l.b16 %v9378
    %v10403 = vunpack.c.l.b16 %v9379
    %v10404 = vunpack.c.l.b16 %v9380
    %v10405 = vunpack.c.l.b16 %v9381
    %v10406 = vunpack.c.l.b16 %v9382
    %v10407 = vunpack.c.l.b16 %v9383
    %v10408 = vunpack.c.l.b16 %v9384
    %v10409 = vunpack.c.l.b16 %v9385
    %v10410 = vunpack.c.l.b16 %v9386
    %v10411 = vunpack.c.l.b16 %v9387
    %v10412 = vunpack.c.l.b16 %v9388
    %v10413 = vunpack.c.l.b16 %v9389
    %v10414 = vunpack.c.l.b16 %v9390
    %v10415 = vunpack.c.l.b16 %v9391
    %v10416 = vunpack.c.l.b16 %v9392
    %v10417 = vunpack.c.l.b16 %v9393
    %v10418 = vunpack.c.l.b16 %v9394
    %v10419 = vunpack.c.l.b16 %v9395
    %v10420 = vunpack.c.l.b16 %v9396
    %v10421 = vunpack.c.l.b16 %v9397
    %v10422 = vunpack.c.l.b16 %v9398
    %v10423 = vunpack.c.l.b16 %v9399
    %v10424 = vunpack.c.l.b16 %v9400
    %v10425 = vunpack.c.l.b16 %v9401
    %v10426 = vunpack.c.l.b16 %v9402
    %v10427 = vunpack.c.l.b16 %v9403
    %v10428 = vunpack.c.l.b16 %v9404
    %v10429 = vunpack.c.l.b16 %v9405
    %v10430 = vunpack.c.l.b16 %v9406
    %v10431 = vunpack.c.l.b16 %v9407
    %v10432 = vunpack.c.l.b16 %v9408
    %v10433 = vunpack.c.l.b16 %v9409
    %v10434 = vunpack.c.l.b16 %v9410
    %v10435 = vunpack.c.l.b16 %v9411
    %v10436 = vunpack.c.l.b16 %v9412
    %v10437 = vunpack.c.l.b16 %v9413
    %v10438 = vunpack.c.l.b16 %v9414
    %v10439 = vunpack.c.l.b16 %v9415
    %v10440 = vunpack.c.l.b16 %v9416
    %v10441 = vunpack.c.l.b16 %v9417
    %v10442 = vunpack.c.l.b16 %v9418
    %v10443 = vunpack.c.l.b16 %v9419
    %v10444 = vunpack.c.l.b16 %v9420
    %v10445 = vunpack.c.l.b16 %v9421
    %v10446 = vunpack.c.l.b16 %v9422
    %v10447 = vunpack.c.l.b16 %v9423
    %v10448 = vunpack.c.l.b16 %v9424
    %v10449 = vunpack.c.l.b16 %v9425
    %v10450 = vunpack.c.l.b16 %v9426
    %v10451 = vunpack.c.l.b16 %v9427
    %v10452 = vunpack.c.l.b16 %v9428
    %v10453 = vunpack.c.l.b16 %v9429
    %v10454 = vunpack.c.l.b16 %v9430
    %v10455 = vunpack.c.l.b16 %v9431
    %v10456 = vunpack.c.l.b16 %v9432
    %v10457 = vunpack.c.l.b16 %v9433
    %v10458 = vunpack.c.l.b16 %v9434
    %v10459 = vunpack.c.l.b16 %v9435
    %v10460 = vunpack.c.l.b16 %v9436
    %v10461 = vunpack.c.l.b16 %v9437
    %v10462 = vunpack.c.l.b16 %v9438
    %v10463 = vunpack.c.l.b16 %v9439
    %v10464 = vunpack.c.l.b16 %v9440
    %v10465 = vunpack.c.l.b16 %v9441
    %v10466 = vunpack.c.l.b16 %v9442
    %v10467 = vunpack.c.l.b16 %v9443
    %v10468 = vunpack.c.l.b16 %v9444
    %v10469 = vunpack.c.l.b16 %v9445
    %v10470 = vunpack.c.l.b16 %v9446
    %v10471 = vunpack.c.l.b16 %v9447
    %v10472 = vunpack.c.l.b16 %v9448
    %v10473 = vunpack.c.l.b16 %v9449
    %v10474 = vunpack.c.l.b16 %v9450
    %v10475 = vunpack.c.l.b16 %v9451
    %v10476 = vunpack.c.l.b16 %v9452
    %v10477 = vunpack.c.l.b16 %v9453
    %v10478 = vunpack.c.l.b16 %v9454
    %v10479 = vunpack.c.l.b16 %v9455
    %v10480 = vunpack.c.l.b16 %v9456
    %v10481 = vunpack.c.l.b16 %v9457
    %v10482 = vunpack.c.l.b16 %v9458
    %v10483 = vunpack.c.l.b16 %v9459
    %v10484 = vunpack.c.l.b16 %v9460
    %v10485 = vunpack.c.l.b16 %v9461
    %v10486 = vunpack.c.l.b16 %v9462
    %v10487 = vunpack.c.l.b16 %v9463
    %v10488 = vunpack.c.l.b16 %v9464
    %v10489 = vunpack.c.l.b16 %v9465
    %v10490 = vunpack.c.l.b16 %v9466
    %v10491 = vunpack.c.l.b16 %v9467
    %v10492 = vunpack.c.l.b16 %v9468
    %v10493 = vunpack.c.l.b16 %v9469
    %v10494 = vunpack.c.l.b16 %v9470
    %v10495 = vunpack.c.l.b16 %v9471
    %v10496 = vunpack.c.l.b16 %v9472
    %v10497 = vunpack.c.l.b16 %v9473
    %v10498 = vunpack.c.l.b16 %v9474
    %v10499 = vunpack.c.l.b16 %v9475
    %v10500 = vunpack.c.l.b16 %v9476
    %v10501 = vunpack.c.l.b16 %v9477
    %v10502 = vunpack.c.l.b16 %v9478
    %v10503 = vunpack.c.l.b16 %v9479
    %v10504 = vunpack.c.l.b16 %v9480
    %v10505 = vunpack.c.l.b16 %v9481
    %v10506 = vunpack.c.l.b16 %v9482
    %v10507 = vunpack.c.l.b16 %v9483
    %v10508 = vunpack.c.l.b16 %v9484
    %v10509 = vunpack.c.l.b16 %v9485
    %v10510 = vunpack.c.l.b16 %v9486
    %v10511 = vunpack.c.l.b16 %v9487
    %v10512 = vunpack.c.l.b16 %v9488
    %v10513 = vunpack.c.l.b16 %v9489
    %v10514 = vunpack.c.l.b16 %v9490
    %v10515 = vunpack.c.l.b16 %v9491
    %v10516 = vunpack.c.l.b16 %v9492
    %v10517 = vunpack.c.l.b16 %v9493
    %v10518 = vunpack.c.l.b16 %v9494
    %v10519 = vunpack.c.l.b16 %v9495
    %v10520 = vunpack.c.l.b16 %v9496
    %v10521 = vunpack.c.l.b16 %v9497
    %v10522 = vunpack.c.l.b16 %v9498
    %v10523 = vunpack.c.l.b16 %v9499
    %v10524 = vunpack.c.l.b16 %v9500
    %v10525 = vunpack.c.l.b16 %v9501
    %v10526 = vunpack.c.l.b16 %v9502
    %v10527 = vunpack.c.l.b16 %v9503
    %v10528 = vunpack.c.l.b16 %v9504
    %v10529 = vunpack.c.l.b16 %v9505
    %v10530 = vunpack.c.l.b16 %v9506
    %v10531 = vunpack.c.l.b16 %v9507
    %v10532 = vunpack.c.l.b16 %v9508
    %v10533 = vunpack.c.l.b16 %v9509
    %v10534 = vunpack.c.l.b16 %v9510
    %v10535 = vunpack.c.l.b16 %v9511
    %v10536 = vunpack.c.l.b16 %v9512
    %v10537 = vunpack.c.l.b16 %v9513
    %v10538 = vunpack.c.l.b16 %v9514
    %v10539 = vunpack.c.l.b16 %v9515
    %v10540 = vunpack.c.l.b16 %v9516
    %v10541 = vunpack.c.l.b16 %v9517
    %v10542 = vunpack.c.l.b16 %v9518
    %v10543 = vunpack.c.l.b16 %v9519
    %v10544 = vunpack.c.l.b16 %v9520
    %v10545 = vunpack.c.l.b16 %v9521
    %v10546 = vunpack.c.l.b16 %v9522
    %v10547 = vunpack.c.l.b16 %v9523
    %v10548 = vunpack.c.l.b16 %v9524
    %v10549 = vunpack.c.l.b16 %v9525
    %v10550 = vunpack.c.l.b16 %v9526
    %v10551 = vunpack.c.l.b16 %v9527
    %v10552 = vunpack.c.l.b16 %v9528
    %v10553 = vunpack.c.l.b16 %v9529
    %v10554 = vunpack.c.l.b16 %v9530
    %v10555 = vunpack.c.l.b16 %v9531
    %v10556 = vunpack.c.l.b16 %v9532
    %v10557 = vunpack.c.l.b16 %v9533
    %v10558 = vunpack.c.l.b16 %v9534
    %v10559 = vunpack.c.l.b16 %v9535
    %v10560 = vunpack.c.l.b16 %v9536
    %v10561 = vunpack.c.l.b16 %v9537
    %v10562 = vunpack.c.l.b16 %v9538
    %v10563 = vunpack.c.l.b16 %v9539
    %v10564 = vunpack.c.l.b16 %v9540
    %v10565 = vunpack.c.l.b16 %v9541
    %v10566 = vunpack.c.l.b16 %v9542
    %v10567 = vunpack.c.l.b16 %v9543
    %v10568 = vunpack.c.l.b16 %v9544
    %v10569 = vunpack.c.l.b16 %v9545
    %v10570 = vunpack.c.l.b16 %v9546
    %v10571 = vunpack.c.l.b16 %v9547
    %v10572 = vunpack.c.l.b16 %v9548
    %v10573 = vunpack.c.l.b16 %v9549
    %v10574 = vunpack.c.l.b16 %v9550
    %v10575 = vunpack.c.l.b16 %v9551
    %v10576 = vunpack.c.l.b16 %v9552
    %v10577 = vunpack.c.l.b16 %v9553
    %v10578 = vunpack.c.l.b16 %v9554
    %v10579 = vunpack.c.l.b16 %v9555
    %v10580 = vunpack.c.l.b16 %v9556
    %v10581 = vunpack.c.l.b16 %v9557
    %v10582 = vunpack.c.l.b16 %v9558
    %v10583 = vunpack.c.l.b16 %v9559
    %v10584 = vunpack.c.l.b16 %v9560
    %v10585 = vunpack.c.l.b16 %v9561
    %v10586 = vunpack.c.l.b16 %v9562
    %v10587 = vunpack.c.l.b16 %v9563
    %v10588 = vunpack.c.l.b16 %v9564
    %v10589 = vunpack.c.l.b16 %v9565
    %v10590 = vunpack.c.l.b16 %v9566
    %v10591 = vunpack.c.l.b16 %v9567
    %v10592 = vunpack.c.l.b16 %v9568
    %v10593 = vunpack.c.l.b16 %v9569
    %v10594 = vunpack.c.l.b16 %v9570
    %v10595 = vunpack.c.l.b16 %v9571
    %v10596 = vunpack.c.l.b16 %v9572
    %v10597 = vunpack.c.l.b16 %v9573
    %v10598 = vunpack.c.l.b16 %v9574
    %v10599 = vunpack.c.l.b16 %v9575
    %v10600 = vunpack.c.l.b16 %v9576
    %v10601 = vunpack.c.l.b16 %v9577
    %v10602 = vunpack.c.l.b16 %v9578
    %v10603 = vunpack.c.l.b16 %v9579
    %v10604 = vunpack.c.l.b16 %v9580
    %v10605 = vunpack.c.l.b16 %v9581
    %v10606 = vunpack.c.l.b16 %v9582
    %v10607 = vunpack.c.l.b16 %v9583
    %v10608 = vunpack.c.l.b16 %v9584
    %v10609 = vunpack.c.l.b16 %v9585
    %v10610 = vunpack.c.l.b16 %v9586
    %v10611 = vunpack.c.l.b16 %v9587
    %v10612 = vunpack.c.l.b16 %v9588
    %v10613 = vunpack.c.l.b16 %v9589
    %v10614 = vunpack.c.l.b16 %v9590
    %v10615 = vunpack.c.l.b16 %v9591
    %v10616 = vunpack.c.l.b16 %v9592
    %v10617 = vunpack.c.l.b16 %v9593
    %v10618 = vunpack.c.l.b16 %v9594
    %v10619 = vunpack.c.l.b16 %v9595
    %v10620 = vunpack.c.l.b16 %v9596
    %v10621 = vunpack.c.l.b16 %v9597
    %v10622 = vunpack.c.l.b16 %v9598
    %v10623 = vunpack.c.l.b16 %v9599
    %v10624 = vunpack.c.l.b16 %v9600
    %v10625 = vunpack.c.l.b16 %v9601
    %v10626 = vunpack.c.l.b16 %v9602
    %v10627 = vunpack.c.l.b16 %v9603
    %v10628 = vunpack.c.l.b16 %v9604
    %v10629 = vunpack.c.l.b16 %v9605
    %v10630 = vunpack.c.l.b16 %v9606
    %v10631 = vunpack.c.l.b16 %v9607
    %v10632 = vunpack.c.l.b16 %v9608
    %v10633 = vunpack.c.l.b16 %v9609
    %v10634 = vunpack.c.l.b16 %v9610
    %v10635 = vunpack.c.l.b16 %v9611
    %v10636 = vunpack.c.l.b16 %v9612
    %v10637 = vunpack.c.l.b16 %v9613
    %v10638 = vunpack.c.l.b16 %v9614
    %v10639 = vunpack.c.l.b16 %v9615
    %v10640 = vunpack.c.l.b16 %v9616
    %v10641 = vunpack.c.l.b16 %v9617
    %v10642 = vunpack.c.l.b16 %v9618
    %v10643 = vunpack.c.l.b16 %v9619
    %v10644 = vunpack.c.l.b16 %v9620
    %v10645 = vunpack.c.l.b16 %v9621
    %v10646 = vunpack.c.l.b16 %v9622
    %v10647 = vunpack.c.l.b16 %v9623
    %v10648 = vunpack.c.l.b16 %v9624
    %v10649 = vunpack.c.l.b16 %v9625
    %v10650 = vunpack.c.l.b16 %v9626
    %v10651 = vunpack.c.l.b16 %v9627
    %v10652 = vunpack.c.l.b16 %v9628
    %v10653 = vunpack.c.l.b16 %v9629
    %v10654 = vunpack.c.l.b16 %v9630
    %v10655 = vunpack.c.l.b16 %v9631
    %v10656 = vunpack.c.l.b16 %v9632
    %v10657 = vunpack.c.l.b16 %v9633
    %v10658 = vunpack.c.l.b16 %v9634
    %v10659 = vunpack.c.l.b16 %v9635
    %v10660 = vunpack.c.l.b16 %v9636
    %v10661 = vunpack.c.l.b16 %v9637
    %v10662 = vunpack.c.l.b16 %v9638
    %v10663 = vunpack.c.l.b16 %v9639
    %v10664 = vunpack.c.l.b16 %v9640
    %v10665 = vunpack.c.l.b16 %v9641
    %v10666 = vunpack.c.l.b16 %v9642
    %v10667 = vunpack.c.l.b16 %v9643
    %v10668 = vunpack.c.l.b16 %v9644
    %v10669 = vunpack.c.l.b16 %v9645
    %v10670 = vunpack.c.l.b16 %v9646
    %v10671 = vunpack.c.l.b16 %v9647
    %v10672 = vunpack.c.l.b16 %v9648
    %v10673 = vunpack.c.l.b16 %v9649
    %v10674 = vunpack.c.l.b16 %v9650
    %v10675 = vunpack.c.l.b16 %v9651
    %v10676 = vunpack.c.l.b16 %v9652
    %v10677 = vunpack.c.l.b16 %v9653
    %v10678 = vunpack.c.l.b16 %v9654
    %v10679 = vunpack.c.l.b16 %v9655
    %v10680 = vunpack.c.l.b16 %v9656
    %v10681 = vunpack.c.l.b16 %v9657
    %v10682 = vunpack.c.l.b16 %v9658
    %v10683 = vunpack.c.l.b16 %v9659
    %v10684 = vunpack.c.l.b16 %v9660
    %v10685 = vunpack.c.l.b16 %v9661
    %v10686 = vunpack.c.l.b16 %v9662
    %v10687 = vunpack.c.l.b16 %v9663
    %v10688 = vunpack.c.l.b16 %v9664
    %v10689 = vunpack.c.l.b16 %v9665
    %v10690 = vunpack.c.l.b16 %v9666
    %v10691 = vunpack.c.l.b16 %v9667
    %v10692 = vunpack.c.l.b16 %v9668
    %v10693 = vunpack.c.l.b16 %v9669
    %v10694 = vunpack.c.l.b16 %v9670
    %v10695 = vunpack.c.l.b16 %v9671
    %v10696 = vunpack.c.l.b16 %v9672
    %v10697 = vunpack.c.l.b16 %v9673
    %v10698 = vunpack.c.l.b16 %v9674
    %v10699 = vunpack.c.l.b16 %v9675
    %v10700 = vunpack.c.l.b16 %v9676
    %v10701 = vunpack.c.l.b16 %v9677
    %v10702 = vunpack.c.l.b16 %v9678
    %v10703 = vunpack.c.l.b16 %v9679
    %v10704 = vunpack.c.l.b16 %v9680
    %v10705 = vunpack.c.l.b16 %v9681
    %v10706 = vunpack.c.l.b16 %v9682
    %v10707 = vunpack.c.l.b16 %v9683
    %v10708 = vunpack.c.l.b16 %v9684
    %v10709 = vunpack.c.l.b16 %v9685
    %v10710 = vunpack.c.l.b16 %v9686
    %v10711 = vunpack.c.l.b16 %v9687
    %v10712 = vunpack.c.l.b16 %v9688
    %v10713 = vunpack.c.l.b16 %v9689
    %v10714 = vunpack.c.l.b16 %v9690
    %v10715 = vunpack.c.l.b16 %v9691
    %v10716 = vunpack.c.l.b16 %v9692
    %v10717 = vunpack.c.l.b16 %v9693
    %v10718 = vunpack.c.l.b16 %v9694
    %v10719 = vunpack.c.l.b16 %v9695
    %v10720 = vunpack.c.l.b16 %v9696
    %v10721 = vunpack.c.l.b16 %v9697
    %v10722 = vunpack.c.l.b16 %v9698
    %v10723 = vunpack.c.l.b16 %v9699
    %v10724 = vunpack.c.l.b16 %v9700
    %v10725 = vunpack.c.l.b16 %v9701
    %v10726 = vunpack.c.l.b16 %v9702
    %v10727 = vunpack.c.l.b16 %v9703
    %v10728 = vunpack.c.l.b16 %v9704
    %v10729 = vunpack.c.l.b16 %v9705
    %v10730 = vunpack.c.l.b16 %v9706
    %v10731 = vunpack.c.l.b16 %v9707
    %v10732 = vunpack.c.l.b16 %v9708
    %v10733 = vunpack.c.l.b16 %v9709
    %v10734 = vunpack.c.l.b16 %v9710
    %v10735 = vunpack.c.l.b16 %v9711
    %v10736 = vunpack.c.l.b16 %v9712
    %v10737 = vunpack.c.l.b16 %v9713
    %v10738 = vunpack.c.l.b16 %v9714
    %v10739 = vunpack.c.l.b16 %v9715
    %v10740 = vunpack.c.l.b16 %v9716
    %v10741 = vunpack.c.l.b16 %v9717
    %v10742 = vunpack.c.l.b16 %v9718
    %v10743 = vunpack.c.l.b16 %v9719
    %v10744 = vunpack.c.l.b16 %v9720
    %v10745 = vunpack.c.l.b16 %v9721
    %v10746 = vunpack.c.l.b16 %v9722
    %v10747 = vunpack.c.l.b16 %v9723
    %v10748 = vunpack.c.l.b16 %v9724
    %v10749 = vunpack.c.l.b16 %v9725
    %v10750 = vunpack.c.l.b16 %v9726
    %v10751 = vunpack.c.l.b16 %v9727
    %v10752 = vunpack.c.l.b16 %v9728
    %v10753 = vunpack.c.l.b16 %v9729
    %v10754 = vunpack.c.l.b16 %v9730
    %v10755 = vunpack.c.l.b16 %v9731
    %v10756 = vunpack.c.l.b16 %v9732
    %v10757 = vunpack.c.l.b16 %v9733
    %v10758 = vunpack.c.l.b16 %v9734
    %v10759 = vunpack.c.l.b16 %v9735
    %v10760 = vunpack.c.l.b16 %v9736
    %v10761 = vunpack.c.l.b16 %v9737
    %v10762 = vunpack.c.l.b16 %v9738
    %v10763 = vunpack.c.l.b16 %v9739
    %v10764 = vunpack.c.l.b16 %v9740
    %v10765 = vunpack.c.l.b16 %v9741
    %v10766 = vunpack.c.l.b16 %v9742
    %v10767 = vunpack.c.l.b16 %v9743
    %v10768 = vunpack.c.l.b16 %v9744
    %v10769 = vunpack.c.l.b16 %v9745
    %v10770 = vunpack.c.l.b16 %v9746
    %v10771 = vunpack.c.l.b16 %v9747
    %v10772 = vunpack.c.l.b16 %v9748
    %v10773 = vunpack.c.l.b16 %v9749
    %v10774 = vunpack.c.l.b16 %v9750
    %v10775 = vunpack.c.l.b16 %v9751
    %v10776 = vunpack.c.l.b16 %v9752
    %v10777 = vunpack.c.l.b16 %v9753
    %v10778 = vunpack.c.l.b16 %v9754
    %v10779 = vunpack.c.l.b16 %v9755
    %v10780 = vunpack.c.l.b16 %v9756
    %v10781 = vunpack.c.l.b16 %v9757
    %v10782 = vunpack.c.l.b16 %v9758
    %v10783 = vunpack.c.l.b16 %v9759
    %v10784 = vunpack.c.l.b16 %v9760
    %v10785 = vunpack.c.l.b16 %v9761
    %v10786 = vunpack.c.l.b16 %v9762
    %v10787 = vunpack.c.l.b16 %v9763
    %v10788 = vunpack.c.l.b16 %v9764
    %v10789 = vunpack.c.l.b16 %v9765
    %v10790 = vunpack.c.l.b16 %v9766
    %v10791 = vunpack.c.l.b16 %v9767
    %v10792 = vunpack.c.l.b16 %v9768
    %v10793 = vunpack.c.l.b16 %v9769
    %v10794 = vunpack.c.l.b16 %v9770
    %v10795 = vunpack.c.l.b16 %v9771
    %v10796 = vunpack.c.l.b16 %v9772
    %v10797 = vunpack.c.l.b16 %v9773
    %v10798 = vunpack.c.l.b16 %v9774
    %v10799 = vunpack.c.l.b16 %v9775
    %v10800 = vunpack.c.l.b16 %v9776
    %v10801 = vunpack.c.l.b16 %v9777
    %v10802 = vunpack.c.l.b16 %v9778
    %v10803 = vunpack.c.l.b16 %v9779
    %v10804 = vunpack.c.l.b16 %v9780
    %v10805 = vunpack.c.l.b16 %v9781
    %v10806 = vunpack.c.l.b16 %v9782
    %v10807 = vunpack.c.l.b16 %v9783
    %v10808 = vunpack.c.l.b16 %v9784
    %v10809 = vunpack.c.l.b16 %v9785
    %v10810 = vunpack.c.l.b16 %v9786
    %v10811 = vunpack.c.l.b16 %v9787
    %v10812 = vunpack.c.l.b16 %v9788
    %v10813 = vunpack.c.l.b16 %v9789
    %v10814 = vunpack.c.l.b16 %v9790
    %v10815 = vunpack.c.l.b16 %v9791
    %v10816 = vpack.c.b16 %v10305, %v10304
    %v10817 = vpack.c.b16 %v10307, %v10306
    %v10818 = vpack.c.b16 %v10309, %v10308
    %v10819 = vpack.c.b16 %v10311, %v10310
    %v10820 = vpack.c.b16 %v10313, %v10312
    %v10821 = vpack.c.b16 %v10315, %v10314
    %v10822 = vpack.c.b16 %v10317, %v10316
    %v10823 = vpack.c.b16 %v10319, %v10318
    %v10824 = vpack.c.b16 %v10321, %v10320
    %v10825 = vpack.c.b16 %v10323, %v10322
    %v10826 = vpack.c.b16 %v10325, %v10324
    %v10827 = vpack.c.b16 %v10327, %v10326
    %v10828 = vpack.c.b16 %v10329, %v10328
    %v10829 = vpack.c.b16 %v10331, %v10330
    %v10830 = vpack.c.b16 %v10333, %v10332
    %v10831 = vpack.c.b16 %v10335, %v10334
    %v10832 = vpack.c.b16 %v10337, %v10336
    %v10833 = vpack.c.b16 %v10339, %v10338
    %v10834 = vpack.c.b16 %v10341, %v10340
    %v10835 = vpack.c.b16 %v10343, %v10342
    %v10836 = vpack.c.b16 %v10345, %v10344
    %v10837 = vpack.c.b16 %v10347, %v10346
    %v10838 = vpack.c.b16 %v10349, %v10348
    %v10839 = vpack.c.b16 %v10351, %v10350
    %v10840 = vpack.c.b16 %v10353, %v10352
    %v10841 = vpack.c.b16 %v10355, %v10354
    %v10842 = vpack.c.b16 %v10357, %v10356
    %v10843 = vpack.c.b16 %v10359, %v10358
    %v10844 = vpack.c.b16 %v10361, %v10360
    %v10845 = vpack.c.b16 %v10363, %v10362
    %v10846 = vpack.c.b16 %v10365, %v10364
    %v10847 = vpack.c.b16 %v10367, %v10366
    %v10848 = vpack.c.b16 %v10369, %v10368
    %v10849 = vpack.c.b16 %v10371, %v10370
    %v10850 = vpack.c.b16 %v10373, %v10372
    %v10851 = vpack.c.b16 %v10375, %v10374
    %v10852 = vpack.c.b16 %v10377, %v10376
    %v10853 = vpack.c.b16 %v10379, %v10378
    %v10854 = vpack.c.b16 %v10381, %v10380
    %v10855 = vpack.c.b16 %v10383, %v10382
    %v10856 = vpack.c.b16 %v10385, %v10384
    %v10857 = vpack.c.b16 %v10387, %v10386
    %v10858 = vpack.c.b16 %v10389, %v10388
    %v10859 = vpack.c.b16 %v10391, %v10390
    %v10860 = vpack.c.b16 %v10393, %v10392
    %v10861 = vpack.c.b16 %v10395, %v10394
    %v10862 = vpack.c.b16 %v10397, %v10396
    %v10863 = vpack.c.b16 %v10399, %v10398
    %v10864 = vpack.c.b16 %v10401, %v10400
    %v10865 = vpack.c.b16 %v10403, %v10402
    %v10866 = vpack.c.b16 %v10405, %v10404
    %v10867 = vpack.c.b16 %v10407, %v10406
    %v10868 = vpack.c.b16 %v10409, %v10408
    %v10869 = vpack.c.b16 %v10411, %v10410
    %v10870 = vpack.c.b16 %v10413, %v10412
    %v10871 = vpack.c.b16 %v10415, %v10414
    %v10872 = vpack.c.b16 %v10417, %v10416
    %v10873 = vpack.c.b16 %v10419, %v10418
    %v10874 = vpack.c.b16 %v10421, %v10420
    %v10875 = vpack.c.b16 %v10423, %v10422
    %v10876 = vpack.c.b16 %v10425, %v10424
    %v10877 = vpack.c.b16 %v10427, %v10426
    %v10878 = vpack.c.b16 %v10429, %v10428
    %v10879 = vpack.c.b16 %v10431, %v10430
    %v10880 = vpack.c.b16 %v10433, %v10432
    %v10881 = vpack.c.b16 %v10435, %v10434
    %v10882 = vpack.c.b16 %v10437, %v10436
    %v10883 = vpack.c.b16 %v10439, %v10438
    %v10884 = vpack.c.b16 %v10441, %v10440
    %v10885 = vpack.c.b16 %v10443, %v10442
    %v10886 = vpack.c.b16 %v10445, %v10444
    %v10887 = vpack.c.b16 %v10447, %v10446
    %v10888 = vpack.c.b16 %v10449, %v10448
    %v10889 = vpack.c.b16 %v10451, %v10450
    %v10890 = vpack.c.b16 %v10453, %v10452
    %v10891 = vpack.c.b16 %v10455, %v10454
    %v10892 = vpack.c.b16 %v10457, %v10456
    %v10893 = vpack.c.b16 %v10459, %v10458
    %v10894 = vpack.c.b16 %v10461, %v10460
    %v10895 = vpack.c.b16 %v10463, %v10462
    %v10896 = vpack.c.b16 %v10465, %v10464
    %v10897 = vpack.c.b16 %v10467, %v10466
    %v10898 = vpack.c.b16 %v10469, %v10468
    %v10899 = vpack.c.b16 %v10471, %v10470
    %v10900 = vpack.c.b16 %v10473, %v10472
    %v10901 = vpack.c.b16 %v10475, %v10474
    %v10902 = vpack.c.b16 %v10477, %v10476
    %v10903 = vpack.c.b16 %v10479, %v10478
    %v10904 = vpack.c.b16 %v10481, %v10480
    %v10905 = vpack.c.b16 %v10483, %v10482
    %v10906 = vpack.c.b16 %v10485, %v10484
    %v10907 = vpack.c.b16 %v10487, %v10486
    %v10908 = vpack.c.b16 %v10489, %v10488
    %v10909 = vpack.c.b16 %v10491, %v10490
    %v10910 = vpack.c.b16 %v10493, %v10492
    %v10911 = vpack.c.b16 %v10495, %v10494
    %v10912 = vpack.c.b16 %v10497, %v10496
    %v10913 = vpack.c.b16 %v10499, %v10498
    %v10914 = vpack.c.b16 %v10501, %v10500
    %v10915 = vpack.c.b16 %v10503, %v10502
    %v10916 = vpack.c.b16 %v10505, %v10504
    %v10917 = vpack.c.b16 %v10507, %v10506
    %v10918 = vpack.c.b16 %v10509, %v10508
    %v10919 = vpack.c.b16 %v10511, %v10510
    %v10920 = vpack.c.b16 %v10513, %v10512
    %v10921 = vpack.c.b16 %v10515, %v10514
    %v10922 = vpack.c.b16 %v10517, %v10516
    %v10923 = vpack.c.b16 %v10519, %v10518
    %v10924 = vpack.c.b16 %v10521, %v10520
    %v10925 = vpack.c.b16 %v10523, %v10522
    %v10926 = vpack.c.b16 %v10525, %v10524
    %v10927 = vpack.c.b16 %v10527, %v10526
    %v10928 = vpack.c.b16 %v10529, %v10528
    %v10929 = vpack.c.b16 %v10531, %v10530
    %v10930 = vpack.c.b16 %v10533, %v10532
    %v10931 = vpack.c.b16 %v10535, %v10534
    %v10932 = vpack.c.b16 %v10537, %v10536
    %v10933 = vpack.c.b16 %v10539, %v10538
    %v10934 = vpack.c.b16 %v10541, %v10540
    %v10935 = vpack.c.b16 %v10543, %v10542
    %v10936 = vpack.c.b16 %v10545, %v10544
    %v10937 = vpack.c.b16 %v10547, %v10546
    %v10938 = vpack.c.b16 %v10549, %v10548
    %v10939 = vpack.c.b16 %v10551, %v10550
    %v10940 = vpack.c.b16 %v10553, %v10552
    %v10941 = vpack.c.b16 %v10555, %v10554
    %v10942 = vpack.c.b16 %v10557, %v10556
    %v10943 = vpack.c.b16 %v10559, %v10558
    %v10944 = vpack.c.b16 %v10561, %v10560
    %v10945 = vpack.c.b16 %v10563, %v10562
    %v10946 = vpack.c.b16 %v10565, %v10564
    %v10947 = vpack.c.b16 %v10567, %v10566
    %v10948 = vpack.c.b16 %v10569, %v10568
    %v10949 = vpack.c.b16 %v10571, %v10570
    %v10950 = vpack.c.b16 %v10573, %v10572
    %v10951 = vpack.c.b16 %v10575, %v10574
    %v10952 = vpack.c.b16 %v10577, %v10576
    %v10953 = vpack.c.b16 %v10579, %v10578
    %v10954 = vpack.c.b16 %v10581, %v10580
    %v10955 = vpack.c.b16 %v10583, %v10582
    %v10956 = vpack.c.b16 %v10585, %v10584
    %v10957 = vpack.c.b16 %v10587, %v10586
    %v10958 = vpack.c.b16 %v10589, %v10588
    %v10959 = vpack.c.b16 %v10591, %v10590
    %v10960 = vpack.c.b16 %v10593, %v10592
    %v10961 = vpack.c.b16 %v10595, %v10594
    %v10962 = vpack.c.b16 %v10597, %v10596
    %v10963 = vpack.c.b16 %v10599, %v10598
    %v10964 = vpack.c.b16 %v10601, %v10600
    %v10965 = vpack.c.b16 %v10603, %v10602
    %v10966 = vpack.c.b16 %v10605, %v10604
    %v10967 = vpack.c.b16 %v10607, %v10606
    %v10968 = vpack.c.b16 %v10609, %v10608
    %v10969 = vpack.c.b16 %v10611, %v10610
    %v10970 = vpack.c.b16 %v10613, %v10612
    %v10971 = vpack.c.b16 %v10615, %v10614
    %v10972 = vpack.c.b16 %v10617, %v10616
    %v10973 = vpack.c.b16 %v10619, %v10618
    %v10974 = vpack.c.b16 %v10621, %v10620
    %v10975 = vpack.c.b16 %v10623, %v10622
    %v10976 = vpack.c.b16 %v10625, %v10624
    %v10977 = vpack.c.b16 %v10627, %v10626
    %v10978 = vpack.c.b16 %v10629, %v10628
    %v10979 = vpack.c.b16 %v10631, %v10630
    %v10980 = vpack.c.b16 %v10633, %v10632
    %v10981 = vpack.c.b16 %v10635, %v10634
    %v10982 = vpack.c.b16 %v10637, %v10636
    %v10983 = vpack.c.b16 %v10639, %v10638
    %v10984 = vpack.c.b16 %v10641, %v10640
    %v10985 = vpack.c.b16 %v10643, %v10642
    %v10986 = vpack.c.b16 %v10645, %v10644
    %v10987 = vpack.c.b16 %v10647, %v10646
    %v10988 = vpack.c.b16 %v10649, %v10648
    %v10989 = vpack.c.b16 %v10651, %v10650
    %v10990 = vpack.c.b16 %v10653, %v10652
    %v10991 = vpack.c.b16 %v10655, %v10654
    %v10992 = vpack.c.b16 %v10657, %v10656
    %v10993 = vpack.c.b16 %v10659, %v10658
    %v10994 = vpack.c.b16 %v10661, %v10660
    %v10995 = vpack.c.b16 %v10663, %v10662
    %v10996 = vpack.c.b16 %v10665, %v10664
    %v10997 = vpack.c.b16 %v10667, %v10666
    %v10998 = vpack.c.b16 %v10669, %v10668
    %v10999 = vpack.c.b16 %v10671, %v10670
    %v11000 = vpack.c.b16 %v10673, %v10672
    %v11001 = vpack.c.b16 %v10675, %v10674
    %v11002 = vpack.c.b16 %v10677, %v10676
    %v11003 = vpack.c.b16 %v10679, %v10678
    %v11004 = vpack.c.b16 %v10681, %v10680
    %v11005 = vpack.c.b16 %v10683, %v10682
    %v11006 = vpack.c.b16 %v10685, %v10684
    %v11007 = vpack.c.b16 %v10687, %v10686
    %v11008 = vpack.c.b16 %v10689, %v10688
    %v11009 = vpack.c.b16 %v10691, %v10690
    %v11010 = vpack.c.b16 %v10693, %v10692
    %v11011 = vpack.c.b16 %v10695, %v10694
    %v11012 = vpack.c.b16 %v10697, %v10696
    %v11013 = vpack.c.b16 %v10699, %v10698
    %v11014 = vpack.c.b16 %v10701, %v10700
    %v11015 = vpack.c.b16 %v10703, %v10702
    %v11016 = vpack.c.b16 %v10705, %v10704
    %v11017 = vpack.c.b16 %v10707, %v10706
    %v11018 = vpack.c.b16 %v10709, %v10708
    %v11019 = vpack.c.b16 %v10711, %v10710
    %v11020 = vpack.c.b16 %v10713, %v10712
    %v11021 = vpack.c.b16 %v10715, %v10714
    %v11022 = vpack.c.b16 %v10717, %v10716
    %v11023 = vpack.c.b16 %v10719, %v10718
    %v11024 = vpack.c.b16 %v10721, %v10720
    %v11025 = vpack.c.b16 %v10723, %v10722
    %v11026 = vpack.c.b16 %v10725, %v10724
    %v11027 = vpack.c.b16 %v10727, %v10726
    %v11028 = vpack.c.b16 %v10729, %v10728
    %v11029 = vpack.c.b16 %v10731, %v10730
    %v11030 = vpack.c.b16 %v10733, %v10732
    %v11031 = vpack.c.b16 %v10735, %v10734
    %v11032 = vpack.c.b16 %v10737, %v10736
    %v11033 = vpack.c.b16 %v10739, %v10738
    %v11034 = vpack.c.b16 %v10741, %v10740
    %v11035 = vpack.c.b16 %v10743, %v10742
    %v11036 = vpack.c.b16 %v10745, %v10744
    %v11037 = vpack.c.b16 %v10747, %v10746
    %v11038 = vpack.c.b16 %v10749, %v10748
    %v11039 = vpack.c.b16 %v10751, %v10750
    %v11040 = vpack.c.b16 %v10753, %v10752
    %v11041 = vpack.c.b16 %v10755, %v10754
    %v11042 = vpack.c.b16 %v10757, %v10756
    %v11043 = vpack.c.b16 %v10759, %v10758
    %v11044 = vpack.c.b16 %v10761, %v10760
    %v11045 = vpack.c.b16 %v10763, %v10762
    %v11046 = vpack.c.b16 %v10765, %v10764
    %v11047 = vpack.c.b16 %v10767, %v10766
    %v11048 = vpack.c.b16 %v10769, %v10768
    %v11049 = vpack.c.b16 %v10771, %v10770
    %v11050 = vpack.c.b16 %v10773, %v10772
    %v11051 = vpack.c.b16 %v10775, %v10774
    %v11052 = vpack.c.b16 %v10777, %v10776
    %v11053 = vpack.c.b16 %v10779, %v10778
    %v11054 = vpack.c.b16 %v10781, %v10780
    %v11055 = vpack.c.b16 %v10783, %v10782
    %v11056 = vpack.c.b16 %v10785, %v10784
    %v11057 = vpack.c.b16 %v10787, %v10786
    %v11058 = vpack.c.b16 %v10789, %v10788
    %v11059 = vpack.c.b16 %v10791, %v10790
    %v11060 = vpack.c.b16 %v10793, %v10792
    %v11061 = vpack.c.b16 %v10795, %v10794
    %v11062 = vpack.c.b16 %v10797, %v10796
    %v11063 = vpack.c.b16 %v10799, %v10798
    %v11064 = vpack.c.b16 %v10801, %v10800
    %v11065 = vpack.c.b16 %v10803, %v10802
    %v11066 = vpack.c.b16 %v10805, %v10804
    %v11067 = vpack.c.b16 %v10807, %v10806
    %v11068 = vpack.c.b16 %v10809, %v10808
    %v11069 = vpack.c.b16 %v10811, %v10810
    %v11070 = vpack.c.b16 %v10813, %v10812
    %v11071 = vpack.c.b16 %v10815, %v10814
    %11328 = vmatprep.subr.bf16.mxu0 0
    %11329 = vmatpush1.bf16.msra.mxu0 %v10816
    %11330 = vmatprep.subr.bf16.mxu0 0
    %11331 = vmatpush1.bf16.msra.mxu0 %v10817
    %11332 = vmatprep.subr.bf16.mxu0 0
    %11333 = vmatpush1.bf16.msra.mxu0 %v10818
    %11334 = vmatprep.subr.bf16.mxu0 0
    %11335 = vmatpush1.bf16.msra.mxu0 %v10819
    %11336 = vmatprep.subr.bf16.mxu0 0
    %11337 = vmatpush1.bf16.msra.mxu0 %v10820
    %11338 = vmatprep.subr.bf16.mxu0 0
    %11339 = vmatpush1.bf16.msra.mxu0 %v10821
    %11340 = vmatprep.subr.bf16.mxu0 0
    %11341 = vmatpush1.bf16.msra.mxu0 %v10822
    %11342 = vmatprep.subr.bf16.mxu0 0
    %11343 = vmatpush1.bf16.msra.mxu0 %v10823
    %11344 = vmatprep.subr.bf16.mxu0 0
    %11345 = vmatpush1.bf16.msra.mxu0 %v10824
    %11346 = vmatprep.subr.bf16.mxu0 0
    %11347 = vmatpush1.bf16.msra.mxu0 %v10825
    %11348 = vmatprep.subr.bf16.mxu0 0
    %11349 = vmatpush1.bf16.msra.mxu0 %v10826
    %11350 = vmatprep.subr.bf16.mxu0 0
    %11351 = vmatpush1.bf16.msra.mxu0 %v10827
    %11352 = vmatprep.subr.bf16.mxu0 0
    %11353 = vmatpush1.bf16.msra.mxu0 %v10828
    %11354 = vmatprep.subr.bf16.mxu0 0
    %11355 = vmatpush1.bf16.msra.mxu0 %v10829
    %11356 = vmatprep.subr.bf16.mxu0 0
    %11357 = vmatpush1.bf16.msra.mxu0 %v10830
    %11358 = vmatprep.subr.bf16.mxu0 0
    %11359 = vmatpush1.bf16.msra.mxu0 %v10831
    %11360 = vmatprep.mubr.bf16.mxu0 %v9217
    %11361 = vmatmul.mubr.bf16.gmra.mrb[0].mxu0 %v9216
    %v11362 = vpop.f32.mrb[0].mxu0
    %v11363 = vadd.f32 0.0, %v11362
    %v11364 = vpop.f32.mrb[0].mxu0
    %v11365 = vpop.f32.mrb[0].mxu0
    %v11366 = vadd.f32 0.0, %v11365
    %v11367 = vpop.f32.mrb[0].mxu0
    %11368 = vmatprep.mubr.bf16.mxu0 %v9249
    %11369 = vmatmul.mubr.bf16.gmra.mrb[0].mxu0 %v9248
    %v11370 = vpop.f32.mrb[0].mxu0
    %v11371 = vadd.f32 0.0, %v11370
    %v11372 = vpop.f32.mrb[0].mxu0
    %v11373 = vpop.f32.mrb[0].mxu0
    %v11374 = vadd.f32 0.0, %v11373
    %v11375 = vpop.f32.mrb[0].mxu0
    %11376 = vdwg.mxu0
    %11377 = vmatprep.subr.bf16.mxu0 0
    %11378 = vmatpush1.bf16.msra.mxu0 %v10832
    %11379 = vmatprep.subr.bf16.mxu0 0
    %11380 = vmatpush1.bf16.msra.mxu0 %v10833
    %11381 = vmatprep.subr.bf16.mxu0 0
    %11382 = vmatpush1.bf16.msra.mxu0 %v10834
    %11383 = vmatprep.subr.bf16.mxu0 0
    %11384 = vmatpush1.bf16.msra.mxu0 %v10835
    %11385 = vmatprep.subr.bf16.mxu0 0
    %11386 = vmatpush1.bf16.msra.mxu0 %v10836
    %11387 = vmatprep.subr.bf16.mxu0 0
    %11388 = vmatpush1.bf16.msra.mxu0 %v10837
    %11389 = vmatprep.subr.bf16.mxu0 0
    %11390 = vmatpush1.bf16.msra.mxu0 %v10838
    %11391 = vmatprep.subr.bf16.mxu0 0
    %11392 = vmatpush1.bf16.msra.mxu0 %v10839
    %11393 = vmatprep.subr.bf16.mxu0 0
    %11394 = vmatpush1.bf16.msra.mxu0 %v10840
    %11395 = vmatprep.subr.bf16.mxu0 0
    %11396 = vmatpush1.bf16.msra.mxu0 %v10841
    %11397 = vmatprep.subr.bf16.mxu0 0
    %11398 = vmatpush1.bf16.msra.mxu0 %v10842
    %11399 = vmatprep.subr.bf16.mxu0 0
    %11400 = vmatpush1.bf16.msra.mxu0 %v10843
    %11401 = vmatprep.subr.bf16.mxu0 0
    %11402 = vmatpush1.bf16.msra.mxu0 %v10844
    %11403 = vmatprep.subr.bf16.mxu0 0
    %11404 = vmatpush1.bf16.msra.mxu0 %v10845
    %11405 = vmatprep.subr.bf16.mxu0 0
    %11406 = vmatpush1.bf16.msra.mxu0 %v10846
    %11407 = vmatprep.subr.bf16.mxu0 0
    %11408 = vmatpush1.bf16.msra.mxu0 %v10847
    %11409 = vmatprep.mubr.bf16.mxu0 %v9219
    %11410 = vmatmul.mubr.bf16.gmra.mrb[0].mxu0 %v9218
    %v11411 = vpop.f32.mrb[0].mxu0
    %v11412 = vadd.f32 %v11363, %v11411
    %v11413 = vpop.f32.mrb[0].mxu0
    %v11414 = vpop.f32.mrb[0].mxu0
    %v11415 = vadd.f32 %v11366, %v11414
    %v11416 = vpop.f32.mrb[0].mxu0
    %11417 = vmatprep.mubr.bf16.mxu0 %v9251
    %11418 = vmatmul.mubr.bf16.gmra.mrb[0].mxu0 %v9250
    %v11419 = vpop.f32.mrb[0].mxu0
    %v11420 = vadd.f32 %v11371, %v11419
    %v11421 = vpop.f32.mrb[0].mxu0
    %v11422 = vpop.f32.mrb[0].mxu0
    %v11423 = vadd.f32 %v11374, %v11422
    %v11424 = vpop.f32.mrb[0].mxu0
    %11425 = vdwg.mxu0
    %11426 = vmatprep.subr.bf16.mxu0 0
    %11427 = vmatpush1.bf16.msra.mxu0 %v10848
    %11428 = vmatprep.subr.bf16.mxu0 0
    %11429 = vmatpush1.bf16.msra.mxu0 %v10849
    %11430 = vmatprep.subr.bf16.mxu0 0
    %11431 = vmatpush1.bf16.msra.mxu0 %v10850
    %11432 = vmatprep.subr.bf16.mxu0 0
    %11433 = vmatpush1.bf16.msra.mxu0 %v10851
    %11434 = vmatprep.subr.bf16.mxu0 0
    %11435 = vmatpush1.bf16.msra.mxu0 %v10852
    %11436 = vmatprep.subr.bf16.mxu0 0
    %11437 = vmatpush1.bf16.msra.mxu0 %v10853
    %11438 = vmatprep.subr.bf16.mxu0 0
    %11439 = vmatpush1.bf16.msra.mxu0 %v10854
    %11440 = vmatprep.subr.bf16.mxu0 0
    %11441 = vmatpush1.bf16.msra.mxu0 %v10855
    %11442 = vmatprep.subr.bf16.mxu0 0
    %11443 = vmatpush1.bf16.msra.mxu0 %v10856
    %11444 = vmatprep.subr.bf16.mxu0 0
    %11445 = vmatpush1.bf16.msra.mxu0 %v10857
    %11446 = vmatprep.subr.bf16.mxu0 0
    %11447 = vmatpush1.bf16.msra.mxu0 %v10858
    %11448 = vmatprep.subr.bf16.mxu0 0
    %11449 = vmatpush1.bf16.msra.mxu0 %v10859
    %11450 = vmatprep.subr.bf16.mxu0 0
    %11451 = vmatpush1.bf16.msra.mxu0 %v10860
    %11452 = vmatprep.subr.bf16.mxu0 0
    %11453 = vmatpush1.bf16.msra.mxu0 %v10861
    %11454 = vmatprep.subr.bf16.mxu0 0
    %11455 = vmatpush1.bf16.msra.mxu0 %v10862
    %11456 = vmatprep.subr.bf16.mxu0 0
    %11457 = vmatpush1.bf16.msra.mxu0 %v10863
    %11458 = vmatprep.mubr.bf16.mxu0 %v9221
    %11459 = vmatmul.mubr.bf16.gmra.mrb[0].mxu0 %v9220
    %v11460 = vpop.f32.mrb[0].mxu0
    %v11461 = vadd.f32 %v11412, %v11460
    %v11462 = vpop.f32.mrb[0].mxu0
    %v11463 = vpop.f32.mrb[0].mxu0
    %v11464 = vadd.f32 %v11415, %v11463
    %v11465 = vpop.f32.mrb[0].mxu0
    %11466 = vmatprep.mubr.bf16.mxu0 %v9253
    %11467 = vmatmul.mubr.bf16.gmra.mrb[0].mxu0 %v9252
    %v11468 = vpop.f32.mrb[0].mxu0
    %v11469 = vadd.f32 %v11420, %v11468
    %v11470 = vpop.f32.mrb[0].mxu0
    %v11471 = vpop.f32.mrb[0].mxu0
    %v11472 = vadd.f32 %v11423, %v11471
    %v11473 = vpop.f32.mrb[0].mxu0
    %11474 = vdwg.mxu0
    %11475 = vmatprep.subr.bf16.mxu0 0
    %11476 = vmatpush1.bf16.msra.mxu0 %v10864
    %11477 = vmatprep.subr.bf16.mxu0 0
    %11478 = vmatpush1.bf16.msra.mxu0 %v10865
    %11479 = vmatprep.subr.bf16.mxu0 0
    %11480 = vmatpush1.bf16.msra.mxu0 %v10866
    %11481 = vmatprep.subr.bf16.mxu0 0
    %11482 = vmatpush1.bf16.msra.mxu0 %v10867
    %11483 = vmatprep.subr.bf16.mxu0 0
    %11484 = vmatpush1.bf16.msra.mxu0 %v10868
    %11485 = vmatprep.subr.bf16.mxu0 0
    %11486 = vmatpush1.bf16.msra.mxu0 %v10869
    %11487 = vmatprep.subr.bf16.mxu0 0
    %11488 = vmatpush1.bf16.msra.mxu0 %v10870
    %11489 = vmatprep.subr.bf16.mxu0 0
    %11490 = vmatpush1.bf16.msra.mxu0 %v10871
    %11491 = vmatprep.subr.bf16.mxu0 0
    %11492 = vmatpush1.bf16.msra.mxu0 %v10872
    %11493 = vmatprep.subr.bf16.mxu0 0
    %11494 = vmatpush1.bf16.msra.mxu0 %v10873
    %11495 = vmatprep.subr.bf16.mxu0 0
    %11496 = vmatpush1.bf16.msra.mxu0 %v10874
    %11497 = vmatprep.subr.bf16.mxu0 0
    %11498 = vmatpush1.bf16.msra.mxu0 %v10875
    %11499 = vmatprep.subr.bf16.mxu0 0
    %11500 = vmatpush1.bf16.msra.mxu0 %v10876
    %11501 = vmatprep.subr.bf16.mxu0 0
    %11502 = vmatpush1.bf16.msra.mxu0 %v10877
    %11503 = vmatprep.subr.bf16.mxu0 0
    %11504 = vmatpush1.bf16.msra.mxu0 %v10878
    %11505 = vmatprep.subr.bf16.mxu0 0
    %11506 = vmatpush1.bf16.msra.mxu0 %v10879
    %11507 = vmatprep.mubr.bf16.mxu0 %v9223
    %11508 = vmatmul.mubr.bf16.gmra.mrb[0].mxu0 %v9222
    %v11509 = vpop.f32.mrb[0].mxu0
    %v11510 = vadd.f32 %v11461, %v11509
    %v11511 = vpop.f32.mrb[0].mxu0
    %v11512 = vpop.f32.mrb[0].mxu0
    %v11513 = vadd.f32 %v11464, %v11512
    %v11514 = vpop.f32.mrb[0].mxu0
    %11515 = vmatprep.mubr.bf16.mxu0 %v9255
    %11516 = vmatmul.mubr.bf16.gmra.mrb[0].mxu0 %v9254
    %v11517 = vpop.f32.mrb[0].mxu0
    %v11518 = vadd.f32 %v11469, %v11517
    %v11519 = vpop.f32.mrb[0].mxu0
    %v11520 = vpop.f32.mrb[0].mxu0
    %v11521 = vadd.f32 %v11472, %v11520
    %v11522 = vpop.f32.mrb[0].mxu0
    %11523 = vdwg.mxu0
    %11524 = vmatprep.subr.bf16.mxu0 0
    %11525 = vmatpush1.bf16.msra.mxu0 %v10880
    %11526 = vmatprep.subr.bf16.mxu0 0
    %11527 = vmatpush1.bf16.msra.mxu0 %v10881
    %11528 = vmatprep.subr.bf16.mxu0 0
    %11529 = vmatpush1.bf16.msra.mxu0 %v10882
    %11530 = vmatprep.subr.bf16.mxu0 0
    %11531 = vmatpush1.bf16.msra.mxu0 %v10883
    %11532 = vmatprep.subr.bf16.mxu0 0
    %11533 = vmatpush1.bf16.msra.mxu0 %v10884
    %11534 = vmatprep.subr.bf16.mxu0 0
    %11535 = vmatpush1.bf16.msra.mxu0 %v10885
    %11536 = vmatprep.subr.bf16.mxu0 0
    %11537 = vmatpush1.bf16.msra.mxu0 %v10886
    %11538 = vmatprep.subr.bf16.mxu0 0
    %11539 = vmatpush1.bf16.msra.mxu0 %v10887
    %11540 = vmatprep.subr.bf16.mxu0 0
    %11541 = vmatpush1.bf16.msra.mxu0 %v10888
    %11542 = vmatprep.subr.bf16.mxu0 0
    %11543 = vmatpush1.bf16.msra.mxu0 %v10889
    %11544 = vmatprep.subr.bf16.mxu0 0
    %11545 = vmatpush1.bf16.msra.mxu0 %v10890
    %11546 = vmatprep.subr.bf16.mxu0 0
    %11547 = vmatpush1.bf16.msra.mxu0 %v10891
    %11548 = vmatprep.subr.bf16.mxu0 0
    %11549 = vmatpush1.bf16.msra.mxu0 %v10892
    %11550 = vmatprep.subr.bf16.mxu0 0
    %11551 = vmatpush1.bf16.msra.mxu0 %v10893
    %11552 = vmatprep.subr.bf16.mxu0 0
    %11553 = vmatpush1.bf16.msra.mxu0 %v10894
    %11554 = vmatprep.subr.bf16.mxu0 0
    %11555 = vmatpush1.bf16.msra.mxu0 %v10895
    %11556 = vmatprep.mubr.bf16.mxu0 %v9225
    %11557 = vmatmul.mubr.bf16.gmra.mrb[0].mxu0 %v9224
    %v11558 = vpop.f32.mrb[0].mxu0
    %v11559 = vadd.f32 %v11510, %v11558
    %v11560 = vpop.f32.mrb[0].mxu0
    %v11561 = vpop.f32.mrb[0].mxu0
    %v11562 = vadd.f32 %v11513, %v11561
    %v11563 = vpop.f32.mrb[0].mxu0
    %11564 = vmatprep.mubr.bf16.mxu0 %v9257
    %11565 = vmatmul.mubr.bf16.gmra.mrb[0].mxu0 %v9256
    %v11566 = vpop.f32.mrb[0].mxu0
    %v11567 = vadd.f32 %v11518, %v11566
    %v11568 = vpop.f32.mrb[0].mxu0
    %v11569 = vpop.f32.mrb[0].mxu0
    %v11570 = vadd.f32 %v11521, %v11569
    %v11571 = vpop.f32.mrb[0].mxu0
    %11572 = vdwg.mxu0
    %11573 = vmatprep.subr.bf16.mxu0 0
    %11574 = vmatpush1.bf16.msra.mxu0 %v10896
    %11575 = vmatprep.subr.bf16.mxu0 0
    %11576 = vmatpush1.bf16.msra.mxu0 %v10897
    %11577 = vmatprep.subr.bf16.mxu0 0
    %11578 = vmatpush1.bf16.msra.mxu0 %v10898
    %11579 = vmatprep.subr.bf16.mxu0 0
    %11580 = vmatpush1.bf16.msra.mxu0 %v10899
    %11581 = vmatprep.subr.bf16.mxu0 0
    %11582 = vmatpush1.bf16.msra.mxu0 %v10900
    %11583 = vmatprep.subr.bf16.mxu0 0
    %11584 = vmatpush1.bf16.msra.mxu0 %v10901
    %11585 = vmatprep.subr.bf16.mxu0 0
    %11586 = vmatpush1.bf16.msra.mxu0 %v10902
    %11587 = vmatprep.subr.bf16.mxu0 0
    %11588 = vmatpush1.bf16.msra.mxu0 %v10903
    %11589 = vmatprep.subr.bf16.mxu0 0
    %11590 = vmatpush1.bf16.msra.mxu0 %v10904
    %11591 = vmatprep.subr.bf16.mxu0 0
    %11592 = vmatpush1.bf16.msra.mxu0 %v10905
    %11593 = vmatprep.subr.bf16.mxu0 0
    %11594 = vmatpush1.bf16.msra.mxu0 %v10906
    %11595 = vmatprep.subr.bf16.mxu0 0
    %11596 = vmatpush1.bf16.msra.mxu0 %v10907
    %11597 = vmatprep.subr.bf16.mxu0 0
    %11598 = vmatpush1.bf16.msra.mxu0 %v10908
    %11599 = vmatprep.subr.bf16.mxu0 0
    %11600 = vmatpush1.bf16.msra.mxu0 %v10909
    %11601 = vmatprep.subr.bf16.mxu0 0
    %11602 = vmatpush1.bf16.msra.mxu0 %v10910
    %11603 = vmatprep.subr.bf16.mxu0 0
    %11604 = vmatpush1.bf16.msra.mxu0 %v10911
    %11605 = vmatprep.mubr.bf16.mxu0 %v9227
    %11606 = vmatmul.mubr.bf16.gmra.mrb[0].mxu0 %v9226
    %v11607 = vpop.f32.mrb[0].mxu0
    %v11608 = vadd.f32 %v11559, %v11607
    %v11609 = vpop.f32.mrb[0].mxu0
    %v11610 = vpop.f32.mrb[0].mxu0
    %v11611 = vadd.f32 %v11562, %v11610
    %v11612 = vpop.f32.mrb[0].mxu0
    %11613 = vmatprep.mubr.bf16.mxu0 %v9259
    %11614 = vmatmul.mubr.bf16.gmra.mrb[0].mxu0 %v9258
    %v11615 = vpop.f32.mrb[0].mxu0
    %v11616 = vadd.f32 %v11567, %v11615
    %v11617 = vpop.f32.mrb[0].mxu0
    %v11618 = vpop.f32.mrb[0].mxu0
    %v11619 = vadd.f32 %v11570, %v11618
    %v11620 = vpop.f32.mrb[0].mxu0
    %11621 = vdwg.mxu0
    %11622 = vmatprep.subr.bf16.mxu0 0
    %11623 = vmatpush1.bf16.msra.mxu0 %v10912
    %11624 = vmatprep.subr.bf16.mxu0 0
    %11625 = vmatpush1.bf16.msra.mxu0 %v10913
    %11626 = vmatprep.subr.bf16.mxu0 0
    %11627 = vmatpush1.bf16.msra.mxu0 %v10914
    %11628 = vmatprep.subr.bf16.mxu0 0
    %11629 = vmatpush1.bf16.msra.mxu0 %v10915
    %11630 = vmatprep.subr.bf16.mxu0 0
    %11631 = vmatpush1.bf16.msra.mxu0 %v10916
    %11632 = vmatprep.subr.bf16.mxu0 0
    %11633 = vmatpush1.bf16.msra.mxu0 %v10917
    %11634 = vmatprep.subr.bf16.mxu0 0
    %11635 = vmatpush1.bf16.msra.mxu0 %v10918
    %11636 = vmatprep.subr.bf16.mxu0 0
    %11637 = vmatpush1.bf16.msra.mxu0 %v10919
    %11638 = vmatprep.subr.bf16.mxu0 0
    %11639 = vmatpush1.bf16.msra.mxu0 %v10920
    %11640 = vmatprep.subr.bf16.mxu0 0
    %11641 = vmatpush1.bf16.msra.mxu0 %v10921
    %11642 = vmatprep.subr.bf16.mxu0 0
    %11643 = vmatpush1.bf16.msra.mxu0 %v10922
    %11644 = vmatprep.subr.bf16.mxu0 0
    %11645 = vmatpush1.bf16.msra.mxu0 %v10923
    %11646 = vmatprep.subr.bf16.mxu0 0
    %11647 = vmatpush1.bf16.msra.mxu0 %v10924
    %11648 = vmatprep.subr.bf16.mxu0 0
    %11649 = vmatpush1.bf16.msra.mxu0 %v10925
    %11650 = vmatprep.subr.bf16.mxu0 0
    %11651 = vmatpush1.bf16.msra.mxu0 %v10926
    %11652 = vmatprep.subr.bf16.mxu0 0
    %11653 = vmatpush1.bf16.msra.mxu0 %v10927
    %11654 = vmatprep.mubr.bf16.mxu0 %v9229
    %11655 = vmatmul.mubr.bf16.gmra.mrb[0].mxu0 %v9228
    %v11656 = vpop.f32.mrb[0].mxu0
    %v11657 = vadd.f32 %v11608, %v11656
    %v11658 = vpop.f32.mrb[0].mxu0
    %v11659 = vpop.f32.mrb[0].mxu0
    %v11660 = vadd.f32 %v11611, %v11659
    %v11661 = vpop.f32.mrb[0].mxu0
    %11662 = vmatprep.mubr.bf16.mxu0 %v9261
    %11663 = vmatmul.mubr.bf16.gmra.mrb[0].mxu0 %v9260
    %v11664 = vpop.f32.mrb[0].mxu0
    %v11665 = vadd.f32 %v11616, %v11664
    %v11666 = vpop.f32.mrb[0].mxu0
    %v11667 = vpop.f32.mrb[0].mxu0
    %v11668 = vadd.f32 %v11619, %v11667
    %v11669 = vpop.f32.mrb[0].mxu0
    %11670 = vdwg.mxu0
    %11671 = vmatprep.subr.bf16.mxu0 0
    %11672 = vmatpush1.bf16.msra.mxu0 %v10928
    %11673 = vmatprep.subr.bf16.mxu0 0
    %11674 = vmatpush1.bf16.msra.mxu0 %v10929
    %11675 = vmatprep.subr.bf16.mxu0 0
    %11676 = vmatpush1.bf16.msra.mxu0 %v10930
    %11677 = vmatprep.subr.bf16.mxu0 0
    %11678 = vmatpush1.bf16.msra.mxu0 %v10931
    %11679 = vmatprep.subr.bf16.mxu0 0
    %11680 = vmatpush1.bf16.msra.mxu0 %v10932
    %11681 = vmatprep.subr.bf16.mxu0 0
    %11682 = vmatpush1.bf16.msra.mxu0 %v10933
    %11683 = vmatprep.subr.bf16.mxu0 0
    %11684 = vmatpush1.bf16.msra.mxu0 %v10934
    %11685 = vmatprep.subr.bf16.mxu0 0
    %11686 = vmatpush1.bf16.msra.mxu0 %v10935
    %11687 = vmatprep.subr.bf16.mxu0 0
    %11688 = vmatpush1.bf16.msra.mxu0 %v10936
    %11689 = vmatprep.subr.bf16.mxu0 0
    %11690 = vmatpush1.bf16.msra.mxu0 %v10937
    %11691 = vmatprep.subr.bf16.mxu0 0
    %11692 = vmatpush1.bf16.msra.mxu0 %v10938
    %11693 = vmatprep.subr.bf16.mxu0 0
    %11694 = vmatpush1.bf16.msra.mxu0 %v10939
    %11695 = vmatprep.subr.bf16.mxu0 0
    %11696 = vmatpush1.bf16.msra.mxu0 %v10940
    %11697 = vmatprep.subr.bf16.mxu0 0
    %11698 = vmatpush1.bf16.msra.mxu0 %v10941
    %11699 = vmatprep.subr.bf16.mxu0 0
    %11700 = vmatpush1.bf16.msra.mxu0 %v10942
    %11701 = vmatprep.subr.bf16.mxu0 0
    %11702 = vmatpush1.bf16.msra.mxu0 %v10943
    %11703 = vmatprep.mubr.bf16.mxu0 %v9231
    %11704 = vmatmul.mubr.bf16.gmra.mrb[0].mxu0 %v9230
    %v11705 = vpop.f32.mrb[0].mxu0
    %v11706 = vadd.f32 %v11657, %v11705
    %v11707 = vpop.f32.mrb[0].mxu0
    %v11708 = vpop.f32.mrb[0].mxu0
    %v11709 = vadd.f32 %v11660, %v11708
    %v11710 = vpop.f32.mrb[0].mxu0
    %11711 = vmatprep.mubr.bf16.mxu0 %v9263
    %11712 = vmatmul.mubr.bf16.gmra.mrb[0].mxu0 %v9262
    %v11713 = vpop.f32.mrb[0].mxu0
    %v11714 = vadd.f32 %v11665, %v11713
    %v11715 = vpop.f32.mrb[0].mxu0
    %v11716 = vpop.f32.mrb[0].mxu0
    %v11717 = vadd.f32 %v11668, %v11716
    %v11718 = vpop.f32.mrb[0].mxu0
    %11719 = vdwg.mxu0
    %11720 = vmatprep.subr.bf16.mxu0 0
    %11721 = vmatpush1.bf16.msra.mxu0 %v10944
    %11722 = vmatprep.subr.bf16.mxu0 0
    %11723 = vmatpush1.bf16.msra.mxu0 %v10945
    %11724 = vmatprep.subr.bf16.mxu0 0
    %11725 = vmatpush1.bf16.msra.mxu0 %v10946
    %11726 = vmatprep.subr.bf16.mxu0 0
    %11727 = vmatpush1.bf16.msra.mxu0 %v10947
    %11728 = vmatprep.subr.bf16.mxu0 0
    %11729 = vmatpush1.bf16.msra.mxu0 %v10948
    %11730 = vmatprep.subr.bf16.mxu0 0
    %11731 = vmatpush1.bf16.msra.mxu0 %v10949
    %11732 = vmatprep.subr.bf16.mxu0 0
    %11733 = vmatpush1.bf16.msra.mxu0 %v10950
    %11734 = vmatprep.subr.bf16.mxu0 0
    %11735 = vmatpush1.bf16.msra.mxu0 %v10951
    %11736 = vmatprep.subr.bf16.mxu0 0
    %11737 = vmatpush1.bf16.msra.mxu0 %v10952
    %11738 = vmatprep.subr.bf16.mxu0 0
    %11739 = vmatpush1.bf16.msra.mxu0 %v10953
    %11740 = vmatprep.subr.bf16.mxu0 0
    %11741 = vmatpush1.bf16.msra.mxu0 %v10954
    %11742 = vmatprep.subr.bf16.mxu0 0
    %11743 = vmatpush1.bf16.msra.mxu0 %v10955
    %11744 = vmatprep.subr.bf16.mxu0 0
    %11745 = vmatpush1.bf16.msra.mxu0 %v10956
    %11746 = vmatprep.subr.bf16.mxu0 0
    %11747 = vmatpush1.bf16.msra.mxu0 %v10957
    %11748 = vmatprep.subr.bf16.mxu0 0
    %11749 = vmatpush1.bf16.msra.mxu0 %v10958
    %11750 = vmatprep.subr.bf16.mxu0 0
    %11751 = vmatpush1.bf16.msra.mxu0 %v10959
    %11752 = vmatprep.mubr.bf16.mxu0 %v9233
    %11753 = vmatmul.mubr.bf16.gmra.mrb[0].mxu0 %v9232
    %v11754 = vpop.f32.mrb[0].mxu0
    %v11755 = vadd.f32 %v11706, %v11754
    %v11756 = vpop.f32.mrb[0].mxu0
    %v11757 = vpop.f32.mrb[0].mxu0
    %v11758 = vadd.f32 %v11709, %v11757
    %v11759 = vpop.f32.mrb[0].mxu0
    %11760 = vmatprep.mubr.bf16.mxu0 %v9265
    %11761 = vmatmul.mubr.bf16.gmra.mrb[0].mxu0 %v9264
    %v11762 = vpop.f32.mrb[0].mxu0
    %v11763 = vadd.f32 %v11714, %v11762
    %v11764 = vpop.f32.mrb[0].mxu0
    %v11765 = vpop.f32.mrb[0].mxu0
    %v11766 = vadd.f32 %v11717, %v11765
    %v11767 = vpop.f32.mrb[0].mxu0
    %11768 = vdwg.mxu0
    %11769 = vmatprep.subr.bf16.mxu0 0
    %11770 = vmatpush1.bf16.msra.mxu0 %v10960
    %11771 = vmatprep.subr.bf16.mxu0 0
    %11772 = vmatpush1.bf16.msra.mxu0 %v10961
    %11773 = vmatprep.subr.bf16.mxu0 0
    %11774 = vmatpush1.bf16.msra.mxu0 %v10962
    %11775 = vmatprep.subr.bf16.mxu0 0
    %11776 = vmatpush1.bf16.msra.mxu0 %v10963
    %11777 = vmatprep.subr.bf16.mxu0 0
    %11778 = vmatpush1.bf16.msra.mxu0 %v10964
    %11779 = vmatprep.subr.bf16.mxu0 0
    %11780 = vmatpush1.bf16.msra.mxu0 %v10965
    %11781 = vmatprep.subr.bf16.mxu0 0
    %11782 = vmatpush1.bf16.msra.mxu0 %v10966
    %11783 = vmatprep.subr.bf16.mxu0 0
    %11784 = vmatpush1.bf16.msra.mxu0 %v10967
    %11785 = vmatprep.subr.bf16.mxu0 0
    %11786 = vmatpush1.bf16.msra.mxu0 %v10968
    %11787 = vmatprep.subr.bf16.mxu0 0
    %11788 = vmatpush1.bf16.msra.mxu0 %v10969
    %11789 = vmatprep.subr.bf16.mxu0 0
    %11790 = vmatpush1.bf16.msra.mxu0 %v10970
    %11791 = vmatprep.subr.bf16.mxu0 0
    %11792 = vmatpush1.bf16.msra.mxu0 %v10971
    %11793 = vmatprep.subr.bf16.mxu0 0
    %11794 = vmatpush1.bf16.msra.mxu0 %v10972
    %11795 = vmatprep.subr.bf16.mxu0 0
    %11796 = vmatpush1.bf16.msra.mxu0 %v10973
    %11797 = vmatprep.subr.bf16.mxu0 0
    %11798 = vmatpush1.bf16.msra.mxu0 %v10974
    %11799 = vmatprep.subr.bf16.mxu0 0
    %11800 = vmatpush1.bf16.msra.mxu0 %v10975
    %11801 = vmatprep.mubr.bf16.mxu0 %v9235
    %11802 = vmatmul.mubr.bf16.gmra.mrb[0].mxu0 %v9234
    %v11803 = vpop.f32.mrb[0].mxu0
    %v11804 = vadd.f32 %v11755, %v11803
    %v11805 = vpop.f32.mrb[0].mxu0
    %v11806 = vpop.f32.mrb[0].mxu0
    %v11807 = vadd.f32 %v11758, %v11806
    %v11808 = vpop.f32.mrb[0].mxu0
    %11809 = vmatprep.mubr.bf16.mxu0 %v9267
    %11810 = vmatmul.mubr.bf16.gmra.mrb[0].mxu0 %v9266
    %v11811 = vpop.f32.mrb[0].mxu0
    %v11812 = vadd.f32 %v11763, %v11811
    %v11813 = vpop.f32.mrb[0].mxu0
    %v11814 = vpop.f32.mrb[0].mxu0
    %v11815 = vadd.f32 %v11766, %v11814
    %v11816 = vpop.f32.mrb[0].mxu0
    %11817 = vdwg.mxu0
    %11818 = vmatprep.subr.bf16.mxu0 0
    %11819 = vmatpush1.bf16.msra.mxu0 %v10976
    %11820 = vmatprep.subr.bf16.mxu0 0
    %11821 = vmatpush1.bf16.msra.mxu0 %v10977
    %11822 = vmatprep.subr.bf16.mxu0 0
    %11823 = vmatpush1.bf16.msra.mxu0 %v10978
    %11824 = vmatprep.subr.bf16.mxu0 0
    %11825 = vmatpush1.bf16.msra.mxu0 %v10979
    %11826 = vmatprep.subr.bf16.mxu0 0
    %11827 = vmatpush1.bf16.msra.mxu0 %v10980
    %11828 = vmatprep.subr.bf16.mxu0 0
    %11829 = vmatpush1.bf16.msra.mxu0 %v10981
    %11830 = vmatprep.subr.bf16.mxu0 0
    %11831 = vmatpush1.bf16.msra.mxu0 %v10982
    %11832 = vmatprep.subr.bf16.mxu0 0
    %11833 = vmatpush1.bf16.msra.mxu0 %v10983
    %11834 = vmatprep.subr.bf16.mxu0 0
    %11835 = vmatpush1.bf16.msra.mxu0 %v10984
    %11836 = vmatprep.subr.bf16.mxu0 0
    %11837 = vmatpush1.bf16.msra.mxu0 %v10985
    %11838 = vmatprep.subr.bf16.mxu0 0
    %11839 = vmatpush1.bf16.msra.mxu0 %v10986
    %11840 = vmatprep.subr.bf16.mxu0 0
    %11841 = vmatpush1.bf16.msra.mxu0 %v10987
    %11842 = vmatprep.subr.bf16.mxu0 0
    %11843 = vmatpush1.bf16.msra.mxu0 %v10988
    %11844 = vmatprep.subr.bf16.mxu0 0
    %11845 = vmatpush1.bf16.msra.mxu0 %v10989
    %11846 = vmatprep.subr.bf16.mxu0 0
    %11847 = vmatpush1.bf16.msra.mxu0 %v10990
    %11848 = vmatprep.subr.bf16.mxu0 0
    %11849 = vmatpush1.bf16.msra.mxu0 %v10991
    %11850 = vmatprep.mubr.bf16.mxu0 %v9237
    %11851 = vmatmul.mubr.bf16.gmra.mrb[0].mxu0 %v9236
    %v11852 = vpop.f32.mrb[0].mxu0
    %v11853 = vadd.f32 %v11804, %v11852
    %v11854 = vpop.f32.mrb[0].mxu0
    %v11855 = vpop.f32.mrb[0].mxu0
    %v11856 = vadd.f32 %v11807, %v11855
    %v11857 = vpop.f32.mrb[0].mxu0
    %11858 = vmatprep.mubr.bf16.mxu0 %v9269
    %11859 = vmatmul.mubr.bf16.gmra.mrb[0].mxu0 %v9268
    %v11860 = vpop.f32.mrb[0].mxu0
    %v11861 = vadd.f32 %v11812, %v11860
    %v11862 = vpop.f32.mrb[0].mxu0
    %v11863 = vpop.f32.mrb[0].mxu0
    %v11864 = vadd.f32 %v11815, %v11863
    %v11865 = vpop.f32.mrb[0].mxu0
    %11866 = vdwg.mxu0
    %11867 = vmatprep.subr.bf16.mxu0 0
    %11868 = vmatpush1.bf16.msra.mxu0 %v10992
    %11869 = vmatprep.subr.bf16.mxu0 0
    %11870 = vmatpush1.bf16.msra.mxu0 %v10993
    %11871 = vmatprep.subr.bf16.mxu0 0
    %11872 = vmatpush1.bf16.msra.mxu0 %v10994
    %11873 = vmatprep.subr.bf16.mxu0 0
    %11874 = vmatpush1.bf16.msra.mxu0 %v10995
    %11875 = vmatprep.subr.bf16.mxu0 0
    %11876 = vmatpush1.bf16.msra.mxu0 %v10996
    %11877 = vmatprep.subr.bf16.mxu0 0
    %11878 = vmatpush1.bf16.msra.mxu0 %v10997
    %11879 = vmatprep.subr.bf16.mxu0 0
    %11880 = vmatpush1.bf16.msra.mxu0 %v10998
    %11881 = vmatprep.subr.bf16.mxu0 0
    %11882 = vmatpush1.bf16.msra.mxu0 %v10999
    %11883 = vmatprep.subr.bf16.mxu0 0
    %11884 = vmatpush1.bf16.msra.mxu0 %v11000
    %11885 = vmatprep.subr.bf16.mxu0 0
    %11886 = vmatpush1.bf16.msra.mxu0 %v11001
    %11887 = vmatprep.subr.bf16.mxu0 0
    %11888 = vmatpush1.bf16.msra.mxu0 %v11002
    %11889 = vmatprep.subr.bf16.mxu0 0
    %11890 = vmatpush1.bf16.msra.mxu0 %v11003
    %11891 = vmatprep.subr.bf16.mxu0 0
    %11892 = vmatpush1.bf16.msra.mxu0 %v11004
    %11893 = vmatprep.subr.bf16.mxu0 0
    %11894 = vmatpush1.bf16.msra.mxu0 %v11005
    %11895 = vmatprep.subr.bf16.mxu0 0
    %11896 = vmatpush1.bf16.msra.mxu0 %v11006
    %11897 = vmatprep.subr.bf16.mxu0 0
    %11898 = vmatpush1.bf16.msra.mxu0 %v11007
    %11899 = vmatprep.mubr.bf16.mxu0 %v9239
    %11900 = vmatmul.mubr.bf16.gmra.mrb[0].mxu0 %v9238
    %v11901 = vpop.f32.mrb[0].mxu0
    %v11902 = vadd.f32 %v11853, %v11901
    %v11903 = vpop.f32.mrb[0].mxu0
    %v11904 = vpop.f32.mrb[0].mxu0
    %v11905 = vadd.f32 %v11856, %v11904
    %v11906 = vpop.f32.mrb[0].mxu0
    %11907 = vmatprep.mubr.bf16.mxu0 %v9271
    %11908 = vmatmul.mubr.bf16.gmra.mrb[0].mxu0 %v9270
    %v11909 = vpop.f32.mrb[0].mxu0
    %v11910 = vadd.f32 %v11861, %v11909
    %v11911 = vpop.f32.mrb[0].mxu0
    %v11912 = vpop.f32.mrb[0].mxu0
    %v11913 = vadd.f32 %v11864, %v11912
    %v11914 = vpop.f32.mrb[0].mxu0
    %11915 = vdwg.mxu0
    %11916 = vmatprep.subr.bf16.mxu0 0
    %11917 = vmatpush1.bf16.msra.mxu0 %v11008
    %11918 = vmatprep.subr.bf16.mxu0 0
    %11919 = vmatpush1.bf16.msra.mxu0 %v11009
    %11920 = vmatprep.subr.bf16.mxu0 0
    %11921 = vmatpush1.bf16.msra.mxu0 %v11010
    %11922 = vmatprep.subr.bf16.mxu0 0
    %11923 = vmatpush1.bf16.msra.mxu0 %v11011
    %11924 = vmatprep.subr.bf16.mxu0 0
    %11925 = vmatpush1.bf16.msra.mxu0 %v11012
    %11926 = vmatprep.subr.bf16.mxu0 0
    %11927 = vmatpush1.bf16.msra.mxu0 %v11013
    %11928 = vmatprep.subr.bf16.mxu0 0
    %11929 = vmatpush1.bf16.msra.mxu0 %v11014
    %11930 = vmatprep.subr.bf16.mxu0 0
    %11931 = vmatpush1.bf16.msra.mxu0 %v11015
    %11932 = vmatprep.subr.bf16.mxu0 0
    %11933 = vmatpush1.bf16.msra.mxu0 %v11016
    %11934 = vmatprep.subr.bf16.mxu0 0
    %11935 = vmatpush1.bf16.msra.mxu0 %v11017
    %11936 = vmatprep.subr.bf16.mxu0 0
    %11937 = vmatpush1.bf16.msra.mxu0 %v11018
    %11938 = vmatprep.subr.bf16.mxu0 0
    %11939 = vmatpush1.bf16.msra.mxu0 %v11019
    %11940 = vmatprep.subr.bf16.mxu0 0
    %11941 = vmatpush1.bf16.msra.mxu0 %v11020
    %11942 = vmatprep.subr.bf16.mxu0 0
    %11943 = vmatpush1.bf16.msra.mxu0 %v11021
    %11944 = vmatprep.subr.bf16.mxu0 0
    %11945 = vmatpush1.bf16.msra.mxu0 %v11022
    %11946 = vmatprep.subr.bf16.mxu0 0
    %11947 = vmatpush1.bf16.msra.mxu0 %v11023
    %11948 = vmatprep.mubr.bf16.mxu0 %v9241
    %11949 = vmatmul.mubr.bf16.gmra.mrb[0].mxu0 %v9240
    %v11950 = vpop.f32.mrb[0].mxu0
    %v11951 = vadd.f32 %v11902, %v11950
    %v11952 = vpop.f32.mrb[0].mxu0
    %v11953 = vpop.f32.mrb[0].mxu0
    %v11954 = vadd.f32 %v11905, %v11953
    %v11955 = vpop.f32.mrb[0].mxu0
    %11956 = vmatprep.mubr.bf16.mxu0 %v9273
    %11957 = vmatmul.mubr.bf16.gmra.mrb[0].mxu0 %v9272
    %v11958 = vpop.f32.mrb[0].mxu0
    %v11959 = vadd.f32 %v11910, %v11958
    %v11960 = vpop.f32.mrb[0].mxu0
    %v11961 = vpop.f32.mrb[0].mxu0
    %v11962 = vadd.f32 %v11913, %v11961
    %v11963 = vpop.f32.mrb[0].mxu0
    %11964 = vdwg.mxu0
    %11965 = vmatprep.subr.bf16.mxu0 0
    %11966 = vmatpush1.bf16.msra.mxu0 %v11024
    %11967 = vmatprep.subr.bf16.mxu0 0
    %11968 = vmatpush1.bf16.msra.mxu0 %v11025
    %11969 = vmatprep.subr.bf16.mxu0 0
    %11970 = vmatpush1.bf16.msra.mxu0 %v11026
    %11971 = vmatprep.subr.bf16.mxu0 0
    %11972 = vmatpush1.bf16.msra.mxu0 %v11027
    %11973 = vmatprep.subr.bf16.mxu0 0
    %11974 = vmatpush1.bf16.msra.mxu0 %v11028
    %11975 = vmatprep.subr.bf16.mxu0 0
    %11976 = vmatpush1.bf16.msra.mxu0 %v11029
    %11977 = vmatprep.subr.bf16.mxu0 0
    %11978 = vmatpush1.bf16.msra.mxu0 %v11030
    %11979 = vmatprep.subr.bf16.mxu0 0
    %11980 = vmatpush1.bf16.msra.mxu0 %v11031
    %11981 = vmatprep.subr.bf16.mxu0 0
    %11982 = vmatpush1.bf16.msra.mxu0 %v11032
    %11983 = vmatprep.subr.bf16.mxu0 0
    %11984 = vmatpush1.bf16.msra.mxu0 %v11033
    %11985 = vmatprep.subr.bf16.mxu0 0
    %11986 = vmatpush1.bf16.msra.mxu0 %v11034
    %11987 = vmatprep.subr.bf16.mxu0 0
    %11988 = vmatpush1.bf16.msra.mxu0 %v11035
    %11989 = vmatprep.subr.bf16.mxu0 0
    %11990 = vmatpush1.bf16.msra.mxu0 %v11036
    %11991 = vmatprep.subr.bf16.mxu0 0
    %11992 = vmatpush1.bf16.msra.mxu0 %v11037
    %11993 = vmatprep.subr.bf16.mxu0 0
    %11994 = vmatpush1.bf16.msra.mxu0 %v11038
    %11995 = vmatprep.subr.bf16.mxu0 0
    %11996 = vmatpush1.bf16.msra.mxu0 %v11039
    %11997 = vmatprep.mubr.bf16.mxu0 %v9243
    %11998 = vmatmul.mubr.bf16.gmra.mrb[0].mxu0 %v9242
    %v11999 = vpop.f32.mrb[0].mxu0
    %v12000 = vadd.f32 %v11951, %v11999
    %v12001 = vpop.f32.mrb[0].mxu0
    %v12002 = vpop.f32.mrb[0].mxu0
    %v12003 = vadd.f32 %v11954, %v12002
    %v12004 = vpop.f32.mrb[0].mxu0
    %12005 = vmatprep.mubr.bf16.mxu0 %v9275
    %12006 = vmatmul.mubr.bf16.gmra.mrb[0].mxu0 %v9274
    %v12007 = vpop.f32.mrb[0].mxu0
    %v12008 = vadd.f32 %v11959, %v12007
    %v12009 = vpop.f32.mrb[0].mxu0
    %v12010 = vpop.f32.mrb[0].mxu0
    %v12011 = vadd.f32 %v11962, %v12010
    %v12012 = vpop.f32.mrb[0].mxu0
    %12013 = vdwg.mxu0
    %12014 = vmatprep.subr.bf16.mxu0 0
    %12015 = vmatpush1.bf16.msra.mxu0 %v11040
    %12016 = vmatprep.subr.bf16.mxu0 0
    %12017 = vmatpush1.bf16.msra.mxu0 %v11041
    %12018 = vmatprep.subr.bf16.mxu0 0
    %12019 = vmatpush1.bf16.msra.mxu0 %v11042
    %12020 = vmatprep.subr.bf16.mxu0 0
    %12021 = vmatpush1.bf16.msra.mxu0 %v11043
    %12022 = vmatprep.subr.bf16.mxu0 0
    %12023 = vmatpush1.bf16.msra.mxu0 %v11044
    %12024 = vmatprep.subr.bf16.mxu0 0
    %12025 = vmatpush1.bf16.msra.mxu0 %v11045
    %12026 = vmatprep.subr.bf16.mxu0 0
    %12027 = vmatpush1.bf16.msra.mxu0 %v11046
    %12028 = vmatprep.subr.bf16.mxu0 0
    %12029 = vmatpush1.bf16.msra.mxu0 %v11047
    %12030 = vmatprep.subr.bf16.mxu0 0
    %12031 = vmatpush1.bf16.msra.mxu0 %v11048
    %12032 = vmatprep.subr.bf16.mxu0 0
    %12033 = vmatpush1.bf16.msra.mxu0 %v11049
    %12034 = vmatprep.subr.bf16.mxu0 0
    %12035 = vmatpush1.bf16.msra.mxu0 %v11050
    %12036 = vmatprep.subr.bf16.mxu0 0
    %12037 = vmatpush1.bf16.msra.mxu0 %v11051
    %12038 = vmatprep.subr.bf16.mxu0 0
    %12039 = vmatpush1.bf16.msra.mxu0 %v11052
    %12040 = vmatprep.subr.bf16.mxu0 0
    %12041 = vmatpush1.bf16.msra.mxu0 %v11053
    %12042 = vmatprep.subr.bf16.mxu0 0
    %12043 = vmatpush1.bf16.msra.mxu0 %v11054
    %12044 = vmatprep.subr.bf16.mxu0 0
    %12045 = vmatpush1.bf16.msra.mxu0 %v11055
    %12046 = vmatprep.mubr.bf16.mxu0 %v9245
    %12047 = vmatmul.mubr.bf16.gmra.mrb[0].mxu0 %v9244
    %v12048 = vpop.f32.mrb[0].mxu0
    %v12049 = vadd.f32 %v12000, %v12048
    %v12050 = vpop.f32.mrb[0].mxu0
    %v12051 = vpop.f32.mrb[0].mxu0
    %v12052 = vadd.f32 %v12003, %v12051
    %v12053 = vpop.f32.mrb[0].mxu0
    %12054 = vmatprep.mubr.bf16.mxu0 %v9277
    %12055 = vmatmul.mubr.bf16.gmra.mrb[0].mxu0 %v9276
    %v12056 = vpop.f32.mrb[0].mxu0
    %v12057 = vadd.f32 %v12008, %v12056
    %v12058 = vpop.f32.mrb[0].mxu0
    %v12059 = vpop.f32.mrb[0].mxu0
    %v12060 = vadd.f32 %v12011, %v12059
    %v12061 = vpop.f32.mrb[0].mxu0
    %12062 = vdwg.mxu0
    %12063 = vmatprep.subr.bf16.mxu0 0
    %12064 = vmatpush1.bf16.msra.mxu0 %v11056
    %12065 = vmatprep.subr.bf16.mxu0 0
    %12066 = vmatpush1.bf16.msra.mxu0 %v11057
    %12067 = vmatprep.subr.bf16.mxu0 0
    %12068 = vmatpush1.bf16.msra.mxu0 %v11058
    %12069 = vmatprep.subr.bf16.mxu0 0
    %12070 = vmatpush1.bf16.msra.mxu0 %v11059
    %12071 = vmatprep.subr.bf16.mxu0 0
    %12072 = vmatpush1.bf16.msra.mxu0 %v11060
    %12073 = vmatprep.subr.bf16.mxu0 0
    %12074 = vmatpush1.bf16.msra.mxu0 %v11061
    %12075 = vmatprep.subr.bf16.mxu0 0
    %12076 = vmatpush1.bf16.msra.mxu0 %v11062
    %12077 = vmatprep.subr.bf16.mxu0 0
    %12078 = vmatpush1.bf16.msra.mxu0 %v11063
    %12079 = vmatprep.subr.bf16.mxu0 0
    %12080 = vmatpush1.bf16.msra.mxu0 %v11064
    %12081 = vmatprep.subr.bf16.mxu0 0
    %12082 = vmatpush1.bf16.msra.mxu0 %v11065
    %12083 = vmatprep.subr.bf16.mxu0 0
    %12084 = vmatpush1.bf16.msra.mxu0 %v11066
    %12085 = vmatprep.subr.bf16.mxu0 0
    %12086 = vmatpush1.bf16.msra.mxu0 %v11067
    %12087 = vmatprep.subr.bf16.mxu0 0
    %12088 = vmatpush1.bf16.msra.mxu0 %v11068
    %12089 = vmatprep.subr.bf16.mxu0 0
    %12090 = vmatpush1.bf16.msra.mxu0 %v11069
    %12091 = vmatprep.subr.bf16.mxu0 0
    %12092 = vmatpush1.bf16.msra.mxu0 %v11070
    %12093 = vmatprep.subr.bf16.mxu0 0
    %12094 = vmatpush1.bf16.msra.mxu0 %v11071
    %12095 = vmatprep.mubr.bf16.mxu0 %v9247
    %12096 = vmatmul.mubr.bf16.gmra.mrb[0].mxu0 %v9246
    %v12097 = vpop.f32.mrb[0].mxu0
    %v12098 = vadd.f32 %v12049, %v12097
    %v12099 = vpop.f32.mrb[0].mxu0
    %v12100 = vpop.f32.mrb[0].mxu0
    %v12101 = vadd.f32 %v12052, %v12100
    %v12102 = vpop.f32.mrb[0].mxu0
    %12103 = vmatprep.mubr.bf16.mxu0 %v9279
    %12104 = vmatmul.mubr.bf16.gmra.mrb[0].mxu0 %v9278
    %v12105 = vpop.f32.mrb[0].mxu0
    %v12106 = vadd.f32 %v12057, %v12105
    %v12107 = vpop.f32.mrb[0].mxu0
    %v12108 = vpop.f32.mrb[0].mxu0
    %v12109 = vadd.f32 %v12060, %v12108
    %v12110 = vpop.f32.mrb[0].mxu0
    %12111 = vdwg.mxu0
    %v12112 = vpack.c.bf16 %v12101, %v12098
    %v12113 = vpack.c.bf16 %v12109, %v12106
    %12114 = vmatprep.subr.bf16.mxu0 0
    %12115 = vmatpush1.bf16.msra.mxu0 %v12112
    %12116 = vmatprep.subr.bf16.mxu0 0
    %12117 = vmatpush1.bf16.msra.mxu0 %v12113
    %12118 = vmatprep.subr.bf16.mxu0 0
    %12119 = vmatpush1.bf16.msra.mxu0 0
    %12120 = vmatprep.subr.bf16.mxu0 0
    %12121 = vmatpush1.bf16.msra.mxu0 0
    %12122 = vmatprep.subr.bf16.mxu0 0
    %12123 = vmatpush1.bf16.msra.mxu0 0
    %12124 = vmatprep.subr.bf16.mxu0 0
    %12125 = vmatpush1.bf16.msra.mxu0 0
    %12126 = vmatprep.subr.bf16.mxu0 0
    %12127 = vmatpush1.bf16.msra.mxu0 0
    %12128 = vmatprep.subr.bf16.mxu0 0
    %12129 = vmatpush1.bf16.msra.mxu0 0
    %12130 = vmatprep.subr.bf16.mxu0 0
    %12131 = vmatpush1.bf16.msra.mxu0 0
    %12132 = vmatprep.subr.bf16.mxu0 0
    %12133 = vmatpush1.bf16.msra.mxu0 0
    %12134 = vmatprep.subr.bf16.mxu0 0
    %12135 = vmatpush1.bf16.msra.mxu0 0
    %12136 = vmatprep.subr.bf16.mxu0 0
    %12137 = vmatpush1.bf16.msra.mxu0 0
    %12138 = vmatprep.subr.bf16.mxu0 0
    %12139 = vmatpush1.bf16.msra.mxu0 0
    %12140 = vmatprep.subr.bf16.mxu0 0
    %12141 = vmatpush1.bf16.msra.mxu0 0
    %12142 = vmatprep.subr.bf16.mxu0 0
    %12143 = vmatpush1.bf16.msra.mxu0 0
    %12144 = vmatprep.subr.bf16.mxu0 0
    %12145 = vmatpush1.bf16.msra.mxu0 0
    %12146 = vmatprep.mubr.bf16.mxu0 0
    %12147 = vmatmul.mubr.bf16.gmra.mrb[0].mxu0 %v1139
    %v12148 = vpop.f32.mrb[0].mxu0
    %v12149 = vadd.f32 0.0, %v12148
    %v12150 = vpop.f32.mrb[0].mxu0
    %v12151 = vpop.f32.mrb[0].mxu0
    %v12152 = vadd.f32 0.0, %v12151
    %v12153 = vpop.f32.mrb[0].mxu0
    %12154 = vdwg.mxu0
    %v12155 = vld [vmem:[#allocation2 + $0x18] sm:$0xf]
    %v12156 = vld [vmem:[#allocation2 + $0x1c] sm:$0xf]
    %v12157 = vld [vmem:[#allocation2 + $0x20] sm:$0xf]
    %v12158 = vld [vmem:[#allocation2 + $0x24] sm:$0xf]
    %v12159 = vld [vmem:[#allocation2 + $0x28] sm:$0xf]
    %v12160 = vld [vmem:[#allocation2 + $0x2c] sm:$0xf]
    %v12161 = vld [vmem:[#allocation2 + $0x30] sm:$0xf]
    %v12162 = vld [vmem:[#allocation2 + $0x34] sm:$0xf]
    %v12171 = vunpack.c.l.b16 %v12155
    %v12172 = vunpack.c.l.b16 %v12156
    %v12173 = vunpack.c.l.b16 %v12157
    %v12174 = vunpack.c.l.b16 %v12158
    %v12175 = vunpack.c.l.b16 %v12159
    %v12176 = vunpack.c.l.b16 %v12160
    %v12177 = vunpack.c.l.b16 %v12161
    %v12178 = vunpack.c.l.b16 %v12162
    %v12179 = vpack.c.b16 %v12172, %v12171
    %v12180 = vpack.c.b16 %v12174, %v12173
    %v12181 = vpack.c.b16 %v12176, %v12175
    %v12182 = vpack.c.b16 %v12178, %v12177
    %v12188 = vsel %vm8233, %v4849, 0
    %12190 = vmatprep.subr.bf16.mxu0 0
    %12191 = vmatpush1.bf16.msra.mxu0 %v12179
    %12192 = vmatprep.subr.bf16.mxu0 0
    %12193 = vmatpush1.bf16.msra.mxu0 %v12180
    %12194 = vmatprep.subr.bf16.mxu0 0
    %12195 = vmatpush1.bf16.msra.mxu0 %v12181
    %12196 = vmatprep.subr.bf16.mxu0 0
    %12197 = vmatpush1.bf16.msra.mxu0 %v12182
    %12198 = vmatprep.subr.bf16.mxu0 0
    %12199 = vmatpush1.bf16.msra.mxu0 0
    %12200 = vmatprep.subr.bf16.mxu0 0
    %12201 = vmatpush1.bf16.msra.mxu0 0
    %12202 = vmatprep.subr.bf16.mxu0 0
    %12203 = vmatpush1.bf16.msra.mxu0 0
    %12204 = vmatprep.subr.bf16.mxu0 0
    %12205 = vmatpush1.bf16.msra.mxu0 0
    %12206 = vmatprep.subr.bf16.mxu0 0
    %12207 = vmatpush1.bf16.msra.mxu0 0
    %12208 = vmatprep.subr.bf16.mxu0 0
    %12209 = vmatpush1.bf16.msra.mxu0 0
    %12210 = vmatprep.subr.bf16.mxu0 0
    %12211 = vmatpush1.bf16.msra.mxu0 0
    %12212 = vmatprep.subr.bf16.mxu0 0
    %12213 = vmatpush1.bf16.msra.mxu0 0
    %12214 = vmatprep.subr.bf16.mxu0 0
    %12215 = vmatpush1.bf16.msra.mxu0 0
    %12216 = vmatprep.subr.bf16.mxu0 0
    %12217 = vmatpush1.bf16.msra.mxu0 0
    %12218 = vmatprep.subr.bf16.mxu0 0
    %12219 = vmatpush1.bf16.msra.mxu0 0
    %12220 = vmatprep.subr.bf16.mxu0 0
    %12221 = vmatpush1.bf16.msra.mxu0 0
    %12222 = vmatprep.mubr.bf16.mxu0 0
    %12223 = vmatmul.mubr.bf16.gmra.mrb[0].mxu0 %v12188
    %v12224 = vpop.f32.mrb[0].mxu0
    %v12225 = vadd.f32 %v12149, %v12224
    %v12226 = vpop.f32.mrb[0].mxu0
    %v12227 = vpop.f32.mrb[0].mxu0
    %v12228 = vadd.f32 %v12152, %v12227
    %v12229 = vpop.f32.mrb[0].mxu0
    %12230 = vdwg.mxu0
    %v12231 = vld [vmem:[#allocation5 + $0x6] ss:$0 sm:$0xff]
    %v12232 = vadd.f32 %v12225, %v12231
    %v12233 = vadd.f32 %v12228, %v12231
    %v12234 = vmin.f32 %v12232, 0.0
    %v12235 = vmin.f32 %v12233, 0.0
    %v12236 = vmul.f32 %v12234, 0.5
    %v12237 = vmul.f32 %v12235, 0.5
    %v12238 = vtanh.pop %v12236
    %v12239 = vtanh.pop %v12237
    %v12240 = vmul.f32 %v12238, 2.0
    %v12241 = vmul.f32 %v12239, 2.0
    %v12242 = vsub.f32 1.0, %v12238
    %v12243 = vsub.f32 1.0, %v12239
    %v12244 = vrcp.pop %v12242
    %v12245 = vrcp.pop %v12243
    %v12246 = vmul.f32 %v12240, %v12244
    %v12247 = vmul.f32 %v12241, %v12245
    %vm12248 = vcmp.gt.f32.partialorder %v12232, 0.0
    %vm12249 = vcmp.gt.f32.partialorder %v12233, 0.0
    %v12250 = vsel %vm12248, %v12232, %v12246
    %v12251 = vsel %vm12249, %v12233, %v12247
    %v12252 = vld [vmem:[%s4] sm:$0xf]
    %v12253 = vld [vmem:[%s4 + $0x4] sm:$0xf]
    %v12254 = vld [vmem:[%s4 + $0x8] sm:$0xf]
    %v12255 = vld [vmem:[%s4 + $0xc] sm:$0xf]
    %v12256 = vpack.c.bf16 %v12251, %v12250
    %v12261 = vunpack.c.l.b16 %v12252
    %v12262 = vunpack.c.l.b16 %v12253
    %v12263 = vunpack.c.l.b16 %v12254
    %v12264 = vunpack.c.l.b16 %v12255
    %v12265 = vpack.c.b16 %v12262, %v12261
    %v12266 = vpack.c.b16 %v12264, %v12263
    %v12268 = vsel %vm587, %v12265, 0
    %v12271 = vsel %vm587, %v12266, 0
    %12273 = vmatprep.subr.bf16.mxu0 0
    %12274 = vmatpush1.bf16.msra.mxu0 %v12256
    %12275 = vmatprep.subr.bf16.mxu0 0
    %12276 = vmatpush1.bf16.msra.mxu0 0
    %12277 = vmatprep.subr.bf16.mxu0 0
    %12278 = vmatpush1.bf16.msra.mxu0 0
    %12279 = vmatprep.subr.bf16.mxu0 0
    %12280 = vmatpush1.bf16.msra.mxu0 0
    %12281 = vmatprep.subr.bf16.mxu0 0
    %12282 = vmatpush1.bf16.msra.mxu0 0
    %12283 = vmatprep.subr.bf16.mxu0 0
    %12284 = vmatpush1.bf16.msra.mxu0 0
    %12285 = vmatprep.subr.bf16.mxu0 0
    %12286 = vmatpush1.bf16.msra.mxu0 0
    %12287 = vmatprep.subr.bf16.mxu0 0
    %12288 = vmatpush1.bf16.msra.mxu0 0
    %12289 = vmatprep.subr.bf16.mxu0 0
    %12290 = vmatpush1.bf16.msra.mxu0 0
    %12291 = vmatprep.subr.bf16.mxu0 0
    %12292 = vmatpush1.bf16.msra.mxu0 0
    %12293 = vmatprep.subr.bf16.mxu0 0
    %12294 = vmatpush1.bf16.msra.mxu0 0
    %12295 = vmatprep.subr.bf16.mxu0 0
    %12296 = vmatpush1.bf16.msra.mxu0 0
    %12297 = vmatprep.subr.bf16.mxu0 0
    %12298 = vmatpush1.bf16.msra.mxu0 0
    %12299 = vmatprep.subr.bf16.mxu0 0
    %12300 = vmatpush1.bf16.msra.mxu0 0
    %12301 = vmatprep.subr.bf16.mxu0 0
    %12302 = vmatpush1.bf16.msra.mxu0 0
    %12303 = vmatprep.subr.bf16.mxu0 0
    %12304 = vmatpush1.bf16.msra.mxu0 0
    %12305 = vmatprep.mubr.bf16.mxu0 0
    %12306 = vmatmul.mubr.bf16.gmra.mrb[0].mxu0 %v12268
    %v12307 = vpop.f32.mrb[0].mxu0
    %v12308 = vadd.f32 0.0, %v12307
    %v12309 = vpop.f32.mrb[0].mxu0
    %v12310 = vpop.f32.mrb[0].mxu0
    %v12311 = vadd.f32 0.0, %v12310
    %v12312 = vpop.f32.mrb[0].mxu0
    %12313 = vmatprep.mubr.bf16.mxu0 0
    %12314 = vmatmul.mubr.bf16.gmra.mrb[0].mxu0 %v12271
    %v12315 = vpop.f32.mrb[0].mxu0
    %v12316 = vadd.f32 0.0, %v12315
    %v12317 = vpop.f32.mrb[0].mxu0
    %v12318 = vpop.f32.mrb[0].mxu0
    %v12319 = vadd.f32 0.0, %v12318
    %v12320 = vpop.f32.mrb[0].mxu0
    %12321 = vdwg.mxu0
    %v12322 = vld [vmem:[%s5] sm:$0xf]
    %v12323 = vld [vmem:[%s5 + $0x4] sm:$0xf]
    %v12324 = vld [vmem:[%s5 + $0x8] sm:$0xf]
    %v12325 = vld [vmem:[%s6] sm:$0xf]
    %v12326 = vld [vmem:[%s6 + $0x4] sm:$0xf]
    %v12327 = vld [vmem:[%s6 + $0x8] sm:$0xf]
    %v12328 = vpack.c.bf16 %v12316, %v12311
    %v12329 = vpack.c.bf16 %v12319, %v12319
    %v12330 = vld [vmem:[#allocation2 + $0x38] sm:$0xf]
    %v12331 = vld [vmem:[#allocation2 + $0x3c] sm:$0xf]
    %v12332 = vld [vmem:[#allocation2 + $0x40] sm:$0xf]
    %v12333 = vld [vmem:[#allocation2 + $0x44] sm:$0xf]
    %v12334 = vld [vmem:[#allocation2 + $0x48] sm:$0xf]
    %v12335 = vld [vmem:[#allocation2 + $0x4c] sm:$0xf]
    %v12336 = vld [vmem:[#allocation2 + $0x50] sm:$0xf]
    %v12337 = vld [vmem:[#allocation2 + $0x54] sm:$0xf]
    %v12346 = vunpack.c.l.b16 %v12330
    %v12347 = vunpack.c.l.b16 %v12331
    %v12348 = vunpack.c.l.b16 %v12332
    %v12349 = vunpack.c.l.b16 %v12333
    %v12350 = vunpack.c.l.b16 %v12334
    %v12351 = vunpack.c.l.b16 %v12335
    %v12352 = vunpack.c.l.b16 %v12336
    %v12353 = vunpack.c.l.b16 %v12337
    %v12354 = vpack.c.b16 %v12347, %v12346
    %v12355 = vpack.c.b16 %v12349, %v12348
    %v12356 = vpack.c.b16 %v12351, %v12350
    %v12357 = vpack.c.b16 %v12353, %v12352
    %v12363 = vsel %vm8233, %v12328, 0
    %v12366 = vsel %vm8233, %v12329, 0
    %12368 = vmatprep.subr.bf16.mxu0 0
    %12369 = vmatpush1.bf16.msra.mxu0 %v12354
    %12370 = vmatprep.subr.bf16.mxu0 0
    %12371 = vmatpush1.bf16.msra.mxu0 %v12355
    %12372 = vmatprep.subr.bf16.mxu0 0
    %12373 = vmatpush1.bf16.msra.mxu0 %v12356
    %12374 = vmatprep.subr.bf16.mxu0 0
    %12375 = vmatpush1.bf16.msra.mxu0 %v12357
    %12376 = vmatprep.subr.bf16.mxu0 0
    %12377 = vmatpush1.bf16.msra.mxu0 0
    %12378 = vmatprep.subr.bf16.mxu0 0
    %12379 = vmatpush1.bf16.msra.mxu0 0
    %12380 = vmatprep.subr.bf16.mxu0 0
    %12381 = vmatpush1.bf16.msra.mxu0 0
    %12382 = vmatprep.subr.bf16.mxu0 0
    %12383 = vmatpush1.bf16.msra.mxu0 0
    %12384 = vmatprep.subr.bf16.mxu0 0
    %12385 = vmatpush1.bf16.msra.mxu0 0
    %12386 = vmatprep.subr.bf16.mxu0 0
    %12387 = vmatpush1.bf16.msra.mxu0 0
    %12388 = vmatprep.subr.bf16.mxu0 0
    %12389 = vmatpush1.bf16.msra.mxu0 0
    %12390 = vmatprep.subr.bf16.mxu0 0
    %12391 = vmatpush1.bf16.msra.mxu0 0
    %12392 = vmatprep.subr.bf16.mxu0 0
    %12393 = vmatpush1.bf16.msra.mxu0 0
    %12394 = vmatprep.subr.bf16.mxu0 0
    %12395 = vmatpush1.bf16.msra.mxu0 0
    %12396 = vmatprep.subr.bf16.mxu0 0
    %12397 = vmatpush1.bf16.msra.mxu0 0
    %12398 = vmatprep.subr.bf16.mxu0 0
    %12399 = vmatpush1.bf16.msra.mxu0 0
    %12400 = vmatprep.mubr.bf16.mxu0 0
    %12401 = vmatmul.mubr.bf16.gmra.mrb[0].mxu0 %v12363
    %v12402 = vpop.f32.mrb[0].mxu0
    %v12403 = vadd.f32 0.0, %v12402
    %v12404 = vpop.f32.mrb[0].mxu0
    %v12405 = vpop.f32.mrb[0].mxu0
    %v12406 = vadd.f32 0.0, %v12405
    %v12407 = vpop.f32.mrb[0].mxu0
    %12408 = vmatprep.mubr.bf16.mxu0 0
    %12409 = vmatmul.mubr.bf16.gmra.mrb[0].mxu0 %v12366
    %v12410 = vpop.f32.mrb[0].mxu0
    %v12411 = vadd.f32 0.0, %v12410
    %v12412 = vpop.f32.mrb[0].mxu0
    %v12413 = vpop.f32.mrb[0].mxu0
    %v12414 = vpop.f32.mrb[0].mxu0
    %12415 = vdwg.mxu0
    %v12416 = vld [vmem:[#allocation2 + $0x58] sm:$0xf]
    %v12420 = vunpack.c.l.b16 %v12322
    %v12421 = vunpack.c.l.b16 %v12323
    %v12422 = vunpack.c.l.b16 %v12324
    %v12423 = vpack.c.b16 %v12421, %v12420
    %v12424 = vpack.c.b16 %v12422, %v12422
    %vm12425 = vcmask 64512
    %v12427 = vsel %vm12425, %v12423, 0
    %v12430 = vsel %vm12425, %v12424, 0
    %vm12432 = vcmask 1043456
    %v12434 = vsel %vm12432, %v12416, 0
    %12436 = vmatprep.subr.bf16.mxu0 0
    %12437 = vmatpush1.bf16.msra.mxu0 %v12434
    %12438 = vmatprep.subr.bf16.mxu0 0
    %12439 = vmatpush1.bf16.msra.mxu0 0
    %12440 = vmatprep.subr.bf16.mxu0 0
    %12441 = vmatpush1.bf16.msra.mxu0 0
    %12442 = vmatprep.subr.bf16.mxu0 0
    %12443 = vmatpush1.bf16.msra.mxu0 0
    %12444 = vmatprep.subr.bf16.mxu0 0
    %12445 = vmatpush1.bf16.msra.mxu0 0
    %12446 = vmatprep.subr.bf16.mxu0 0
    %12447 = vmatpush1.bf16.msra.mxu0 0
    %12448 = vmatprep.subr.bf16.mxu0 0
    %12449 = vmatpush1.bf16.msra.mxu0 0
    %12450 = vmatprep.subr.bf16.mxu0 0
    %12451 = vmatpush1.bf16.msra.mxu0 0
    %12452 = vmatprep.subr.bf16.mxu0 0
    %12453 = vmatpush1.bf16.msra.mxu0 0
    %12454 = vmatprep.subr.bf16.mxu0 0
    %12455 = vmatpush1.bf16.msra.mxu0 0
    %12456 = vmatprep.subr.bf16.mxu0 0
    %12457 = vmatpush1.bf16.msra.mxu0 0
    %12458 = vmatprep.subr.bf16.mxu0 0
    %12459 = vmatpush1.bf16.msra.mxu0 0
    %12460 = vmatprep.subr.bf16.mxu0 0
    %12461 = vmatpush1.bf16.msra.mxu0 0
    %12462 = vmatprep.subr.bf16.mxu0 0
    %12463 = vmatpush1.bf16.msra.mxu0 0
    %12464 = vmatprep.subr.bf16.mxu0 0
    %12465 = vmatpush1.bf16.msra.mxu0 0
    %12466 = vmatprep.subr.bf16.mxu0 0
    %12467 = vmatpush1.bf16.msra.mxu0 0
    %12468 = vmatprep.mubr.bf16.mxu0 0
    %12469 = vmatmul.mubr.bf16.gmra.mrb[0].mxu0 %v12427
    %v12470 = vpop.f32.mrb[0].mxu0
    %v12471 = vadd.f32 0.0, %v12470
    %v12472 = vpop.f32.mrb[0].mxu0
    %v12473 = vpop.f32.mrb[0].mxu0
    %v12474 = vadd.f32 0.0, %v12473
    %v12475 = vpop.f32.mrb[0].mxu0
    %12476 = vmatprep.mubr.bf16.mxu0 0
    %12477 = vmatmul.mubr.bf16.gmra.mrb[0].mxu0 %v12430
    %v12478 = vpop.f32.mrb[0].mxu0
    %v12479 = vadd.f32 0.0, %v12478
    %v12480 = vpop.f32.mrb[0].mxu0
    %v12481 = vpop.f32.mrb[0].mxu0
    %v12482 = vpop.f32.mrb[0].mxu0
    %12483 = vdwg.mxu0
    %v12484 = vadd.f32 %v12403, %v12471
    %v12485 = vadd.f32 %v12406, %v12474
    %v12486 = vadd.f32 %v12411, %v12479
    %v12487 = vpack.c.bf16 %v12485, %v12484
    %v12488 = vpack.c.bf16 %v12486, %v12486
    %v12492 = vunpack.c.l.b16 %v12325
    %v12493 = vunpack.c.l.b16 %v12326
    %v12494 = vunpack.c.l.b16 %v12327
    %v12495 = vpack.c.b16 %v12493, %v12492
    %v12496 = vpack.c.b16 %v12494, %v12494
    %12500 = vrot.lane.b32.xlu0 %v12403, 64
    %v12501 = vpop.permute.xlu0 %12500
    %12502 = vrot.lane.b32.xlu0 %v12406, 64
    %v12503 = vpop.permute.xlu0 %12502
    %12504 = vrot.lane.b32.xlu0 %v12411, 64
    %v12505 = vpop.permute.xlu0 %12504
    %vm12509 = vcmask 195584
    %v12511 = vsel %vm12509, %v12495, 0
    %v12514 = vsel %vm12509, %v12496, 0
    %v12517 = vsel %vm12432, %v12488, 0
    %12519 = vmatprep.subr.bf16.mxu0 0
    %12520 = vmatpush1.bf16.msra.mxu0 %v12487
    %12521 = vmatprep.subr.bf16.mxu0 0
    %12522 = vmatpush1.bf16.msra.mxu0 %v12517
    %12523 = vmatprep.subr.bf16.mxu0 0
    %12524 = vmatpush1.bf16.msra.mxu0 0
    %12525 = vmatprep.subr.bf16.mxu0 0
    %12526 = vmatpush1.bf16.msra.mxu0 0
    %12527 = vmatprep.subr.bf16.mxu0 0
    %12528 = vmatpush1.bf16.msra.mxu0 0
    %12529 = vmatprep.subr.bf16.mxu0 0
    %12530 = vmatpush1.bf16.msra.mxu0 0
    %12531 = vmatprep.subr.bf16.mxu0 0
    %12532 = vmatpush1.bf16.msra.mxu0 0
    %12533 = vmatprep.subr.bf16.mxu0 0
    %12534 = vmatpush1.bf16.msra.mxu0 0
    %12535 = vmatprep.subr.bf16.mxu0 0
    %12536 = vmatpush1.bf16.msra.mxu0 0
    %12537 = vmatprep.subr.bf16.mxu0 0
    %12538 = vmatpush1.bf16.msra.mxu0 0
    %12539 = vmatprep.subr.bf16.mxu0 0
    %12540 = vmatpush1.bf16.msra.mxu0 0
    %12541 = vmatprep.subr.bf16.mxu0 0
    %12542 = vmatpush1.bf16.msra.mxu0 0
    %12543 = vmatprep.subr.bf16.mxu0 0
    %12544 = vmatpush1.bf16.msra.mxu0 0
    %12545 = vmatprep.subr.bf16.mxu0 0
    %12546 = vmatpush1.bf16.msra.mxu0 0
    %12547 = vmatprep.subr.bf16.mxu0 0
    %12548 = vmatpush1.bf16.msra.mxu0 0
    %12549 = vmatprep.subr.bf16.mxu0 0
    %12550 = vmatpush1.bf16.msra.mxu0 0
    %12551 = vmatprep.mubr.bf16.mxu0 0
    %12552 = vmatmul.mubr.bf16.gmra.mrb[0].mxu0 %v12511
    %v12553 = vpop.f32.mrb[0].mxu0
    %v12554 = vadd.f32 %v12501, %v12553
    %v12555 = vpop.f32.mrb[0].mxu0
    %v12556 = vpop.f32.mrb[0].mxu0
    %v12557 = vadd.f32 %v12503, %v12556
    %v12558 = vpop.f32.mrb[0].mxu0
    %12559 = vmatprep.mubr.bf16.mxu0 0
    %12560 = vmatmul.mubr.bf16.gmra.mrb[0].mxu0 %v12514
    %v12561 = vpop.f32.mrb[0].mxu0
    %v12562 = vadd.f32 %v12505, %v12561
    %v12563 = vpop.f32.mrb[0].mxu0
    %v12564 = vpop.f32.mrb[0].mxu0
    %v12565 = vpop.f32.mrb[0].mxu0
    %12566 = vdwg.mxu0
    %12570 = vrot.lane.b32.xlu0 %v12471, 64
    %v12571 = vpop.permute.xlu0 %12570
    %12572 = vrot.lane.b32.xlu0 %v12474, 64
    %v12573 = vpop.permute.xlu0 %12572
    %12574 = vrot.lane.b32.xlu0 %v12479, 64
    %v12575 = vpop.permute.xlu0 %12574
    %v12579 = vadd.f32 %v12554, %v12571
    %v12580 = vadd.f32 %v12557, %v12573
    %v12581 = vadd.f32 %v12562, %v12575
    %v12582 = vld [vmem:[#allocation5 + $0x7] ss:$0 sm:$0xff]
    %v12583 = vadd.f32 %v12579, %v12582
    %v12584 = vadd.f32 %v12580, %v12582
    %v12585 = vadd.f32 %v12581, %v12582
    %v12586 = vmin.f32 %v12583, 0.0
    %v12587 = vmin.f32 %v12584, 0.0
    %v12588 = vmin.f32 %v12585, 0.0
    %v12589 = vmul.f32 %v12586, 0.5
    %v12590 = vmul.f32 %v12587, 0.5
    %v12591 = vmul.f32 %v12588, 0.5
    %v12592 = vtanh.pop %v12589
    %v12593 = vtanh.pop %v12590
    %v12594 = vtanh.pop %v12591
    %v12595 = vmul.f32 %v12592, 2.0
    %v12596 = vmul.f32 %v12593, 2.0
    %v12597 = vmul.f32 %v12594, 2.0
    %v12598 = vsub.f32 1.0, %v12592
    %v12599 = vsub.f32 1.0, %v12593
    %v12600 = vsub.f32 1.0, %v12594
    %v12601 = vrcp.pop %v12598
    %v12602 = vrcp.pop %v12599
    %v12603 = vrcp.pop %v12600
    %v12604 = vmul.f32 %v12595, %v12601
    %v12605 = vmul.f32 %v12596, %v12602
    %v12606 = vmul.f32 %v12597, %v12603
    %vm12607 = vcmp.gt.f32.partialorder %v12583, 0.0
    %vm12608 = vcmp.gt.f32.partialorder %v12584, 0.0
    %vm12609 = vcmp.gt.f32.partialorder %v12585, 0.0
    %v12610 = vsel %vm12607, %v12583, %v12604
    %v12611 = vsel %vm12608, %v12584, %v12605
    %v12612 = vsel %vm12609, %v12585, %v12606
    %v12613 = vpack.c.bf16 %v12611, %v12610
    %v12614 = vpack.c.bf16 %v12612, %v12612
    %v12615 = vld [vmem:[#allocation2 + $0x5c] sm:$0xf]
    %v12616 = vld [vmem:[#allocation2 + $0x60] sm:$0xf]
    %v12617 = vld [vmem:[#allocation2 + $0x64] sm:$0xf]
    %v12618 = vld [vmem:[#allocation2 + $0x68] sm:$0xf]
    %v12619 = vld [vmem:[#allocation2 + $0x6c] sm:$0xf]
    %v12620 = vld [vmem:[#allocation2 + $0x70] sm:$0xf]
    %v12621 = vld [vmem:[#allocation2 + $0x74] sm:$0xf]
    %v12622 = vld [vmem:[#allocation2 + $0x78] sm:$0xf]
    %v12631 = vunpack.c.l.b16 %v12615
    %v12632 = vunpack.c.l.b16 %v12616
    %v12633 = vunpack.c.l.b16 %v12617
    %v12634 = vunpack.c.l.b16 %v12618
    %v12635 = vunpack.c.l.b16 %v12619
    %v12636 = vunpack.c.l.b16 %v12620
    %v12637 = vunpack.c.l.b16 %v12621
    %v12638 = vunpack.c.l.b16 %v12622
    %v12639 = vpack.c.b16 %v12632, %v12631
    %v12640 = vpack.c.b16 %v12634, %v12633
    %v12641 = vpack.c.b16 %v12636, %v12635
    %v12642 = vpack.c.b16 %v12638, %v12637
    %v12648 = vsel %vm8233, %v12613, 0
    %v12651 = vsel %vm8233, %v12614, 0
    %12653 = vmatprep.subr.bf16.mxu0 0
    %12654 = vmatpush1.bf16.msra.mxu0 %v12639
    %12655 = vmatprep.subr.bf16.mxu0 0
    %12656 = vmatpush1.bf16.msra.mxu0 %v12640
    %12657 = vmatprep.subr.bf16.mxu0 0
    %12658 = vmatpush1.bf16.msra.mxu0 %v12641
    %12659 = vmatprep.subr.bf16.mxu0 0
    %12660 = vmatpush1.bf16.msra.mxu0 %v12642
    %12661 = vmatprep.subr.bf16.mxu0 0
    %12662 = vmatpush1.bf16.msra.mxu0 0
    %12663 = vmatprep.subr.bf16.mxu0 0
    %12664 = vmatpush1.bf16.msra.mxu0 0
    %12665 = vmatprep.subr.bf16.mxu0 0
    %12666 = vmatpush1.bf16.msra.mxu0 0
    %12667 = vmatprep.subr.bf16.mxu0 0
    %12668 = vmatpush1.bf16.msra.mxu0 0
    %12669 = vmatprep.subr.bf16.mxu0 0
    %12670 = vmatpush1.bf16.msra.mxu0 0
    %12671 = vmatprep.subr.bf16.mxu0 0
    %12672 = vmatpush1.bf16.msra.mxu0 0
    %12673 = vmatprep.subr.bf16.mxu0 0
    %12674 = vmatpush1.bf16.msra.mxu0 0
    %12675 = vmatprep.subr.bf16.mxu0 0
    %12676 = vmatpush1.bf16.msra.mxu0 0
    %12677 = vmatprep.subr.bf16.mxu0 0
    %12678 = vmatpush1.bf16.msra.mxu0 0
    %12679 = vmatprep.subr.bf16.mxu0 0
    %12680 = vmatpush1.bf16.msra.mxu0 0
    %12681 = vmatprep.subr.bf16.mxu0 0
    %12682 = vmatpush1.bf16.msra.mxu0 0
    %12683 = vmatprep.subr.bf16.mxu0 0
    %12684 = vmatpush1.bf16.msra.mxu0 0
    %12685 = vmatprep.mubr.bf16.mxu0 0
    %12686 = vmatmul.mubr.bf16.gmra.mrb[0].mxu0 %v12648
    %v12687 = vpop.f32.mrb[0].mxu0
    %v12688 = vadd.f32 0.0, %v12687
    %v12689 = vpop.f32.mrb[0].mxu0
    %v12690 = vpop.f32.mrb[0].mxu0
    %v12691 = vadd.f32 0.0, %v12690
    %v12692 = vpop.f32.mrb[0].mxu0
    %12693 = vmatprep.mubr.bf16.mxu0 0
    %12694 = vmatmul.mubr.bf16.gmra.mrb[0].mxu0 %v12651
    %v12695 = vpop.f32.mrb[0].mxu0
    %v12696 = vadd.f32 0.0, %v12695
    %v12697 = vpop.f32.mrb[0].mxu0
    %v12698 = vpop.f32.mrb[0].mxu0
    %v12699 = vpop.f32.mrb[0].mxu0
    %12700 = vdwg.mxu0
    %v12701 = vpack.c.bf16 %v12691, %v12688
    %v12702 = vpack.c.bf16 %v12696, %v12696
    %12706 = vrot.lane.b32.xlu0 %v12688, 64
    %v12707 = vpop.permute.xlu0 %12706
    %12708 = vrot.lane.b32.xlu0 %v12691, 64
    %v12709 = vpop.permute.xlu0 %12708
    %12710 = vrot.lane.b32.xlu0 %v12696, 64
    %v12711 = vpop.permute.xlu0 %12710
    %v12716 = vsel %vm12432, %v12702, 0
    %12718 = vmatprep.subr.bf16.mxu0 0
    %12719 = vmatpush1.bf16.msra.mxu0 %v12701
    %12720 = vmatprep.subr.bf16.mxu0 0
    %12721 = vmatpush1.bf16.msra.mxu0 %v12716
    %12722 = vmatprep.subr.bf16.mxu0 0
    %12723 = vmatpush1.bf16.msra.mxu0 0
    %12724 = vmatprep.subr.bf16.mxu0 0
    %12725 = vmatpush1.bf16.msra.mxu0 0
    %12726 = vmatprep.subr.bf16.mxu0 0
    %12727 = vmatpush1.bf16.msra.mxu0 0
    %12728 = vmatprep.subr.bf16.mxu0 0
    %12729 = vmatpush1.bf16.msra.mxu0 0
    %12730 = vmatprep.subr.bf16.mxu0 0
    %12731 = vmatpush1.bf16.msra.mxu0 0
    %12732 = vmatprep.subr.bf16.mxu0 0
    %12733 = vmatpush1.bf16.msra.mxu0 0
    %12734 = vmatprep.subr.bf16.mxu0 0
    %12735 = vmatpush1.bf16.msra.mxu0 0
    %12736 = vmatprep.subr.bf16.mxu0 0
    %12737 = vmatpush1.bf16.msra.mxu0 0
    %12738 = vmatprep.subr.bf16.mxu0 0
    %12739 = vmatpush1.bf16.msra.mxu0 0
    %12740 = vmatprep.subr.bf16.mxu0 0
    %12741 = vmatpush1.bf16.msra.mxu0 0
    %12742 = vmatprep.subr.bf16.mxu0 0
    %12743 = vmatpush1.bf16.msra.mxu0 0
    %12744 = vmatprep.subr.bf16.mxu0 0
    %12745 = vmatpush1.bf16.msra.mxu0 0
    %12746 = vmatprep.subr.bf16.mxu0 0
    %12747 = vmatpush1.bf16.msra.mxu0 0
    %12748 = vmatprep.subr.bf16.mxu0 0
    %12749 = vmatpush1.bf16.msra.mxu0 0
    %12750 = vmatprep.mubr.bf16.mxu0 0
    %12751 = vmatmul.mubr.bf16.gmra.mrb[0].mxu0 %v12511
    %v12752 = vpop.f32.mrb[0].mxu0
    %v12753 = vadd.f32 %v12707, %v12752
    %v12754 = vpop.f32.mrb[0].mxu0
    %v12755 = vpop.f32.mrb[0].mxu0
    %v12756 = vadd.f32 %v12709, %v12755
    %v12757 = vpop.f32.mrb[0].mxu0
    %12758 = vmatprep.mubr.bf16.mxu0 0
    %12759 = vmatmul.mubr.bf16.gmra.mrb[0].mxu0 %v12514
    %v12760 = vpop.f32.mrb[0].mxu0
    %v12761 = vadd.f32 %v12711, %v12760
    %v12762 = vpop.f32.mrb[0].mxu0
    %v12763 = vpop.f32.mrb[0].mxu0
    %v12764 = vpop.f32.mrb[0].mxu0
    %12765 = vdwg.mxu0
    %v12766 = vld [vmem:[#allocation5 + $0x100] ss:$0 sm:$0xff]
    %v12767 = vadd.f32 %v12753, %v12766
    %v12768 = vadd.f32 %v12756, %v12766
    %v12769 = vadd.f32 %v12761, %v12766
    %v12770 = vmin.f32 %v12767, 0.0
    %v12771 = vmin.f32 %v12768, 0.0
    %v12772 = vmin.f32 %v12769, 0.0
    %v12773 = vmul.f32 %v12770, 0.5
    %v12774 = vmul.f32 %v12771, 0.5
    %v12775 = vmul.f32 %v12772, 0.5
    %v12776 = vtanh.pop %v12773
    %v12777 = vtanh.pop %v12774
    %v12778 = vtanh.pop %v12775
    %v12779 = vmul.f32 %v12776, 2.0
    %v12780 = vmul.f32 %v12777, 2.0
    %v12781 = vmul.f32 %v12778, 2.0
    %v12782 = vsub.f32 1.0, %v12776
    %v12783 = vsub.f32 1.0, %v12777
    %v12784 = vsub.f32 1.0, %v12778
    %v12785 = vrcp.pop %v12782
    %v12786 = vrcp.pop %v12783
    %v12787 = vrcp.pop %v12784
    %v12788 = vmul.f32 %v12779, %v12785
    %v12789 = vmul.f32 %v12780, %v12786
    %v12790 = vmul.f32 %v12781, %v12787
    %vm12791 = vcmp.gt.f32.partialorder %v12767, 0.0
    %vm12792 = vcmp.gt.f32.partialorder %v12768, 0.0
    %vm12793 = vcmp.gt.f32.partialorder %v12769, 0.0
    %v12794 = vsel %vm12791, %v12767, %v12788
    %v12795 = vsel %vm12792, %v12768, %v12789
    %v12796 = vsel %vm12793, %v12769, %v12790
    %v12797 = vld [vmem:[%s7] sm:$0x1]
    %v12798 = vpack.c.bf16 %v12795, %v12794
    %v12799 = vpack.c.bf16 %v12796, %v12796
    %v12801 = vsel %vm12509, %v12797, 0
    %v12804 = vsel %vm12432, %v12799, 0
    %12806 = vmatprep.subr.bf16.mxu0 0
    %12807 = vmatpush1.bf16.msra.mxu0 %v12798
    %12808 = vmatprep.subr.bf16.mxu0 0
    %12809 = vmatpush1.bf16.msra.mxu0 %v12804
    %12810 = vmatprep.subr.bf16.mxu0 0
    %12811 = vmatpush1.bf16.msra.mxu0 0
    %12812 = vmatprep.subr.bf16.mxu0 0
    %12813 = vmatpush1.bf16.msra.mxu0 0
    %12814 = vmatprep.subr.bf16.mxu0 0
    %12815 = vmatpush1.bf16.msra.mxu0 0
    %12816 = vmatprep.subr.bf16.mxu0 0
    %12817 = vmatpush1.bf16.msra.mxu0 0
    %12818 = vmatprep.subr.bf16.mxu0 0
    %12819 = vmatpush1.bf16.msra.mxu0 0
    %12820 = vmatprep.subr.bf16.mxu0 0
    %12821 = vmatpush1.bf16.msra.mxu0 0
    %12822 = vmatprep.subr.bf16.mxu0 0
    %12823 = vmatpush1.bf16.msra.mxu0 0
    %12824 = vmatprep.subr.bf16.mxu0 0
    %12825 = vmatpush1.bf16.msra.mxu0 0
    %12826 = vmatprep.subr.bf16.mxu0 0
    %12827 = vmatpush1.bf16.msra.mxu0 0
    %12828 = vmatprep.subr.bf16.mxu0 0
    %12829 = vmatpush1.bf16.msra.mxu0 0
    %12830 = vmatprep.subr.bf16.mxu0 0
    %12831 = vmatpush1.bf16.msra.mxu0 0
    %12832 = vmatprep.subr.bf16.mxu0 0
    %12833 = vmatpush1.bf16.msra.mxu0 0
    %12834 = vmatprep.subr.bf16.mxu0 0
    %12835 = vmatpush1.bf16.msra.mxu0 0
    %12836 = vmatprep.subr.bf16.mxu0 0
    %12837 = vmatpush1.bf16.msra.mxu0 0
    %12838 = vmatprep.mubr.bf16.mxu0 0
    %12839 = vmatmul.mubr.bf16.gmra.mrb[0].mxu0 %v12801
    %v12840 = vpop.f32.mrb[0].mxu0
    %v12841 = vadd.f32 0.0, %v12840
    %v12842 = vpop.f32.mrb[0].mxu0
    %v12843 = vpop.f32.mrb[0].mxu0
    %v12844 = vpop.f32.mrb[0].mxu0
    %12845 = vdwg.mxu0
    %v12846 = vpack.c.bf16 %v12308, %v12308
    %v12847 = vld [vmem:[#allocation2 + $0x7c] sm:$0xf]
    %v12848 = vld [vmem:[#allocation2 + $0x80] sm:$0xf]
    %v12849 = vld [vmem:[#allocation2 + $0x84] sm:$0xf]
    %v12850 = vld [vmem:[#allocation2 + $0x88] sm:$0xf]
    %v12851 = vld [vmem:[#allocation2 + $0x8c] sm:$0xf]
    %v12852 = vld [vmem:[#allocation2 + $0x90] sm:$0xf]
    %v12853 = vld [vmem:[#allocation2 + $0x94] sm:$0xf]
    %v12854 = vld [vmem:[#allocation2 + $0x98] sm:$0xf]
    %v12855 = vpack.c.bf16 %v12841, %v12841
    %v12856 = vld [vmem:[#allocation2 + $0x9c] sm:$0xf]
    %v12857 = vld [vmem:[#allocation2 + $0xa0] sm:$0xf]
    %v12858 = vld [vmem:[#allocation2 + $0xa4] sm:$0xf]
    %v12859 = vld [vmem:[#allocation2 + $0xa8] sm:$0xf]
    %v12860 = vld [vmem:[#allocation2 + $0xac] sm:$0xf]
    %v12861 = vld [vmem:[#allocation2 + $0xb0] sm:$0xf]
    %v12862 = vld [vmem:[#allocation2 + $0xb4] sm:$0xf]
    %v12863 = vld [vmem:[#allocation2 + $0xb8] sm:$0xf]
    %v12872 = vunpack.c.l.b16 %v12856
    %v12873 = vunpack.c.l.b16 %v12857
    %v12874 = vunpack.c.l.b16 %v12858
    %v12875 = vunpack.c.l.b16 %v12859
    %v12876 = vunpack.c.l.b16 %v12860
    %v12877 = vunpack.c.l.b16 %v12861
    %v12878 = vunpack.c.l.b16 %v12862
    %v12879 = vunpack.c.l.b16 %v12863
    %v12880 = vpack.c.b16 %v12873, %v12872
    %v12881 = vpack.c.b16 %v12875, %v12874
    %v12882 = vpack.c.b16 %v12877, %v12876
    %v12883 = vpack.c.b16 %v12879, %v12878
    %v12889 = vsel %vm8233, %v12855, 0
    %12891 = vmatprep.subr.bf16.mxu0 0
    %12892 = vmatpush1.bf16.msra.mxu0 %v12880
    %12893 = vmatprep.subr.bf16.mxu0 0
    %12894 = vmatpush1.bf16.msra.mxu0 %v12881
    %12895 = vmatprep.subr.bf16.mxu0 0
    %12896 = vmatpush1.bf16.msra.mxu0 %v12882
    %12897 = vmatprep.subr.bf16.mxu0 0
    %12898 = vmatpush1.bf16.msra.mxu0 %v12883
    %12899 = vmatprep.subr.bf16.mxu0 0
    %12900 = vmatpush1.bf16.msra.mxu0 0
    %12901 = vmatprep.subr.bf16.mxu0 0
    %12902 = vmatpush1.bf16.msra.mxu0 0
    %12903 = vmatprep.subr.bf16.mxu0 0
    %12904 = vmatpush1.bf16.msra.mxu0 0
    %12905 = vmatprep.subr.bf16.mxu0 0
    %12906 = vmatpush1.bf16.msra.mxu0 0
    %12907 = vmatprep.subr.bf16.mxu0 0
    %12908 = vmatpush1.bf16.msra.mxu0 0
    %12909 = vmatprep.subr.bf16.mxu0 0
    %12910 = vmatpush1.bf16.msra.mxu0 0
    %12911 = vmatprep.subr.bf16.mxu0 0
    %12912 = vmatpush1.bf16.msra.mxu0 0
    %12913 = vmatprep.subr.bf16.mxu0 0
    %12914 = vmatpush1.bf16.msra.mxu0 0
    %12915 = vmatprep.subr.bf16.mxu0 0
    %12916 = vmatpush1.bf16.msra.mxu0 0
    %12917 = vmatprep.subr.bf16.mxu0 0
    %12918 = vmatpush1.bf16.msra.mxu0 0
    %12919 = vmatprep.subr.bf16.mxu0 0
    %12920 = vmatpush1.bf16.msra.mxu0 0
    %12921 = vmatprep.subr.bf16.mxu0 0
    %12922 = vmatpush1.bf16.msra.mxu0 0
    %12923 = vmatprep.mubr.bf16.mxu0 0
    %12924 = vmatmul.mubr.bf16.gmra.mrb[0].mxu0 %v12889
    %v12925 = vpop.f32.mrb[0].mxu0
    %v12926 = vadd.f32 0.0, %v12925
    %v12927 = vpop.f32.mrb[0].mxu0
    %v12928 = vpop.f32.mrb[0].mxu0
    %v12929 = vpop.f32.mrb[0].mxu0
    %12930 = vdwg.mxu0
    %v12939 = vunpack.c.l.b16 %v12847
    %v12940 = vunpack.c.l.b16 %v12848
    %v12941 = vunpack.c.l.b16 %v12849
    %v12942 = vunpack.c.l.b16 %v12850
    %v12943 = vunpack.c.l.b16 %v12851
    %v12944 = vunpack.c.l.b16 %v12852
    %v12945 = vunpack.c.l.b16 %v12853
    %v12946 = vunpack.c.l.b16 %v12854
    %v12947 = vpack.c.b16 %v12940, %v12939
    %v12948 = vpack.c.b16 %v12942, %v12941
    %v12949 = vpack.c.b16 %v12944, %v12943
    %v12950 = vpack.c.b16 %v12946, %v12945
    %v12956 = vsel %vm8233, %v12846, 0
    %12958 = vmatprep.subr.bf16.mxu0 0
    %12959 = vmatpush1.bf16.msra.mxu0 %v12947
    %12960 = vmatprep.subr.bf16.mxu0 0
    %12961 = vmatpush1.bf16.msra.mxu0 %v12948
    %12962 = vmatprep.subr.bf16.mxu0 0
    %12963 = vmatpush1.bf16.msra.mxu0 %v12949
    %12964 = vmatprep.subr.bf16.mxu0 0
    %12965 = vmatpush1.bf16.msra.mxu0 %v12950
    %12966 = vmatprep.subr.bf16.mxu0 0
    %12967 = vmatpush1.bf16.msra.mxu0 0
    %12968 = vmatprep.subr.bf16.mxu0 0
    %12969 = vmatpush1.bf16.msra.mxu0 0
    %12970 = vmatprep.subr.bf16.mxu0 0
    %12971 = vmatpush1.bf16.msra.mxu0 0
    %12972 = vmatprep.subr.bf16.mxu0 0
    %12973 = vmatpush1.bf16.msra.mxu0 0
    %12974 = vmatprep.subr.bf16.mxu0 0
    %12975 = vmatpush1.bf16.msra.mxu0 0
    %12976 = vmatprep.subr.bf16.mxu0 0
    %12977 = vmatpush1.bf16.msra.mxu0 0
    %12978 = vmatprep.subr.bf16.mxu0 0
    %12979 = vmatpush1.bf16.msra.mxu0 0
    %12980 = vmatprep.subr.bf16.mxu0 0
    %12981 = vmatpush1.bf16.msra.mxu0 0
    %12982 = vmatprep.subr.bf16.mxu0 0
    %12983 = vmatpush1.bf16.msra.mxu0 0
    %12984 = vmatprep.subr.bf16.mxu0 0
    %12985 = vmatpush1.bf16.msra.mxu0 0
    %12986 = vmatprep.subr.bf16.mxu0 0
    %12987 = vmatpush1.bf16.msra.mxu0 0
    %12988 = vmatprep.subr.bf16.mxu0 0
    %12989 = vmatpush1.bf16.msra.mxu0 0
    %12990 = vmatprep.mubr.bf16.mxu0 0
    %12991 = vmatmul.mubr.bf16.gmra.mrb[0].mxu0 %v12956
    %v12992 = vpop.f32.mrb[0].mxu0
    %v12993 = vadd.f32 %v12926, %v12992
    %v12994 = vpop.f32.mrb[0].mxu0
    %v12995 = vpop.f32.mrb[0].mxu0
    %v12996 = vpop.f32.mrb[0].mxu0
    %12997 = vdwg.mxu0
    %v12998 = vld [vmem:[#allocation5 + $0x101] ss:$0 sm:$0xff]
    %v12999 = vadd.f32 %v12993, %v12998
    %v13000 = vmin.f32 %v12999, 0.0
    %v13001 = vmul.f32 %v13000, 0.5
    %v13002 = vtanh.pop %v13001
    %v13003 = vmul.f32 %v13002, 2.0
    %v13004 = vsub.f32 1.0, %v13002
    %v13005 = vrcp.pop %v13004
    %v13006 = vmul.f32 %v13003, %v13005
    %vm13007 = vcmp.gt.f32.partialorder %v12999, 0.0
    %v13008 = vsel %vm13007, %v12999, %v13006
    %v13009 = vpack.c.bf16 %v13008, %v13008
    %v13010 = vld [vmem:[#allocation2 + $0xbc] sm:$0xf]
    %v13011 = vld [vmem:[#allocation2 + $0xc0] sm:$0xf]
    %v13012 = vld [vmem:[#allocation2 + $0xc4] sm:$0xf]
    %v13013 = vld [vmem:[#allocation2 + $0xc8] sm:$0xf]
    %v13014 = vld [vmem:[#allocation2 + $0xcc] sm:$0xf]
    %v13015 = vld [vmem:[#allocation2 + $0xd0] sm:$0xf]
    %v13016 = vld [vmem:[#allocation2 + $0xd4] sm:$0xf]
    %v13017 = vld [vmem:[#allocation2 + $0xd8] sm:$0xf]
    %v13018 = vld [vmem:[#allocation5 + $0x102] ss:$0 sm:$0xff]
    %v13027 = vunpack.c.l.b16 %v13010
    %v13028 = vunpack.c.l.b16 %v13011
    %v13029 = vunpack.c.l.b16 %v13012
    %v13030 = vunpack.c.l.b16 %v13013
    %v13031 = vunpack.c.l.b16 %v13014
    %v13032 = vunpack.c.l.b16 %v13015
    %v13033 = vunpack.c.l.b16 %v13016
    %v13034 = vunpack.c.l.b16 %v13017
    %v13035 = vpack.c.b16 %v13028, %v13027
    %v13036 = vpack.c.b16 %v13030, %v13029
    %v13037 = vpack.c.b16 %v13032, %v13031
    %v13038 = vpack.c.b16 %v13034, %v13033
    %v13044 = vsel %vm8233, %v13009, 0
    %13046 = vmatprep.subr.bf16.mxu0 0
    %13047 = vmatpush1.bf16.msra.mxu0 %v13035
    %13048 = vmatprep.subr.bf16.mxu0 0
    %13049 = vmatpush1.bf16.msra.mxu0 %v13036
    %13050 = vmatprep.subr.bf16.mxu0 0
    %13051 = vmatpush1.bf16.msra.mxu0 %v13037
    %13052 = vmatprep.subr.bf16.mxu0 0
    %13053 = vmatpush1.bf16.msra.mxu0 %v13038
    %13054 = vmatprep.subr.bf16.mxu0 0
    %13055 = vmatpush1.bf16.msra.mxu0 0
    %13056 = vmatprep.subr.bf16.mxu0 0
    %13057 = vmatpush1.bf16.msra.mxu0 0
    %13058 = vmatprep.subr.bf16.mxu0 0
    %13059 = vmatpush1.bf16.msra.mxu0 0
    %13060 = vmatprep.subr.bf16.mxu0 0
    %13061 = vmatpush1.bf16.msra.mxu0 0
    %13062 = vmatprep.subr.bf16.mxu0 0
    %13063 = vmatpush1.bf16.msra.mxu0 0
    %13064 = vmatprep.subr.bf16.mxu0 0
    %13065 = vmatpush1.bf16.msra.mxu0 0
    %13066 = vmatprep.subr.bf16.mxu0 0
    %13067 = vmatpush1.bf16.msra.mxu0 0
    %13068 = vmatprep.subr.bf16.mxu0 0
    %13069 = vmatpush1.bf16.msra.mxu0 0
    %13070 = vmatprep.subr.bf16.mxu0 0
    %13071 = vmatpush1.bf16.msra.mxu0 0
    %13072 = vmatprep.subr.bf16.mxu0 0
    %13073 = vmatpush1.bf16.msra.mxu0 0
    %13074 = vmatprep.subr.bf16.mxu0 0
    %13075 = vmatpush1.bf16.msra.mxu0 0
    %13076 = vmatprep.subr.bf16.mxu0 0
    %13077 = vmatpush1.bf16.msra.mxu0 0
    %13078 = vmatprep.mubr.bf16.mxu0 0
    %13079 = vmatmul.mubr.bf16.gmra.mrb[0].mxu0 %v13044
    %v13080 = vpop.f32.mrb[0].mxu0
    %v13081 = vadd.f32 %v13018, %v13080
    %v13082 = vpop.f32.mrb[0].mxu0
    %v13083 = vpop.f32.mrb[0].mxu0
    %v13084 = vpop.f32.mrb[0].mxu0
    %13085 = vdwg.mxu0
    %v13086 = vmin.f32 %v13081, 0.0
    %v13087 = vmul.f32 %v13086, 0.5
    %v13088 = vtanh.pop %v13087
    %v13089 = vmul.f32 %v13088, 2.0
    %v13090 = vsub.f32 1.0, %v13088
    %v13091 = vrcp.pop %v13090
    %v13092 = vmul.f32 %v13089, %v13091
    %vm13093 = vcmp.gt.f32.partialorder %v13081, 0.0
    %v13094 = vsel %vm13093, %v13081, %v13092
    %v13095 = vpack.c.bf16 %v13094, %v13094
    %v13096 = vld [vmem:[#allocation2 + $0xdc] sm:$0xf]
    %v13097 = vld [vmem:[#allocation2 + $0xe0] sm:$0xf]
    %v13098 = vld [vmem:[#allocation2 + $0xe4] sm:$0xf]
    %v13099 = vld [vmem:[#allocation2 + $0xe8] sm:$0xf]
    %v13100 = vld [vmem:[#allocation5 + $0x103] ss:$0 sm:$0xff]
    %v13105 = vunpack.c.l.b16 %v13096
    %v13106 = vunpack.c.l.b16 %v13097
    %v13107 = vunpack.c.l.b16 %v13098
    %v13108 = vunpack.c.l.b16 %v13099
    %v13109 = vpack.c.b16 %v13106, %v13105
    %v13110 = vpack.c.b16 %v13108, %v13107
    %v13114 = vsel %vm1026, %v13095, 0
    %13116 = vmatprep.subr.bf16.mxu0 0
    %13117 = vmatpush1.bf16.msra.mxu0 %v13109
    %13118 = vmatprep.subr.bf16.mxu0 0
    %13119 = vmatpush1.bf16.msra.mxu0 %v13110
    %13120 = vmatprep.subr.bf16.mxu0 0
    %13121 = vmatpush1.bf16.msra.mxu0 0
    %13122 = vmatprep.subr.bf16.mxu0 0
    %13123 = vmatpush1.bf16.msra.mxu0 0
    %13124 = vmatprep.subr.bf16.mxu0 0
    %13125 = vmatpush1.bf16.msra.mxu0 0
    %13126 = vmatprep.subr.bf16.mxu0 0
    %13127 = vmatpush1.bf16.msra.mxu0 0
    %13128 = vmatprep.subr.bf16.mxu0 0
    %13129 = vmatpush1.bf16.msra.mxu0 0
    %13130 = vmatprep.subr.bf16.mxu0 0
    %13131 = vmatpush1.bf16.msra.mxu0 0
    %13132 = vmatprep.subr.bf16.mxu0 0
    %13133 = vmatpush1.bf16.msra.mxu0 0
    %13134 = vmatprep.subr.bf16.mxu0 0
    %13135 = vmatpush1.bf16.msra.mxu0 0
    %13136 = vmatprep.subr.bf16.mxu0 0
    %13137 = vmatpush1.bf16.msra.mxu0 0
    %13138 = vmatprep.subr.bf16.mxu0 0
    %13139 = vmatpush1.bf16.msra.mxu0 0
    %13140 = vmatprep.subr.bf16.mxu0 0
    %13141 = vmatpush1.bf16.msra.mxu0 0
    %13142 = vmatprep.subr.bf16.mxu0 0
    %13143 = vmatpush1.bf16.msra.mxu0 0
    %13144 = vmatprep.subr.bf16.mxu0 0
    %13145 = vmatpush1.bf16.msra.mxu0 0
    %13146 = vmatprep.subr.bf16.mxu0 0
    %13147 = vmatpush1.bf16.msra.mxu0 0
    %13148 = vmatprep.mubr.bf16.mxu0 0
    %13149 = vmatmul.mubr.bf16.gmra.mrb[0].mxu0 %v13114
    %v13150 = vpop.f32.mrb[0].mxu0
    %v13151 = vadd.f32 %v13100, %v13150
    %v13152 = vpop.f32.mrb[0].mxu0
    %v13153 = vpop.f32.mrb[0].mxu0
    %v13154 = vpop.f32.mrb[0].mxu0
    %13155 = vdwg.mxu0
    %13156 = vst [vmem:[#allocation7] sm:$0x3] %v13151
    // Predicated region
    $region66: #{net_forward.1} parent=1 // pred_check
      _
    $region67: #{net_forward.1} parent=1 // pred_check_branch
      %13158 = sbr.rel (0) target = $region69
    $region68: #{net_forward.1} parent=1 // pred_region
      %s13160 = ssub.s32 32, 32
      %13161 = vsyncadd [#allocation4], %s13160
      %s13163 = sshll.u32 [#allocation7], 4
      %s13164 = int_to_ptr.vmem [resolvable:$true] %s13163
      %13166 = dma.vmem_to_hbm [thread:$0]  %s13164, 32, %s14, [#allocation4]
    $region69: #{net_forward.1} parent=1 // pred_fallthru
      _
    // Predicated region
    $region70: #{net_forward.1} parent=1 // pred_check
      _
    $region71: #{net_forward.1} parent=1 // pred_check_branch
      %13168 = sbr.rel (0) target = $region73
    $region72: #{net_forward.1} parent=1 // pred_region
      %13169 = dma.done [#allocation4], 32
    $region73: #{net_forward.1} parent=1 // pred_fallthru
      _
    %13170 = vsyncpa [#allocation3], 1
    %13171 = vsyncpa [#allocation6], 1
    %13172 = vsyncpa [#allocation4], 1

</llo_original>
